<compile_context>
chip_gen: v7x
topology: tpu7x:2x2x1
jax: 0.10.0
libtpu: 0.0.40
codegen_flags: <defaults>
</compile_context>

<pallas_src>
import functools

import jax
import jax.numpy as jnp
from jax.experimental import pallas as pl
from jax.experimental.pallas import tpu as pltpu


# ---------------------------------------------------------------------------
# Pass A: per-(batch, channel) sum / sum-of-squares of x over the points axis,
#          packed into one lane-dense (Bt, 2, C) output.
# ---------------------------------------------------------------------------
def _x_stats_kernel(x_ref, stat_ref):
    x = x_ref[...]                                              # (Bt, C, N) f32
    stat_ref[...] = jnp.stack(
        [jnp.sum(x, axis=2), jnp.sum(x * x, axis=2)], axis=1)   # (Bt, 2, C)


# ---------------------------------------------------------------------------
# Pass B: conv1 = (IN + BN + ReLU) folded to per-(b,c) affine (s1, t1), then a
#          1x1 conv = [O,C]@[C,N] MXU matmul per batch.  Emits y in bf16 plus
#          per-point partial stats (of the bf16-rounded y) for conv2's BN.
# ---------------------------------------------------------------------------
def _conv1_kernel(x_ref, s1_ref, t1_ref, w1_ref, bb1_ref, y_ref, ystat_ref):
    bt = x_ref.shape[0]
    w1 = w1_ref[...]                                            # [O, C] bf16
    bb1 = bb1_ref[...]                                          # [O, 1] f32
    for b in range(bt):                                         # static, small
        h = jnp.maximum(x_ref[b] * s1_ref[b] + t1_ref[b], 0.0)  # [C, N] f32
        y = jnp.dot(w1, h.astype(jnp.bfloat16),
                    preferred_element_type=jnp.float32) + bb1   # [O, N] f32
        y_bf = y.astype(jnp.bfloat16)
        y_ref[b] = y_bf
        yf = y_bf.astype(jnp.float32)                           # stats of what C reads
        ystat_ref[b] = jnp.stack(
            [jnp.sum(yf, axis=0), jnp.sum(yf * yf, axis=0)], axis=0)   # [2, N]


# ---------------------------------------------------------------------------
# Pass C: conv2 = BN(points)+ReLU folded to lane-dense per-point affine, a
#          point-mixing 1x1 conv (batch-stacked [Bt*O, N] @ w2.T on the MXU),
#          residual add, plus packed per-(b, channel) stats of the bf16 z.
# ---------------------------------------------------------------------------
def _conv2_kernel(y_ref, w2t_ref, s2_ref, t2_ref, bb2_ref, z_ref, zstat_ref):
    bt, o, n = y_ref.shape
    y = y_ref[...].astype(jnp.float32).reshape(bt * o, n)       # upcast bf16 -> f32
    h2 = jnp.maximum(y * s2_ref[...] + t2_ref[...], 0.0)        # (Bt*O, N)
    # c2[r, p] = sum_q h2[r, q] * w2[p, q]   (w2 pre-transposed -> native MXU)
    c2 = jnp.dot(h2.astype(jnp.bfloat16), w2t_ref[...],
                 preferred_element_type=jnp.float32)            # (Bt*O, N)
    z = y + c2 + bb2_ref[...]
    z_bf = z.astype(jnp.bfloat16)
    z_ref[...] = z_bf.reshape(bt, o, n)
    zf = z_bf.astype(jnp.float32).reshape(bt, o, n)             # stats of what D reads
    zstat_ref[...] = jnp.stack(
        [jnp.sum(zf, axis=2), jnp.sum(zf * zf, axis=2)], axis=1)  # (Bt, 2, O)


# ---------------------------------------------------------------------------
# Pass D: conv3 = (IN + BN + ReLU) folded to per-(b,o) affine, 1x1 conv, and
#          the identity shortcut.  Output written directly in NCHW layout.
# ---------------------------------------------------------------------------
def _conv3_kernel(z_ref, x_ref, s3_ref, t3_ref, w3_ref, bb3_ref, o_ref):
    bt = z_ref.shape[0]
    w3 = w3_ref[...]                                            # [O, O] bf16
    bb3 = bb3_ref[...]                                          # [O, 1] f32
    for b in range(bt):
        zb = z_ref[b].astype(jnp.float32)                       # [O, N]
        h3 = jnp.maximum(zb * s3_ref[b] + t3_ref[b], 0.0)
        y3 = jnp.dot(w3, h3.astype(jnp.bfloat16),
                     preferred_element_type=jnp.float32)        # [O, N]
        o_ref[b] = y3 + bb3 + x_ref[b]


# ---------------------------------------------------------------------------
# VMEM budgeting helpers (generation-aware).
# ---------------------------------------------------------------------------
def _vmem_cap_bytes():
    """~3/4 of physical VMEM (48 MiB on v7x, 96 MiB on v5e/v6e), leaving
    headroom for Mosaic internal scratch."""
    try:
        cap = int(getattr(pltpu.get_tpu_info(), "vmem_capacity_bytes", 128 << 20))
    except Exception:
        cap = 128 << 20
    return (cap * 3) // 4


def _cparams(step_bytes, resident_bytes, cap):
    limit = int(min(max(2 * step_bytes + resident_bytes + (4 << 20), 16 << 20), cap))
    return pltpu.CompilerParams(dimension_semantics=("parallel",),
                                vmem_limit_bytes=limit)


def _pick_bt(B, per_batch_bytes, resident_bytes, budget, max_bt=8):
    """Largest divisor of B (<= max_bt) whose double-buffered blocks + resident
    weights fit the VMEM budget."""
    bt = 1
    for cand in range(1, min(B, max_bt) + 1):
        if B % cand:
            continue
        if 2 * cand * per_batch_bytes + resident_bytes + (4 << 20) <= budget:
            bt = cand
    return bt


def prepare_params(params):
    """One-time weight plumbing OUTSIDE the jitted hot path: bf16 casts for the
    MXU, pre-transposed w2, lane-dense per-point params as [1, N], per-channel
    biases as [O, 1] sublane vectors."""
    f32 = jnp.float32
    O, C = params['w1'].shape
    N = params['w2'].shape[0]
    return dict(
        w1=params['w1'].astype(jnp.bfloat16),            # [O, C]
        w2t=params['w2'].T.astype(jnp.bfloat16),         # [N, N] (q, p)
        w3=params['w3'].astype(jnp.bfloat16),            # [O, O]
        g1=params['g1'].astype(f32), be1=params['be1'].astype(f32),
        bb1=params['bb1'].reshape(O, 1).astype(f32),
        g2=params['g2'].astype(f32), be2=params['be2'].astype(f32),
        bb2=params['bb2'].reshape(1, N).astype(f32),
        g3=params['g3'].astype(f32), be3=params['be3'].astype(f32),
        bb3=params['bb3'].reshape(O, 1).astype(f32),
    )


@functools.partial(jax.jit, static_argnames=("single_buffer",))
def oafilter(x_nchw, p, single_buffer=True):
    """OAFilter forward.  x_nchw: [B, channels, points, 1] float32 (NCHW).
    `p` is the output of prepare_params()."""
    B, C, N, W = x_nchw.shape
    assert W == 1
    O = p['w1'].shape[0]
    assert O == C, "identity shortcut requires out_channels == channels"
    f32, bf16 = jnp.float32, jnp.bfloat16
    x = jnp.squeeze(x_nchw, -1)                          # [B, C, N]

    cap = _vmem_cap_bytes()
    # Worst-case per-batch working set (f32 temps + bf16 y/z + f32 x/out).
    per_batch_bytes = 20 * C * N
    resident_bytes = 2 * N * N + 2 * (O * C + O * O) + 16 * N
    bt = _pick_bt(B, per_batch_bytes, resident_bytes, cap)
    grid = (B // bt,)

    def bspec(shape):        # per-batch-tile blocked operand
        return pl.BlockSpec((bt,) + shape, lambda b: (b,) + (0,) * len(shape))

    def cspec(shape):        # grid-invariant operand (single-buffered)
        idx = lambda b: (0,) * len(shape)
        if single_buffer:
            return pl.BlockSpec(shape, idx, pipeline_mode=pl.Buffered(1))
        return pl.BlockSpec(shape, idx)

    # ---- Pass A: x statistics ------------------------------------------------
    xstat = pl.pallas_call(
        _x_stats_kernel,
        grid=grid,
        in_specs=[bspec((C, N))],
        out_specs=bspec((2, C)),
        out_shape=jax.ShapeDtypeStruct((B, 2, C), f32),
        compiler_params=_cparams(bt * C * N * 4, 0, cap),
    )(x)

    # conv1 norm folding (tiny [B, C] math).  IN eps=1e-3, BN eps=1e-5,
    # training-mode batch stats, biased variance.
    # TODO(synk): E[x^2]-E[x]^2 can cancel for far-from-zero-mean activations;
    # a centered two-pass reduction would be more robust.
    xsum, xsq = xstat[:, 0, :], xstat[:, 1, :]
    mu1 = xsum / N
    var1 = jnp.maximum(xsq / N - mu1 * mu1, 0.0)
    r1 = 1.0 / (var1 + 1e-3)
    bvar1 = jnp.mean(var1 * r1, axis=0, keepdims=True)   # post-IN batch variance
    s1 = p['g1'][None, :] * jnp.sqrt(r1) * jax.lax.rsqrt(bvar1 + 1e-5)
    t1 = p['be1'][None, :] - mu1 * s1
    s1 = s1.reshape(B, C, 1)
    t1 = t1.reshape(B, C, 1)

    # ---- Pass B: conv1 --------------------------------------------------------
    y, ystat = pl.pallas_call(
        _conv1_kernel,
        grid=grid,
        in_specs=[bspec((C, N)), bspec((C, 1)), bspec((C, 1)),
                  cspec((O, C)), cspec((O, 1))],
        out_specs=[bspec((O, N)), bspec((2, N))],
        out_shape=[jax.ShapeDtypeStruct((B, O, N), bf16),
                   jax.ShapeDtypeStruct((B, 2, N), f32)],
        compiler_params=_cparams(bt * (C * N * 4 + O * N * 2 + 2 * N * 4),
                                 O * C * 2 + O * 4, cap),
    )(x, s1, t1, p['w1'], p['bb1'])

    # conv2 BatchNorm2d(points) folding: per-point stats over (B, out_channels).
    bmu2 = jnp.sum(ystat[:, 0, :], axis=0) / (B * O)
    bvar2 = jnp.maximum(jnp.sum(ystat[:, 1, :], axis=0) / (B * O) - bmu2 * bmu2, 0.0)
    s2f = p['g2'] * jax.lax.rsqrt(bvar2 + 1e-5)
    t2f = p['be2'] - bmu2 * s2f
    s2 = s2f.reshape(1, N)
    t2 = t2f.reshape(1, N)

    # ---- Pass C: conv2 + residual (batch-stacked MXU matmul) ------------------
    z, zstat = pl.pallas_call(
        _conv2_kernel,
        grid=grid,
        in_specs=[bspec((O, N)), cspec((N, N)),
                  cspec((1, N)), cspec((1, N)), cspec((1, N))],
        out_specs=[bspec((O, N)), bspec((2, O))],
        out_shape=[jax.ShapeDtypeStruct((B, O, N), bf16),
                   jax.ShapeDtypeStruct((B, 2, O), f32)],
        compiler_params=_cparams(bt * O * N * 16, N * N * 2 + 3 * N * 4, cap),
    )(y, p['w2t'], s2, t2, p['bb2'])

    # conv3 norm folding (IN eps=1e-3 then BN eps=1e-5, same analytic fold).
    zsum, zsq = zstat[:, 0, :], zstat[:, 1, :]
    mu3 = zsum / N
    var3 = jnp.maximum(zsq / N - mu3 * mu3, 0.0)
    r3 = 1.0 / (var3 + 1e-3)
    bvar3 = jnp.mean(var3 * r3, axis=0, keepdims=True)
    s3 = p['g3'][None, :] * jnp.sqrt(r3) * jax.lax.rsqrt(bvar3 + 1e-5)
    t3 = p['be3'][None, :] - mu3 * s3
    s3 = s3.reshape(B, O, 1)
    t3 = t3.reshape(B, O, 1)

    # ---- Pass D: conv3 + identity shortcut, NCHW output -----------------------
    out = pl.pallas_call(
        _conv3_kernel,
        grid=grid,
        in_specs=[bspec((O, N)), bspec((C, N)), bspec((O, 1)), bspec((O, 1)),
                  cspec((O, O)), cspec((O, 1))],
        out_specs=bspec((C, N)),
        out_shape=jax.ShapeDtypeStruct((B, C, N), f32),
        compiler_params=_cparams(bt * (O * N * 2 + 2 * C * N * 4),
                                 O * O * 2 + O * 4, cap),
    )(z, x, s3, t3, p['w3'], p['bb3'])

    return out[..., None]                                # NCHW [B, C, points, 1]


# ---------------------------------------------------------------------------
# Pure-JAX f32 reference mirroring the PyTorch module op-for-op (train mode).
# ---------------------------------------------------------------------------
@jax.jit
def oafilter_reference(x_nchw, params):
    x = x_nchw[..., 0]                                   # [B, C, N]

    def inorm(v, eps):                                   # InstanceNorm2d over spatial
        mu = jnp.mean(v, axis=2, keepdims=True)
        var = jnp.mean((v - mu) ** 2, axis=2, keepdims=True)
        return (v - mu) / jnp.sqrt(var + eps)

    def bnorm(v, g, b, eps=1e-5):                        # BatchNorm2d, batch stats
        mu = jnp.mean(v, axis=(0, 2), keepdims=True)
        var = jnp.mean((v - mu) ** 2, axis=(0, 2), keepdims=True)
        return ((v - mu) / jnp.sqrt(var + eps)) * g.reshape(1, -1, 1) \
            + b.reshape(1, -1, 1)

    h = jax.nn.relu(bnorm(inorm(x, 1e-3), params['g1'], params['be1']))
    y = jnp.einsum('oc,bcn->bon', params['w1'], h,
                   precision='highest') + params['bb1'].reshape(1, -1, 1)
    yt = jnp.transpose(y, (0, 2, 1))                     # trans(1,2): [B, N, O]
    h2 = jax.nn.relu(bnorm(yt, params['g2'], params['be2']))
    c2 = jnp.einsum('pq,bqo->bpo', params['w2'], h2,
                    precision='highest') + params['bb2'].reshape(1, -1, 1)
    zt = yt + c2
    z = jnp.transpose(zt, (0, 2, 1))                     # trans(1,2): [B, O, N]
    h3 = jax.nn.relu(bnorm(inorm(z, 1e-3), params['g3'], params['be3']))
    y3 = jnp.einsum('oc,bcn->bon', params['w3'], h3,
                    precision='highest') + params['bb3'].reshape(1, -1, 1)
    return (y3 + x)[..., None]


def make_params(key, channels, points):
    """Deterministic synthetic parameters (PyTorch-convention shapes,
    out_channels == channels)."""
    C, N, O = channels, points, channels
    ks = jax.random.split(key, 12)
    return {
        # conv1: BN(channels) affine + Conv2d(C->O, 1x1)
        'g1': 1.0 + 0.1 * jax.random.normal(ks[0], (C,), jnp.float32),
        'be1': 0.1 * jax.random.normal(ks[1], (C,), jnp.float32),
        'w1': jax.random.normal(ks[2], (O, C), jnp.float32) / jnp.sqrt(C),
        'bb1': 0.1 * jax.random.normal(ks[3], (O,), jnp.float32),
        # conv2: BN(points) affine + Conv2d(points->points, 1x1)
        'g2': 1.0 + 0.1 * jax.random.normal(ks[4], (N,), jnp.float32),
        'be2': 0.1 * jax.random.normal(ks[5], (N,), jnp.float32),
        'w2': jax.random.normal(ks[6], (N, N), jnp.float32) / jnp.sqrt(N),
        'bb2': 0.1 * jax.random.normal(ks[7], (N,), jnp.float32),
        # conv3: BN(out_channels) affine + Conv2d(O->O, 1x1)
        'g3': 1.0 + 0.1 * jax.random.normal(ks[8], (O,), jnp.float32),
        'be3': 0.1 * jax.random.normal(ks[9], (O,), jnp.float32),
        'w3': jax.random.normal(ks[10], (O, O), jnp.float32) / jnp.sqrt(O),
        'bb3': 0.1 * jax.random.normal(ks[11], (O,), jnp.float32),
    }


if __name__ == "__main__":
    # Small but lane-dense shapes (real NCMNet OAFilter: channels=128, points=250).
    B, channels, points = 2, 128, 256
    key = jax.random.PRNGKey(0)
    kx, kp = jax.random.split(key)
    x = jax.random.normal(kx, (B, channels, points, 1), dtype=jnp.float32)
    params = make_params(kp, channels, points)
    prepped = prepare_params(params)       # one-time bf16 cast + w2 transpose

    try:
        out = jax.block_until_ready(oafilter(x, prepped, single_buffer=True))
    except Exception:
        # Fallback if this JAX build rejects pipeline_mode=pl.Buffered(1).
        out = jax.block_until_ready(oafilter(x, prepped, single_buffer=False))

    assert out.shape == (B, channels, points, 1)
    assert bool(jnp.all(jnp.isfinite(out)))

    # Correctness vs. an f32 pure-JAX reference (kernel uses bf16 MXU inputs and
    # bf16 inter-pass intermediates, so compare with bf16-level tolerances).
    ref = jax.block_until_ready(oafilter_reference(x, params))
    max_err = float(jnp.max(jnp.abs(out - ref)))
    rel_err = float(jnp.sqrt(jnp.mean((out - ref) ** 2) / jnp.mean(ref ** 2)))
    assert max_err < 0.25 and rel_err < 0.05, (max_err, rel_err)
    print("KERNEL_OK")
</pallas_src>

<mosaic_0001>
module attributes {stable_mosaic.version = 11 : i64} {
  func.func @_x_stats_kernel(%arg0: i32, %arg1: memref<2x128x256xf32, #tpu.memory_space<vmem>>, %arg2: memref<2x2x128xf32, #tpu.memory_space<vmem>>) attributes {dimension_semantics = [#tpu.dimension_semantics<parallel>], iteration_bounds = array<i64: 1>, scalar_prefetch = 0 : i64, scratch_operands = 0 : i64, tpu.core_type = #tpu.core_type<tc>, window_params = [{transform_indices = @transform_0, window_bounds = array<i64: 2, 128, 256>}, {transform_indices = @transform_1, window_bounds = array<i64: 2, 2, 128>}]} {
    %c0 = arith.constant 0 : index
    %c0_0 = arith.constant 0 : index
    %c0_1 = arith.constant 0 : index
    %0 = vector.load %arg1[%c0, %c0_0, %c0_1] : memref<2x128x256xf32, #tpu.memory_space<vmem>>, vector<2x128x256xf32>
    %cst = arith.constant dense<0.000000e+00> : vector<2x128xf32>
    %1 = vector.multi_reduction <add>, %0, %cst [2] : vector<2x128x256xf32> to vector<2x128xf32>
    %2 = arith.mulf %0, %0 : vector<2x128x256xf32>
    %cst_2 = arith.constant dense<0.000000e+00> : vector<2x128xf32>
    %3 = vector.multi_reduction <add>, %2, %cst_2 [2] : vector<2x128x256xf32> to vector<2x128xf32>
    %4 = vector.shape_cast %1 : vector<2x128xf32> to vector<2x1x128xf32>
    %5 = vector.shape_cast %3 : vector<2x128xf32> to vector<2x1x128xf32>
    %6 = tpu.concatenate %4, %5 in 1 : vector<2x1x128xf32>, vector<2x1x128xf32> -> vector<2x2x128xf32>
    %c0_3 = arith.constant 0 : index
    %c0_4 = arith.constant 0 : index
    %c0_5 = arith.constant 0 : index
    %7 = vector.load %arg2[%c0_3, %c0_4, %c0_5] : memref<2x2x128xf32, #tpu.memory_space<vmem>>, vector<2x2x128xf32>
    tpu.vector_store %arg2[%c0_3, %c0_4, %c0_5], %6 {strides = array<i32>} : memref<2x2x128xf32, #tpu.memory_space<vmem>>, vector<2x2x128xf32>,
    return
  }
  func.func @transform_0(%arg0: i32) -> (i32, i32, i32) {
    %c0_i32 = arith.constant 0 : i32
    %c0_i32_0 = arith.constant 0 : i32
    %c0_i32_1 = arith.constant 0 : i32
    return %arg0, %c0_i32, %c0_i32_0 : i32, i32, i32
  }
  func.func @transform_1(%arg0: i32) -> (i32, i32, i32) {
    %c0_i32 = arith.constant 0 : i32
    %c0_i32_0 = arith.constant 0 : i32
    %c0_i32_1 = arith.constant 0 : i32
    return %arg0, %c0_i32, %c0_i32_0 : i32, i32, i32
  }
}

module attributes {stable_mosaic.version = 11 : i64} {
  func.func @_conv1_kernel(%arg0: i32, %arg1: memref<2x128x256xf32, #tpu.memory_space<vmem>>, %arg2: memref<2x128x1xf32, #tpu.memory_space<vmem>>, %arg3: memref<2x128x1xf32, #tpu.memory_space<vmem>>, %arg4: memref<128x128xbf16, #tpu.memory_space<vmem>>, %arg5: memref<128x1xf32, #tpu.memory_space<vmem>>, %arg6: memref<2x128x256xbf16, #tpu.memory_space<vmem>>, %arg7: memref<2x2x256xf32, #tpu.memory_space<vmem>>) attributes {dimension_semantics = [#tpu.dimension_semantics<parallel>], iteration_bounds = array<i64: 1>, scalar_prefetch = 0 : i64, scratch_operands = 0 : i64, tpu.core_type = #tpu.core_type<tc>, window_params = [{transform_indices = @transform_0, window_bounds = array<i64: 2, 128, 256>}, {transform_indices = @transform_1, window_bounds = array<i64: 2, 128, 1>}, {transform_indices = @transform_2, window_bounds = array<i64: 2, 128, 1>}, {pipeline_mode = #tpu.pipeline_mode<synchronous>, transform_indices = @transform_3, window_bounds = array<i64: 128, 128>}, {pipeline_mode = #tpu.pipeline_mode<synchronous>, transform_indices = @transform_4, window_bounds = array<i64: 128, 1>}, {transform_indices = @transform_5, window_bounds = array<i64: 2, 128, 256>}, {transform_indices = @transform_6, window_bounds = array<i64: 2, 2, 256>}]} {
    %c0 = arith.constant 0 : index
    %c0_0 = arith.constant 0 : index
    %0 = vector.load %arg4[%c0, %c0_0] : memref<128x128xbf16, #tpu.memory_space<vmem>>, vector<128x128xbf16>
    %c0_1 = arith.constant 0 : index
    %c0_2 = arith.constant 0 : index
    %1 = vector.load %arg5[%c0_1, %c0_2] : memref<128x1xf32, #tpu.memory_space<vmem>>, vector<128x1xf32>
    %c0_3 = arith.constant 0 : index
    %c0_4 = arith.constant 0 : index
    %c0_5 = arith.constant 0 : index
    %2 = vector.load %arg1[%c0_3, %c0_4, %c0_5] : memref<2x128x256xf32, #tpu.memory_space<vmem>>, vector<1x128x256xf32>
    %3 = vector.shape_cast %2 : vector<1x128x256xf32> to vector<128x256xf32>
    %c0_6 = arith.constant 0 : index
    %c0_7 = arith.constant 0 : index
    %c0_8 = arith.constant 0 : index
    %4 = vector.load %arg2[%c0_6, %c0_7, %c0_8] : memref<2x128x1xf32, #tpu.memory_space<vmem>>, vector<1x128x1xf32>
    %5 = vector.shape_cast %4 : vector<1x128x1xf32> to vector<128x1xf32>
    %6 = vector.broadcast %5 : vector<128x1xf32> to vector<128x256xf32>
    %7 = arith.mulf %3, %6 : vector<128x256xf32>
    %c0_9 = arith.constant 0 : index
    %c0_10 = arith.constant 0 : index
    %c0_11 = arith.constant 0 : index
    %8 = vector.load %arg3[%c0_9, %c0_10, %c0_11] : memref<2x128x1xf32, #tpu.memory_space<vmem>>, vector<1x128x1xf32>
    %9 = vector.shape_cast %8 : vector<1x128x1xf32> to vector<128x1xf32>
    %10 = vector.broadcast %9 : vector<128x1xf32> to vector<128x256xf32>
    %11 = arith.addf %7, %10 : vector<128x256xf32>
    %cst = arith.constant 0.000000e+00 : f32
    %12 = vector.broadcast %cst : f32 to vector<128x256xf32>
    %13 = arith.maximumf %11, %12 : vector<128x256xf32>
    %14 = arith.truncf %13 : vector<128x256xf32> to vector<128x256xbf16>
    %cst_12 = arith.constant dense<0.000000e+00> : vector<128x256xf32>
    %15 = tpu.matmul %0, %14, %cst_12 {dimension_numbers = #tpu.dot_dimension_numbers<[1], [0], [0], [1], [0, 0, 1, 1], [], []>} : vector<128x128xbf16>, vector<128x256xbf16>, vector<128x256xf32> -> vector<128x256xf32>
    %16 = vector.broadcast %1 : vector<128x1xf32> to vector<128x256xf32>
    %17 = arith.addf %15, %16 : vector<128x256xf32>
    %18 = arith.truncf %17 : vector<128x256xf32> to vector<128x256xbf16>
    %c0_13 = arith.constant 0 : index
    %c0_14 = arith.constant 0 : index
    %c0_15 = arith.constant 0 : index
    %19 = vector.load %arg6[%c0_13, %c0_14, %c0_15] : memref<2x128x256xbf16, #tpu.memory_space<vmem>>, vector<1x128x256xbf16>
    %20 = vector.shape_cast %19 : vector<1x128x256xbf16> to vector<128x256xbf16>
    %21 = vector.shape_cast %18 : vector<128x256xbf16> to vector<1x128x256xbf16>
    tpu.vector_store %arg6[%c0_13, %c0_14, %c0_15], %21 {strides = array<i32>} : memref<2x128x256xbf16, #tpu.memory_space<vmem>>, vector<1x128x256xbf16>,
    %22 = arith.extf %18 : vector<128x256xbf16> to vector<128x256xf32>
    %cst_16 = arith.constant dense<0.000000e+00> : vector<256xf32>
    %23 = vector.multi_reduction <add>, %22, %cst_16 [0] : vector<128x256xf32> to vector<256xf32>
    %24 = arith.mulf %22, %22 : vector<128x256xf32>
    %cst_17 = arith.constant dense<0.000000e+00> : vector<256xf32>
    %25 = vector.multi_reduction <add>, %24, %cst_17 [0] : vector<128x256xf32> to vector<256xf32>
    %26 = vector.shape_cast %23 : vector<256xf32> to vector<1x256xf32>
    %27 = vector.shape_cast %25 : vector<256xf32> to vector<1x256xf32>
    %28 = tpu.concatenate %26, %27 in 0 : vector<1x256xf32>, vector<1x256xf32> -> vector<2x256xf32>
    %c0_18 = arith.constant 0 : index
    %c0_19 = arith.constant 0 : index
    %c0_20 = arith.constant 0 : index
    %29 = vector.load %arg7[%c0_18, %c0_19, %c0_20] : memref<2x2x256xf32, #tpu.memory_space<vmem>>, vector<1x2x256xf32>
    %30 = vector.shape_cast %29 : vector<1x2x256xf32> to vector<2x256xf32>
    %31 = vector.shape_cast %28 : vector<2x256xf32> to vector<1x2x256xf32>
    tpu.vector_store %arg7[%c0_18, %c0_19, %c0_20], %31 {strides = array<i32>} : memref<2x2x256xf32, #tpu.memory_space<vmem>>, vector<1x2x256xf32>,
    %c1 = arith.constant 1 : index
    %c0_21 = arith.constant 0 : index
    %c0_22 = arith.constant 0 : index
    %32 = vector.load %arg1[%c1, %c0_21, %c0_22] : memref<2x128x256xf32, #tpu.memory_space<vmem>>, vector<1x128x256xf32>
    %33 = vector.shape_cast %32 : vector<1x128x256xf32> to vector<128x256xf32>
    %c1_23 = arith.constant 1 : index
    %c0_24 = arith.constant 0 : index
    %c0_25 = arith.constant 0 : index
    %34 = vector.load %arg2[%c1_23, %c0_24, %c0_25] : memref<2x128x1xf32, #tpu.memory_space<vmem>>, vector<1x128x1xf32>
    %35 = vector.shape_cast %34 : vector<1x128x1xf32> to vector<128x1xf32>
    %36 = vector.broadcast %35 : vector<128x1xf32> to vector<128x256xf32>
    %37 = arith.mulf %33, %36 : vector<128x256xf32>
    %c1_26 = arith.constant 1 : index
    %c0_27 = arith.constant 0 : index
    %c0_28 = arith.constant 0 : index
    %38 = vector.load %arg3[%c1_26, %c0_27, %c0_28] : memref<2x128x1xf32, #tpu.memory_space<vmem>>, vector<1x128x1xf32>
    %39 = vector.shape_cast %38 : vector<1x128x1xf32> to vector<128x1xf32>
    %40 = vector.broadcast %39 : vector<128x1xf32> to vector<128x256xf32>
    %41 = arith.addf %37, %40 : vector<128x256xf32>
    %cst_29 = arith.constant 0.000000e+00 : f32
    %42 = vector.broadcast %cst_29 : f32 to vector<128x256xf32>
    %43 = arith.maximumf %41, %42 : vector<128x256xf32>
    %44 = arith.truncf %43 : vector<128x256xf32> to vector<128x256xbf16>
    %cst_30 = arith.constant dense<0.000000e+00> : vector<128x256xf32>
    %45 = tpu.matmul %0, %44, %cst_30 {dimension_numbers = #tpu.dot_dimension_numbers<[1], [0], [0], [1], [0, 0, 1, 1], [], []>} : vector<128x128xbf16>, vector<128x256xbf16>, vector<128x256xf32> -> vector<128x256xf32>
    %46 = vector.broadcast %1 : vector<128x1xf32> to vector<128x256xf32>
    %47 = arith.addf %45, %46 : vector<128x256xf32>
    %48 = arith.truncf %47 : vector<128x256xf32> to vector<128x256xbf16>
    %c1_31 = arith.constant 1 : index
    %c0_32 = arith.constant 0 : index
    %c0_33 = arith.constant 0 : index
    %49 = vector.load %arg6[%c1_31, %c0_32, %c0_33] : memref<2x128x256xbf16, #tpu.memory_space<vmem>>, vector<1x128x256xbf16>
    %50 = vector.shape_cast %49 : vector<1x128x256xbf16> to vector<128x256xbf16>
    %51 = vector.shape_cast %48 : vector<128x256xbf16> to vector<1x128x256xbf16>
    tpu.vector_store %arg6[%c1_31, %c0_32, %c0_33], %51 {strides = array<i32>} : memref<2x128x256xbf16, #tpu.memory_space<vmem>>, vector<1x128x256xbf16>,
    %52 = arith.extf %48 : vector<128x256xbf16> to vector<128x256xf32>
    %cst_34 = arith.constant dense<0.000000e+00> : vector<256xf32>
    %53 = vector.multi_reduction <add>, %52, %cst_34 [0] : vector<128x256xf32> to vector<256xf32>
    %54 = arith.mulf %52, %52 : vector<128x256xf32>
    %cst_35 = arith.constant dense<0.000000e+00> : vector<256xf32>
    %55 = vector.multi_reduction <add>, %54, %cst_35 [0] : vector<128x256xf32> to vector<256xf32>
    %56 = vector.shape_cast %53 : vector<256xf32> to vector<1x256xf32>
    %57 = vector.shape_cast %55 : vector<256xf32> to vector<1x256xf32>
    %58 = tpu.concatenate %56, %57 in 0 : vector<1x256xf32>, vector<1x256xf32> -> vector<2x256xf32>
    %c1_36 = arith.constant 1 : index
    %c0_37 = arith.constant 0 : index
    %c0_38 = arith.constant 0 : index
    %59 = vector.load %arg7[%c1_36, %c0_37, %c0_38] : memref<2x2x256xf32, #tpu.memory_space<vmem>>, vector<1x2x256xf32>
    %60 = vector.shape_cast %59 : vector<1x2x256xf32> to vector<2x256xf32>
    %61 = vector.shape_cast %58 : vector<2x256xf32> to vector<1x2x256xf32>
    tpu.vector_store %arg7[%c1_36, %c0_37, %c0_38], %61 {strides = array<i32>} : memref<2x2x256xf32, #tpu.memory_space<vmem>>, vector<1x2x256xf32>,
    return
  }
  func.func @transform_0(%arg0: i32) -> (i32, i32, i32) {
    %c0_i32 = arith.constant 0 : i32
    %c0_i32_0 = arith.constant 0 : i32
    %c0_i32_1 = arith.constant 0 : i32
    return %arg0, %c0_i32, %c0_i32_0 : i32, i32, i32
  }
  func.func @transform_1(%arg0: i32) -> (i32, i32, i32) {
    %c0_i32 = arith.constant 0 : i32
    %c0_i32_0 = arith.constant 0 : i32
    %c0_i32_1 = arith.constant 0 : i32
    return %arg0, %c0_i32, %c0_i32_0 : i32, i32, i32
  }
  func.func @transform_2(%arg0: i32) -> (i32, i32, i32) {
    %c0_i32 = arith.constant 0 : i32
    %c0_i32_0 = arith.constant 0 : i32
    %c0_i32_1 = arith.constant 0 : i32
    return %arg0, %c0_i32, %c0_i32_0 : i32, i32, i32
  }
  func.func @transform_3(%arg0: i32) -> (i32, i32) {
    %c0_i32 = arith.constant 0 : i32
    %c0_i32_0 = arith.constant 0 : i32
    %c0_i32_1 = arith.constant 0 : i32
    return %c0_i32, %c0_i32_0 : i32, i32
  }
  func.func @transform_4(%arg0: i32) -> (i32, i32) {
    %c0_i32 = arith.constant 0 : i32
    %c0_i32_0 = arith.constant 0 : i32
    %c0_i32_1 = arith.constant 0 : i32
    return %c0_i32, %c0_i32_0 : i32, i32
  }
  func.func @transform_5(%arg0: i32) -> (i32, i32, i32) {
    %c0_i32 = arith.constant 0 : i32
    %c0_i32_0 = arith.constant 0 : i32
    %c0_i32_1 = arith.constant 0 : i32
    return %arg0, %c0_i32, %c0_i32_0 : i32, i32, i32
  }
  func.func @transform_6(%arg0: i32) -> (i32, i32, i32) {
    %c0_i32 = arith.constant 0 : i32
    %c0_i32_0 = arith.constant 0 : i32
    %c0_i32_1 = arith.constant 0 : i32
    return %arg0, %c0_i32, %c0_i32_0 : i32, i32, i32
  }
}

module attributes {stable_mosaic.version = 11 : i64} {
  func.func @_conv2_kernel(%arg0: i32, %arg1: memref<2x128x256xbf16, #tpu.memory_space<vmem>>, %arg2: memref<256x256xbf16, #tpu.memory_space<vmem>>, %arg3: memref<1x256xf32, #tpu.memory_space<vmem>>, %arg4: memref<1x256xf32, #tpu.memory_space<vmem>>, %arg5: memref<1x256xf32, #tpu.memory_space<vmem>>, %arg6: memref<2x128x256xbf16, #tpu.memory_space<vmem>>, %arg7: memref<2x2x128xf32, #tpu.memory_space<vmem>>) attributes {dimension_semantics = [#tpu.dimension_semantics<parallel>], iteration_bounds = array<i64: 1>, scalar_prefetch = 0 : i64, scratch_operands = 0 : i64, tpu.core_type = #tpu.core_type<tc>, window_params = [{transform_indices = @transform_0, window_bounds = array<i64: 2, 128, 256>}, {pipeline_mode = #tpu.pipeline_mode<synchronous>, transform_indices = @transform_1, window_bounds = array<i64: 256, 256>}, {pipeline_mode = #tpu.pipeline_mode<synchronous>, transform_indices = @transform_2, window_bounds = array<i64: 1, 256>}, {pipeline_mode = #tpu.pipeline_mode<synchronous>, transform_indices = @transform_3, window_bounds = array<i64: 1, 256>}, {pipeline_mode = #tpu.pipeline_mode<synchronous>, transform_indices = @transform_4, window_bounds = array<i64: 1, 256>}, {transform_indices = @transform_5, window_bounds = array<i64: 2, 128, 256>}, {transform_indices = @transform_6, window_bounds = array<i64: 2, 2, 128>}]} {
    %c0 = arith.constant 0 : index
    %c0_0 = arith.constant 0 : index
    %c0_1 = arith.constant 0 : index
    %0 = vector.load %arg1[%c0, %c0_0, %c0_1] : memref<2x128x256xbf16, #tpu.memory_space<vmem>>, vector<2x128x256xbf16>
    %1 = arith.extf %0 : vector<2x128x256xbf16> to vector<2x128x256xf32>
    %2 = vector.shape_cast %1 : vector<2x128x256xf32> to vector<256x256xf32>
    %c0_2 = arith.constant 0 : index
    %c0_3 = arith.constant 0 : index
    %3 = vector.load %arg3[%c0_2, %c0_3] : memref<1x256xf32, #tpu.memory_space<vmem>>, vector<1x256xf32>
    %4 = vector.broadcast %3 : vector<1x256xf32> to vector<256x256xf32>
    %5 = arith.mulf %2, %4 : vector<256x256xf32>
    %c0_4 = arith.constant 0 : index
    %c0_5 = arith.constant 0 : index
    %6 = vector.load %arg4[%c0_4, %c0_5] : memref<1x256xf32, #tpu.memory_space<vmem>>, vector<1x256xf32>
    %7 = vector.broadcast %6 : vector<1x256xf32> to vector<256x256xf32>
    %8 = arith.addf %5, %7 : vector<256x256xf32>
    %cst = arith.constant 0.000000e+00 : f32
    %9 = vector.broadcast %cst : f32 to vector<256x256xf32>
    %10 = arith.maximumf %8, %9 : vector<256x256xf32>
    %11 = arith.truncf %10 : vector<256x256xf32> to vector<256x256xbf16>
    %c0_6 = arith.constant 0 : index
    %c0_7 = arith.constant 0 : index
    %12 = vector.load %arg2[%c0_6, %c0_7] : memref<256x256xbf16, #tpu.memory_space<vmem>>, vector<256x256xbf16>
    %cst_8 = arith.constant dense<0.000000e+00> : vector<256x256xf32>
    %13 = tpu.matmul %11, %12, %cst_8 {dimension_numbers = #tpu.dot_dimension_numbers<[1], [0], [0], [1], [0, 0, 1, 1], [], []>} : vector<256x256xbf16>, vector<256x256xbf16>, vector<256x256xf32> -> vector<256x256xf32>
    %14 = arith.addf %2, %13 : vector<256x256xf32>
    %c0_9 = arith.constant 0 : index
    %c0_10 = arith.constant 0 : index
    %15 = vector.load %arg5[%c0_9, %c0_10] : memref<1x256xf32, #tpu.memory_space<vmem>>, vector<1x256xf32>
    %16 = vector.broadcast %15 : vector<1x256xf32> to vector<256x256xf32>
    %17 = arith.addf %14, %16 : vector<256x256xf32>
    %18 = arith.truncf %17 : vector<256x256xf32> to vector<256x256xbf16>
    %19 = vector.shape_cast %18 : vector<256x256xbf16> to vector<2x128x256xbf16>
    %c0_11 = arith.constant 0 : index
    %c0_12 = arith.constant 0 : index
    %c0_13 = arith.constant 0 : index
    %20 = vector.load %arg6[%c0_11, %c0_12, %c0_13] : memref<2x128x256xbf16, #tpu.memory_space<vmem>>, vector<2x128x256xbf16>
    tpu.vector_store %arg6[%c0_11, %c0_12, %c0_13], %19 {strides = array<i32>} : memref<2x128x256xbf16, #tpu.memory_space<vmem>>, vector<2x128x256xbf16>,
    %21 = arith.extf %18 : vector<256x256xbf16> to vector<256x256xf32>
    %22 = vector.shape_cast %21 : vector<256x256xf32> to vector<2x128x256xf32>
    %cst_14 = arith.constant dense<0.000000e+00> : vector<2x128xf32>
    %23 = vector.multi_reduction <add>, %22, %cst_14 [2] : vector<2x128x256xf32> to vector<2x128xf32>
    %24 = arith.mulf %22, %22 : vector<2x128x256xf32>
    %cst_15 = arith.constant dense<0.000000e+00> : vector<2x128xf32>
    %25 = vector.multi_reduction <add>, %24, %cst_15 [2] : vector<2x128x256xf32> to vector<2x128xf32>
    %26 = vector.shape_cast %23 : vector<2x128xf32> to vector<2x1x128xf32>
    %27 = vector.shape_cast %25 : vector<2x128xf32> to vector<2x1x128xf32>
    %28 = tpu.concatenate %26, %27 in 1 : vector<2x1x128xf32>, vector<2x1x128xf32> -> vector<2x2x128xf32>
    %c0_16 = arith.constant 0 : index
    %c0_17 = arith.constant 0 : index
    %c0_18 = arith.constant 0 : index
    %29 = vector.load %arg7[%c0_16, %c0_17, %c0_18] : memref<2x2x128xf32, #tpu.memory_space<vmem>>, vector<2x2x128xf32>
    tpu.vector_store %arg7[%c0_16, %c0_17, %c0_18], %28 {strides = array<i32>} : memref<2x2x128xf32, #tpu.memory_space<vmem>>, vector<2x2x128xf32>,
    return
  }
  func.func @transform_0(%arg0: i32) -> (i32, i32, i32) {
    %c0_i32 = arith.constant 0 : i32
    %c0_i32_0 = arith.constant 0 : i32
    %c0_i32_1 = arith.constant 0 : i32
    return %arg0, %c0_i32, %c0_i32_0 : i32, i32, i32
  }
  func.func @transform_1(%arg0: i32) -> (i32, i32) {
    %c0_i32 = arith.constant 0 : i32
    %c0_i32_0 = arith.constant 0 : i32
    %c0_i32_1 = arith.constant 0 : i32
    return %c0_i32, %c0_i32_0 : i32, i32
  }
  func.func @transform_2(%arg0: i32) -> (i32, i32) {
    %c0_i32 = arith.constant 0 : i32
    %c0_i32_0 = arith.constant 0 : i32
    %c0_i32_1 = arith.constant 0 : i32
    return %c0_i32, %c0_i32_0 : i32, i32
  }
  func.func @transform_3(%arg0: i32) -> (i32, i32) {
    %c0_i32 = arith.constant 0 : i32
    %c0_i32_0 = arith.constant 0 : i32
    %c0_i32_1 = arith.constant 0 : i32
    return %c0_i32, %c0_i32_0 : i32, i32
  }
  func.func @transform_4(%arg0: i32) -> (i32, i32) {
    %c0_i32 = arith.constant 0 : i32
    %c0_i32_0 = arith.constant 0 : i32
    %c0_i32_1 = arith.constant 0 : i32
    return %c0_i32, %c0_i32_0 : i32, i32
  }
  func.func @transform_5(%arg0: i32) -> (i32, i32, i32) {
    %c0_i32 = arith.constant 0 : i32
    %c0_i32_0 = arith.constant 0 : i32
    %c0_i32_1 = arith.constant 0 : i32
    return %arg0, %c0_i32, %c0_i32_0 : i32, i32, i32
  }
  func.func @transform_6(%arg0: i32) -> (i32, i32, i32) {
    %c0_i32 = arith.constant 0 : i32
    %c0_i32_0 = arith.constant 0 : i32
    %c0_i32_1 = arith.constant 0 : i32
    return %arg0, %c0_i32, %c0_i32_0 : i32, i32, i32
  }
}

module attributes {stable_mosaic.version = 11 : i64} {
  func.func @_conv3_kernel(%arg0: i32, %arg1: memref<2x128x256xbf16, #tpu.memory_space<vmem>>, %arg2: memref<2x128x256xf32, #tpu.memory_space<vmem>>, %arg3: memref<2x128x1xf32, #tpu.memory_space<vmem>>, %arg4: memref<2x128x1xf32, #tpu.memory_space<vmem>>, %arg5: memref<128x128xbf16, #tpu.memory_space<vmem>>, %arg6: memref<128x1xf32, #tpu.memory_space<vmem>>, %arg7: memref<2x128x256xf32, #tpu.memory_space<vmem>>) attributes {dimension_semantics = [#tpu.dimension_semantics<parallel>], iteration_bounds = array<i64: 1>, scalar_prefetch = 0 : i64, scratch_operands = 0 : i64, tpu.core_type = #tpu.core_type<tc>, window_params = [{transform_indices = @transform_0, window_bounds = array<i64: 2, 128, 256>}, {transform_indices = @transform_1, window_bounds = array<i64: 2, 128, 256>}, {transform_indices = @transform_2, window_bounds = array<i64: 2, 128, 1>}, {transform_indices = @transform_3, window_bounds = array<i64: 2, 128, 1>}, {pipeline_mode = #tpu.pipeline_mode<synchronous>, transform_indices = @transform_4, window_bounds = array<i64: 128, 128>}, {pipeline_mode = #tpu.pipeline_mode<synchronous>, transform_indices = @transform_5, window_bounds = array<i64: 128, 1>}, {transform_indices = @transform_6, window_bounds = array<i64: 2, 128, 256>}]} {
    %c0 = arith.constant 0 : index
    %c0_0 = arith.constant 0 : index
    %0 = vector.load %arg5[%c0, %c0_0] : memref<128x128xbf16, #tpu.memory_space<vmem>>, vector<128x128xbf16>
    %c0_1 = arith.constant 0 : index
    %c0_2 = arith.constant 0 : index
    %1 = vector.load %arg6[%c0_1, %c0_2] : memref<128x1xf32, #tpu.memory_space<vmem>>, vector<128x1xf32>
    %c0_3 = arith.constant 0 : index
    %c0_4 = arith.constant 0 : index
    %c0_5 = arith.constant 0 : index
    %2 = vector.load %arg1[%c0_3, %c0_4, %c0_5] : memref<2x128x256xbf16, #tpu.memory_space<vmem>>, vector<1x128x256xbf16>
    %3 = vector.shape_cast %2 : vector<1x128x256xbf16> to vector<128x256xbf16>
    %4 = arith.extf %3 : vector<128x256xbf16> to vector<128x256xf32>
    %c0_6 = arith.constant 0 : index
    %c0_7 = arith.constant 0 : index
    %c0_8 = arith.constant 0 : index
    %5 = vector.load %arg3[%c0_6, %c0_7, %c0_8] : memref<2x128x1xf32, #tpu.memory_space<vmem>>, vector<1x128x1xf32>
    %6 = vector.shape_cast %5 : vector<1x128x1xf32> to vector<128x1xf32>
    %7 = vector.broadcast %6 : vector<128x1xf32> to vector<128x256xf32>
    %8 = arith.mulf %4, %7 : vector<128x256xf32>
    %c0_9 = arith.constant 0 : index
    %c0_10 = arith.constant 0 : index
    %c0_11 = arith.constant 0 : index
    %9 = vector.load %arg4[%c0_9, %c0_10, %c0_11] : memref<2x128x1xf32, #tpu.memory_space<vmem>>, vector<1x128x1xf32>
    %10 = vector.shape_cast %9 : vector<1x128x1xf32> to vector<128x1xf32>
    %11 = vector.broadcast %10 : vector<128x1xf32> to vector<128x256xf32>
    %12 = arith.addf %8, %11 : vector<128x256xf32>
    %cst = arith.constant 0.000000e+00 : f32
    %13 = vector.broadcast %cst : f32 to vector<128x256xf32>
    %14 = arith.maximumf %12, %13 : vector<128x256xf32>
    %15 = arith.truncf %14 : vector<128x256xf32> to vector<128x256xbf16>
    %cst_12 = arith.constant dense<0.000000e+00> : vector<128x256xf32>
    %16 = tpu.matmul %0, %15, %cst_12 {dimension_numbers = #tpu.dot_dimension_numbers<[1], [0], [0], [1], [0, 0, 1, 1], [], []>} : vector<128x128xbf16>, vector<128x256xbf16>, vector<128x256xf32> -> vector<128x256xf32>
    %17 = vector.broadcast %1 : vector<128x1xf32> to vector<128x256xf32>
    %18 = arith.addf %16, %17 : vector<128x256xf32>
    %c0_13 = arith.constant 0 : index
    %c0_14 = arith.constant 0 : index
    %c0_15 = arith.constant 0 : index
    %19 = vector.load %arg2[%c0_13, %c0_14, %c0_15] : memref<2x128x256xf32, #tpu.memory_space<vmem>>, vector<1x128x256xf32>
    %20 = vector.shape_cast %19 : vector<1x128x256xf32> to vector<128x256xf32>
    %21 = arith.addf %18, %20 : vector<128x256xf32>
    %c0_16 = arith.constant 0 : index
    %c0_17 = arith.constant 0 : index
    %c0_18 = arith.constant 0 : index
    %22 = vector.load %arg7[%c0_16, %c0_17, %c0_18] : memref<2x128x256xf32, #tpu.memory_space<vmem>>, vector<1x128x256xf32>
    %23 = vector.shape_cast %22 : vector<1x128x256xf32> to vector<128x256xf32>
    %24 = vector.shape_cast %21 : vector<128x256xf32> to vector<1x128x256xf32>
    tpu.vector_store %arg7[%c0_16, %c0_17, %c0_18], %24 {strides = array<i32>} : memref<2x128x256xf32, #tpu.memory_space<vmem>>, vector<1x128x256xf32>,
    %c1 = arith.constant 1 : index
    %c0_19 = arith.constant 0 : index
    %c0_20 = arith.constant 0 : index
    %25 = vector.load %arg1[%c1, %c0_19, %c0_20] : memref<2x128x256xbf16, #tpu.memory_space<vmem>>, vector<1x128x256xbf16>
    %26 = vector.shape_cast %25 : vector<1x128x256xbf16> to vector<128x256xbf16>
    %27 = arith.extf %26 : vector<128x256xbf16> to vector<128x256xf32>
    %c1_21 = arith.constant 1 : index
    %c0_22 = arith.constant 0 : index
    %c0_23 = arith.constant 0 : index
    %28 = vector.load %arg3[%c1_21, %c0_22, %c0_23] : memref<2x128x1xf32, #tpu.memory_space<vmem>>, vector<1x128x1xf32>
    %29 = vector.shape_cast %28 : vector<1x128x1xf32> to vector<128x1xf32>
    %30 = vector.broadcast %29 : vector<128x1xf32> to vector<128x256xf32>
    %31 = arith.mulf %27, %30 : vector<128x256xf32>
    %c1_24 = arith.constant 1 : index
    %c0_25 = arith.constant 0 : index
    %c0_26 = arith.constant 0 : index
    %32 = vector.load %arg4[%c1_24, %c0_25, %c0_26] : memref<2x128x1xf32, #tpu.memory_space<vmem>>, vector<1x128x1xf32>
    %33 = vector.shape_cast %32 : vector<1x128x1xf32> to vector<128x1xf32>
    %34 = vector.broadcast %33 : vector<128x1xf32> to vector<128x256xf32>
    %35 = arith.addf %31, %34 : vector<128x256xf32>
    %cst_27 = arith.constant 0.000000e+00 : f32
    %36 = vector.broadcast %cst_27 : f32 to vector<128x256xf32>
    %37 = arith.maximumf %35, %36 : vector<128x256xf32>
    %38 = arith.truncf %37 : vector<128x256xf32> to vector<128x256xbf16>
    %cst_28 = arith.constant dense<0.000000e+00> : vector<128x256xf32>
    %39 = tpu.matmul %0, %38, %cst_28 {dimension_numbers = #tpu.dot_dimension_numbers<[1], [0], [0], [1], [0, 0, 1, 1], [], []>} : vector<128x128xbf16>, vector<128x256xbf16>, vector<128x256xf32> -> vector<128x256xf32>
    %40 = vector.broadcast %1 : vector<128x1xf32> to vector<128x256xf32>
    %41 = arith.addf %39, %40 : vector<128x256xf32>
    %c1_29 = arith.constant 1 : index
    %c0_30 = arith.constant 0 : index
    %c0_31 = arith.constant 0 : index
    %42 = vector.load %arg2[%c1_29, %c0_30, %c0_31] : memref<2x128x256xf32, #tpu.memory_space<vmem>>, vector<1x128x256xf32>
    %43 = vector.shape_cast %42 : vector<1x128x256xf32> to vector<128x256xf32>
    %44 = arith.addf %41, %43 : vector<128x256xf32>
    %c1_32 = arith.constant 1 : index
    %c0_33 = arith.constant 0 : index
    %c0_34 = arith.constant 0 : index
    %45 = vector.load %arg7[%c1_32, %c0_33, %c0_34] : memref<2x128x256xf32, #tpu.memory_space<vmem>>, vector<1x128x256xf32>
    %46 = vector.shape_cast %45 : vector<1x128x256xf32> to vector<128x256xf32>
    %47 = vector.shape_cast %44 : vector<128x256xf32> to vector<1x128x256xf32>
    tpu.vector_store %arg7[%c1_32, %c0_33, %c0_34], %47 {strides = array<i32>} : memref<2x128x256xf32, #tpu.memory_space<vmem>>, vector<1x128x256xf32>,
    return
  }
  func.func @transform_0(%arg0: i32) -> (i32, i32, i32) {
    %c0_i32 = arith.constant 0 : i32
    %c0_i32_0 = arith.constant 0 : i32
    %c0_i32_1 = arith.constant 0 : i32
    return %arg0, %c0_i32, %c0_i32_0 : i32, i32, i32
  }
  func.func @transform_1(%arg0: i32) -> (i32, i32, i32) {
    %c0_i32 = arith.constant 0 : i32
    %c0_i32_0 = arith.constant 0 : i32
    %c0_i32_1 = arith.constant 0 : i32
    return %arg0, %c0_i32, %c0_i32_0 : i32, i32, i32
  }
  func.func @transform_2(%arg0: i32) -> (i32, i32, i32) {
    %c0_i32 = arith.constant 0 : i32
    %c0_i32_0 = arith.constant 0 : i32
    %c0_i32_1 = arith.constant 0 : i32
    return %arg0, %c0_i32, %c0_i32_0 : i32, i32, i32
  }
  func.func @transform_3(%arg0: i32) -> (i32, i32, i32) {
    %c0_i32 = arith.constant 0 : i32
    %c0_i32_0 = arith.constant 0 : i32
    %c0_i32_1 = arith.constant 0 : i32
    return %arg0, %c0_i32, %c0_i32_0 : i32, i32, i32
  }
  func.func @transform_4(%arg0: i32) -> (i32, i32) {
    %c0_i32 = arith.constant 0 : i32
    %c0_i32_0 = arith.constant 0 : i32
    %c0_i32_1 = arith.constant 0 : i32
    return %c0_i32, %c0_i32_0 : i32, i32
  }
  func.func @transform_5(%arg0: i32) -> (i32, i32) {
    %c0_i32 = arith.constant 0 : i32
    %c0_i32_0 = arith.constant 0 : i32
    %c0_i32_1 = arith.constant 0 : i32
    return %c0_i32, %c0_i32_0 : i32, i32
  }
  func.func @transform_6(%arg0: i32) -> (i32, i32, i32) {
    %c0_i32 = arith.constant 0 : i32
    %c0_i32_0 = arith.constant 0 : i32
    %c0_i32_1 = arith.constant 0 : i32
    return %arg0, %c0_i32, %c0_i32_0 : i32, i32, i32
  }
}

module attributes {stable_mosaic.version = 11 : i64} {
  func.func @_x_stats_kernel(%arg0: i32, %arg1: memref<2x128x256xf32, #tpu.memory_space<vmem>>, %arg2: memref<2x2x128xf32, #tpu.memory_space<vmem>>) attributes {dimension_semantics = [#tpu.dimension_semantics<parallel>], iteration_bounds = array<i64: 1>, scalar_prefetch = 0 : i64, scratch_operands = 0 : i64, tpu.core_type = #tpu.core_type<tc>, window_params = [{transform_indices = @transform_0, window_bounds = array<i64: 2, 128, 256>}, {transform_indices = @transform_1, window_bounds = array<i64: 2, 2, 128>}]} {
    %c0 = arith.constant 0 : index
    %c0_0 = arith.constant 0 : index
    %c0_1 = arith.constant 0 : index
    %0 = vector.load %arg1[%c0, %c0_0, %c0_1] : memref<2x128x256xf32, #tpu.memory_space<vmem>>, vector<2x128x256xf32>
    %cst = arith.constant dense<0.000000e+00> : vector<2x128xf32>
    %1 = vector.multi_reduction <add>, %0, %cst [2] : vector<2x128x256xf32> to vector<2x128xf32>
    %2 = arith.mulf %0, %0 : vector<2x128x256xf32>
    %cst_2 = arith.constant dense<0.000000e+00> : vector<2x128xf32>
    %3 = vector.multi_reduction <add>, %2, %cst_2 [2] : vector<2x128x256xf32> to vector<2x128xf32>
    %4 = vector.shape_cast %1 : vector<2x128xf32> to vector<2x1x128xf32>
    %5 = vector.shape_cast %3 : vector<2x128xf32> to vector<2x1x128xf32>
    %6 = tpu.concatenate %4, %5 in 1 : vector<2x1x128xf32>, vector<2x1x128xf32> -> vector<2x2x128xf32>
    %c0_3 = arith.constant 0 : index
    %c0_4 = arith.constant 0 : index
    %c0_5 = arith.constant 0 : index
    %7 = vector.load %arg2[%c0_3, %c0_4, %c0_5] : memref<2x2x128xf32, #tpu.memory_space<vmem>>, vector<2x2x128xf32>
    tpu.vector_store %arg2[%c0_3, %c0_4, %c0_5], %6 {strides = array<i32>} : memref<2x2x128xf32, #tpu.memory_space<vmem>>, vector<2x2x128xf32>,
    return
  }
  func.func @transform_0(%arg0: i32) -> (i32, i32, i32) {
    %c0_i32 = arith.constant 0 : i32
    %c0_i32_0 = arith.constant 0 : i32
    %c0_i32_1 = arith.constant 0 : i32
    return %arg0, %c0_i32, %c0_i32_0 : i32, i32, i32
  }
  func.func @transform_1(%arg0: i32) -> (i32, i32, i32) {
    %c0_i32 = arith.constant 0 : i32
    %c0_i32_0 = arith.constant 0 : i32
    %c0_i32_1 = arith.constant 0 : i32
    return %arg0, %c0_i32, %c0_i32_0 : i32, i32, i32
  }
}

module attributes {stable_mosaic.version = 11 : i64} {
  func.func @_conv1_kernel(%arg0: i32, %arg1: memref<2x128x256xf32, #tpu.memory_space<vmem>>, %arg2: memref<2x128x1xf32, #tpu.memory_space<vmem>>, %arg3: memref<2x128x1xf32, #tpu.memory_space<vmem>>, %arg4: memref<128x128xbf16, #tpu.memory_space<vmem>>, %arg5: memref<128x1xf32, #tpu.memory_space<vmem>>, %arg6: memref<2x128x256xbf16, #tpu.memory_space<vmem>>, %arg7: memref<2x2x256xf32, #tpu.memory_space<vmem>>) attributes {dimension_semantics = [#tpu.dimension_semantics<parallel>], iteration_bounds = array<i64: 1>, scalar_prefetch = 0 : i64, scratch_operands = 0 : i64, tpu.core_type = #tpu.core_type<tc>, window_params = [{transform_indices = @transform_0, window_bounds = array<i64: 2, 128, 256>}, {transform_indices = @transform_1, window_bounds = array<i64: 2, 128, 1>}, {transform_indices = @transform_2, window_bounds = array<i64: 2, 128, 1>}, {pipeline_mode = #tpu.pipeline_mode<synchronous>, transform_indices = @transform_3, window_bounds = array<i64: 128, 128>}, {pipeline_mode = #tpu.pipeline_mode<synchronous>, transform_indices = @transform_4, window_bounds = array<i64: 128, 1>}, {transform_indices = @transform_5, window_bounds = array<i64: 2, 128, 256>}, {transform_indices = @transform_6, window_bounds = array<i64: 2, 2, 256>}]} {
    %c0 = arith.constant 0 : index
    %c0_0 = arith.constant 0 : index
    %0 = vector.load %arg4[%c0, %c0_0] : memref<128x128xbf16, #tpu.memory_space<vmem>>, vector<128x128xbf16>
    %c0_1 = arith.constant 0 : index
    %c0_2 = arith.constant 0 : index
    %1 = vector.load %arg5[%c0_1, %c0_2] : memref<128x1xf32, #tpu.memory_space<vmem>>, vector<128x1xf32>
    %c0_3 = arith.constant 0 : index
    %c0_4 = arith.constant 0 : index
    %c0_5 = arith.constant 0 : index
    %2 = vector.load %arg1[%c0_3, %c0_4, %c0_5] : memref<2x128x256xf32, #tpu.memory_space<vmem>>, vector<1x128x256xf32>
    %3 = vector.shape_cast %2 : vector<1x128x256xf32> to vector<128x256xf32>
    %c0_6 = arith.constant 0 : index
    %c0_7 = arith.constant 0 : index
    %c0_8 = arith.constant 0 : index
    %4 = vector.load %arg2[%c0_6, %c0_7, %c0_8] : memref<2x128x1xf32, #tpu.memory_space<vmem>>, vector<1x128x1xf32>
    %5 = vector.shape_cast %4 : vector<1x128x1xf32> to vector<128x1xf32>
    %6 = vector.broadcast %5 : vector<128x1xf32> to vector<128x256xf32>
    %7 = arith.mulf %3, %6 : vector<128x256xf32>
    %c0_9 = arith.constant 0 : index
    %c0_10 = arith.constant 0 : index
    %c0_11 = arith.constant 0 : index
    %8 = vector.load %arg3[%c0_9, %c0_10, %c0_11] : memref<2x128x1xf32, #tpu.memory_space<vmem>>, vector<1x128x1xf32>
    %9 = vector.shape_cast %8 : vector<1x128x1xf32> to vector<128x1xf32>
    %10 = vector.broadcast %9 : vector<128x1xf32> to vector<128x256xf32>
    %11 = arith.addf %7, %10 : vector<128x256xf32>
    %cst = arith.constant 0.000000e+00 : f32
    %12 = vector.broadcast %cst : f32 to vector<128x256xf32>
    %13 = arith.maximumf %11, %12 : vector<128x256xf32>
    %14 = arith.truncf %13 : vector<128x256xf32> to vector<128x256xbf16>
    %cst_12 = arith.constant dense<0.000000e+00> : vector<128x256xf32>
    %15 = tpu.matmul %0, %14, %cst_12 {dimension_numbers = #tpu.dot_dimension_numbers<[1], [0], [0], [1], [0, 0, 1, 1], [], []>} : vector<128x128xbf16>, vector<128x256xbf16>, vector<128x256xf32> -> vector<128x256xf32>
    %16 = vector.broadcast %1 : vector<128x1xf32> to vector<128x256xf32>
    %17 = arith.addf %15, %16 : vector<128x256xf32>
    %18 = arith.truncf %17 : vector<128x256xf32> to vector<128x256xbf16>
    %c0_13 = arith.constant 0 : index
    %c0_14 = arith.constant 0 : index
    %c0_15 = arith.constant 0 : index
    %19 = vector.load %arg6[%c0_13, %c0_14, %c0_15] : memref<2x128x256xbf16, #tpu.memory_space<vmem>>, vector<1x128x256xbf16>
    %20 = vector.shape_cast %19 : vector<1x128x256xbf16> to vector<128x256xbf16>
    %21 = vector.shape_cast %18 : vector<128x256xbf16> to vector<1x128x256xbf16>
    tpu.vector_store %arg6[%c0_13, %c0_14, %c0_15], %21 {strides = array<i32>} : memref<2x128x256xbf16, #tpu.memory_space<vmem>>, vector<1x128x256xbf16>,
    %22 = arith.extf %18 : vector<128x256xbf16> to vector<128x256xf32>
    %cst_16 = arith.constant dense<0.000000e+00> : vector<256xf32>
    %23 = vector.multi_reduction <add>, %22, %cst_16 [0] : vector<128x256xf32> to vector<256xf32>
    %24 = arith.mulf %22, %22 : vector<128x256xf32>
    %cst_17 = arith.constant dense<0.000000e+00> : vector<256xf32>
    %25 = vector.multi_reduction <add>, %24, %cst_17 [0] : vector<128x256xf32> to vector<256xf32>
    %26 = vector.shape_cast %23 : vector<256xf32> to vector<1x256xf32>
    %27 = vector.shape_cast %25 : vector<256xf32> to vector<1x256xf32>
    %28 = tpu.concatenate %26, %27 in 0 : vector<1x256xf32>, vector<1x256xf32> -> vector<2x256xf32>
    %c0_18 = arith.constant 0 : index
    %c0_19 = arith.constant 0 : index
    %c0_20 = arith.constant 0 : index
    %29 = vector.load %arg7[%c0_18, %c0_19, %c0_20] : memref<2x2x256xf32, #tpu.memory_space<vmem>>, vector<1x2x256xf32>
    %30 = vector.shape_cast %29 : vector<1x2x256xf32> to vector<2x256xf32>
    %31 = vector.shape_cast %28 : vector<2x256xf32> to vector<1x2x256xf32>
    tpu.vector_store %arg7[%c0_18, %c0_19, %c0_20], %31 {strides = array<i32>} : memref<2x2x256xf32, #tpu.memory_space<vmem>>, vector<1x2x256xf32>,
    %c1 = arith.constant 1 : index
    %c0_21 = arith.constant 0 : index
    %c0_22 = arith.constant 0 : index
    %32 = vector.load %arg1[%c1, %c0_21, %c0_22] : memref<2x128x256xf32, #tpu.memory_space<vmem>>, vector<1x128x256xf32>
    %33 = vector.shape_cast %32 : vector<1x128x256xf32> to vector<128x256xf32>
    %c1_23 = arith.constant 1 : index
    %c0_24 = arith.constant 0 : index
    %c0_25 = arith.constant 0 : index
    %34 = vector.load %arg2[%c1_23, %c0_24, %c0_25] : memref<2x128x1xf32, #tpu.memory_space<vmem>>, vector<1x128x1xf32>
    %35 = vector.shape_cast %34 : vector<1x128x1xf32> to vector<128x1xf32>
    %36 = vector.broadcast %35 : vector<128x1xf32> to vector<128x256xf32>
    %37 = arith.mulf %33, %36 : vector<128x256xf32>
    %c1_26 = arith.constant 1 : index
    %c0_27 = arith.constant 0 : index
    %c0_28 = arith.constant 0 : index
    %38 = vector.load %arg3[%c1_26, %c0_27, %c0_28] : memref<2x128x1xf32, #tpu.memory_space<vmem>>, vector<1x128x1xf32>
    %39 = vector.shape_cast %38 : vector<1x128x1xf32> to vector<128x1xf32>
    %40 = vector.broadcast %39 : vector<128x1xf32> to vector<128x256xf32>
    %41 = arith.addf %37, %40 : vector<128x256xf32>
    %cst_29 = arith.constant 0.000000e+00 : f32
    %42 = vector.broadcast %cst_29 : f32 to vector<128x256xf32>
    %43 = arith.maximumf %41, %42 : vector<128x256xf32>
    %44 = arith.truncf %43 : vector<128x256xf32> to vector<128x256xbf16>
    %cst_30 = arith.constant dense<0.000000e+00> : vector<128x256xf32>
    %45 = tpu.matmul %0, %44, %cst_30 {dimension_numbers = #tpu.dot_dimension_numbers<[1], [0], [0], [1], [0, 0, 1, 1], [], []>} : vector<128x128xbf16>, vector<128x256xbf16>, vector<128x256xf32> -> vector<128x256xf32>
    %46 = vector.broadcast %1 : vector<128x1xf32> to vector<128x256xf32>
    %47 = arith.addf %45, %46 : vector<128x256xf32>
    %48 = arith.truncf %47 : vector<128x256xf32> to vector<128x256xbf16>
    %c1_31 = arith.constant 1 : index
    %c0_32 = arith.constant 0 : index
    %c0_33 = arith.constant 0 : index
    %49 = vector.load %arg6[%c1_31, %c0_32, %c0_33] : memref<2x128x256xbf16, #tpu.memory_space<vmem>>, vector<1x128x256xbf16>
    %50 = vector.shape_cast %49 : vector<1x128x256xbf16> to vector<128x256xbf16>
    %51 = vector.shape_cast %48 : vector<128x256xbf16> to vector<1x128x256xbf16>
    tpu.vector_store %arg6[%c1_31, %c0_32, %c0_33], %51 {strides = array<i32>} : memref<2x128x256xbf16, #tpu.memory_space<vmem>>, vector<1x128x256xbf16>,
    %52 = arith.extf %48 : vector<128x256xbf16> to vector<128x256xf32>
    %cst_34 = arith.constant dense<0.000000e+00> : vector<256xf32>
    %53 = vector.multi_reduction <add>, %52, %cst_34 [0] : vector<128x256xf32> to vector<256xf32>
    %54 = arith.mulf %52, %52 : vector<128x256xf32>
    %cst_35 = arith.constant dense<0.000000e+00> : vector<256xf32>
    %55 = vector.multi_reduction <add>, %54, %cst_35 [0] : vector<128x256xf32> to vector<256xf32>
    %56 = vector.shape_cast %53 : vector<256xf32> to vector<1x256xf32>
    %57 = vector.shape_cast %55 : vector<256xf32> to vector<1x256xf32>
    %58 = tpu.concatenate %56, %57 in 0 : vector<1x256xf32>, vector<1x256xf32> -> vector<2x256xf32>
    %c1_36 = arith.constant 1 : index
    %c0_37 = arith.constant 0 : index
    %c0_38 = arith.constant 0 : index
    %59 = vector.load %arg7[%c1_36, %c0_37, %c0_38] : memref<2x2x256xf32, #tpu.memory_space<vmem>>, vector<1x2x256xf32>
    %60 = vector.shape_cast %59 : vector<1x2x256xf32> to vector<2x256xf32>
    %61 = vector.shape_cast %58 : vector<2x256xf32> to vector<1x2x256xf32>
    tpu.vector_store %arg7[%c1_36, %c0_37, %c0_38], %61 {strides = array<i32>} : memref<2x2x256xf32, #tpu.memory_space<vmem>>, vector<1x2x256xf32>,
    return
  }
  func.func @transform_0(%arg0: i32) -> (i32, i32, i32) {
    %c0_i32 = arith.constant 0 : i32
    %c0_i32_0 = arith.constant 0 : i32
    %c0_i32_1 = arith.constant 0 : i32
    return %arg0, %c0_i32, %c0_i32_0 : i32, i32, i32
  }
  func.func @transform_1(%arg0: i32) -> (i32, i32, i32) {
    %c0_i32 = arith.constant 0 : i32
    %c0_i32_0 = arith.constant 0 : i32
    %c0_i32_1 = arith.constant 0 : i32
    return %arg0, %c0_i32, %c0_i32_0 : i32, i32, i32
  }
  func.func @transform_2(%arg0: i32) -> (i32, i32, i32) {
    %c0_i32 = arith.constant 0 : i32
    %c0_i32_0 = arith.constant 0 : i32
    %c0_i32_1 = arith.constant 0 : i32
    return %arg0, %c0_i32, %c0_i32_0 : i32, i32, i32
  }
  func.func @transform_3(%arg0: i32) -> (i32, i32) {
    %c0_i32 = arith.constant 0 : i32
    %c0_i32_0 = arith.constant 0 : i32
    %c0_i32_1 = arith.constant 0 : i32
    return %c0_i32, %c0_i32_0 : i32, i32
  }
  func.func @transform_4(%arg0: i32) -> (i32, i32) {
    %c0_i32 = arith.constant 0 : i32
    %c0_i32_0 = arith.constant 0 : i32
    %c0_i32_1 = arith.constant 0 : i32
    return %c0_i32, %c0_i32_0 : i32, i32
  }
  func.func @transform_5(%arg0: i32) -> (i32, i32, i32) {
    %c0_i32 = arith.constant 0 : i32
    %c0_i32_0 = arith.constant 0 : i32
    %c0_i32_1 = arith.constant 0 : i32
    return %arg0, %c0_i32, %c0_i32_0 : i32, i32, i32
  }
  func.func @transform_6(%arg0: i32) -> (i32, i32, i32) {
    %c0_i32 = arith.constant 0 : i32
    %c0_i32_0 = arith.constant 0 : i32
    %c0_i32_1 = arith.constant 0 : i32
    return %arg0, %c0_i32, %c0_i32_0 : i32, i32, i32
  }
}

module attributes {stable_mosaic.version = 11 : i64} {
  func.func @_conv2_kernel(%arg0: i32, %arg1: memref<2x128x256xbf16, #tpu.memory_space<vmem>>, %arg2: memref<256x256xbf16, #tpu.memory_space<vmem>>, %arg3: memref<1x256xf32, #tpu.memory_space<vmem>>, %arg4: memref<1x256xf32, #tpu.memory_space<vmem>>, %arg5: memref<1x256xf32, #tpu.memory_space<vmem>>, %arg6: memref<2x128x256xbf16, #tpu.memory_space<vmem>>, %arg7: memref<2x2x128xf32, #tpu.memory_space<vmem>>) attributes {dimension_semantics = [#tpu.dimension_semantics<parallel>], iteration_bounds = array<i64: 1>, scalar_prefetch = 0 : i64, scratch_operands = 0 : i64, tpu.core_type = #tpu.core_type<tc>, window_params = [{transform_indices = @transform_0, window_bounds = array<i64: 2, 128, 256>}, {pipeline_mode = #tpu.pipeline_mode<synchronous>, transform_indices = @transform_1, window_bounds = array<i64: 256, 256>}, {pipeline_mode = #tpu.pipeline_mode<synchronous>, transform_indices = @transform_2, window_bounds = array<i64: 1, 256>}, {pipeline_mode = #tpu.pipeline_mode<synchronous>, transform_indices = @transform_3, window_bounds = array<i64: 1, 256>}, {pipeline_mode = #tpu.pipeline_mode<synchronous>, transform_indices = @transform_4, window_bounds = array<i64: 1, 256>}, {transform_indices = @transform_5, window_bounds = array<i64: 2, 128, 256>}, {transform_indices = @transform_6, window_bounds = array<i64: 2, 2, 128>}]} {
    %c0 = arith.constant 0 : index
    %c0_0 = arith.constant 0 : index
    %c0_1 = arith.constant 0 : index
    %0 = vector.load %arg1[%c0, %c0_0, %c0_1] : memref<2x128x256xbf16, #tpu.memory_space<vmem>>, vector<2x128x256xbf16>
    %1 = arith.extf %0 : vector<2x128x256xbf16> to vector<2x128x256xf32>
    %2 = vector.shape_cast %1 : vector<2x128x256xf32> to vector<256x256xf32>
    %c0_2 = arith.constant 0 : index
    %c0_3 = arith.constant 0 : index
    %3 = vector.load %arg3[%c0_2, %c0_3] : memref<1x256xf32, #tpu.memory_space<vmem>>, vector<1x256xf32>
    %4 = vector.broadcast %3 : vector<1x256xf32> to vector<256x256xf32>
    %5 = arith.mulf %2, %4 : vector<256x256xf32>
    %c0_4 = arith.constant 0 : index
    %c0_5 = arith.constant 0 : index
    %6 = vector.load %arg4[%c0_4, %c0_5] : memref<1x256xf32, #tpu.memory_space<vmem>>, vector<1x256xf32>
    %7 = vector.broadcast %6 : vector<1x256xf32> to vector<256x256xf32>
    %8 = arith.addf %5, %7 : vector<256x256xf32>
    %cst = arith.constant 0.000000e+00 : f32
    %9 = vector.broadcast %cst : f32 to vector<256x256xf32>
    %10 = arith.maximumf %8, %9 : vector<256x256xf32>
    %11 = arith.truncf %10 : vector<256x256xf32> to vector<256x256xbf16>
    %c0_6 = arith.constant 0 : index
    %c0_7 = arith.constant 0 : index
    %12 = vector.load %arg2[%c0_6, %c0_7] : memref<256x256xbf16, #tpu.memory_space<vmem>>, vector<256x256xbf16>
    %cst_8 = arith.constant dense<0.000000e+00> : vector<256x256xf32>
    %13 = tpu.matmul %11, %12, %cst_8 {dimension_numbers = #tpu.dot_dimension_numbers<[1], [0], [0], [1], [0, 0, 1, 1], [], []>} : vector<256x256xbf16>, vector<256x256xbf16>, vector<256x256xf32> -> vector<256x256xf32>
    %14 = arith.addf %2, %13 : vector<256x256xf32>
    %c0_9 = arith.constant 0 : index
    %c0_10 = arith.constant 0 : index
    %15 = vector.load %arg5[%c0_9, %c0_10] : memref<1x256xf32, #tpu.memory_space<vmem>>, vector<1x256xf32>
    %16 = vector.broadcast %15 : vector<1x256xf32> to vector<256x256xf32>
    %17 = arith.addf %14, %16 : vector<256x256xf32>
    %18 = arith.truncf %17 : vector<256x256xf32> to vector<256x256xbf16>
    %19 = vector.shape_cast %18 : vector<256x256xbf16> to vector<2x128x256xbf16>
    %c0_11 = arith.constant 0 : index
    %c0_12 = arith.constant 0 : index
    %c0_13 = arith.constant 0 : index
    %20 = vector.load %arg6[%c0_11, %c0_12, %c0_13] : memref<2x128x256xbf16, #tpu.memory_space<vmem>>, vector<2x128x256xbf16>
    tpu.vector_store %arg6[%c0_11, %c0_12, %c0_13], %19 {strides = array<i32>} : memref<2x128x256xbf16, #tpu.memory_space<vmem>>, vector<2x128x256xbf16>,
    %21 = arith.extf %18 : vector<256x256xbf16> to vector<256x256xf32>
    %22 = vector.shape_cast %21 : vector<256x256xf32> to vector<2x128x256xf32>
    %cst_14 = arith.constant dense<0.000000e+00> : vector<2x128xf32>
    %23 = vector.multi_reduction <add>, %22, %cst_14 [2] : vector<2x128x256xf32> to vector<2x128xf32>
    %24 = arith.mulf %22, %22 : vector<2x128x256xf32>
    %cst_15 = arith.constant dense<0.000000e+00> : vector<2x128xf32>
    %25 = vector.multi_reduction <add>, %24, %cst_15 [2] : vector<2x128x256xf32> to vector<2x128xf32>
    %26 = vector.shape_cast %23 : vector<2x128xf32> to vector<2x1x128xf32>
    %27 = vector.shape_cast %25 : vector<2x128xf32> to vector<2x1x128xf32>
    %28 = tpu.concatenate %26, %27 in 1 : vector<2x1x128xf32>, vector<2x1x128xf32> -> vector<2x2x128xf32>
    %c0_16 = arith.constant 0 : index
    %c0_17 = arith.constant 0 : index
    %c0_18 = arith.constant 0 : index
    %29 = vector.load %arg7[%c0_16, %c0_17, %c0_18] : memref<2x2x128xf32, #tpu.memory_space<vmem>>, vector<2x2x128xf32>
    tpu.vector_store %arg7[%c0_16, %c0_17, %c0_18], %28 {strides = array<i32>} : memref<2x2x128xf32, #tpu.memory_space<vmem>>, vector<2x2x128xf32>,
    return
  }
  func.func @transform_0(%arg0: i32) -> (i32, i32, i32) {
    %c0_i32 = arith.constant 0 : i32
    %c0_i32_0 = arith.constant 0 : i32
    %c0_i32_1 = arith.constant 0 : i32
    return %arg0, %c0_i32, %c0_i32_0 : i32, i32, i32
  }
  func.func @transform_1(%arg0: i32) -> (i32, i32) {
    %c0_i32 = arith.constant 0 : i32
    %c0_i32_0 = arith.constant 0 : i32
    %c0_i32_1 = arith.constant 0 : i32
    return %c0_i32, %c0_i32_0 : i32, i32
  }
  func.func @transform_2(%arg0: i32) -> (i32, i32) {
    %c0_i32 = arith.constant 0 : i32
    %c0_i32_0 = arith.constant 0 : i32
    %c0_i32_1 = arith.constant 0 : i32
    return %c0_i32, %c0_i32_0 : i32, i32
  }
  func.func @transform_3(%arg0: i32) -> (i32, i32) {
    %c0_i32 = arith.constant 0 : i32
    %c0_i32_0 = arith.constant 0 : i32
    %c0_i32_1 = arith.constant 0 : i32
    return %c0_i32, %c0_i32_0 : i32, i32
  }
  func.func @transform_4(%arg0: i32) -> (i32, i32) {
    %c0_i32 = arith.constant 0 : i32
    %c0_i32_0 = arith.constant 0 : i32
    %c0_i32_1 = arith.constant 0 : i32
    return %c0_i32, %c0_i32_0 : i32, i32
  }
  func.func @transform_5(%arg0: i32) -> (i32, i32, i32) {
    %c0_i32 = arith.constant 0 : i32
    %c0_i32_0 = arith.constant 0 : i32
    %c0_i32_1 = arith.constant 0 : i32
    return %arg0, %c0_i32, %c0_i32_0 : i32, i32, i32
  }
  func.func @transform_6(%arg0: i32) -> (i32, i32, i32) {
    %c0_i32 = arith.constant 0 : i32
    %c0_i32_0 = arith.constant 0 : i32
    %c0_i32_1 = arith.constant 0 : i32
    return %arg0, %c0_i32, %c0_i32_0 : i32, i32, i32
  }
}

module attributes {stable_mosaic.version = 11 : i64} {
  func.func @_conv3_kernel(%arg0: i32, %arg1: memref<2x128x256xbf16, #tpu.memory_space<vmem>>, %arg2: memref<2x128x256xf32, #tpu.memory_space<vmem>>, %arg3: memref<2x128x1xf32, #tpu.memory_space<vmem>>, %arg4: memref<2x128x1xf32, #tpu.memory_space<vmem>>, %arg5: memref<128x128xbf16, #tpu.memory_space<vmem>>, %arg6: memref<128x1xf32, #tpu.memory_space<vmem>>, %arg7: memref<2x128x256xf32, #tpu.memory_space<vmem>>) attributes {dimension_semantics = [#tpu.dimension_semantics<parallel>], iteration_bounds = array<i64: 1>, scalar_prefetch = 0 : i64, scratch_operands = 0 : i64, tpu.core_type = #tpu.core_type<tc>, window_params = [{transform_indices = @transform_0, window_bounds = array<i64: 2, 128, 256>}, {transform_indices = @transform_1, window_bounds = array<i64: 2, 128, 256>}, {transform_indices = @transform_2, window_bounds = array<i64: 2, 128, 1>}, {transform_indices = @transform_3, window_bounds = array<i64: 2, 128, 1>}, {pipeline_mode = #tpu.pipeline_mode<synchronous>, transform_indices = @transform_4, window_bounds = array<i64: 128, 128>}, {pipeline_mode = #tpu.pipeline_mode<synchronous>, transform_indices = @transform_5, window_bounds = array<i64: 128, 1>}, {transform_indices = @transform_6, window_bounds = array<i64: 2, 128, 256>}]} {
    %c0 = arith.constant 0 : index
    %c0_0 = arith.constant 0 : index
    %0 = vector.load %arg5[%c0, %c0_0] : memref<128x128xbf16, #tpu.memory_space<vmem>>, vector<128x128xbf16>
    %c0_1 = arith.constant 0 : index
    %c0_2 = arith.constant 0 : index
    %1 = vector.load %arg6[%c0_1, %c0_2] : memref<128x1xf32, #tpu.memory_space<vmem>>, vector<128x1xf32>
    %c0_3 = arith.constant 0 : index
    %c0_4 = arith.constant 0 : index
    %c0_5 = arith.constant 0 : index
    %2 = vector.load %arg1[%c0_3, %c0_4, %c0_5] : memref<2x128x256xbf16, #tpu.memory_space<vmem>>, vector<1x128x256xbf16>
    %3 = vector.shape_cast %2 : vector<1x128x256xbf16> to vector<128x256xbf16>
    %4 = arith.extf %3 : vector<128x256xbf16> to vector<128x256xf32>
    %c0_6 = arith.constant 0 : index
    %c0_7 = arith.constant 0 : index
    %c0_8 = arith.constant 0 : index
    %5 = vector.load %arg3[%c0_6, %c0_7, %c0_8] : memref<2x128x1xf32, #tpu.memory_space<vmem>>, vector<1x128x1xf32>
    %6 = vector.shape_cast %5 : vector<1x128x1xf32> to vector<128x1xf32>
    %7 = vector.broadcast %6 : vector<128x1xf32> to vector<128x256xf32>
    %8 = arith.mulf %4, %7 : vector<128x256xf32>
    %c0_9 = arith.constant 0 : index
    %c0_10 = arith.constant 0 : index
    %c0_11 = arith.constant 0 : index
    %9 = vector.load %arg4[%c0_9, %c0_10, %c0_11] : memref<2x128x1xf32, #tpu.memory_space<vmem>>, vector<1x128x1xf32>
    %10 = vector.shape_cast %9 : vector<1x128x1xf32> to vector<128x1xf32>
    %11 = vector.broadcast %10 : vector<128x1xf32> to vector<128x256xf32>
    %12 = arith.addf %8, %11 : vector<128x256xf32>
    %cst = arith.constant 0.000000e+00 : f32
    %13 = vector.broadcast %cst : f32 to vector<128x256xf32>
    %14 = arith.maximumf %12, %13 : vector<128x256xf32>
    %15 = arith.truncf %14 : vector<128x256xf32> to vector<128x256xbf16>
    %cst_12 = arith.constant dense<0.000000e+00> : vector<128x256xf32>
    %16 = tpu.matmul %0, %15, %cst_12 {dimension_numbers = #tpu.dot_dimension_numbers<[1], [0], [0], [1], [0, 0, 1, 1], [], []>} : vector<128x128xbf16>, vector<128x256xbf16>, vector<128x256xf32> -> vector<128x256xf32>
    %17 = vector.broadcast %1 : vector<128x1xf32> to vector<128x256xf32>
    %18 = arith.addf %16, %17 : vector<128x256xf32>
    %c0_13 = arith.constant 0 : index
    %c0_14 = arith.constant 0 : index
    %c0_15 = arith.constant 0 : index
    %19 = vector.load %arg2[%c0_13, %c0_14, %c0_15] : memref<2x128x256xf32, #tpu.memory_space<vmem>>, vector<1x128x256xf32>
    %20 = vector.shape_cast %19 : vector<1x128x256xf32> to vector<128x256xf32>
    %21 = arith.addf %18, %20 : vector<128x256xf32>
    %c0_16 = arith.constant 0 : index
    %c0_17 = arith.constant 0 : index
    %c0_18 = arith.constant 0 : index
    %22 = vector.load %arg7[%c0_16, %c0_17, %c0_18] : memref<2x128x256xf32, #tpu.memory_space<vmem>>, vector<1x128x256xf32>
    %23 = vector.shape_cast %22 : vector<1x128x256xf32> to vector<128x256xf32>
    %24 = vector.shape_cast %21 : vector<128x256xf32> to vector<1x128x256xf32>
    tpu.vector_store %arg7[%c0_16, %c0_17, %c0_18], %24 {strides = array<i32>} : memref<2x128x256xf32, #tpu.memory_space<vmem>>, vector<1x128x256xf32>,
    %c1 = arith.constant 1 : index
    %c0_19 = arith.constant 0 : index
    %c0_20 = arith.constant 0 : index
    %25 = vector.load %arg1[%c1, %c0_19, %c0_20] : memref<2x128x256xbf16, #tpu.memory_space<vmem>>, vector<1x128x256xbf16>
    %26 = vector.shape_cast %25 : vector<1x128x256xbf16> to vector<128x256xbf16>
    %27 = arith.extf %26 : vector<128x256xbf16> to vector<128x256xf32>
    %c1_21 = arith.constant 1 : index
    %c0_22 = arith.constant 0 : index
    %c0_23 = arith.constant 0 : index
    %28 = vector.load %arg3[%c1_21, %c0_22, %c0_23] : memref<2x128x1xf32, #tpu.memory_space<vmem>>, vector<1x128x1xf32>
    %29 = vector.shape_cast %28 : vector<1x128x1xf32> to vector<128x1xf32>
    %30 = vector.broadcast %29 : vector<128x1xf32> to vector<128x256xf32>
    %31 = arith.mulf %27, %30 : vector<128x256xf32>
    %c1_24 = arith.constant 1 : index
    %c0_25 = arith.constant 0 : index
    %c0_26 = arith.constant 0 : index
    %32 = vector.load %arg4[%c1_24, %c0_25, %c0_26] : memref<2x128x1xf32, #tpu.memory_space<vmem>>, vector<1x128x1xf32>
    %33 = vector.shape_cast %32 : vector<1x128x1xf32> to vector<128x1xf32>
    %34 = vector.broadcast %33 : vector<128x1xf32> to vector<128x256xf32>
    %35 = arith.addf %31, %34 : vector<128x256xf32>
    %cst_27 = arith.constant 0.000000e+00 : f32
    %36 = vector.broadcast %cst_27 : f32 to vector<128x256xf32>
    %37 = arith.maximumf %35, %36 : vector<128x256xf32>
    %38 = arith.truncf %37 : vector<128x256xf32> to vector<128x256xbf16>
    %cst_28 = arith.constant dense<0.000000e+00> : vector<128x256xf32>
    %39 = tpu.matmul %0, %38, %cst_28 {dimension_numbers = #tpu.dot_dimension_numbers<[1], [0], [0], [1], [0, 0, 1, 1], [], []>} : vector<128x128xbf16>, vector<128x256xbf16>, vector<128x256xf32> -> vector<128x256xf32>
    %40 = vector.broadcast %1 : vector<128x1xf32> to vector<128x256xf32>
    %41 = arith.addf %39, %40 : vector<128x256xf32>
    %c1_29 = arith.constant 1 : index
    %c0_30 = arith.constant 0 : index
    %c0_31 = arith.constant 0 : index
    %42 = vector.load %arg2[%c1_29, %c0_30, %c0_31] : memref<2x128x256xf32, #tpu.memory_space<vmem>>, vector<1x128x256xf32>
    %43 = vector.shape_cast %42 : vector<1x128x256xf32> to vector<128x256xf32>
    %44 = arith.addf %41, %43 : vector<128x256xf32>
    %c1_32 = arith.constant 1 : index
    %c0_33 = arith.constant 0 : index
    %c0_34 = arith.constant 0 : index
    %45 = vector.load %arg7[%c1_32, %c0_33, %c0_34] : memref<2x128x256xf32, #tpu.memory_space<vmem>>, vector<1x128x256xf32>
    %46 = vector.shape_cast %45 : vector<1x128x256xf32> to vector<128x256xf32>
    %47 = vector.shape_cast %44 : vector<128x256xf32> to vector<1x128x256xf32>
    tpu.vector_store %arg7[%c1_32, %c0_33, %c0_34], %47 {strides = array<i32>} : memref<2x128x256xf32, #tpu.memory_space<vmem>>, vector<1x128x256xf32>,
    return
  }
  func.func @transform_0(%arg0: i32) -> (i32, i32, i32) {
    %c0_i32 = arith.constant 0 : i32
    %c0_i32_0 = arith.constant 0 : i32
    %c0_i32_1 = arith.constant 0 : i32
    return %arg0, %c0_i32, %c0_i32_0 : i32, i32, i32
  }
  func.func @transform_1(%arg0: i32) -> (i32, i32, i32) {
    %c0_i32 = arith.constant 0 : i32
    %c0_i32_0 = arith.constant 0 : i32
    %c0_i32_1 = arith.constant 0 : i32
    return %arg0, %c0_i32, %c0_i32_0 : i32, i32, i32
  }
  func.func @transform_2(%arg0: i32) -> (i32, i32, i32) {
    %c0_i32 = arith.constant 0 : i32
    %c0_i32_0 = arith.constant 0 : i32
    %c0_i32_1 = arith.constant 0 : i32
    return %arg0, %c0_i32, %c0_i32_0 : i32, i32, i32
  }
  func.func @transform_3(%arg0: i32) -> (i32, i32, i32) {
    %c0_i32 = arith.constant 0 : i32
    %c0_i32_0 = arith.constant 0 : i32
    %c0_i32_1 = arith.constant 0 : i32
    return %arg0, %c0_i32, %c0_i32_0 : i32, i32, i32
  }
  func.func @transform_4(%arg0: i32) -> (i32, i32) {
    %c0_i32 = arith.constant 0 : i32
    %c0_i32_0 = arith.constant 0 : i32
    %c0_i32_1 = arith.constant 0 : i32
    return %c0_i32, %c0_i32_0 : i32, i32
  }
  func.func @transform_5(%arg0: i32) -> (i32, i32) {
    %c0_i32 = arith.constant 0 : i32
    %c0_i32_0 = arith.constant 0 : i32
    %c0_i32_1 = arith.constant 0 : i32
    return %c0_i32, %c0_i32_0 : i32, i32
  }
  func.func @transform_6(%arg0: i32) -> (i32, i32, i32) {
    %c0_i32 = arith.constant 0 : i32
    %c0_i32_0 = arith.constant 0 : i32
    %c0_i32_1 = arith.constant 0 : i32
    return %arg0, %c0_i32, %c0_i32_0 : i32, i32, i32
  }
}

</mosaic_0001>

<llo_original>
// kernel: oafilter.4
$region0: #{oafilter.4}
  #allocation0 [shape = 'u32[]', space=smem, size = 0x4, offset = 0x4, fixed_abs, tag = 'smem constant byte address 0x4 - core index']
  #allocation1 [shape = 'u32[144,128]{1,0:T(1,128)}', space=vmem, size = 0x12000, scoped, tag = 'internal scratch']
  %s0 = inlined_call_operand.vmem [shape: f32[2,128,256], index: 0, kind: input, shape index: {}]
  %s1 = inlined_call_operand.vmem [shape: f32[2,2,128], index: 1, kind: output, shape index: {}]
  %s2 = sld [smem:[#allocation0]]
  $region14: #{oafilter.4} parent=0
    _
  %s4 = ssub.s32 1, %s2
  %s5 = scalar_select 0, %s4, %s2
  // Predicated region
  $region2: #{oafilter.4} parent=0 // pred_check
    _
  $region3: #{oafilter.4} parent=0 // pred_check_branch
    %7 = sbr.rel (0) target = $region5
  $region4: #{oafilter.4} parent=0 // pred_region
    _
  $region5: #{oafilter.4} parent=0 // pred_fallthru
    _
  %v8 = vld [vmem:[%s0] sm:$0xff]
  %v9 = vld [vmem:[%s0 + $0x8] sm:$0xff]
  %v10 = vld [vmem:[%s0 + $0x10] sm:$0xff]
  %v11 = vld [vmem:[%s0 + $0x18] sm:$0xff]
  %v12 = vld [vmem:[%s0 + $0x20] sm:$0xff]
  %v13 = vld [vmem:[%s0 + $0x28] sm:$0xff]
  %v14 = vld [vmem:[%s0 + $0x30] sm:$0xff]
  %v15 = vld [vmem:[%s0 + $0x38] sm:$0xff]
  %v16 = vld [vmem:[%s0 + $0x40] sm:$0xff]
  %v17 = vld [vmem:[%s0 + $0x48] sm:$0xff]
  %v18 = vld [vmem:[%s0 + $0x50] sm:$0xff]
  %v19 = vld [vmem:[%s0 + $0x58] sm:$0xff]
  %v20 = vld [vmem:[%s0 + $0x60] sm:$0xff]
  %v21 = vld [vmem:[%s0 + $0x68] sm:$0xff]
  %v22 = vld [vmem:[%s0 + $0x70] sm:$0xff]
  %v23 = vld [vmem:[%s0 + $0x78] sm:$0xff]
  %v24 = vld [vmem:[%s0 + $0x80] sm:$0xff]
  %v25 = vld [vmem:[%s0 + $0x88] sm:$0xff]
  %v26 = vld [vmem:[%s0 + $0x90] sm:$0xff]
  %v27 = vld [vmem:[%s0 + $0x98] sm:$0xff]
  %v28 = vld [vmem:[%s0 + $0xa0] sm:$0xff]
  %v29 = vld [vmem:[%s0 + $0xa8] sm:$0xff]
  %v30 = vld [vmem:[%s0 + $0xb0] sm:$0xff]
  %v31 = vld [vmem:[%s0 + $0xb8] sm:$0xff]
  %v32 = vld [vmem:[%s0 + $0xc0] sm:$0xff]
  %v33 = vld [vmem:[%s0 + $0xc8] sm:$0xff]
  %v34 = vld [vmem:[%s0 + $0xd0] sm:$0xff]
  %v35 = vld [vmem:[%s0 + $0xd8] sm:$0xff]
  %v36 = vld [vmem:[%s0 + $0xe0] sm:$0xff]
  %v37 = vld [vmem:[%s0 + $0xe8] sm:$0xff]
  %v38 = vld [vmem:[%s0 + $0xf0] sm:$0xff]
  %v39 = vld [vmem:[%s0 + $0xf8] sm:$0xff]
  %v40 = vld [vmem:[%s0 + $0x100] sm:$0xff]
  %v41 = vld [vmem:[%s0 + $0x108] sm:$0xff]
  %v42 = vld [vmem:[%s0 + $0x110] sm:$0xff]
  %v43 = vld [vmem:[%s0 + $0x118] sm:$0xff]
  %v44 = vld [vmem:[%s0 + $0x120] sm:$0xff]
  %v45 = vld [vmem:[%s0 + $0x128] sm:$0xff]
  %v46 = vld [vmem:[%s0 + $0x130] sm:$0xff]
  %v47 = vld [vmem:[%s0 + $0x138] sm:$0xff]
  %v48 = vld [vmem:[%s0 + $0x140] sm:$0xff]
  %v49 = vld [vmem:[%s0 + $0x148] sm:$0xff]
  %v50 = vld [vmem:[%s0 + $0x150] sm:$0xff]
  %v51 = vld [vmem:[%s0 + $0x158] sm:$0xff]
  %v52 = vld [vmem:[%s0 + $0x160] sm:$0xff]
  %v53 = vld [vmem:[%s0 + $0x168] sm:$0xff]
  %v54 = vld [vmem:[%s0 + $0x170] sm:$0xff]
  %v55 = vld [vmem:[%s0 + $0x178] sm:$0xff]
  %v56 = vld [vmem:[%s0 + $0x180] sm:$0xff]
  %v57 = vld [vmem:[%s0 + $0x188] sm:$0xff]
  %v58 = vld [vmem:[%s0 + $0x190] sm:$0xff]
  %v59 = vld [vmem:[%s0 + $0x198] sm:$0xff]
  %v60 = vld [vmem:[%s0 + $0x1a0] sm:$0xff]
  %v61 = vld [vmem:[%s0 + $0x1a8] sm:$0xff]
  %v62 = vld [vmem:[%s0 + $0x1b0] sm:$0xff]
  %v63 = vld [vmem:[%s0 + $0x1b8] sm:$0xff]
  %v64 = vld [vmem:[%s0 + $0x1c0] sm:$0xff]
  %v65 = vld [vmem:[%s0 + $0x1c8] sm:$0xff]
  %v66 = vld [vmem:[%s0 + $0x1d0] sm:$0xff]
  %v67 = vld [vmem:[%s0 + $0x1d8] sm:$0xff]
  %v68 = vld [vmem:[%s0 + $0x1e0] sm:$0xff]
  %v69 = vld [vmem:[%s0 + $0x1e8] sm:$0xff]
  %v70 = vld [vmem:[%s0 + $0x1f0] sm:$0xff]
  %v71 = vld [vmem:[%s0 + $0x1f8] sm:$0xff]
  %v72 = vadd.f32 %v8, %v9
  %73 = vadd.xlane.f32.xlu0 %v72
  %v74 = vpop.xlane.xlu0 %73
  %v75 = vadd.f32 %v10, %v11
  %76 = vadd.xlane.f32.xlu0 %v75
  %v77 = vpop.xlane.xlu0 %76
  %v78 = vadd.f32 %v12, %v13
  %79 = vadd.xlane.f32.xlu0 %v78
  %v80 = vpop.xlane.xlu0 %79
  %v81 = vadd.f32 %v14, %v15
  %82 = vadd.xlane.f32.xlu0 %v81
  %v83 = vpop.xlane.xlu0 %82
  %v84 = vadd.f32 %v16, %v17
  %85 = vadd.xlane.f32.xlu0 %v84
  %v86 = vpop.xlane.xlu0 %85
  %v87 = vadd.f32 %v18, %v19
  %88 = vadd.xlane.f32.xlu0 %v87
  %v89 = vpop.xlane.xlu0 %88
  %v90 = vadd.f32 %v20, %v21
  %91 = vadd.xlane.f32.xlu0 %v90
  %v92 = vpop.xlane.xlu0 %91
  %v93 = vadd.f32 %v22, %v23
  %94 = vadd.xlane.f32.xlu0 %v93
  %v95 = vpop.xlane.xlu0 %94
  %v96 = vadd.f32 %v24, %v25
  %97 = vadd.xlane.f32.xlu0 %v96
  %v98 = vpop.xlane.xlu0 %97
  %v99 = vadd.f32 %v26, %v27
  %100 = vadd.xlane.f32.xlu0 %v99
  %v101 = vpop.xlane.xlu0 %100
  %v102 = vadd.f32 %v28, %v29
  %103 = vadd.xlane.f32.xlu0 %v102
  %v104 = vpop.xlane.xlu0 %103
  %v105 = vadd.f32 %v30, %v31
  %106 = vadd.xlane.f32.xlu0 %v105
  %v107 = vpop.xlane.xlu0 %106
  %v108 = vadd.f32 %v32, %v33
  %109 = vadd.xlane.f32.xlu0 %v108
  %v110 = vpop.xlane.xlu0 %109
  %v111 = vadd.f32 %v34, %v35
  %112 = vadd.xlane.f32.xlu0 %v111
  %v113 = vpop.xlane.xlu0 %112
  %v114 = vadd.f32 %v36, %v37
  %115 = vadd.xlane.f32.xlu0 %v114
  %v116 = vpop.xlane.xlu0 %115
  %v117 = vadd.f32 %v38, %v39
  %118 = vadd.xlane.f32.xlu0 %v117
  %v119 = vpop.xlane.xlu0 %118
  %v120 = vadd.f32 %v40, %v41
  %121 = vadd.xlane.f32.xlu0 %v120
  %v122 = vpop.xlane.xlu0 %121
  %v123 = vadd.f32 %v42, %v43
  %124 = vadd.xlane.f32.xlu0 %v123
  %v125 = vpop.xlane.xlu0 %124
  %v126 = vadd.f32 %v44, %v45
  %127 = vadd.xlane.f32.xlu0 %v126
  %v128 = vpop.xlane.xlu0 %127
  %v129 = vadd.f32 %v46, %v47
  %130 = vadd.xlane.f32.xlu0 %v129
  %v131 = vpop.xlane.xlu0 %130
  %v132 = vadd.f32 %v48, %v49
  %133 = vadd.xlane.f32.xlu0 %v132
  %v134 = vpop.xlane.xlu0 %133
  %v135 = vadd.f32 %v50, %v51
  %136 = vadd.xlane.f32.xlu0 %v135
  %v137 = vpop.xlane.xlu0 %136
  %v138 = vadd.f32 %v52, %v53
  %139 = vadd.xlane.f32.xlu0 %v138
  %v140 = vpop.xlane.xlu0 %139
  %v141 = vadd.f32 %v54, %v55
  %142 = vadd.xlane.f32.xlu0 %v141
  %v143 = vpop.xlane.xlu0 %142
  %v144 = vadd.f32 %v56, %v57
  %145 = vadd.xlane.f32.xlu0 %v144
  %v146 = vpop.xlane.xlu0 %145
  %v147 = vadd.f32 %v58, %v59
  %148 = vadd.xlane.f32.xlu0 %v147
  %v149 = vpop.xlane.xlu0 %148
  %v150 = vadd.f32 %v60, %v61
  %151 = vadd.xlane.f32.xlu0 %v150
  %v152 = vpop.xlane.xlu0 %151
  %v153 = vadd.f32 %v62, %v63
  %154 = vadd.xlane.f32.xlu0 %v153
  %v155 = vpop.xlane.xlu0 %154
  %v156 = vadd.f32 %v64, %v65
  %157 = vadd.xlane.f32.xlu0 %v156
  %v158 = vpop.xlane.xlu0 %157
  %v159 = vadd.f32 %v66, %v67
  %160 = vadd.xlane.f32.xlu0 %v159
  %v161 = vpop.xlane.xlu0 %160
  %v162 = vadd.f32 %v68, %v69
  %163 = vadd.xlane.f32.xlu0 %v162
  %v164 = vpop.xlane.xlu0 %163
  %v165 = vadd.f32 %v70, %v71
  %166 = vadd.xlane.f32.xlu0 %v165
  %v167 = vpop.xlane.xlu0 %166
  %v168 = vmul.f32 %v8, %v8
  %v169 = vmul.f32 %v9, %v9
  %v170 = vmul.f32 %v10, %v10
  %v171 = vmul.f32 %v11, %v11
  %v172 = vmul.f32 %v12, %v12
  %v173 = vmul.f32 %v13, %v13
  %v174 = vmul.f32 %v14, %v14
  %v175 = vmul.f32 %v15, %v15
  %v176 = vmul.f32 %v16, %v16
  %v177 = vmul.f32 %v17, %v17
  %v178 = vmul.f32 %v18, %v18
  %v179 = vmul.f32 %v19, %v19
  %v180 = vmul.f32 %v20, %v20
  %v181 = vmul.f32 %v21, %v21
  %v182 = vmul.f32 %v22, %v22
  %v183 = vmul.f32 %v23, %v23
  %v184 = vmul.f32 %v24, %v24
  %v185 = vmul.f32 %v25, %v25
  %v186 = vmul.f32 %v26, %v26
  %v187 = vmul.f32 %v27, %v27
  %v188 = vmul.f32 %v28, %v28
  %v189 = vmul.f32 %v29, %v29
  %v190 = vmul.f32 %v30, %v30
  %v191 = vmul.f32 %v31, %v31
  %v192 = vmul.f32 %v32, %v32
  %v193 = vmul.f32 %v33, %v33
  %v194 = vmul.f32 %v34, %v34
  %v195 = vmul.f32 %v35, %v35
  %v196 = vmul.f32 %v36, %v36
  %v197 = vmul.f32 %v37, %v37
  %v198 = vmul.f32 %v38, %v38
  %v199 = vmul.f32 %v39, %v39
  %v200 = vmul.f32 %v40, %v40
  %v201 = vmul.f32 %v41, %v41
  %v202 = vmul.f32 %v42, %v42
  %v203 = vmul.f32 %v43, %v43
  %v204 = vmul.f32 %v44, %v44
  %v205 = vmul.f32 %v45, %v45
  %v206 = vmul.f32 %v46, %v46
  %v207 = vmul.f32 %v47, %v47
  %v208 = vmul.f32 %v48, %v48
  %v209 = vmul.f32 %v49, %v49
  %v210 = vmul.f32 %v50, %v50
  %v211 = vmul.f32 %v51, %v51
  %v212 = vmul.f32 %v52, %v52
  %v213 = vmul.f32 %v53, %v53
  %v214 = vmul.f32 %v54, %v54
  %v215 = vmul.f32 %v55, %v55
  %v216 = vmul.f32 %v56, %v56
  %v217 = vmul.f32 %v57, %v57
  %v218 = vmul.f32 %v58, %v58
  %v219 = vmul.f32 %v59, %v59
  %v220 = vmul.f32 %v60, %v60
  %v221 = vmul.f32 %v61, %v61
  %v222 = vmul.f32 %v62, %v62
  %v223 = vmul.f32 %v63, %v63
  %v224 = vmul.f32 %v64, %v64
  %v225 = vmul.f32 %v65, %v65
  %v226 = vmul.f32 %v66, %v66
  %v227 = vmul.f32 %v67, %v67
  %v228 = vmul.f32 %v68, %v68
  %v229 = vmul.f32 %v69, %v69
  %v230 = vmul.f32 %v70, %v70
  %v231 = vmul.f32 %v71, %v71
  %v232 = vadd.f32 %v168, %v169
  %233 = vadd.xlane.f32.xlu0 %v232
  %v234 = vpop.xlane.xlu0 %233
  %v235 = vadd.f32 %v170, %v171
  %236 = vadd.xlane.f32.xlu0 %v235
  %v237 = vpop.xlane.xlu0 %236
  %v238 = vadd.f32 %v172, %v173
  %239 = vadd.xlane.f32.xlu0 %v238
  %v240 = vpop.xlane.xlu0 %239
  %v241 = vadd.f32 %v174, %v175
  %242 = vadd.xlane.f32.xlu0 %v241
  %v243 = vpop.xlane.xlu0 %242
  %v244 = vadd.f32 %v176, %v177
  %245 = vadd.xlane.f32.xlu0 %v244
  %v246 = vpop.xlane.xlu0 %245
  %v247 = vadd.f32 %v178, %v179
  %248 = vadd.xlane.f32.xlu0 %v247
  %v249 = vpop.xlane.xlu0 %248
  %v250 = vadd.f32 %v180, %v181
  %251 = vadd.xlane.f32.xlu0 %v250
  %v252 = vpop.xlane.xlu0 %251
  %v253 = vadd.f32 %v182, %v183
  %254 = vadd.xlane.f32.xlu0 %v253
  %v255 = vpop.xlane.xlu0 %254
  %v256 = vadd.f32 %v184, %v185
  %257 = vadd.xlane.f32.xlu0 %v256
  %v258 = vpop.xlane.xlu0 %257
  %v259 = vadd.f32 %v186, %v187
  %260 = vadd.xlane.f32.xlu0 %v259
  %v261 = vpop.xlane.xlu0 %260
  %v262 = vadd.f32 %v188, %v189
  %263 = vadd.xlane.f32.xlu0 %v262
  %v264 = vpop.xlane.xlu0 %263
  %v265 = vadd.f32 %v190, %v191
  %266 = vadd.xlane.f32.xlu0 %v265
  %v267 = vpop.xlane.xlu0 %266
  %v268 = vadd.f32 %v192, %v193
  %269 = vadd.xlane.f32.xlu0 %v268
  %v270 = vpop.xlane.xlu0 %269
  %v271 = vadd.f32 %v194, %v195
  %272 = vadd.xlane.f32.xlu0 %v271
  %v273 = vpop.xlane.xlu0 %272
  %v274 = vadd.f32 %v196, %v197
  %275 = vadd.xlane.f32.xlu0 %v274
  %v276 = vpop.xlane.xlu0 %275
  %v277 = vadd.f32 %v198, %v199
  %278 = vadd.xlane.f32.xlu0 %v277
  %v279 = vpop.xlane.xlu0 %278
  %v280 = vadd.f32 %v200, %v201
  %281 = vadd.xlane.f32.xlu0 %v280
  %v282 = vpop.xlane.xlu0 %281
  %v283 = vadd.f32 %v202, %v203
  %284 = vadd.xlane.f32.xlu0 %v283
  %v285 = vpop.xlane.xlu0 %284
  %v286 = vadd.f32 %v204, %v205
  %287 = vadd.xlane.f32.xlu0 %v286
  %v288 = vpop.xlane.xlu0 %287
  %v289 = vadd.f32 %v206, %v207
  %290 = vadd.xlane.f32.xlu0 %v289
  %v291 = vpop.xlane.xlu0 %290
  %v292 = vadd.f32 %v208, %v209
  %293 = vadd.xlane.f32.xlu0 %v292
  %v294 = vpop.xlane.xlu0 %293
  %v295 = vadd.f32 %v210, %v211
  %296 = vadd.xlane.f32.xlu0 %v295
  %v297 = vpop.xlane.xlu0 %296
  %v298 = vadd.f32 %v212, %v213
  %299 = vadd.xlane.f32.xlu0 %v298
  %v300 = vpop.xlane.xlu0 %299
  %v301 = vadd.f32 %v214, %v215
  %302 = vadd.xlane.f32.xlu0 %v301
  %v303 = vpop.xlane.xlu0 %302
  %v304 = vadd.f32 %v216, %v217
  %305 = vadd.xlane.f32.xlu0 %v304
  %v306 = vpop.xlane.xlu0 %305
  %v307 = vadd.f32 %v218, %v219
  %308 = vadd.xlane.f32.xlu0 %v307
  %v309 = vpop.xlane.xlu0 %308
  %v310 = vadd.f32 %v220, %v221
  %311 = vadd.xlane.f32.xlu0 %v310
  %v312 = vpop.xlane.xlu0 %311
  %v313 = vadd.f32 %v222, %v223
  %314 = vadd.xlane.f32.xlu0 %v313
  %v315 = vpop.xlane.xlu0 %314
  %v316 = vadd.f32 %v224, %v225
  %317 = vadd.xlane.f32.xlu0 %v316
  %v318 = vpop.xlane.xlu0 %317
  %v319 = vadd.f32 %v226, %v227
  %320 = vadd.xlane.f32.xlu0 %v319
  %v321 = vpop.xlane.xlu0 %320
  %v322 = vadd.f32 %v228, %v229
  %323 = vadd.xlane.f32.xlu0 %v322
  %v324 = vpop.xlane.xlu0 %323
  %v325 = vadd.f32 %v230, %v231
  %326 = vadd.xlane.f32.xlu0 %v325
  %v327 = vpop.xlane.xlu0 %326
  %v360 = vlaneseq
  %v361 = vand.u32 %v360, 127
  %v362 = vlaneseq
  %v363 = vshrl.u32 %v362, 7
  %v364 = vsub.s32 %v361, %v363
  %v365 = vrot.slane %v74, %v364
  %v366 = vadd.s32 %v361, 4294967288
  %v367 = vlaneseq
  %v368 = vshrl.u32 %v367, 7
  %v369 = vsub.s32 %v366, %v368
  %v370 = vrot.slane %v77, %v369
  %vm371 = vcmask 130112
  %v372 = vsel %vm371, %v370, %v365
  %v373 = vadd.s32 %v361, 4294967280
  %v374 = vlaneseq
  %v375 = vshrl.u32 %v374, 7
  %v376 = vsub.s32 %v373, %v375
  %v377 = vrot.slane %v80, %v376
  %vm378 = vcmask 195712
  %v379 = vsel %vm378, %v377, %v372
  %v380 = vadd.s32 %v361, 4294967272
  %v381 = vlaneseq
  %v382 = vshrl.u32 %v381, 7
  %v383 = vsub.s32 %v380, %v382
  %v384 = vrot.slane %v83, %v383
  %vm385 = vcmask 261312
  %v386 = vsel %vm385, %v384, %v379
  %v387 = vadd.s32 %v361, 4294967264
  %v388 = vlaneseq
  %v389 = vshrl.u32 %v388, 7
  %v390 = vsub.s32 %v387, %v389
  %v391 = vrot.slane %v86, %v390
  %vm392 = vcmask 326912
  %v393 = vsel %vm392, %v391, %v386
  %v394 = vadd.s32 %v361, 4294967256
  %v395 = vlaneseq
  %v396 = vshrl.u32 %v395, 7
  %v397 = vsub.s32 %v394, %v396
  %v398 = vrot.slane %v89, %v397
  %vm399 = vcmask 392512
  %v400 = vsel %vm399, %v398, %v393
  %v401 = vadd.s32 %v361, 4294967248
  %v402 = vlaneseq
  %v403 = vshrl.u32 %v402, 7
  %v404 = vsub.s32 %v401, %v403
  %v405 = vrot.slane %v92, %v404
  %vm406 = vcmask 458112
  %v407 = vsel %vm406, %v405, %v400
  %v408 = vadd.s32 %v361, 4294967240
  %v409 = vlaneseq
  %v410 = vshrl.u32 %v409, 7
  %v411 = vsub.s32 %v408, %v410
  %v412 = vrot.slane %v95, %v411
  %vm413 = vcmask 523712
  %v414 = vsel %vm413, %v412, %v407
  %v415 = vadd.s32 %v361, 4294967232
  %v416 = vlaneseq
  %v417 = vshrl.u32 %v416, 7
  %v418 = vsub.s32 %v415, %v417
  %v419 = vrot.slane %v98, %v418
  %vm420 = vcmask 589312
  %v421 = vsel %vm420, %v419, %v414
  %v422 = vadd.s32 %v361, 4294967224
  %v423 = vlaneseq
  %v424 = vshrl.u32 %v423, 7
  %v425 = vsub.s32 %v422, %v424
  %v426 = vrot.slane %v101, %v425
  %vm427 = vcmask 654912
  %v428 = vsel %vm427, %v426, %v421
  %v429 = vadd.s32 %v361, 4294967216
  %v430 = vlaneseq
  %v431 = vshrl.u32 %v430, 7
  %v432 = vsub.s32 %v429, %v431
  %v433 = vrot.slane %v104, %v432
  %vm434 = vcmask 720512
  %v435 = vsel %vm434, %v433, %v428
  %v436 = vadd.s32 %v361, 4294967208
  %v437 = vlaneseq
  %v438 = vshrl.u32 %v437, 7
  %v439 = vsub.s32 %v436, %v438
  %v440 = vrot.slane %v107, %v439
  %vm441 = vcmask 786112
  %v442 = vsel %vm441, %v440, %v435
  %v443 = vadd.s32 %v361, 4294967200
  %v444 = vlaneseq
  %v445 = vshrl.u32 %v444, 7
  %v446 = vsub.s32 %v443, %v445
  %v447 = vrot.slane %v110, %v446
  %vm448 = vcmask 851712
  %v449 = vsel %vm448, %v447, %v442
  %v450 = vadd.s32 %v361, 4294967192
  %v451 = vlaneseq
  %v452 = vshrl.u32 %v451, 7
  %v453 = vsub.s32 %v450, %v452
  %v454 = vrot.slane %v113, %v453
  %vm455 = vcmask 917312
  %v456 = vsel %vm455, %v454, %v449
  %v457 = vadd.s32 %v361, 4294967184
  %v458 = vlaneseq
  %v459 = vshrl.u32 %v458, 7
  %v460 = vsub.s32 %v457, %v459
  %v461 = vrot.slane %v116, %v460
  %vm462 = vcmask 982912
  %v463 = vsel %vm462, %v461, %v456
  %v464 = vadd.s32 %v361, 4294967176
  %v465 = vlaneseq
  %v466 = vshrl.u32 %v465, 7
  %v467 = vsub.s32 %v464, %v466
  %v468 = vrot.slane %v119, %v467
  %vm469 = vcmask 1048512
  %v470 = vsel %vm469, %v468, %v463
  %v471 = vlaneseq
  %v472 = vshrl.u32 %v471, 7
  %v473 = vsub.s32 %v361, %v472
  %v474 = vrot.slane %v122, %v473
  %v475 = vlaneseq
  %v476 = vshrl.u32 %v475, 7
  %v477 = vsub.s32 %v366, %v476
  %v478 = vrot.slane %v125, %v477
  %v479 = vsel %vm371, %v478, %v474
  %v480 = vlaneseq
  %v481 = vshrl.u32 %v480, 7
  %v482 = vsub.s32 %v373, %v481
  %v483 = vrot.slane %v128, %v482
  %v484 = vsel %vm378, %v483, %v479
  %v485 = vlaneseq
  %v486 = vshrl.u32 %v485, 7
  %v487 = vsub.s32 %v380, %v486
  %v488 = vrot.slane %v131, %v487
  %v489 = vsel %vm385, %v488, %v484
  %v490 = vlaneseq
  %v491 = vshrl.u32 %v490, 7
  %v492 = vsub.s32 %v387, %v491
  %v493 = vrot.slane %v134, %v492
  %v494 = vsel %vm392, %v493, %v489
  %v495 = vlaneseq
  %v496 = vshrl.u32 %v495, 7
  %v497 = vsub.s32 %v394, %v496
  %v498 = vrot.slane %v137, %v497
  %v499 = vsel %vm399, %v498, %v494
  %v500 = vlaneseq
  %v501 = vshrl.u32 %v500, 7
  %v502 = vsub.s32 %v401, %v501
  %v503 = vrot.slane %v140, %v502
  %v504 = vsel %vm406, %v503, %v499
  %v505 = vlaneseq
  %v506 = vshrl.u32 %v505, 7
  %v507 = vsub.s32 %v408, %v506
  %v508 = vrot.slane %v143, %v507
  %v509 = vsel %vm413, %v508, %v504
  %v510 = vlaneseq
  %v511 = vshrl.u32 %v510, 7
  %v512 = vsub.s32 %v415, %v511
  %v513 = vrot.slane %v146, %v512
  %v514 = vsel %vm420, %v513, %v509
  %v515 = vlaneseq
  %v516 = vshrl.u32 %v515, 7
  %v517 = vsub.s32 %v422, %v516
  %v518 = vrot.slane %v149, %v517
  %v519 = vsel %vm427, %v518, %v514
  %v520 = vlaneseq
  %v521 = vshrl.u32 %v520, 7
  %v522 = vsub.s32 %v429, %v521
  %v523 = vrot.slane %v152, %v522
  %v524 = vsel %vm434, %v523, %v519
  %v525 = vlaneseq
  %v526 = vshrl.u32 %v525, 7
  %v527 = vsub.s32 %v436, %v526
  %v528 = vrot.slane %v155, %v527
  %v529 = vsel %vm441, %v528, %v524
  %v530 = vlaneseq
  %v531 = vshrl.u32 %v530, 7
  %v532 = vsub.s32 %v443, %v531
  %v533 = vrot.slane %v158, %v532
  %v534 = vsel %vm448, %v533, %v529
  %v535 = vlaneseq
  %v536 = vshrl.u32 %v535, 7
  %v537 = vsub.s32 %v450, %v536
  %v538 = vrot.slane %v161, %v537
  %v539 = vsel %vm455, %v538, %v534
  %v540 = vlaneseq
  %v541 = vshrl.u32 %v540, 7
  %v542 = vsub.s32 %v457, %v541
  %v543 = vrot.slane %v164, %v542
  %v544 = vsel %vm462, %v543, %v539
  %v545 = vlaneseq
  %v546 = vshrl.u32 %v545, 7
  %v547 = vsub.s32 %v464, %v546
  %v548 = vrot.slane %v167, %v547
  %v549 = vsel %vm469, %v548, %v544
  %v584 = vlaneseq
  %v585 = vshrl.u32 %v584, 7
  %v586 = vsub.s32 %v361, %v585
  %v587 = vrot.slane %v234, %v586
  %v588 = vlaneseq
  %v589 = vshrl.u32 %v588, 7
  %v590 = vsub.s32 %v366, %v589
  %v591 = vrot.slane %v237, %v590
  %v592 = vsel %vm371, %v591, %v587
  %v593 = vlaneseq
  %v594 = vshrl.u32 %v593, 7
  %v595 = vsub.s32 %v373, %v594
  %v596 = vrot.slane %v240, %v595
  %v597 = vsel %vm378, %v596, %v592
  %v598 = vlaneseq
  %v599 = vshrl.u32 %v598, 7
  %v600 = vsub.s32 %v380, %v599
  %v601 = vrot.slane %v243, %v600
  %v602 = vsel %vm385, %v601, %v597
  %v603 = vlaneseq
  %v604 = vshrl.u32 %v603, 7
  %v605 = vsub.s32 %v387, %v604
  %v606 = vrot.slane %v246, %v605
  %v607 = vsel %vm392, %v606, %v602
  %v608 = vlaneseq
  %v609 = vshrl.u32 %v608, 7
  %v610 = vsub.s32 %v394, %v609
  %v611 = vrot.slane %v249, %v610
  %v612 = vsel %vm399, %v611, %v607
  %v613 = vlaneseq
  %v614 = vshrl.u32 %v613, 7
  %v615 = vsub.s32 %v401, %v614
  %v616 = vrot.slane %v252, %v615
  %v617 = vsel %vm406, %v616, %v612
  %v618 = vlaneseq
  %v619 = vshrl.u32 %v618, 7
  %v620 = vsub.s32 %v408, %v619
  %v621 = vrot.slane %v255, %v620
  %v622 = vsel %vm413, %v621, %v617
  %v623 = vlaneseq
  %v624 = vshrl.u32 %v623, 7
  %v625 = vsub.s32 %v415, %v624
  %v626 = vrot.slane %v258, %v625
  %v627 = vsel %vm420, %v626, %v622
  %v628 = vlaneseq
  %v629 = vshrl.u32 %v628, 7
  %v630 = vsub.s32 %v422, %v629
  %v631 = vrot.slane %v261, %v630
  %v632 = vsel %vm427, %v631, %v627
  %v633 = vlaneseq
  %v634 = vshrl.u32 %v633, 7
  %v635 = vsub.s32 %v429, %v634
  %v636 = vrot.slane %v264, %v635
  %v637 = vsel %vm434, %v636, %v632
  %v638 = vlaneseq
  %v639 = vshrl.u32 %v638, 7
  %v640 = vsub.s32 %v436, %v639
  %v641 = vrot.slane %v267, %v640
  %v642 = vsel %vm441, %v641, %v637
  %v643 = vlaneseq
  %v644 = vshrl.u32 %v643, 7
  %v645 = vsub.s32 %v443, %v644
  %v646 = vrot.slane %v270, %v645
  %v647 = vsel %vm448, %v646, %v642
  %v648 = vlaneseq
  %v649 = vshrl.u32 %v648, 7
  %v650 = vsub.s32 %v450, %v649
  %v651 = vrot.slane %v273, %v650
  %v652 = vsel %vm455, %v651, %v647
  %v653 = vlaneseq
  %v654 = vshrl.u32 %v653, 7
  %v655 = vsub.s32 %v457, %v654
  %v656 = vrot.slane %v276, %v655
  %v657 = vsel %vm462, %v656, %v652
  %v658 = vlaneseq
  %v659 = vshrl.u32 %v658, 7
  %v660 = vsub.s32 %v464, %v659
  %v661 = vrot.slane %v279, %v660
  %v662 = vsel %vm469, %v661, %v657
  %v663 = vlaneseq
  %v664 = vshrl.u32 %v663, 7
  %v665 = vsub.s32 %v361, %v664
  %v666 = vrot.slane %v282, %v665
  %v667 = vlaneseq
  %v668 = vshrl.u32 %v667, 7
  %v669 = vsub.s32 %v366, %v668
  %v670 = vrot.slane %v285, %v669
  %v671 = vsel %vm371, %v670, %v666
  %v672 = vlaneseq
  %v673 = vshrl.u32 %v672, 7
  %v674 = vsub.s32 %v373, %v673
  %v675 = vrot.slane %v288, %v674
  %v676 = vsel %vm378, %v675, %v671
  %v677 = vlaneseq
  %v678 = vshrl.u32 %v677, 7
  %v679 = vsub.s32 %v380, %v678
  %v680 = vrot.slane %v291, %v679
  %v681 = vsel %vm385, %v680, %v676
  %v682 = vlaneseq
  %v683 = vshrl.u32 %v682, 7
  %v684 = vsub.s32 %v387, %v683
  %v685 = vrot.slane %v294, %v684
  %v686 = vsel %vm392, %v685, %v681
  %v687 = vlaneseq
  %v688 = vshrl.u32 %v687, 7
  %v689 = vsub.s32 %v394, %v688
  %v690 = vrot.slane %v297, %v689
  %v691 = vsel %vm399, %v690, %v686
  %v692 = vlaneseq
  %v693 = vshrl.u32 %v692, 7
  %v694 = vsub.s32 %v401, %v693
  %v695 = vrot.slane %v300, %v694
  %v696 = vsel %vm406, %v695, %v691
  %v697 = vlaneseq
  %v698 = vshrl.u32 %v697, 7
  %v699 = vsub.s32 %v408, %v698
  %v700 = vrot.slane %v303, %v699
  %v701 = vsel %vm413, %v700, %v696
  %v702 = vlaneseq
  %v703 = vshrl.u32 %v702, 7
  %v704 = vsub.s32 %v415, %v703
  %v705 = vrot.slane %v306, %v704
  %v706 = vsel %vm420, %v705, %v701
  %v707 = vlaneseq
  %v708 = vshrl.u32 %v707, 7
  %v709 = vsub.s32 %v422, %v708
  %v710 = vrot.slane %v309, %v709
  %v711 = vsel %vm427, %v710, %v706
  %v712 = vlaneseq
  %v713 = vshrl.u32 %v712, 7
  %v714 = vsub.s32 %v429, %v713
  %v715 = vrot.slane %v312, %v714
  %v716 = vsel %vm434, %v715, %v711
  %v717 = vlaneseq
  %v718 = vshrl.u32 %v717, 7
  %v719 = vsub.s32 %v436, %v718
  %v720 = vrot.slane %v315, %v719
  %v721 = vsel %vm441, %v720, %v716
  %v722 = vlaneseq
  %v723 = vshrl.u32 %v722, 7
  %v724 = vsub.s32 %v443, %v723
  %v725 = vrot.slane %v318, %v724
  %v726 = vsel %vm448, %v725, %v721
  %v727 = vlaneseq
  %v728 = vshrl.u32 %v727, 7
  %v729 = vsub.s32 %v450, %v728
  %v730 = vrot.slane %v321, %v729
  %v731 = vsel %vm455, %v730, %v726
  %v732 = vlaneseq
  %v733 = vshrl.u32 %v732, 7
  %v734 = vsub.s32 %v457, %v733
  %v735 = vrot.slane %v324, %v734
  %v736 = vsel %vm462, %v735, %v731
  %v737 = vlaneseq
  %v738 = vshrl.u32 %v737, 7
  %v739 = vsub.s32 %v464, %v738
  %v740 = vrot.slane %v327, %v739
  %v741 = vsel %vm469, %v740, %v736
  %vm744 = vcmask 1040384
  %v745 = vsel %vm744, %v470, %v662
  %v746 = vsel %vm744, %v549, %v741
  %747 = vst [vmem:[%s1] sm:$0x3] %v745
  %748 = vst [vmem:[%s1 + $0x2] sm:$0x3] %v746
  // Predicated region
  $region6: #{oafilter.4} parent=0 // pred_check
    _
  $region7: #{oafilter.4} parent=0 // pred_check_branch
    %750 = sbr.rel (0) target = $region9
  $region8: #{oafilter.4} parent=0 // pred_region
    _
  $region9: #{oafilter.4} parent=0 // pred_fallthru
    _
  // Predicated region
  $region10: #{oafilter.4} parent=0 // pred_check
    _
  $region11: #{oafilter.4} parent=0 // pred_check_branch
    %752 = sbr.rel (0) target = $region13
  $region12: #{oafilter.4} parent=0 // pred_region
    _
  $region13: #{oafilter.4} parent=0 // pred_fallthru
    _

// kernel: oafilter.5
$region0: #{oafilter.5}
  #allocation0 [shape = 'u32[]', space=smem, size = 0x4, offset = 0x4, fixed_abs, tag = 'smem constant byte address 0x4 - core index']
  #allocation1 [shape = 'u32[144,128]{1,0:T(1,128)}', space=vmem, size = 0x12000, scoped, tag = 'internal scratch']
  %s0 = inlined_call_operand.vmem [shape: f32[2,128,256], index: 0, kind: input, shape index: {}]
  %s1 = inlined_call_operand.vmem [shape: f32[2,128,1], index: 1, kind: input, shape index: {}]
  %s2 = inlined_call_operand.vmem [shape: f32[2,128,1], index: 2, kind: input, shape index: {}]
  %s3 = inlined_call_operand.vmem [shape: bf16[128,128], index: 3, kind: input, shape index: {}]
  %s4 = inlined_call_operand.vmem [shape: f32[128,1], index: 4, kind: input, shape index: {}]
  %s5 = inlined_call_operand.vmem [shape: bf16[2,128,256], index: 5, kind: output, shape index: {0}]
  %s6 = inlined_call_operand.vmem [shape: f32[2,2,256], index: 6, kind: output, shape index: {1}]
  %7 = xla_tuple %s5, %s6
  %s8 = sld [smem:[#allocation0]]
  $region38: #{oafilter.5} parent=0
    _
  %s10 = ssub.s32 1, %s8
  %s11 = scalar_select 0, %s10, %s8
  // Predicated region
  $region2: #{oafilter.5} parent=0 // pred_check
    _
  $region3: #{oafilter.5} parent=0 // pred_check_branch
    %13 = sbr.rel (0) target = $region5
  $region4: #{oafilter.5} parent=0 // pred_region
    _
  $region5: #{oafilter.5} parent=0 // pred_fallthru
    _
  // Predicated region
  $region6: #{oafilter.5} parent=0 // pred_check
    _
  $region7: #{oafilter.5} parent=0 // pred_check_branch
    %15 = sbr.rel (0) target = $region9
  $region8: #{oafilter.5} parent=0 // pred_region
    _
  $region9: #{oafilter.5} parent=0 // pred_fallthru
    _
  // Predicated region
  $region10: #{oafilter.5} parent=0 // pred_check
    _
  $region11: #{oafilter.5} parent=0 // pred_check_branch
    %17 = sbr.rel (0) target = $region13
  $region12: #{oafilter.5} parent=0 // pred_region
    _
  $region13: #{oafilter.5} parent=0 // pred_fallthru
    _
  // Predicated region
  $region14: #{oafilter.5} parent=0 // pred_check
    _
  $region15: #{oafilter.5} parent=0 // pred_check_branch
    %19 = sbr.rel (0) target = $region17
  $region16: #{oafilter.5} parent=0 // pred_region
    _
  $region17: #{oafilter.5} parent=0 // pred_fallthru
    _
  // Predicated region
  $region18: #{oafilter.5} parent=0 // pred_check
    _
  $region19: #{oafilter.5} parent=0 // pred_check_branch
    %21 = sbr.rel (0) target = $region21
  $region20: #{oafilter.5} parent=0 // pred_region
    _
  $region21: #{oafilter.5} parent=0 // pred_fallthru
    _
  %v23 = vld [vmem:[%s3] sm:$0xf]
  %v24 = vld [vmem:[%s3 + $0x4] sm:$0xf]
  %v25 = vld [vmem:[%s3 + $0x8] sm:$0xf]
  %v26 = vld [vmem:[%s3 + $0xc] sm:$0xf]
  %v27 = vld [vmem:[%s3 + $0x10] sm:$0xf]
  %v28 = vld [vmem:[%s3 + $0x14] sm:$0xf]
  %v29 = vld [vmem:[%s3 + $0x18] sm:$0xf]
  %v30 = vld [vmem:[%s3 + $0x1c] sm:$0xf]
  %v31 = vld [vmem:[%s3 + $0x20] sm:$0xf]
  %v32 = vld [vmem:[%s3 + $0x24] sm:$0xf]
  %v33 = vld [vmem:[%s3 + $0x28] sm:$0xf]
  %v34 = vld [vmem:[%s3 + $0x2c] sm:$0xf]
  %v35 = vld [vmem:[%s3 + $0x30] sm:$0xf]
  %v36 = vld [vmem:[%s3 + $0x34] sm:$0xf]
  %v37 = vld [vmem:[%s3 + $0x38] sm:$0xf]
  %v38 = vld [vmem:[%s3 + $0x3c] sm:$0xf]
  %v39 = vld [vmem:[%s4] sm:$0xff]
  %v40 = vld [vmem:[%s4 + $0x8] sm:$0xff]
  %v41 = vld [vmem:[%s4 + $0x10] sm:$0xff]
  %v42 = vld [vmem:[%s4 + $0x18] sm:$0xff]
  %v43 = vld [vmem:[%s4 + $0x20] sm:$0xff]
  %v44 = vld [vmem:[%s4 + $0x28] sm:$0xff]
  %v45 = vld [vmem:[%s4 + $0x30] sm:$0xff]
  %v46 = vld [vmem:[%s4 + $0x38] sm:$0xff]
  %v47 = vld [vmem:[%s4 + $0x40] sm:$0xff]
  %v48 = vld [vmem:[%s4 + $0x48] sm:$0xff]
  %v49 = vld [vmem:[%s4 + $0x50] sm:$0xff]
  %v50 = vld [vmem:[%s4 + $0x58] sm:$0xff]
  %v51 = vld [vmem:[%s4 + $0x60] sm:$0xff]
  %v52 = vld [vmem:[%s4 + $0x68] sm:$0xff]
  %v53 = vld [vmem:[%s4 + $0x70] sm:$0xff]
  %v54 = vld [vmem:[%s4 + $0x78] sm:$0xff]
  %v55 = vld [vmem:[%s0] sm:$0xff]
  %v56 = vld [vmem:[%s0 + $0x8] sm:$0xff]
  %v57 = vld [vmem:[%s0 + $0x10] sm:$0xff]
  %v58 = vld [vmem:[%s0 + $0x18] sm:$0xff]
  %v59 = vld [vmem:[%s0 + $0x20] sm:$0xff]
  %v60 = vld [vmem:[%s0 + $0x28] sm:$0xff]
  %v61 = vld [vmem:[%s0 + $0x30] sm:$0xff]
  %v62 = vld [vmem:[%s0 + $0x38] sm:$0xff]
  %v63 = vld [vmem:[%s0 + $0x40] sm:$0xff]
  %v64 = vld [vmem:[%s0 + $0x48] sm:$0xff]
  %v65 = vld [vmem:[%s0 + $0x50] sm:$0xff]
  %v66 = vld [vmem:[%s0 + $0x58] sm:$0xff]
  %v67 = vld [vmem:[%s0 + $0x60] sm:$0xff]
  %v68 = vld [vmem:[%s0 + $0x68] sm:$0xff]
  %v69 = vld [vmem:[%s0 + $0x70] sm:$0xff]
  %v70 = vld [vmem:[%s0 + $0x78] sm:$0xff]
  %v71 = vld [vmem:[%s0 + $0x80] sm:$0xff]
  %v72 = vld [vmem:[%s0 + $0x88] sm:$0xff]
  %v73 = vld [vmem:[%s0 + $0x90] sm:$0xff]
  %v74 = vld [vmem:[%s0 + $0x98] sm:$0xff]
  %v75 = vld [vmem:[%s0 + $0xa0] sm:$0xff]
  %v76 = vld [vmem:[%s0 + $0xa8] sm:$0xff]
  %v77 = vld [vmem:[%s0 + $0xb0] sm:$0xff]
  %v78 = vld [vmem:[%s0 + $0xb8] sm:$0xff]
  %v79 = vld [vmem:[%s0 + $0xc0] sm:$0xff]
  %v80 = vld [vmem:[%s0 + $0xc8] sm:$0xff]
  %v81 = vld [vmem:[%s0 + $0xd0] sm:$0xff]
  %v82 = vld [vmem:[%s0 + $0xd8] sm:$0xff]
  %v83 = vld [vmem:[%s0 + $0xe0] sm:$0xff]
  %v84 = vld [vmem:[%s0 + $0xe8] sm:$0xff]
  %v85 = vld [vmem:[%s0 + $0xf0] sm:$0xff]
  %v86 = vld [vmem:[%s0 + $0xf8] sm:$0xff]
  %v87 = vld [vmem:[%s1] sm:$0xff]
  %v88 = vld [vmem:[%s1 + $0x8] sm:$0xff]
  %v89 = vld [vmem:[%s1 + $0x10] sm:$0xff]
  %v90 = vld [vmem:[%s1 + $0x18] sm:$0xff]
  %v91 = vld [vmem:[%s1 + $0x20] sm:$0xff]
  %v92 = vld [vmem:[%s1 + $0x28] sm:$0xff]
  %v93 = vld [vmem:[%s1 + $0x30] sm:$0xff]
  %v94 = vld [vmem:[%s1 + $0x38] sm:$0xff]
  %v95 = vld [vmem:[%s1 + $0x40] sm:$0xff]
  %v96 = vld [vmem:[%s1 + $0x48] sm:$0xff]
  %v97 = vld [vmem:[%s1 + $0x50] sm:$0xff]
  %v98 = vld [vmem:[%s1 + $0x58] sm:$0xff]
  %v99 = vld [vmem:[%s1 + $0x60] sm:$0xff]
  %v100 = vld [vmem:[%s1 + $0x68] sm:$0xff]
  %v101 = vld [vmem:[%s1 + $0x70] sm:$0xff]
  %v102 = vld [vmem:[%s1 + $0x78] sm:$0xff]
  %104 = vset.pattern.permute.xlu0 0
  %105 = vperm.xlu0 %104, %v87
  %v106 = vpop.permute.xlu0 %105
  %109 = vset.pattern.permute.xlu0 0
  %110 = vperm.xlu0 %109, %v88
  %v111 = vpop.permute.xlu0 %110
  %114 = vset.pattern.permute.xlu0 0
  %115 = vperm.xlu0 %114, %v89
  %v116 = vpop.permute.xlu0 %115
  %119 = vset.pattern.permute.xlu0 0
  %120 = vperm.xlu0 %119, %v90
  %v121 = vpop.permute.xlu0 %120
  %124 = vset.pattern.permute.xlu0 0
  %125 = vperm.xlu0 %124, %v91
  %v126 = vpop.permute.xlu0 %125
  %129 = vset.pattern.permute.xlu0 0
  %130 = vperm.xlu0 %129, %v92
  %v131 = vpop.permute.xlu0 %130
  %134 = vset.pattern.permute.xlu0 0
  %135 = vperm.xlu0 %134, %v93
  %v136 = vpop.permute.xlu0 %135
  %139 = vset.pattern.permute.xlu0 0
  %140 = vperm.xlu0 %139, %v94
  %v141 = vpop.permute.xlu0 %140
  %144 = vset.pattern.permute.xlu0 0
  %145 = vperm.xlu0 %144, %v95
  %v146 = vpop.permute.xlu0 %145
  %149 = vset.pattern.permute.xlu0 0
  %150 = vperm.xlu0 %149, %v96
  %v151 = vpop.permute.xlu0 %150
  %154 = vset.pattern.permute.xlu0 0
  %155 = vperm.xlu0 %154, %v97
  %v156 = vpop.permute.xlu0 %155
  %159 = vset.pattern.permute.xlu0 0
  %160 = vperm.xlu0 %159, %v98
  %v161 = vpop.permute.xlu0 %160
  %164 = vset.pattern.permute.xlu0 0
  %165 = vperm.xlu0 %164, %v99
  %v166 = vpop.permute.xlu0 %165
  %169 = vset.pattern.permute.xlu0 0
  %170 = vperm.xlu0 %169, %v100
  %v171 = vpop.permute.xlu0 %170
  %174 = vset.pattern.permute.xlu0 0
  %175 = vperm.xlu0 %174, %v101
  %v176 = vpop.permute.xlu0 %175
  %179 = vset.pattern.permute.xlu0 0
  %180 = vperm.xlu0 %179, %v102
  %v181 = vpop.permute.xlu0 %180
  %v183 = vmul.f32 %v55, %v106
  %v184 = vmul.f32 %v56, %v106
  %v185 = vmul.f32 %v57, %v111
  %v186 = vmul.f32 %v58, %v111
  %v187 = vmul.f32 %v59, %v116
  %v188 = vmul.f32 %v60, %v116
  %v189 = vmul.f32 %v61, %v121
  %v190 = vmul.f32 %v62, %v121
  %v191 = vmul.f32 %v63, %v126
  %v192 = vmul.f32 %v64, %v126
  %v193 = vmul.f32 %v65, %v131
  %v194 = vmul.f32 %v66, %v131
  %v195 = vmul.f32 %v67, %v136
  %v196 = vmul.f32 %v68, %v136
  %v197 = vmul.f32 %v69, %v141
  %v198 = vmul.f32 %v70, %v141
  %v199 = vmul.f32 %v71, %v146
  %v200 = vmul.f32 %v72, %v146
  %v201 = vmul.f32 %v73, %v151
  %v202 = vmul.f32 %v74, %v151
  %v203 = vmul.f32 %v75, %v156
  %v204 = vmul.f32 %v76, %v156
  %v205 = vmul.f32 %v77, %v161
  %v206 = vmul.f32 %v78, %v161
  %v207 = vmul.f32 %v79, %v166
  %v208 = vmul.f32 %v80, %v166
  %v209 = vmul.f32 %v81, %v171
  %v210 = vmul.f32 %v82, %v171
  %v211 = vmul.f32 %v83, %v176
  %v212 = vmul.f32 %v84, %v176
  %v213 = vmul.f32 %v85, %v181
  %v214 = vmul.f32 %v86, %v181
  %v215 = vld [vmem:[%s2] sm:$0xff]
  %v216 = vld [vmem:[%s2 + $0x8] sm:$0xff]
  %v217 = vld [vmem:[%s2 + $0x10] sm:$0xff]
  %v218 = vld [vmem:[%s2 + $0x18] sm:$0xff]
  %v219 = vld [vmem:[%s2 + $0x20] sm:$0xff]
  %v220 = vld [vmem:[%s2 + $0x28] sm:$0xff]
  %v221 = vld [vmem:[%s2 + $0x30] sm:$0xff]
  %v222 = vld [vmem:[%s2 + $0x38] sm:$0xff]
  %v223 = vld [vmem:[%s2 + $0x40] sm:$0xff]
  %v224 = vld [vmem:[%s2 + $0x48] sm:$0xff]
  %v225 = vld [vmem:[%s2 + $0x50] sm:$0xff]
  %v226 = vld [vmem:[%s2 + $0x58] sm:$0xff]
  %v227 = vld [vmem:[%s2 + $0x60] sm:$0xff]
  %v228 = vld [vmem:[%s2 + $0x68] sm:$0xff]
  %v229 = vld [vmem:[%s2 + $0x70] sm:$0xff]
  %v230 = vld [vmem:[%s2 + $0x78] sm:$0xff]
  %232 = vset.pattern.permute.xlu0 0
  %233 = vperm.xlu0 %232, %v215
  %v234 = vpop.permute.xlu0 %233
  %237 = vset.pattern.permute.xlu0 0
  %238 = vperm.xlu0 %237, %v216
  %v239 = vpop.permute.xlu0 %238
  %242 = vset.pattern.permute.xlu0 0
  %243 = vperm.xlu0 %242, %v217
  %v244 = vpop.permute.xlu0 %243
  %247 = vset.pattern.permute.xlu0 0
  %248 = vperm.xlu0 %247, %v218
  %v249 = vpop.permute.xlu0 %248
  %252 = vset.pattern.permute.xlu0 0
  %253 = vperm.xlu0 %252, %v219
  %v254 = vpop.permute.xlu0 %253
  %257 = vset.pattern.permute.xlu0 0
  %258 = vperm.xlu0 %257, %v220
  %v259 = vpop.permute.xlu0 %258
  %262 = vset.pattern.permute.xlu0 0
  %263 = vperm.xlu0 %262, %v221
  %v264 = vpop.permute.xlu0 %263
  %267 = vset.pattern.permute.xlu0 0
  %268 = vperm.xlu0 %267, %v222
  %v269 = vpop.permute.xlu0 %268
  %272 = vset.pattern.permute.xlu0 0
  %273 = vperm.xlu0 %272, %v223
  %v274 = vpop.permute.xlu0 %273
  %277 = vset.pattern.permute.xlu0 0
  %278 = vperm.xlu0 %277, %v224
  %v279 = vpop.permute.xlu0 %278
  %282 = vset.pattern.permute.xlu0 0
  %283 = vperm.xlu0 %282, %v225
  %v284 = vpop.permute.xlu0 %283
  %287 = vset.pattern.permute.xlu0 0
  %288 = vperm.xlu0 %287, %v226
  %v289 = vpop.permute.xlu0 %288
  %292 = vset.pattern.permute.xlu0 0
  %293 = vperm.xlu0 %292, %v227
  %v294 = vpop.permute.xlu0 %293
  %297 = vset.pattern.permute.xlu0 0
  %298 = vperm.xlu0 %297, %v228
  %v299 = vpop.permute.xlu0 %298
  %302 = vset.pattern.permute.xlu0 0
  %303 = vperm.xlu0 %302, %v229
  %v304 = vpop.permute.xlu0 %303
  %307 = vset.pattern.permute.xlu0 0
  %308 = vperm.xlu0 %307, %v230
  %v309 = vpop.permute.xlu0 %308
  %v311 = vadd.f32 %v183, %v234
  %v312 = vadd.f32 %v184, %v234
  %v313 = vadd.f32 %v185, %v239
  %v314 = vadd.f32 %v186, %v239
  %v315 = vadd.f32 %v187, %v244
  %v316 = vadd.f32 %v188, %v244
  %v317 = vadd.f32 %v189, %v249
  %v318 = vadd.f32 %v190, %v249
  %v319 = vadd.f32 %v191, %v254
  %v320 = vadd.f32 %v192, %v254
  %v321 = vadd.f32 %v193, %v259
  %v322 = vadd.f32 %v194, %v259
  %v323 = vadd.f32 %v195, %v264
  %v324 = vadd.f32 %v196, %v264
  %v325 = vadd.f32 %v197, %v269
  %v326 = vadd.f32 %v198, %v269
  %v327 = vadd.f32 %v199, %v274
  %v328 = vadd.f32 %v200, %v274
  %v329 = vadd.f32 %v201, %v279
  %v330 = vadd.f32 %v202, %v279
  %v331 = vadd.f32 %v203, %v284
  %v332 = vadd.f32 %v204, %v284
  %v333 = vadd.f32 %v205, %v289
  %v334 = vadd.f32 %v206, %v289
  %v335 = vadd.f32 %v207, %v294
  %v336 = vadd.f32 %v208, %v294
  %v337 = vadd.f32 %v209, %v299
  %v338 = vadd.f32 %v210, %v299
  %v339 = vadd.f32 %v211, %v304
  %v340 = vadd.f32 %v212, %v304
  %v341 = vadd.f32 %v213, %v309
  %v342 = vadd.f32 %v214, %v309
  %v343 = vmax.f32 %v311, 0.0
  %v344 = vmax.f32 %v312, 0.0
  %v345 = vmax.f32 %v313, 0.0
  %v346 = vmax.f32 %v314, 0.0
  %v347 = vmax.f32 %v315, 0.0
  %v348 = vmax.f32 %v316, 0.0
  %v349 = vmax.f32 %v317, 0.0
  %v350 = vmax.f32 %v318, 0.0
  %v351 = vmax.f32 %v319, 0.0
  %v352 = vmax.f32 %v320, 0.0
  %v353 = vmax.f32 %v321, 0.0
  %v354 = vmax.f32 %v322, 0.0
  %v355 = vmax.f32 %v323, 0.0
  %v356 = vmax.f32 %v324, 0.0
  %v357 = vmax.f32 %v325, 0.0
  %v358 = vmax.f32 %v326, 0.0
  %v359 = vmax.f32 %v327, 0.0
  %v360 = vmax.f32 %v328, 0.0
  %v361 = vmax.f32 %v329, 0.0
  %v362 = vmax.f32 %v330, 0.0
  %v363 = vmax.f32 %v331, 0.0
  %v364 = vmax.f32 %v332, 0.0
  %v365 = vmax.f32 %v333, 0.0
  %v366 = vmax.f32 %v334, 0.0
  %v367 = vmax.f32 %v335, 0.0
  %v368 = vmax.f32 %v336, 0.0
  %v369 = vmax.f32 %v337, 0.0
  %v370 = vmax.f32 %v338, 0.0
  %v371 = vmax.f32 %v339, 0.0
  %v372 = vmax.f32 %v340, 0.0
  %v373 = vmax.f32 %v341, 0.0
  %v374 = vmax.f32 %v342, 0.0
  %v375 = vpack.c.bf16 %v345, %v343
  %v376 = vpack.c.bf16 %v346, %v344
  %v377 = vpack.c.bf16 %v349, %v347
  %v378 = vpack.c.bf16 %v350, %v348
  %v379 = vpack.c.bf16 %v353, %v351
  %v380 = vpack.c.bf16 %v354, %v352
  %v381 = vpack.c.bf16 %v357, %v355
  %v382 = vpack.c.bf16 %v358, %v356
  %v383 = vpack.c.bf16 %v361, %v359
  %v384 = vpack.c.bf16 %v362, %v360
  %v385 = vpack.c.bf16 %v365, %v363
  %v386 = vpack.c.bf16 %v366, %v364
  %v387 = vpack.c.bf16 %v369, %v367
  %v388 = vpack.c.bf16 %v370, %v368
  %v389 = vpack.c.bf16 %v373, %v371
  %v390 = vpack.c.bf16 %v374, %v372
  %392 = vset.pattern.permute.xlu0 0
  %393 = vperm.xlu0 %392, %v39
  %v394 = vpop.permute.xlu0 %393
  %397 = vset.pattern.permute.xlu0 0
  %398 = vperm.xlu0 %397, %v40
  %v399 = vpop.permute.xlu0 %398
  %402 = vset.pattern.permute.xlu0 0
  %403 = vperm.xlu0 %402, %v41
  %v404 = vpop.permute.xlu0 %403
  %407 = vset.pattern.permute.xlu0 0
  %408 = vperm.xlu0 %407, %v42
  %v409 = vpop.permute.xlu0 %408
  %412 = vset.pattern.permute.xlu0 0
  %413 = vperm.xlu0 %412, %v43
  %v414 = vpop.permute.xlu0 %413
  %417 = vset.pattern.permute.xlu0 0
  %418 = vperm.xlu0 %417, %v44
  %v419 = vpop.permute.xlu0 %418
  %422 = vset.pattern.permute.xlu0 0
  %423 = vperm.xlu0 %422, %v45
  %v424 = vpop.permute.xlu0 %423
  %427 = vset.pattern.permute.xlu0 0
  %428 = vperm.xlu0 %427, %v46
  %v429 = vpop.permute.xlu0 %428
  %432 = vset.pattern.permute.xlu0 0
  %433 = vperm.xlu0 %432, %v47
  %v434 = vpop.permute.xlu0 %433
  %437 = vset.pattern.permute.xlu0 0
  %438 = vperm.xlu0 %437, %v48
  %v439 = vpop.permute.xlu0 %438
  %442 = vset.pattern.permute.xlu0 0
  %443 = vperm.xlu0 %442, %v49
  %v444 = vpop.permute.xlu0 %443
  %447 = vset.pattern.permute.xlu0 0
  %448 = vperm.xlu0 %447, %v50
  %v449 = vpop.permute.xlu0 %448
  %452 = vset.pattern.permute.xlu0 0
  %453 = vperm.xlu0 %452, %v51
  %v454 = vpop.permute.xlu0 %453
  %457 = vset.pattern.permute.xlu0 0
  %458 = vperm.xlu0 %457, %v52
  %v459 = vpop.permute.xlu0 %458
  %462 = vset.pattern.permute.xlu0 0
  %463 = vperm.xlu0 %462, %v53
  %v464 = vpop.permute.xlu0 %463
  %467 = vset.pattern.permute.xlu0 0
  %468 = vperm.xlu0 %467, %v54
  %v469 = vpop.permute.xlu0 %468
  %v487 = vunpack.c.l.b16 %v23
  %v488 = vunpack.c.l.b16 %v24
  %v489 = vunpack.c.l.b16 %v25
  %v490 = vunpack.c.l.b16 %v26
  %v491 = vunpack.c.l.b16 %v27
  %v492 = vunpack.c.l.b16 %v28
  %v493 = vunpack.c.l.b16 %v29
  %v494 = vunpack.c.l.b16 %v30
  %v495 = vunpack.c.l.b16 %v31
  %v496 = vunpack.c.l.b16 %v32
  %v497 = vunpack.c.l.b16 %v33
  %v498 = vunpack.c.l.b16 %v34
  %v499 = vunpack.c.l.b16 %v35
  %v500 = vunpack.c.l.b16 %v36
  %v501 = vunpack.c.l.b16 %v37
  %v502 = vunpack.c.l.b16 %v38
  %v503 = vpack.c.b16 %v488, %v487
  %v504 = vpack.c.b16 %v490, %v489
  %v505 = vpack.c.b16 %v492, %v491
  %v506 = vpack.c.b16 %v494, %v493
  %v507 = vpack.c.b16 %v496, %v495
  %v508 = vpack.c.b16 %v498, %v497
  %v509 = vpack.c.b16 %v500, %v499
  %v510 = vpack.c.b16 %v502, %v501
  %519 = vmatprep.subr.bf16.mxu0 %v376
  %520 = vmatpush1.bf16.msra.mxu0 %v375
  %521 = vmatprep.subr.bf16.mxu0 %v378
  %522 = vmatpush1.bf16.msra.mxu0 %v377
  %523 = vmatprep.subr.bf16.mxu0 %v380
  %524 = vmatpush1.bf16.msra.mxu0 %v379
  %525 = vmatprep.subr.bf16.mxu0 %v382
  %526 = vmatpush1.bf16.msra.mxu0 %v381
  %527 = vmatprep.subr.bf16.mxu0 %v384
  %528 = vmatpush1.bf16.msra.mxu0 %v383
  %529 = vmatprep.subr.bf16.mxu0 %v386
  %530 = vmatpush1.bf16.msra.mxu0 %v385
  %531 = vmatprep.subr.bf16.mxu0 %v388
  %532 = vmatpush1.bf16.msra.mxu0 %v387
  %533 = vmatprep.subr.bf16.mxu0 %v390
  %534 = vmatpush1.bf16.msra.mxu0 %v389
  %535 = vmatprep.subr.bf16.mxu0 0
  %536 = vmatpush1.bf16.msra.mxu0 0
  %537 = vmatprep.subr.bf16.mxu0 0
  %538 = vmatpush1.bf16.msra.mxu0 0
  %539 = vmatprep.subr.bf16.mxu0 0
  %540 = vmatpush1.bf16.msra.mxu0 0
  %541 = vmatprep.subr.bf16.mxu0 0
  %542 = vmatpush1.bf16.msra.mxu0 0
  %543 = vmatprep.subr.bf16.mxu0 0
  %544 = vmatpush1.bf16.msra.mxu0 0
  %545 = vmatprep.subr.bf16.mxu0 0
  %546 = vmatpush1.bf16.msra.mxu0 0
  %547 = vmatprep.subr.bf16.mxu0 0
  %548 = vmatpush1.bf16.msra.mxu0 0
  %549 = vmatprep.subr.bf16.mxu0 0
  %550 = vmatpush1.bf16.msra.mxu0 0
  %551 = vmatprep.mubr.bf16.mxu0 0
  %552 = vmatmul.mubr.bf16.gmra.mrb[0].mxu0 %v503
  %v553 = vpop.f32.mrb[0].mxu0
  %v554 = vadd.f32 %v394, %v553
  %v555 = vpop.f32.mrb[0].mxu0
  %v556 = vadd.f32 %v394, %v555
  %v557 = vpop.f32.mrb[0].mxu0
  %v558 = vadd.f32 %v399, %v557
  %v559 = vpop.f32.mrb[0].mxu0
  %v560 = vadd.f32 %v399, %v559
  %561 = vmatprep.mubr.bf16.mxu0 0
  %562 = vmatmul.mubr.bf16.gmra.mrb[0].mxu0 %v504
  %v563 = vpop.f32.mrb[0].mxu0
  %v564 = vadd.f32 %v404, %v563
  %v565 = vpop.f32.mrb[0].mxu0
  %v566 = vadd.f32 %v404, %v565
  %v567 = vpop.f32.mrb[0].mxu0
  %v568 = vadd.f32 %v409, %v567
  %v569 = vpop.f32.mrb[0].mxu0
  %v570 = vadd.f32 %v409, %v569
  %571 = vmatprep.mubr.bf16.mxu0 0
  %572 = vmatmul.mubr.bf16.gmra.mrb[0].mxu0 %v505
  %v573 = vpop.f32.mrb[0].mxu0
  %v574 = vadd.f32 %v414, %v573
  %v575 = vpop.f32.mrb[0].mxu0
  %v576 = vadd.f32 %v414, %v575
  %v577 = vpop.f32.mrb[0].mxu0
  %v578 = vadd.f32 %v419, %v577
  %v579 = vpop.f32.mrb[0].mxu0
  %v580 = vadd.f32 %v419, %v579
  %581 = vmatprep.mubr.bf16.mxu0 0
  %582 = vmatmul.mubr.bf16.gmra.mrb[0].mxu0 %v506
  %v583 = vpop.f32.mrb[0].mxu0
  %v584 = vadd.f32 %v424, %v583
  %v585 = vpop.f32.mrb[0].mxu0
  %v586 = vadd.f32 %v424, %v585
  %v587 = vpop.f32.mrb[0].mxu0
  %v588 = vadd.f32 %v429, %v587
  %v589 = vpop.f32.mrb[0].mxu0
  %v590 = vadd.f32 %v429, %v589
  %591 = vmatprep.mubr.bf16.mxu0 0
  %592 = vmatmul.mubr.bf16.gmra.mrb[0].mxu0 %v507
  %v593 = vpop.f32.mrb[0].mxu0
  %v594 = vadd.f32 %v434, %v593
  %v595 = vpop.f32.mrb[0].mxu0
  %v596 = vadd.f32 %v434, %v595
  %v597 = vpop.f32.mrb[0].mxu0
  %v598 = vadd.f32 %v439, %v597
  %v599 = vpop.f32.mrb[0].mxu0
  %v600 = vadd.f32 %v439, %v599
  %601 = vmatprep.mubr.bf16.mxu0 0
  %602 = vmatmul.mubr.bf16.gmra.mrb[0].mxu0 %v508
  %v603 = vpop.f32.mrb[0].mxu0
  %v604 = vadd.f32 %v444, %v603
  %v605 = vpop.f32.mrb[0].mxu0
  %v606 = vadd.f32 %v444, %v605
  %v607 = vpop.f32.mrb[0].mxu0
  %v608 = vadd.f32 %v449, %v607
  %v609 = vpop.f32.mrb[0].mxu0
  %v610 = vadd.f32 %v449, %v609
  %611 = vmatprep.mubr.bf16.mxu0 0
  %612 = vmatmul.mubr.bf16.gmra.mrb[0].mxu0 %v509
  %v613 = vpop.f32.mrb[0].mxu0
  %v614 = vadd.f32 %v454, %v613
  %v615 = vpop.f32.mrb[0].mxu0
  %v616 = vadd.f32 %v454, %v615
  %v617 = vpop.f32.mrb[0].mxu0
  %v618 = vadd.f32 %v459, %v617
  %v619 = vpop.f32.mrb[0].mxu0
  %v620 = vadd.f32 %v459, %v619
  %621 = vmatprep.mubr.bf16.mxu0 0
  %622 = vmatmul.mubr.bf16.gmra.mrb[0].mxu0 %v510
  %v623 = vpop.f32.mrb[0].mxu0
  %v624 = vadd.f32 %v464, %v623
  %v625 = vpop.f32.mrb[0].mxu0
  %v626 = vadd.f32 %v464, %v625
  %v627 = vpop.f32.mrb[0].mxu0
  %v628 = vadd.f32 %v469, %v627
  %v629 = vpop.f32.mrb[0].mxu0
  %v630 = vadd.f32 %v469, %v629
  %631 = vdwg.mxu0
  %v632 = vpack.c.bf16 %v558, %v554
  %v633 = vpack.c.bf16 %v560, %v556
  %v634 = vpack.c.bf16 %v568, %v564
  %v635 = vpack.c.bf16 %v570, %v566
  %v636 = vpack.c.bf16 %v578, %v574
  %v637 = vpack.c.bf16 %v580, %v576
  %v638 = vpack.c.bf16 %v588, %v584
  %v639 = vpack.c.bf16 %v590, %v586
  %v640 = vpack.c.bf16 %v598, %v594
  %v641 = vpack.c.bf16 %v600, %v596
  %v642 = vpack.c.bf16 %v608, %v604
  %v643 = vpack.c.bf16 %v610, %v606
  %v644 = vpack.c.bf16 %v618, %v614
  %v645 = vpack.c.bf16 %v620, %v616
  %v646 = vpack.c.bf16 %v628, %v624
  %v647 = vpack.c.bf16 %v630, %v626
  %v664 = vunpack.c.l.b16 %v632
  %v665 = vunpack.c.l.b16 %v633
  %v666 = vunpack.c.h.b16 %v632
  %v667 = vunpack.c.h.b16 %v633
  %v668 = vunpack.c.l.b16 %v634
  %v669 = vunpack.c.l.b16 %v635
  %v670 = vunpack.c.h.b16 %v634
  %v671 = vunpack.c.h.b16 %v635
  %v672 = vunpack.c.l.b16 %v636
  %v673 = vunpack.c.l.b16 %v637
  %v674 = vunpack.c.h.b16 %v636
  %v675 = vunpack.c.h.b16 %v637
  %v676 = vunpack.c.l.b16 %v638
  %v677 = vunpack.c.l.b16 %v639
  %v678 = vunpack.c.h.b16 %v638
  %v679 = vunpack.c.h.b16 %v639
  %v680 = vunpack.c.l.b16 %v640
  %v681 = vunpack.c.l.b16 %v641
  %v682 = vunpack.c.h.b16 %v640
  %v683 = vunpack.c.h.b16 %v641
  %v684 = vunpack.c.l.b16 %v642
  %v685 = vunpack.c.l.b16 %v643
  %v686 = vunpack.c.h.b16 %v642
  %v687 = vunpack.c.h.b16 %v643
  %v688 = vunpack.c.l.b16 %v644
  %v689 = vunpack.c.l.b16 %v645
  %v690 = vunpack.c.h.b16 %v644
  %v691 = vunpack.c.h.b16 %v645
  %v692 = vunpack.c.l.b16 %v646
  %v693 = vunpack.c.l.b16 %v647
  %v694 = vunpack.c.h.b16 %v646
  %v695 = vunpack.c.h.b16 %v647
  %v696 = vpack.c.b16 %v665, %v664
  %v697 = vpack.c.b16 %v667, %v666
  %v698 = vpack.c.b16 %v669, %v668
  %v699 = vpack.c.b16 %v671, %v670
  %v700 = vpack.c.b16 %v673, %v672
  %v701 = vpack.c.b16 %v675, %v674
  %v702 = vpack.c.b16 %v677, %v676
  %v703 = vpack.c.b16 %v679, %v678
  %v704 = vpack.c.b16 %v681, %v680
  %v705 = vpack.c.b16 %v683, %v682
  %v706 = vpack.c.b16 %v685, %v684
  %v707 = vpack.c.b16 %v687, %v686
  %v708 = vpack.c.b16 %v689, %v688
  %v709 = vpack.c.b16 %v691, %v690
  %v710 = vpack.c.b16 %v693, %v692
  %v711 = vpack.c.b16 %v695, %v694
  %728 = vst [vmem:[%s5] sm:$0xff] %v696
  %729 = vst [vmem:[%s5 + $0x8] sm:$0xff] %v697
  %730 = vst [vmem:[%s5 + $0x10] sm:$0xff] %v698
  %731 = vst [vmem:[%s5 + $0x18] sm:$0xff] %v699
  %732 = vst [vmem:[%s5 + $0x20] sm:$0xff] %v700
  %733 = vst [vmem:[%s5 + $0x28] sm:$0xff] %v701
  %734 = vst [vmem:[%s5 + $0x30] sm:$0xff] %v702
  %735 = vst [vmem:[%s5 + $0x38] sm:$0xff] %v703
  %736 = vst [vmem:[%s5 + $0x40] sm:$0xff] %v704
  %737 = vst [vmem:[%s5 + $0x48] sm:$0xff] %v705
  %738 = vst [vmem:[%s5 + $0x50] sm:$0xff] %v706
  %739 = vst [vmem:[%s5 + $0x58] sm:$0xff] %v707
  %740 = vst [vmem:[%s5 + $0x60] sm:$0xff] %v708
  %741 = vst [vmem:[%s5 + $0x68] sm:$0xff] %v709
  %742 = vst [vmem:[%s5 + $0x70] sm:$0xff] %v710
  %743 = vst [vmem:[%s5 + $0x78] sm:$0xff] %v711
  %v744 = vunpack.c.l.bf16 %v632
  %v745 = vunpack.c.l.bf16 %v633
  %v746 = vunpack.c.h.bf16 %v632
  %v747 = vunpack.c.h.bf16 %v633
  %v748 = vunpack.c.l.bf16 %v634
  %v749 = vunpack.c.l.bf16 %v635
  %v750 = vunpack.c.h.bf16 %v634
  %v751 = vunpack.c.h.bf16 %v635
  %v752 = vunpack.c.l.bf16 %v636
  %v753 = vunpack.c.l.bf16 %v637
  %v754 = vunpack.c.h.bf16 %v636
  %v755 = vunpack.c.h.bf16 %v637
  %v756 = vunpack.c.l.bf16 %v638
  %v757 = vunpack.c.l.bf16 %v639
  %v758 = vunpack.c.h.bf16 %v638
  %v759 = vunpack.c.h.bf16 %v639
  %v760 = vunpack.c.l.bf16 %v640
  %v761 = vunpack.c.l.bf16 %v641
  %v762 = vunpack.c.h.bf16 %v640
  %v763 = vunpack.c.h.bf16 %v641
  %v764 = vunpack.c.l.bf16 %v642
  %v765 = vunpack.c.l.bf16 %v643
  %v766 = vunpack.c.h.bf16 %v642
  %v767 = vunpack.c.h.bf16 %v643
  %v768 = vunpack.c.l.bf16 %v644
  %v769 = vunpack.c.l.bf16 %v645
  %v770 = vunpack.c.h.bf16 %v644
  %v771 = vunpack.c.h.bf16 %v645
  %v772 = vunpack.c.l.bf16 %v646
  %v773 = vunpack.c.l.bf16 %v647
  %v774 = vunpack.c.h.bf16 %v646
  %v775 = vunpack.c.h.bf16 %v647
  %v776 = vadd.f32 %v744, %v746
  %v777 = vadd.f32 %v776, %v748
  %v778 = vadd.f32 %v777, %v750
  %v779 = vadd.f32 %v778, %v752
  %v780 = vadd.f32 %v779, %v754
  %v781 = vadd.f32 %v780, %v756
  %v782 = vadd.f32 %v781, %v758
  %v783 = vadd.f32 %v782, %v760
  %v784 = vadd.f32 %v783, %v762
  %v785 = vadd.f32 %v784, %v764
  %v786 = vadd.f32 %v785, %v766
  %v787 = vadd.f32 %v786, %v768
  %v788 = vadd.f32 %v787, %v770
  %v789 = vadd.f32 %v788, %v772
  %v790 = vadd.f32 %v789, %v774
  %v791 = vrot.slane %v790, 4
  %v792 = vadd.f32 %v790, %v791
  %v793 = vrot.slane %v792, 2
  %v794 = vadd.f32 %v792, %v793
  %v795 = vrot.slane %v794, 1
  %v796 = vadd.f32 %v794, %v795
  %v797 = vadd.f32 %v745, %v747
  %v798 = vadd.f32 %v797, %v749
  %v799 = vadd.f32 %v798, %v751
  %v800 = vadd.f32 %v799, %v753
  %v801 = vadd.f32 %v800, %v755
  %v802 = vadd.f32 %v801, %v757
  %v803 = vadd.f32 %v802, %v759
  %v804 = vadd.f32 %v803, %v761
  %v805 = vadd.f32 %v804, %v763
  %v806 = vadd.f32 %v805, %v765
  %v807 = vadd.f32 %v806, %v767
  %v808 = vadd.f32 %v807, %v769
  %v809 = vadd.f32 %v808, %v771
  %v810 = vadd.f32 %v809, %v773
  %v811 = vadd.f32 %v810, %v775
  %v812 = vrot.slane %v811, 4
  %v813 = vadd.f32 %v811, %v812
  %v814 = vrot.slane %v813, 2
  %v815 = vadd.f32 %v813, %v814
  %v816 = vrot.slane %v815, 1
  %v817 = vadd.f32 %v815, %v816
  %v818 = vmul.f32 %v744, %v744
  %v819 = vmul.f32 %v745, %v745
  %v820 = vmul.f32 %v746, %v746
  %v821 = vmul.f32 %v747, %v747
  %v822 = vmul.f32 %v748, %v748
  %v823 = vmul.f32 %v749, %v749
  %v824 = vmul.f32 %v750, %v750
  %v825 = vmul.f32 %v751, %v751
  %v826 = vmul.f32 %v752, %v752
  %v827 = vmul.f32 %v753, %v753
  %v828 = vmul.f32 %v754, %v754
  %v829 = vmul.f32 %v755, %v755
  %v830 = vmul.f32 %v756, %v756
  %v831 = vmul.f32 %v757, %v757
  %v832 = vmul.f32 %v758, %v758
  %v833 = vmul.f32 %v759, %v759
  %v834 = vmul.f32 %v760, %v760
  %v835 = vmul.f32 %v761, %v761
  %v836 = vmul.f32 %v762, %v762
  %v837 = vmul.f32 %v763, %v763
  %v838 = vmul.f32 %v764, %v764
  %v839 = vmul.f32 %v765, %v765
  %v840 = vmul.f32 %v766, %v766
  %v841 = vmul.f32 %v767, %v767
  %v842 = vmul.f32 %v768, %v768
  %v843 = vmul.f32 %v769, %v769
  %v844 = vmul.f32 %v770, %v770
  %v845 = vmul.f32 %v771, %v771
  %v846 = vmul.f32 %v772, %v772
  %v847 = vmul.f32 %v773, %v773
  %v848 = vmul.f32 %v774, %v774
  %v849 = vmul.f32 %v775, %v775
  %v850 = vadd.f32 %v818, %v820
  %v851 = vadd.f32 %v850, %v822
  %v852 = vadd.f32 %v851, %v824
  %v853 = vadd.f32 %v852, %v826
  %v854 = vadd.f32 %v853, %v828
  %v855 = vadd.f32 %v854, %v830
  %v856 = vadd.f32 %v855, %v832
  %v857 = vadd.f32 %v856, %v834
  %v858 = vadd.f32 %v857, %v836
  %v859 = vadd.f32 %v858, %v838
  %v860 = vadd.f32 %v859, %v840
  %v861 = vadd.f32 %v860, %v842
  %v862 = vadd.f32 %v861, %v844
  %v863 = vadd.f32 %v862, %v846
  %v864 = vadd.f32 %v863, %v848
  %v865 = vrot.slane %v864, 4
  %v866 = vadd.f32 %v864, %v865
  %v867 = vrot.slane %v866, 2
  %v868 = vadd.f32 %v866, %v867
  %v869 = vrot.slane %v868, 1
  %v870 = vadd.f32 %v868, %v869
  %v871 = vadd.f32 %v819, %v821
  %v872 = vadd.f32 %v871, %v823
  %v873 = vadd.f32 %v872, %v825
  %v874 = vadd.f32 %v873, %v827
  %v875 = vadd.f32 %v874, %v829
  %v876 = vadd.f32 %v875, %v831
  %v877 = vadd.f32 %v876, %v833
  %v878 = vadd.f32 %v877, %v835
  %v879 = vadd.f32 %v878, %v837
  %v880 = vadd.f32 %v879, %v839
  %v881 = vadd.f32 %v880, %v841
  %v882 = vadd.f32 %v881, %v843
  %v883 = vadd.f32 %v882, %v845
  %v884 = vadd.f32 %v883, %v847
  %v885 = vadd.f32 %v884, %v849
  %v886 = vrot.slane %v885, 4
  %v887 = vadd.f32 %v885, %v886
  %v888 = vrot.slane %v887, 2
  %v889 = vadd.f32 %v887, %v888
  %v890 = vrot.slane %v889, 1
  %v891 = vadd.f32 %v889, %v890
  %vm892 = vcmask 1040384
  %v893 = vsel %vm892, %v796, %v870
  %v894 = vsel %vm892, %v817, %v891
  %v897 = vcombine.low %v893, %v894
  %v899 = vunpack.c.l.s4 1983009808
  %v900 = vunpack.c.0.s8 %v899
  %v901 = vlaneseq
  %v902 = vshrl.u32 %v901, 7
  %v903 = vsub.s32 %v900, %v902
  %v904 = vrot.slane %v897, %v903
  %906 = vst [vmem:[%s6] sm:$0xf] %v904
  %s907 = scalar_lea.vmem %s0, 256
  %v908 = vld [vmem:[%s907] sm:$0xff]
  %v909 = vld [vmem:[%s907 + $0x8] sm:$0xff]
  %v910 = vld [vmem:[%s907 + $0x10] sm:$0xff]
  %v911 = vld [vmem:[%s907 + $0x18] sm:$0xff]
  %v912 = vld [vmem:[%s907 + $0x20] sm:$0xff]
  %v913 = vld [vmem:[%s907 + $0x28] sm:$0xff]
  %v914 = vld [vmem:[%s907 + $0x30] sm:$0xff]
  %v915 = vld [vmem:[%s907 + $0x38] sm:$0xff]
  %v916 = vld [vmem:[%s907 + $0x40] sm:$0xff]
  %v917 = vld [vmem:[%s907 + $0x48] sm:$0xff]
  %v918 = vld [vmem:[%s907 + $0x50] sm:$0xff]
  %v919 = vld [vmem:[%s907 + $0x58] sm:$0xff]
  %v920 = vld [vmem:[%s907 + $0x60] sm:$0xff]
  %v921 = vld [vmem:[%s907 + $0x68] sm:$0xff]
  %v922 = vld [vmem:[%s907 + $0x70] sm:$0xff]
  %v923 = vld [vmem:[%s907 + $0x78] sm:$0xff]
  %v924 = vld [vmem:[%s907 + $0x80] sm:$0xff]
  %v925 = vld [vmem:[%s907 + $0x88] sm:$0xff]
  %v926 = vld [vmem:[%s907 + $0x90] sm:$0xff]
  %v927 = vld [vmem:[%s907 + $0x98] sm:$0xff]
  %v928 = vld [vmem:[%s907 + $0xa0] sm:$0xff]
  %v929 = vld [vmem:[%s907 + $0xa8] sm:$0xff]
  %v930 = vld [vmem:[%s907 + $0xb0] sm:$0xff]
  %v931 = vld [vmem:[%s907 + $0xb8] sm:$0xff]
  %v932 = vld [vmem:[%s907 + $0xc0] sm:$0xff]
  %v933 = vld [vmem:[%s907 + $0xc8] sm:$0xff]
  %v934 = vld [vmem:[%s907 + $0xd0] sm:$0xff]
  %v935 = vld [vmem:[%s907 + $0xd8] sm:$0xff]
  %v936 = vld [vmem:[%s907 + $0xe0] sm:$0xff]
  %v937 = vld [vmem:[%s907 + $0xe8] sm:$0xff]
  %v938 = vld [vmem:[%s907 + $0xf0] sm:$0xff]
  %v939 = vld [vmem:[%s907 + $0xf8] sm:$0xff]
  %s940 = scalar_lea.vmem %s1, 128
  %v941 = vld [vmem:[%s940] sm:$0xff]
  %v942 = vld [vmem:[%s940 + $0x8] sm:$0xff]
  %v943 = vld [vmem:[%s940 + $0x10] sm:$0xff]
  %v944 = vld [vmem:[%s940 + $0x18] sm:$0xff]
  %v945 = vld [vmem:[%s940 + $0x20] sm:$0xff]
  %v946 = vld [vmem:[%s940 + $0x28] sm:$0xff]
  %v947 = vld [vmem:[%s940 + $0x30] sm:$0xff]
  %v948 = vld [vmem:[%s940 + $0x38] sm:$0xff]
  %v949 = vld [vmem:[%s940 + $0x40] sm:$0xff]
  %v950 = vld [vmem:[%s940 + $0x48] sm:$0xff]
  %v951 = vld [vmem:[%s940 + $0x50] sm:$0xff]
  %v952 = vld [vmem:[%s940 + $0x58] sm:$0xff]
  %v953 = vld [vmem:[%s940 + $0x60] sm:$0xff]
  %v954 = vld [vmem:[%s940 + $0x68] sm:$0xff]
  %v955 = vld [vmem:[%s940 + $0x70] sm:$0xff]
  %v956 = vld [vmem:[%s940 + $0x78] sm:$0xff]
  %958 = vset.pattern.permute.xlu0 0
  %959 = vperm.xlu0 %958, %v941
  %v960 = vpop.permute.xlu0 %959
  %963 = vset.pattern.permute.xlu0 0
  %964 = vperm.xlu0 %963, %v942
  %v965 = vpop.permute.xlu0 %964
  %968 = vset.pattern.permute.xlu0 0
  %969 = vperm.xlu0 %968, %v943
  %v970 = vpop.permute.xlu0 %969
  %973 = vset.pattern.permute.xlu0 0
  %974 = vperm.xlu0 %973, %v944
  %v975 = vpop.permute.xlu0 %974
  %978 = vset.pattern.permute.xlu0 0
  %979 = vperm.xlu0 %978, %v945
  %v980 = vpop.permute.xlu0 %979
  %983 = vset.pattern.permute.xlu0 0
  %984 = vperm.xlu0 %983, %v946
  %v985 = vpop.permute.xlu0 %984
  %988 = vset.pattern.permute.xlu0 0
  %989 = vperm.xlu0 %988, %v947
  %v990 = vpop.permute.xlu0 %989
  %993 = vset.pattern.permute.xlu0 0
  %994 = vperm.xlu0 %993, %v948
  %v995 = vpop.permute.xlu0 %994
  %998 = vset.pattern.permute.xlu0 0
  %999 = vperm.xlu0 %998, %v949
  %v1000 = vpop.permute.xlu0 %999
  %1003 = vset.pattern.permute.xlu0 0
  %1004 = vperm.xlu0 %1003, %v950
  %v1005 = vpop.permute.xlu0 %1004
  %1008 = vset.pattern.permute.xlu0 0
  %1009 = vperm.xlu0 %1008, %v951
  %v1010 = vpop.permute.xlu0 %1009
  %1013 = vset.pattern.permute.xlu0 0
  %1014 = vperm.xlu0 %1013, %v952
  %v1015 = vpop.permute.xlu0 %1014
  %1018 = vset.pattern.permute.xlu0 0
  %1019 = vperm.xlu0 %1018, %v953
  %v1020 = vpop.permute.xlu0 %1019
  %1023 = vset.pattern.permute.xlu0 0
  %1024 = vperm.xlu0 %1023, %v954
  %v1025 = vpop.permute.xlu0 %1024
  %1028 = vset.pattern.permute.xlu0 0
  %1029 = vperm.xlu0 %1028, %v955
  %v1030 = vpop.permute.xlu0 %1029
  %1033 = vset.pattern.permute.xlu0 0
  %1034 = vperm.xlu0 %1033, %v956
  %v1035 = vpop.permute.xlu0 %1034
  %v1037 = vmul.f32 %v908, %v960
  %v1038 = vmul.f32 %v909, %v960
  %v1039 = vmul.f32 %v910, %v965
  %v1040 = vmul.f32 %v911, %v965
  %v1041 = vmul.f32 %v912, %v970
  %v1042 = vmul.f32 %v913, %v970
  %v1043 = vmul.f32 %v914, %v975
  %v1044 = vmul.f32 %v915, %v975
  %v1045 = vmul.f32 %v916, %v980
  %v1046 = vmul.f32 %v917, %v980
  %v1047 = vmul.f32 %v918, %v985
  %v1048 = vmul.f32 %v919, %v985
  %v1049 = vmul.f32 %v920, %v990
  %v1050 = vmul.f32 %v921, %v990
  %v1051 = vmul.f32 %v922, %v995
  %v1052 = vmul.f32 %v923, %v995
  %v1053 = vmul.f32 %v924, %v1000
  %v1054 = vmul.f32 %v925, %v1000
  %v1055 = vmul.f32 %v926, %v1005
  %v1056 = vmul.f32 %v927, %v1005
  %v1057 = vmul.f32 %v928, %v1010
  %v1058 = vmul.f32 %v929, %v1010
  %v1059 = vmul.f32 %v930, %v1015
  %v1060 = vmul.f32 %v931, %v1015
  %v1061 = vmul.f32 %v932, %v1020
  %v1062 = vmul.f32 %v933, %v1020
  %v1063 = vmul.f32 %v934, %v1025
  %v1064 = vmul.f32 %v935, %v1025
  %v1065 = vmul.f32 %v936, %v1030
  %v1066 = vmul.f32 %v937, %v1030
  %v1067 = vmul.f32 %v938, %v1035
  %v1068 = vmul.f32 %v939, %v1035
  %s1069 = scalar_lea.vmem %s2, 128
  %v1070 = vld [vmem:[%s1069] sm:$0xff]
  %v1071 = vld [vmem:[%s1069 + $0x8] sm:$0xff]
  %v1072 = vld [vmem:[%s1069 + $0x10] sm:$0xff]
  %v1073 = vld [vmem:[%s1069 + $0x18] sm:$0xff]
  %v1074 = vld [vmem:[%s1069 + $0x20] sm:$0xff]
  %v1075 = vld [vmem:[%s1069 + $0x28] sm:$0xff]
  %v1076 = vld [vmem:[%s1069 + $0x30] sm:$0xff]
  %v1077 = vld [vmem:[%s1069 + $0x38] sm:$0xff]
  %v1078 = vld [vmem:[%s1069 + $0x40] sm:$0xff]
  %v1079 = vld [vmem:[%s1069 + $0x48] sm:$0xff]
  %v1080 = vld [vmem:[%s1069 + $0x50] sm:$0xff]
  %v1081 = vld [vmem:[%s1069 + $0x58] sm:$0xff]
  %v1082 = vld [vmem:[%s1069 + $0x60] sm:$0xff]
  %v1083 = vld [vmem:[%s1069 + $0x68] sm:$0xff]
  %v1084 = vld [vmem:[%s1069 + $0x70] sm:$0xff]
  %v1085 = vld [vmem:[%s1069 + $0x78] sm:$0xff]
  %1087 = vset.pattern.permute.xlu0 0
  %1088 = vperm.xlu0 %1087, %v1070
  %v1089 = vpop.permute.xlu0 %1088
  %1092 = vset.pattern.permute.xlu0 0
  %1093 = vperm.xlu0 %1092, %v1071
  %v1094 = vpop.permute.xlu0 %1093
  %1097 = vset.pattern.permute.xlu0 0
  %1098 = vperm.xlu0 %1097, %v1072
  %v1099 = vpop.permute.xlu0 %1098
  %1102 = vset.pattern.permute.xlu0 0
  %1103 = vperm.xlu0 %1102, %v1073
  %v1104 = vpop.permute.xlu0 %1103
  %1107 = vset.pattern.permute.xlu0 0
  %1108 = vperm.xlu0 %1107, %v1074
  %v1109 = vpop.permute.xlu0 %1108
  %1112 = vset.pattern.permute.xlu0 0
  %1113 = vperm.xlu0 %1112, %v1075
  %v1114 = vpop.permute.xlu0 %1113
  %1117 = vset.pattern.permute.xlu0 0
  %1118 = vperm.xlu0 %1117, %v1076
  %v1119 = vpop.permute.xlu0 %1118
  %1122 = vset.pattern.permute.xlu0 0
  %1123 = vperm.xlu0 %1122, %v1077
  %v1124 = vpop.permute.xlu0 %1123
  %1127 = vset.pattern.permute.xlu0 0
  %1128 = vperm.xlu0 %1127, %v1078
  %v1129 = vpop.permute.xlu0 %1128
  %1132 = vset.pattern.permute.xlu0 0
  %1133 = vperm.xlu0 %1132, %v1079
  %v1134 = vpop.permute.xlu0 %1133
  %1137 = vset.pattern.permute.xlu0 0
  %1138 = vperm.xlu0 %1137, %v1080
  %v1139 = vpop.permute.xlu0 %1138
  %1142 = vset.pattern.permute.xlu0 0
  %1143 = vperm.xlu0 %1142, %v1081
  %v1144 = vpop.permute.xlu0 %1143
  %1147 = vset.pattern.permute.xlu0 0
  %1148 = vperm.xlu0 %1147, %v1082
  %v1149 = vpop.permute.xlu0 %1148
  %1152 = vset.pattern.permute.xlu0 0
  %1153 = vperm.xlu0 %1152, %v1083
  %v1154 = vpop.permute.xlu0 %1153
  %1157 = vset.pattern.permute.xlu0 0
  %1158 = vperm.xlu0 %1157, %v1084
  %v1159 = vpop.permute.xlu0 %1158
  %1162 = vset.pattern.permute.xlu0 0
  %1163 = vperm.xlu0 %1162, %v1085
  %v1164 = vpop.permute.xlu0 %1163
  %v1166 = vadd.f32 %v1037, %v1089
  %v1167 = vadd.f32 %v1038, %v1089
  %v1168 = vadd.f32 %v1039, %v1094
  %v1169 = vadd.f32 %v1040, %v1094
  %v1170 = vadd.f32 %v1041, %v1099
  %v1171 = vadd.f32 %v1042, %v1099
  %v1172 = vadd.f32 %v1043, %v1104
  %v1173 = vadd.f32 %v1044, %v1104
  %v1174 = vadd.f32 %v1045, %v1109
  %v1175 = vadd.f32 %v1046, %v1109
  %v1176 = vadd.f32 %v1047, %v1114
  %v1177 = vadd.f32 %v1048, %v1114
  %v1178 = vadd.f32 %v1049, %v1119
  %v1179 = vadd.f32 %v1050, %v1119
  %v1180 = vadd.f32 %v1051, %v1124
  %v1181 = vadd.f32 %v1052, %v1124
  %v1182 = vadd.f32 %v1053, %v1129
  %v1183 = vadd.f32 %v1054, %v1129
  %v1184 = vadd.f32 %v1055, %v1134
  %v1185 = vadd.f32 %v1056, %v1134
  %v1186 = vadd.f32 %v1057, %v1139
  %v1187 = vadd.f32 %v1058, %v1139
  %v1188 = vadd.f32 %v1059, %v1144
  %v1189 = vadd.f32 %v1060, %v1144
  %v1190 = vadd.f32 %v1061, %v1149
  %v1191 = vadd.f32 %v1062, %v1149
  %v1192 = vadd.f32 %v1063, %v1154
  %v1193 = vadd.f32 %v1064, %v1154
  %v1194 = vadd.f32 %v1065, %v1159
  %v1195 = vadd.f32 %v1066, %v1159
  %v1196 = vadd.f32 %v1067, %v1164
  %v1197 = vadd.f32 %v1068, %v1164
  %v1198 = vmax.f32 %v1166, 0.0
  %v1199 = vmax.f32 %v1167, 0.0
  %v1200 = vmax.f32 %v1168, 0.0
  %v1201 = vmax.f32 %v1169, 0.0
  %v1202 = vmax.f32 %v1170, 0.0
  %v1203 = vmax.f32 %v1171, 0.0
  %v1204 = vmax.f32 %v1172, 0.0
  %v1205 = vmax.f32 %v1173, 0.0
  %v1206 = vmax.f32 %v1174, 0.0
  %v1207 = vmax.f32 %v1175, 0.0
  %v1208 = vmax.f32 %v1176, 0.0
  %v1209 = vmax.f32 %v1177, 0.0
  %v1210 = vmax.f32 %v1178, 0.0
  %v1211 = vmax.f32 %v1179, 0.0
  %v1212 = vmax.f32 %v1180, 0.0
  %v1213 = vmax.f32 %v1181, 0.0
  %v1214 = vmax.f32 %v1182, 0.0
  %v1215 = vmax.f32 %v1183, 0.0
  %v1216 = vmax.f32 %v1184, 0.0
  %v1217 = vmax.f32 %v1185, 0.0
  %v1218 = vmax.f32 %v1186, 0.0
  %v1219 = vmax.f32 %v1187, 0.0
  %v1220 = vmax.f32 %v1188, 0.0
  %v1221 = vmax.f32 %v1189, 0.0
  %v1222 = vmax.f32 %v1190, 0.0
  %v1223 = vmax.f32 %v1191, 0.0
  %v1224 = vmax.f32 %v1192, 0.0
  %v1225 = vmax.f32 %v1193, 0.0
  %v1226 = vmax.f32 %v1194, 0.0
  %v1227 = vmax.f32 %v1195, 0.0
  %v1228 = vmax.f32 %v1196, 0.0
  %v1229 = vmax.f32 %v1197, 0.0
  %v1230 = vpack.c.bf16 %v1200, %v1198
  %v1231 = vpack.c.bf16 %v1201, %v1199
  %v1232 = vpack.c.bf16 %v1204, %v1202
  %v1233 = vpack.c.bf16 %v1205, %v1203
  %v1234 = vpack.c.bf16 %v1208, %v1206
  %v1235 = vpack.c.bf16 %v1209, %v1207
  %v1236 = vpack.c.bf16 %v1212, %v1210
  %v1237 = vpack.c.bf16 %v1213, %v1211
  %v1238 = vpack.c.bf16 %v1216, %v1214
  %v1239 = vpack.c.bf16 %v1217, %v1215
  %v1240 = vpack.c.bf16 %v1220, %v1218
  %v1241 = vpack.c.bf16 %v1221, %v1219
  %v1242 = vpack.c.bf16 %v1224, %v1222
  %v1243 = vpack.c.bf16 %v1225, %v1223
  %v1244 = vpack.c.bf16 %v1228, %v1226
  %v1245 = vpack.c.bf16 %v1229, %v1227
  %1246 = vmatprep.subr.bf16.mxu0 %v1231
  %1247 = vmatpush1.bf16.msra.mxu0 %v1230
  %1248 = vmatprep.subr.bf16.mxu0 %v1233
  %1249 = vmatpush1.bf16.msra.mxu0 %v1232
  %1250 = vmatprep.subr.bf16.mxu0 %v1235
  %1251 = vmatpush1.bf16.msra.mxu0 %v1234
  %1252 = vmatprep.subr.bf16.mxu0 %v1237
  %1253 = vmatpush1.bf16.msra.mxu0 %v1236
  %1254 = vmatprep.subr.bf16.mxu0 %v1239
  %1255 = vmatpush1.bf16.msra.mxu0 %v1238
  %1256 = vmatprep.subr.bf16.mxu0 %v1241
  %1257 = vmatpush1.bf16.msra.mxu0 %v1240
  %1258 = vmatprep.subr.bf16.mxu0 %v1243
  %1259 = vmatpush1.bf16.msra.mxu0 %v1242
  %1260 = vmatprep.subr.bf16.mxu0 %v1245
  %1261 = vmatpush1.bf16.msra.mxu0 %v1244
  %1262 = vmatprep.subr.bf16.mxu0 0
  %1263 = vmatpush1.bf16.msra.mxu0 0
  %1264 = vmatprep.subr.bf16.mxu0 0
  %1265 = vmatpush1.bf16.msra.mxu0 0
  %1266 = vmatprep.subr.bf16.mxu0 0
  %1267 = vmatpush1.bf16.msra.mxu0 0
  %1268 = vmatprep.subr.bf16.mxu0 0
  %1269 = vmatpush1.bf16.msra.mxu0 0
  %1270 = vmatprep.subr.bf16.mxu0 0
  %1271 = vmatpush1.bf16.msra.mxu0 0
  %1272 = vmatprep.subr.bf16.mxu0 0
  %1273 = vmatpush1.bf16.msra.mxu0 0
  %1274 = vmatprep.subr.bf16.mxu0 0
  %1275 = vmatpush1.bf16.msra.mxu0 0
  %1276 = vmatprep.subr.bf16.mxu0 0
  %1277 = vmatpush1.bf16.msra.mxu0 0
  %1278 = vmatprep.mubr.bf16.mxu0 0
  %1279 = vmatmul.mubr.bf16.gmra.mrb[0].mxu0 %v503
  %v1280 = vpop.f32.mrb[0].mxu0
  %v1281 = vadd.f32 %v394, %v1280
  %v1282 = vpop.f32.mrb[0].mxu0
  %v1283 = vadd.f32 %v394, %v1282
  %v1284 = vpop.f32.mrb[0].mxu0
  %v1285 = vadd.f32 %v399, %v1284
  %v1286 = vpop.f32.mrb[0].mxu0
  %v1287 = vadd.f32 %v399, %v1286
  %1288 = vmatprep.mubr.bf16.mxu0 0
  %1289 = vmatmul.mubr.bf16.gmra.mrb[0].mxu0 %v504
  %v1290 = vpop.f32.mrb[0].mxu0
  %v1291 = vadd.f32 %v404, %v1290
  %v1292 = vpop.f32.mrb[0].mxu0
  %v1293 = vadd.f32 %v404, %v1292
  %v1294 = vpop.f32.mrb[0].mxu0
  %v1295 = vadd.f32 %v409, %v1294
  %v1296 = vpop.f32.mrb[0].mxu0
  %v1297 = vadd.f32 %v409, %v1296
  %1298 = vmatprep.mubr.bf16.mxu0 0
  %1299 = vmatmul.mubr.bf16.gmra.mrb[0].mxu0 %v505
  %v1300 = vpop.f32.mrb[0].mxu0
  %v1301 = vadd.f32 %v414, %v1300
  %v1302 = vpop.f32.mrb[0].mxu0
  %v1303 = vadd.f32 %v414, %v1302
  %v1304 = vpop.f32.mrb[0].mxu0
  %v1305 = vadd.f32 %v419, %v1304
  %v1306 = vpop.f32.mrb[0].mxu0
  %v1307 = vadd.f32 %v419, %v1306
  %1308 = vmatprep.mubr.bf16.mxu0 0
  %1309 = vmatmul.mubr.bf16.gmra.mrb[0].mxu0 %v506
  %v1310 = vpop.f32.mrb[0].mxu0
  %v1311 = vadd.f32 %v424, %v1310
  %v1312 = vpop.f32.mrb[0].mxu0
  %v1313 = vadd.f32 %v424, %v1312
  %v1314 = vpop.f32.mrb[0].mxu0
  %v1315 = vadd.f32 %v429, %v1314
  %v1316 = vpop.f32.mrb[0].mxu0
  %v1317 = vadd.f32 %v429, %v1316
  %1318 = vmatprep.mubr.bf16.mxu0 0
  %1319 = vmatmul.mubr.bf16.gmra.mrb[0].mxu0 %v507
  %v1320 = vpop.f32.mrb[0].mxu0
  %v1321 = vadd.f32 %v434, %v1320
  %v1322 = vpop.f32.mrb[0].mxu0
  %v1323 = vadd.f32 %v434, %v1322
  %v1324 = vpop.f32.mrb[0].mxu0
  %v1325 = vadd.f32 %v439, %v1324
  %v1326 = vpop.f32.mrb[0].mxu0
  %v1327 = vadd.f32 %v439, %v1326
  %1328 = vmatprep.mubr.bf16.mxu0 0
  %1329 = vmatmul.mubr.bf16.gmra.mrb[0].mxu0 %v508
  %v1330 = vpop.f32.mrb[0].mxu0
  %v1331 = vadd.f32 %v444, %v1330
  %v1332 = vpop.f32.mrb[0].mxu0
  %v1333 = vadd.f32 %v444, %v1332
  %v1334 = vpop.f32.mrb[0].mxu0
  %v1335 = vadd.f32 %v449, %v1334
  %v1336 = vpop.f32.mrb[0].mxu0
  %v1337 = vadd.f32 %v449, %v1336
  %1338 = vmatprep.mubr.bf16.mxu0 0
  %1339 = vmatmul.mubr.bf16.gmra.mrb[0].mxu0 %v509
  %v1340 = vpop.f32.mrb[0].mxu0
  %v1341 = vadd.f32 %v454, %v1340
  %v1342 = vpop.f32.mrb[0].mxu0
  %v1343 = vadd.f32 %v454, %v1342
  %v1344 = vpop.f32.mrb[0].mxu0
  %v1345 = vadd.f32 %v459, %v1344
  %v1346 = vpop.f32.mrb[0].mxu0
  %v1347 = vadd.f32 %v459, %v1346
  %1348 = vmatprep.mubr.bf16.mxu0 0
  %1349 = vmatmul.mubr.bf16.gmra.mrb[0].mxu0 %v510
  %v1350 = vpop.f32.mrb[0].mxu0
  %v1351 = vadd.f32 %v464, %v1350
  %v1352 = vpop.f32.mrb[0].mxu0
  %v1353 = vadd.f32 %v464, %v1352
  %v1354 = vpop.f32.mrb[0].mxu0
  %v1355 = vadd.f32 %v469, %v1354
  %v1356 = vpop.f32.mrb[0].mxu0
  %v1357 = vadd.f32 %v469, %v1356
  %1358 = vdwg.mxu0
  %v1359 = vpack.c.bf16 %v1285, %v1281
  %v1360 = vpack.c.bf16 %v1287, %v1283
  %v1361 = vpack.c.bf16 %v1295, %v1291
  %v1362 = vpack.c.bf16 %v1297, %v1293
  %v1363 = vpack.c.bf16 %v1305, %v1301
  %v1364 = vpack.c.bf16 %v1307, %v1303
  %v1365 = vpack.c.bf16 %v1315, %v1311
  %v1366 = vpack.c.bf16 %v1317, %v1313
  %v1367 = vpack.c.bf16 %v1325, %v1321
  %v1368 = vpack.c.bf16 %v1327, %v1323
  %v1369 = vpack.c.bf16 %v1335, %v1331
  %v1370 = vpack.c.bf16 %v1337, %v1333
  %v1371 = vpack.c.bf16 %v1345, %v1341
  %v1372 = vpack.c.bf16 %v1347, %v1343
  %v1373 = vpack.c.bf16 %v1355, %v1351
  %v1374 = vpack.c.bf16 %v1357, %v1353
  %v1391 = vunpack.c.l.b16 %v1359
  %v1392 = vunpack.c.l.b16 %v1360
  %v1393 = vunpack.c.h.b16 %v1359
  %v1394 = vunpack.c.h.b16 %v1360
  %v1395 = vunpack.c.l.b16 %v1361
  %v1396 = vunpack.c.l.b16 %v1362
  %v1397 = vunpack.c.h.b16 %v1361
  %v1398 = vunpack.c.h.b16 %v1362
  %v1399 = vunpack.c.l.b16 %v1363
  %v1400 = vunpack.c.l.b16 %v1364
  %v1401 = vunpack.c.h.b16 %v1363
  %v1402 = vunpack.c.h.b16 %v1364
  %v1403 = vunpack.c.l.b16 %v1365
  %v1404 = vunpack.c.l.b16 %v1366
  %v1405 = vunpack.c.h.b16 %v1365
  %v1406 = vunpack.c.h.b16 %v1366
  %v1407 = vunpack.c.l.b16 %v1367
  %v1408 = vunpack.c.l.b16 %v1368
  %v1409 = vunpack.c.h.b16 %v1367
  %v1410 = vunpack.c.h.b16 %v1368
  %v1411 = vunpack.c.l.b16 %v1369
  %v1412 = vunpack.c.l.b16 %v1370
  %v1413 = vunpack.c.h.b16 %v1369
  %v1414 = vunpack.c.h.b16 %v1370
  %v1415 = vunpack.c.l.b16 %v1371
  %v1416 = vunpack.c.l.b16 %v1372
  %v1417 = vunpack.c.h.b16 %v1371
  %v1418 = vunpack.c.h.b16 %v1372
  %v1419 = vunpack.c.l.b16 %v1373
  %v1420 = vunpack.c.l.b16 %v1374
  %v1421 = vunpack.c.h.b16 %v1373
  %v1422 = vunpack.c.h.b16 %v1374
  %v1423 = vpack.c.b16 %v1392, %v1391
  %v1424 = vpack.c.b16 %v1394, %v1393
  %v1425 = vpack.c.b16 %v1396, %v1395
  %v1426 = vpack.c.b16 %v1398, %v1397
  %v1427 = vpack.c.b16 %v1400, %v1399
  %v1428 = vpack.c.b16 %v1402, %v1401
  %v1429 = vpack.c.b16 %v1404, %v1403
  %v1430 = vpack.c.b16 %v1406, %v1405
  %v1431 = vpack.c.b16 %v1408, %v1407
  %v1432 = vpack.c.b16 %v1410, %v1409
  %v1433 = vpack.c.b16 %v1412, %v1411
  %v1434 = vpack.c.b16 %v1414, %v1413
  %v1435 = vpack.c.b16 %v1416, %v1415
  %v1436 = vpack.c.b16 %v1418, %v1417
  %v1437 = vpack.c.b16 %v1420, %v1419
  %v1438 = vpack.c.b16 %v1422, %v1421
  %s1455 = scalar_lea.vmem %s5, 128
  %1456 = vst [vmem:[%s1455] sm:$0xff] %v1423
  %1457 = vst [vmem:[%s1455 + $0x8] sm:$0xff] %v1424
  %1458 = vst [vmem:[%s1455 + $0x10] sm:$0xff] %v1425
  %1459 = vst [vmem:[%s1455 + $0x18] sm:$0xff] %v1426
  %1460 = vst [vmem:[%s1455 + $0x20] sm:$0xff] %v1427
  %1461 = vst [vmem:[%s1455 + $0x28] sm:$0xff] %v1428
  %1462 = vst [vmem:[%s1455 + $0x30] sm:$0xff] %v1429
  %1463 = vst [vmem:[%s1455 + $0x38] sm:$0xff] %v1430
  %1464 = vst [vmem:[%s1455 + $0x40] sm:$0xff] %v1431
  %1465 = vst [vmem:[%s1455 + $0x48] sm:$0xff] %v1432
  %1466 = vst [vmem:[%s1455 + $0x50] sm:$0xff] %v1433
  %1467 = vst [vmem:[%s1455 + $0x58] sm:$0xff] %v1434
  %1468 = vst [vmem:[%s1455 + $0x60] sm:$0xff] %v1435
  %1469 = vst [vmem:[%s1455 + $0x68] sm:$0xff] %v1436
  %1470 = vst [vmem:[%s1455 + $0x70] sm:$0xff] %v1437
  %1471 = vst [vmem:[%s1455 + $0x78] sm:$0xff] %v1438
  %v1472 = vunpack.c.l.bf16 %v1359
  %v1473 = vunpack.c.l.bf16 %v1360
  %v1474 = vunpack.c.h.bf16 %v1359
  %v1475 = vunpack.c.h.bf16 %v1360
  %v1476 = vunpack.c.l.bf16 %v1361
  %v1477 = vunpack.c.l.bf16 %v1362
  %v1478 = vunpack.c.h.bf16 %v1361
  %v1479 = vunpack.c.h.bf16 %v1362
  %v1480 = vunpack.c.l.bf16 %v1363
  %v1481 = vunpack.c.l.bf16 %v1364
  %v1482 = vunpack.c.h.bf16 %v1363
  %v1483 = vunpack.c.h.bf16 %v1364
  %v1484 = vunpack.c.l.bf16 %v1365
  %v1485 = vunpack.c.l.bf16 %v1366
  %v1486 = vunpack.c.h.bf16 %v1365
  %v1487 = vunpack.c.h.bf16 %v1366
  %v1488 = vunpack.c.l.bf16 %v1367
  %v1489 = vunpack.c.l.bf16 %v1368
  %v1490 = vunpack.c.h.bf16 %v1367
  %v1491 = vunpack.c.h.bf16 %v1368
  %v1492 = vunpack.c.l.bf16 %v1369
  %v1493 = vunpack.c.l.bf16 %v1370
  %v1494 = vunpack.c.h.bf16 %v1369
  %v1495 = vunpack.c.h.bf16 %v1370
  %v1496 = vunpack.c.l.bf16 %v1371
  %v1497 = vunpack.c.l.bf16 %v1372
  %v1498 = vunpack.c.h.bf16 %v1371
  %v1499 = vunpack.c.h.bf16 %v1372
  %v1500 = vunpack.c.l.bf16 %v1373
  %v1501 = vunpack.c.l.bf16 %v1374
  %v1502 = vunpack.c.h.bf16 %v1373
  %v1503 = vunpack.c.h.bf16 %v1374
  %v1504 = vadd.f32 %v1472, %v1474
  %v1505 = vadd.f32 %v1504, %v1476
  %v1506 = vadd.f32 %v1505, %v1478
  %v1507 = vadd.f32 %v1506, %v1480
  %v1508 = vadd.f32 %v1507, %v1482
  %v1509 = vadd.f32 %v1508, %v1484
  %v1510 = vadd.f32 %v1509, %v1486
  %v1511 = vadd.f32 %v1510, %v1488
  %v1512 = vadd.f32 %v1511, %v1490
  %v1513 = vadd.f32 %v1512, %v1492
  %v1514 = vadd.f32 %v1513, %v1494
  %v1515 = vadd.f32 %v1514, %v1496
  %v1516 = vadd.f32 %v1515, %v1498
  %v1517 = vadd.f32 %v1516, %v1500
  %v1518 = vadd.f32 %v1517, %v1502
  %v1519 = vrot.slane %v1518, 4
  %v1520 = vadd.f32 %v1518, %v1519
  %v1521 = vrot.slane %v1520, 2
  %v1522 = vadd.f32 %v1520, %v1521
  %v1523 = vrot.slane %v1522, 1
  %v1524 = vadd.f32 %v1522, %v1523
  %v1525 = vadd.f32 %v1473, %v1475
  %v1526 = vadd.f32 %v1525, %v1477
  %v1527 = vadd.f32 %v1526, %v1479
  %v1528 = vadd.f32 %v1527, %v1481
  %v1529 = vadd.f32 %v1528, %v1483
  %v1530 = vadd.f32 %v1529, %v1485
  %v1531 = vadd.f32 %v1530, %v1487
  %v1532 = vadd.f32 %v1531, %v1489
  %v1533 = vadd.f32 %v1532, %v1491
  %v1534 = vadd.f32 %v1533, %v1493
  %v1535 = vadd.f32 %v1534, %v1495
  %v1536 = vadd.f32 %v1535, %v1497
  %v1537 = vadd.f32 %v1536, %v1499
  %v1538 = vadd.f32 %v1537, %v1501
  %v1539 = vadd.f32 %v1538, %v1503
  %v1540 = vrot.slane %v1539, 4
  %v1541 = vadd.f32 %v1539, %v1540
  %v1542 = vrot.slane %v1541, 2
  %v1543 = vadd.f32 %v1541, %v1542
  %v1544 = vrot.slane %v1543, 1
  %v1545 = vadd.f32 %v1543, %v1544
  %v1546 = vmul.f32 %v1472, %v1472
  %v1547 = vmul.f32 %v1473, %v1473
  %v1548 = vmul.f32 %v1474, %v1474
  %v1549 = vmul.f32 %v1475, %v1475
  %v1550 = vmul.f32 %v1476, %v1476
  %v1551 = vmul.f32 %v1477, %v1477
  %v1552 = vmul.f32 %v1478, %v1478
  %v1553 = vmul.f32 %v1479, %v1479
  %v1554 = vmul.f32 %v1480, %v1480
  %v1555 = vmul.f32 %v1481, %v1481
  %v1556 = vmul.f32 %v1482, %v1482
  %v1557 = vmul.f32 %v1483, %v1483
  %v1558 = vmul.f32 %v1484, %v1484
  %v1559 = vmul.f32 %v1485, %v1485
  %v1560 = vmul.f32 %v1486, %v1486
  %v1561 = vmul.f32 %v1487, %v1487
  %v1562 = vmul.f32 %v1488, %v1488
  %v1563 = vmul.f32 %v1489, %v1489
  %v1564 = vmul.f32 %v1490, %v1490
  %v1565 = vmul.f32 %v1491, %v1491
  %v1566 = vmul.f32 %v1492, %v1492
  %v1567 = vmul.f32 %v1493, %v1493
  %v1568 = vmul.f32 %v1494, %v1494
  %v1569 = vmul.f32 %v1495, %v1495
  %v1570 = vmul.f32 %v1496, %v1496
  %v1571 = vmul.f32 %v1497, %v1497
  %v1572 = vmul.f32 %v1498, %v1498
  %v1573 = vmul.f32 %v1499, %v1499
  %v1574 = vmul.f32 %v1500, %v1500
  %v1575 = vmul.f32 %v1501, %v1501
  %v1576 = vmul.f32 %v1502, %v1502
  %v1577 = vmul.f32 %v1503, %v1503
  %v1578 = vadd.f32 %v1546, %v1548
  %v1579 = vadd.f32 %v1578, %v1550
  %v1580 = vadd.f32 %v1579, %v1552
  %v1581 = vadd.f32 %v1580, %v1554
  %v1582 = vadd.f32 %v1581, %v1556
  %v1583 = vadd.f32 %v1582, %v1558
  %v1584 = vadd.f32 %v1583, %v1560
  %v1585 = vadd.f32 %v1584, %v1562
  %v1586 = vadd.f32 %v1585, %v1564
  %v1587 = vadd.f32 %v1586, %v1566
  %v1588 = vadd.f32 %v1587, %v1568
  %v1589 = vadd.f32 %v1588, %v1570
  %v1590 = vadd.f32 %v1589, %v1572
  %v1591 = vadd.f32 %v1590, %v1574
  %v1592 = vadd.f32 %v1591, %v1576
  %v1593 = vrot.slane %v1592, 4
  %v1594 = vadd.f32 %v1592, %v1593
  %v1595 = vrot.slane %v1594, 2
  %v1596 = vadd.f32 %v1594, %v1595
  %v1597 = vrot.slane %v1596, 1
  %v1598 = vadd.f32 %v1596, %v1597
  %v1599 = vadd.f32 %v1547, %v1549
  %v1600 = vadd.f32 %v1599, %v1551
  %v1601 = vadd.f32 %v1600, %v1553
  %v1602 = vadd.f32 %v1601, %v1555
  %v1603 = vadd.f32 %v1602, %v1557
  %v1604 = vadd.f32 %v1603, %v1559
  %v1605 = vadd.f32 %v1604, %v1561
  %v1606 = vadd.f32 %v1605, %v1563
  %v1607 = vadd.f32 %v1606, %v1565
  %v1608 = vadd.f32 %v1607, %v1567
  %v1609 = vadd.f32 %v1608, %v1569
  %v1610 = vadd.f32 %v1609, %v1571
  %v1611 = vadd.f32 %v1610, %v1573
  %v1612 = vadd.f32 %v1611, %v1575
  %v1613 = vadd.f32 %v1612, %v1577
  %v1614 = vrot.slane %v1613, 4
  %v1615 = vadd.f32 %v1613, %v1614
  %v1616 = vrot.slane %v1615, 2
  %v1617 = vadd.f32 %v1615, %v1616
  %v1618 = vrot.slane %v1617, 1
  %v1619 = vadd.f32 %v1617, %v1618
  %v1620 = vsel %vm892, %v1524, %v1598
  %v1621 = vsel %vm892, %v1545, %v1619
  %v1624 = vcombine.low %v1620, %v1621
  %v1626 = vunpack.c.l.s4 1983009808
  %v1627 = vunpack.c.0.s8 %v1626
  %v1628 = vlaneseq
  %v1629 = vshrl.u32 %v1628, 7
  %v1630 = vsub.s32 %v1627, %v1629
  %v1631 = vrot.slane %v1624, %v1630
  %s1633 = scalar_lea.vmem %s6, 4
  %1634 = vst [vmem:[%s1633] sm:$0xf] %v1631
  // Predicated region
  $region22: #{oafilter.5} parent=0 // pred_check
    _
  $region23: #{oafilter.5} parent=0 // pred_check_branch
    %1636 = sbr.rel (0) target = $region25
  $region24: #{oafilter.5} parent=0 // pred_region
    _
  $region25: #{oafilter.5} parent=0 // pred_fallthru
    _
  // Predicated region
  $region26: #{oafilter.5} parent=0 // pred_check
    _
  $region27: #{oafilter.5} parent=0 // pred_check_branch
    %1638 = sbr.rel (0) target = $region29
  $region28: #{oafilter.5} parent=0 // pred_region
    _
  $region29: #{oafilter.5} parent=0 // pred_fallthru
    _
  // Predicated region
  $region30: #{oafilter.5} parent=0 // pred_check
    _
  $region31: #{oafilter.5} parent=0 // pred_check_branch
    %1640 = sbr.rel (0) target = $region33
  $region32: #{oafilter.5} parent=0 // pred_region
    _
  $region33: #{oafilter.5} parent=0 // pred_fallthru
    _
  // Predicated region
  $region34: #{oafilter.5} parent=0 // pred_check
    _
  $region35: #{oafilter.5} parent=0 // pred_check_branch
    %1642 = sbr.rel (0) target = $region37
  $region36: #{oafilter.5} parent=0 // pred_region
    _
  $region37: #{oafilter.5} parent=0 // pred_fallthru
    _

// kernel: oafilter.6
$region0: #{oafilter.6}
  #allocation0 [shape = 'u32[]', space=smem, size = 0x4, offset = 0x4, fixed_abs, tag = 'smem constant byte address 0x4 - core index']
  #allocation1 [shape = 'u32[144,128]{1,0:T(1,128)}', space=vmem, size = 0x12000, scoped, tag = 'internal scratch']
  %s0 = inlined_call_operand.vmem [shape: bf16[2,128,256], index: 0, kind: input, shape index: {}]
  %s1 = inlined_call_operand.vmem [shape: bf16[256,256], index: 1, kind: input, shape index: {}]
  %s2 = inlined_call_operand.vmem [shape: f32[1,256], index: 2, kind: input, shape index: {}]
  %s3 = inlined_call_operand.vmem [shape: f32[1,256], index: 3, kind: input, shape index: {}]
  %s4 = inlined_call_operand.vmem [shape: f32[1,256], index: 4, kind: input, shape index: {}]
  %s5 = inlined_call_operand.vmem [shape: bf16[2,128,256], index: 5, kind: output, shape index: {0}]
  %s6 = inlined_call_operand.vmem [shape: f32[2,2,128], index: 6, kind: output, shape index: {1}]
  %7 = xla_tuple %s5, %s6
  %s8 = sld [smem:[#allocation0]]
  $region38: #{oafilter.6} parent=0
    _
  %s10 = ssub.s32 1, %s8
  %s11 = scalar_select 0, %s10, %s8
  // Predicated region
  $region2: #{oafilter.6} parent=0 // pred_check
    _
  $region3: #{oafilter.6} parent=0 // pred_check_branch
    %13 = sbr.rel (0) target = $region5
  $region4: #{oafilter.6} parent=0 // pred_region
    _
  $region5: #{oafilter.6} parent=0 // pred_fallthru
    _
  // Predicated region
  $region6: #{oafilter.6} parent=0 // pred_check
    _
  $region7: #{oafilter.6} parent=0 // pred_check_branch
    %15 = sbr.rel (0) target = $region9
  $region8: #{oafilter.6} parent=0 // pred_region
    _
  $region9: #{oafilter.6} parent=0 // pred_fallthru
    _
  // Predicated region
  $region10: #{oafilter.6} parent=0 // pred_check
    _
  $region11: #{oafilter.6} parent=0 // pred_check_branch
    %17 = sbr.rel (0) target = $region13
  $region12: #{oafilter.6} parent=0 // pred_region
    _
  $region13: #{oafilter.6} parent=0 // pred_fallthru
    _
  // Predicated region
  $region14: #{oafilter.6} parent=0 // pred_check
    _
  $region15: #{oafilter.6} parent=0 // pred_check_branch
    %19 = sbr.rel (0) target = $region17
  $region16: #{oafilter.6} parent=0 // pred_region
    _
  $region17: #{oafilter.6} parent=0 // pred_fallthru
    _
  // Predicated region
  $region18: #{oafilter.6} parent=0 // pred_check
    _
  $region19: #{oafilter.6} parent=0 // pred_check_branch
    %21 = sbr.rel (0) target = $region21
  $region20: #{oafilter.6} parent=0 // pred_region
    _
  $region21: #{oafilter.6} parent=0 // pred_fallthru
    _
  %v22 = vld [vmem:[%s0] sm:$0xff]
  %v23 = vld [vmem:[%s0 + $0x8] sm:$0xff]
  %v24 = vld [vmem:[%s0 + $0x10] sm:$0xff]
  %v25 = vld [vmem:[%s0 + $0x18] sm:$0xff]
  %v26 = vld [vmem:[%s0 + $0x20] sm:$0xff]
  %v27 = vld [vmem:[%s0 + $0x28] sm:$0xff]
  %v28 = vld [vmem:[%s0 + $0x30] sm:$0xff]
  %v29 = vld [vmem:[%s0 + $0x38] sm:$0xff]
  %v30 = vld [vmem:[%s0 + $0x40] sm:$0xff]
  %v31 = vld [vmem:[%s0 + $0x48] sm:$0xff]
  %v32 = vld [vmem:[%s0 + $0x50] sm:$0xff]
  %v33 = vld [vmem:[%s0 + $0x58] sm:$0xff]
  %v34 = vld [vmem:[%s0 + $0x60] sm:$0xff]
  %v35 = vld [vmem:[%s0 + $0x68] sm:$0xff]
  %v36 = vld [vmem:[%s0 + $0x70] sm:$0xff]
  %v37 = vld [vmem:[%s0 + $0x78] sm:$0xff]
  %v38 = vld [vmem:[%s0 + $0x80] sm:$0xff]
  %v39 = vld [vmem:[%s0 + $0x88] sm:$0xff]
  %v40 = vld [vmem:[%s0 + $0x90] sm:$0xff]
  %v41 = vld [vmem:[%s0 + $0x98] sm:$0xff]
  %v42 = vld [vmem:[%s0 + $0xa0] sm:$0xff]
  %v43 = vld [vmem:[%s0 + $0xa8] sm:$0xff]
  %v44 = vld [vmem:[%s0 + $0xb0] sm:$0xff]
  %v45 = vld [vmem:[%s0 + $0xb8] sm:$0xff]
  %v46 = vld [vmem:[%s0 + $0xc0] sm:$0xff]
  %v47 = vld [vmem:[%s0 + $0xc8] sm:$0xff]
  %v48 = vld [vmem:[%s0 + $0xd0] sm:$0xff]
  %v49 = vld [vmem:[%s0 + $0xd8] sm:$0xff]
  %v50 = vld [vmem:[%s0 + $0xe0] sm:$0xff]
  %v51 = vld [vmem:[%s0 + $0xe8] sm:$0xff]
  %v52 = vld [vmem:[%s0 + $0xf0] sm:$0xff]
  %v53 = vld [vmem:[%s0 + $0xf8] sm:$0xff]
  %v54 = vunpack.c.l.bf16 %v22
  %v55 = vunpack.c.h.bf16 %v22
  %v56 = vunpack.c.l.bf16 %v23
  %v57 = vunpack.c.h.bf16 %v23
  %v58 = vunpack.c.l.bf16 %v24
  %v59 = vunpack.c.h.bf16 %v24
  %v60 = vunpack.c.l.bf16 %v25
  %v61 = vunpack.c.h.bf16 %v25
  %v62 = vunpack.c.l.bf16 %v26
  %v63 = vunpack.c.h.bf16 %v26
  %v64 = vunpack.c.l.bf16 %v27
  %v65 = vunpack.c.h.bf16 %v27
  %v66 = vunpack.c.l.bf16 %v28
  %v67 = vunpack.c.h.bf16 %v28
  %v68 = vunpack.c.l.bf16 %v29
  %v69 = vunpack.c.h.bf16 %v29
  %v70 = vunpack.c.l.bf16 %v30
  %v71 = vunpack.c.h.bf16 %v30
  %v72 = vunpack.c.l.bf16 %v31
  %v73 = vunpack.c.h.bf16 %v31
  %v74 = vunpack.c.l.bf16 %v32
  %v75 = vunpack.c.h.bf16 %v32
  %v76 = vunpack.c.l.bf16 %v33
  %v77 = vunpack.c.h.bf16 %v33
  %v78 = vunpack.c.l.bf16 %v34
  %v79 = vunpack.c.h.bf16 %v34
  %v80 = vunpack.c.l.bf16 %v35
  %v81 = vunpack.c.h.bf16 %v35
  %v82 = vunpack.c.l.bf16 %v36
  %v83 = vunpack.c.h.bf16 %v36
  %v84 = vunpack.c.l.bf16 %v37
  %v85 = vunpack.c.h.bf16 %v37
  %v86 = vunpack.c.l.bf16 %v38
  %v87 = vunpack.c.h.bf16 %v38
  %v88 = vunpack.c.l.bf16 %v39
  %v89 = vunpack.c.h.bf16 %v39
  %v90 = vunpack.c.l.bf16 %v40
  %v91 = vunpack.c.h.bf16 %v40
  %v92 = vunpack.c.l.bf16 %v41
  %v93 = vunpack.c.h.bf16 %v41
  %v94 = vunpack.c.l.bf16 %v42
  %v95 = vunpack.c.h.bf16 %v42
  %v96 = vunpack.c.l.bf16 %v43
  %v97 = vunpack.c.h.bf16 %v43
  %v98 = vunpack.c.l.bf16 %v44
  %v99 = vunpack.c.h.bf16 %v44
  %v100 = vunpack.c.l.bf16 %v45
  %v101 = vunpack.c.h.bf16 %v45
  %v102 = vunpack.c.l.bf16 %v46
  %v103 = vunpack.c.h.bf16 %v46
  %v104 = vunpack.c.l.bf16 %v47
  %v105 = vunpack.c.h.bf16 %v47
  %v106 = vunpack.c.l.bf16 %v48
  %v107 = vunpack.c.h.bf16 %v48
  %v108 = vunpack.c.l.bf16 %v49
  %v109 = vunpack.c.h.bf16 %v49
  %v110 = vunpack.c.l.bf16 %v50
  %v111 = vunpack.c.h.bf16 %v50
  %v112 = vunpack.c.l.bf16 %v51
  %v113 = vunpack.c.h.bf16 %v51
  %v114 = vunpack.c.l.bf16 %v52
  %v115 = vunpack.c.h.bf16 %v52
  %v116 = vunpack.c.l.bf16 %v53
  %v117 = vunpack.c.h.bf16 %v53
  %v118 = vld [vmem:[%s2] sm:$0x3]
  %v120 = vlaneseq
  %v121 = vshrl.u32 %v120, 7
  %v122 = vsub.s32 0, %v121
  %v123 = vrot.slane %v118, %v122
  %v124 = vlaneseq
  %v125 = vshrl.u32 %v124, 7
  %v126 = vsub.s32 1, %v125
  %v127 = vrot.slane %v118, %v126
  %v130 = vmul.f32 %v54, %v123
  %v131 = vmul.f32 %v55, %v127
  %v132 = vmul.f32 %v56, %v123
  %v133 = vmul.f32 %v57, %v127
  %v134 = vmul.f32 %v58, %v123
  %v135 = vmul.f32 %v59, %v127
  %v136 = vmul.f32 %v60, %v123
  %v137 = vmul.f32 %v61, %v127
  %v138 = vmul.f32 %v62, %v123
  %v139 = vmul.f32 %v63, %v127
  %v140 = vmul.f32 %v64, %v123
  %v141 = vmul.f32 %v65, %v127
  %v142 = vmul.f32 %v66, %v123
  %v143 = vmul.f32 %v67, %v127
  %v144 = vmul.f32 %v68, %v123
  %v145 = vmul.f32 %v69, %v127
  %v146 = vmul.f32 %v70, %v123
  %v147 = vmul.f32 %v71, %v127
  %v148 = vmul.f32 %v72, %v123
  %v149 = vmul.f32 %v73, %v127
  %v150 = vmul.f32 %v74, %v123
  %v151 = vmul.f32 %v75, %v127
  %v152 = vmul.f32 %v76, %v123
  %v153 = vmul.f32 %v77, %v127
  %v154 = vmul.f32 %v78, %v123
  %v155 = vmul.f32 %v79, %v127
  %v156 = vmul.f32 %v80, %v123
  %v157 = vmul.f32 %v81, %v127
  %v158 = vmul.f32 %v82, %v123
  %v159 = vmul.f32 %v83, %v127
  %v160 = vmul.f32 %v84, %v123
  %v161 = vmul.f32 %v85, %v127
  %v162 = vmul.f32 %v86, %v123
  %v163 = vmul.f32 %v87, %v127
  %v164 = vmul.f32 %v88, %v123
  %v165 = vmul.f32 %v89, %v127
  %v166 = vmul.f32 %v90, %v123
  %v167 = vmul.f32 %v91, %v127
  %v168 = vmul.f32 %v92, %v123
  %v169 = vmul.f32 %v93, %v127
  %v170 = vmul.f32 %v94, %v123
  %v171 = vmul.f32 %v95, %v127
  %v172 = vmul.f32 %v96, %v123
  %v173 = vmul.f32 %v97, %v127
  %v174 = vmul.f32 %v98, %v123
  %v175 = vmul.f32 %v99, %v127
  %v176 = vmul.f32 %v100, %v123
  %v177 = vmul.f32 %v101, %v127
  %v178 = vmul.f32 %v102, %v123
  %v179 = vmul.f32 %v103, %v127
  %v180 = vmul.f32 %v104, %v123
  %v181 = vmul.f32 %v105, %v127
  %v182 = vmul.f32 %v106, %v123
  %v183 = vmul.f32 %v107, %v127
  %v184 = vmul.f32 %v108, %v123
  %v185 = vmul.f32 %v109, %v127
  %v186 = vmul.f32 %v110, %v123
  %v187 = vmul.f32 %v111, %v127
  %v188 = vmul.f32 %v112, %v123
  %v189 = vmul.f32 %v113, %v127
  %v190 = vmul.f32 %v114, %v123
  %v191 = vmul.f32 %v115, %v127
  %v192 = vmul.f32 %v116, %v123
  %v193 = vmul.f32 %v117, %v127
  %v194 = vld [vmem:[%s3] sm:$0x3]
  %v196 = vlaneseq
  %v197 = vshrl.u32 %v196, 7
  %v198 = vsub.s32 0, %v197
  %v199 = vrot.slane %v194, %v198
  %v200 = vlaneseq
  %v201 = vshrl.u32 %v200, 7
  %v202 = vsub.s32 1, %v201
  %v203 = vrot.slane %v194, %v202
  %v206 = vadd.f32 %v130, %v199
  %v207 = vadd.f32 %v131, %v203
  %v208 = vadd.f32 %v132, %v199
  %v209 = vadd.f32 %v133, %v203
  %v210 = vadd.f32 %v134, %v199
  %v211 = vadd.f32 %v135, %v203
  %v212 = vadd.f32 %v136, %v199
  %v213 = vadd.f32 %v137, %v203
  %v214 = vadd.f32 %v138, %v199
  %v215 = vadd.f32 %v139, %v203
  %v216 = vadd.f32 %v140, %v199
  %v217 = vadd.f32 %v141, %v203
  %v218 = vadd.f32 %v142, %v199
  %v219 = vadd.f32 %v143, %v203
  %v220 = vadd.f32 %v144, %v199
  %v221 = vadd.f32 %v145, %v203
  %v222 = vadd.f32 %v146, %v199
  %v223 = vadd.f32 %v147, %v203
  %v224 = vadd.f32 %v148, %v199
  %v225 = vadd.f32 %v149, %v203
  %v226 = vadd.f32 %v150, %v199
  %v227 = vadd.f32 %v151, %v203
  %v228 = vadd.f32 %v152, %v199
  %v229 = vadd.f32 %v153, %v203
  %v230 = vadd.f32 %v154, %v199
  %v231 = vadd.f32 %v155, %v203
  %v232 = vadd.f32 %v156, %v199
  %v233 = vadd.f32 %v157, %v203
  %v234 = vadd.f32 %v158, %v199
  %v235 = vadd.f32 %v159, %v203
  %v236 = vadd.f32 %v160, %v199
  %v237 = vadd.f32 %v161, %v203
  %v238 = vadd.f32 %v162, %v199
  %v239 = vadd.f32 %v163, %v203
  %v240 = vadd.f32 %v164, %v199
  %v241 = vadd.f32 %v165, %v203
  %v242 = vadd.f32 %v166, %v199
  %v243 = vadd.f32 %v167, %v203
  %v244 = vadd.f32 %v168, %v199
  %v245 = vadd.f32 %v169, %v203
  %v246 = vadd.f32 %v170, %v199
  %v247 = vadd.f32 %v171, %v203
  %v248 = vadd.f32 %v172, %v199
  %v249 = vadd.f32 %v173, %v203
  %v250 = vadd.f32 %v174, %v199
  %v251 = vadd.f32 %v175, %v203
  %v252 = vadd.f32 %v176, %v199
  %v253 = vadd.f32 %v177, %v203
  %v254 = vadd.f32 %v178, %v199
  %v255 = vadd.f32 %v179, %v203
  %v256 = vadd.f32 %v180, %v199
  %v257 = vadd.f32 %v181, %v203
  %v258 = vadd.f32 %v182, %v199
  %v259 = vadd.f32 %v183, %v203
  %v260 = vadd.f32 %v184, %v199
  %v261 = vadd.f32 %v185, %v203
  %v262 = vadd.f32 %v186, %v199
  %v263 = vadd.f32 %v187, %v203
  %v264 = vadd.f32 %v188, %v199
  %v265 = vadd.f32 %v189, %v203
  %v266 = vadd.f32 %v190, %v199
  %v267 = vadd.f32 %v191, %v203
  %v268 = vadd.f32 %v192, %v199
  %v269 = vadd.f32 %v193, %v203
  %v270 = vmax.f32 %v206, 0.0
  %v271 = vmax.f32 %v207, 0.0
  %v272 = vmax.f32 %v208, 0.0
  %v273 = vmax.f32 %v209, 0.0
  %v274 = vmax.f32 %v210, 0.0
  %v275 = vmax.f32 %v211, 0.0
  %v276 = vmax.f32 %v212, 0.0
  %v277 = vmax.f32 %v213, 0.0
  %v278 = vmax.f32 %v214, 0.0
  %v279 = vmax.f32 %v215, 0.0
  %v280 = vmax.f32 %v216, 0.0
  %v281 = vmax.f32 %v217, 0.0
  %v282 = vmax.f32 %v218, 0.0
  %v283 = vmax.f32 %v219, 0.0
  %v284 = vmax.f32 %v220, 0.0
  %v285 = vmax.f32 %v221, 0.0
  %v286 = vmax.f32 %v222, 0.0
  %v287 = vmax.f32 %v223, 0.0
  %v288 = vmax.f32 %v224, 0.0
  %v289 = vmax.f32 %v225, 0.0
  %v290 = vmax.f32 %v226, 0.0
  %v291 = vmax.f32 %v227, 0.0
  %v292 = vmax.f32 %v228, 0.0
  %v293 = vmax.f32 %v229, 0.0
  %v294 = vmax.f32 %v230, 0.0
  %v295 = vmax.f32 %v231, 0.0
  %v296 = vmax.f32 %v232, 0.0
  %v297 = vmax.f32 %v233, 0.0
  %v298 = vmax.f32 %v234, 0.0
  %v299 = vmax.f32 %v235, 0.0
  %v300 = vmax.f32 %v236, 0.0
  %v301 = vmax.f32 %v237, 0.0
  %v302 = vmax.f32 %v238, 0.0
  %v303 = vmax.f32 %v239, 0.0
  %v304 = vmax.f32 %v240, 0.0
  %v305 = vmax.f32 %v241, 0.0
  %v306 = vmax.f32 %v242, 0.0
  %v307 = vmax.f32 %v243, 0.0
  %v308 = vmax.f32 %v244, 0.0
  %v309 = vmax.f32 %v245, 0.0
  %v310 = vmax.f32 %v246, 0.0
  %v311 = vmax.f32 %v247, 0.0
  %v312 = vmax.f32 %v248, 0.0
  %v313 = vmax.f32 %v249, 0.0
  %v314 = vmax.f32 %v250, 0.0
  %v315 = vmax.f32 %v251, 0.0
  %v316 = vmax.f32 %v252, 0.0
  %v317 = vmax.f32 %v253, 0.0
  %v318 = vmax.f32 %v254, 0.0
  %v319 = vmax.f32 %v255, 0.0
  %v320 = vmax.f32 %v256, 0.0
  %v321 = vmax.f32 %v257, 0.0
  %v322 = vmax.f32 %v258, 0.0
  %v323 = vmax.f32 %v259, 0.0
  %v324 = vmax.f32 %v260, 0.0
  %v325 = vmax.f32 %v261, 0.0
  %v326 = vmax.f32 %v262, 0.0
  %v327 = vmax.f32 %v263, 0.0
  %v328 = vmax.f32 %v264, 0.0
  %v329 = vmax.f32 %v265, 0.0
  %v330 = vmax.f32 %v266, 0.0
  %v331 = vmax.f32 %v267, 0.0
  %v332 = vmax.f32 %v268, 0.0
  %v333 = vmax.f32 %v269, 0.0
  %v334 = vpack.c.bf16 %v272, %v270
  %v335 = vpack.c.bf16 %v273, %v271
  %v336 = vpack.c.bf16 %v276, %v274
  %v337 = vpack.c.bf16 %v277, %v275
  %v338 = vpack.c.bf16 %v280, %v278
  %v339 = vpack.c.bf16 %v281, %v279
  %v340 = vpack.c.bf16 %v284, %v282
  %v341 = vpack.c.bf16 %v285, %v283
  %v342 = vpack.c.bf16 %v288, %v286
  %v343 = vpack.c.bf16 %v289, %v287
  %v344 = vpack.c.bf16 %v292, %v290
  %v345 = vpack.c.bf16 %v293, %v291
  %v346 = vpack.c.bf16 %v296, %v294
  %v347 = vpack.c.bf16 %v297, %v295
  %v348 = vpack.c.bf16 %v300, %v298
  %v349 = vpack.c.bf16 %v301, %v299
  %v350 = vpack.c.bf16 %v304, %v302
  %v351 = vpack.c.bf16 %v305, %v303
  %v352 = vpack.c.bf16 %v308, %v306
  %v353 = vpack.c.bf16 %v309, %v307
  %v354 = vpack.c.bf16 %v312, %v310
  %v355 = vpack.c.bf16 %v313, %v311
  %v356 = vpack.c.bf16 %v316, %v314
  %v357 = vpack.c.bf16 %v317, %v315
  %v358 = vpack.c.bf16 %v320, %v318
  %v359 = vpack.c.bf16 %v321, %v319
  %v360 = vpack.c.bf16 %v324, %v322
  %v361 = vpack.c.bf16 %v325, %v323
  %v362 = vpack.c.bf16 %v328, %v326
  %v363 = vpack.c.bf16 %v329, %v327
  %v364 = vpack.c.bf16 %v332, %v330
  %v365 = vpack.c.bf16 %v333, %v331
  %v366 = vld [vmem:[%s1] sm:$0xff]
  %v367 = vld [vmem:[%s1 + $0x8] sm:$0xff]
  %v368 = vld [vmem:[%s1 + $0x10] sm:$0xff]
  %v369 = vld [vmem:[%s1 + $0x18] sm:$0xff]
  %v370 = vld [vmem:[%s1 + $0x20] sm:$0xff]
  %v371 = vld [vmem:[%s1 + $0x28] sm:$0xff]
  %v372 = vld [vmem:[%s1 + $0x30] sm:$0xff]
  %v373 = vld [vmem:[%s1 + $0x38] sm:$0xff]
  %v374 = vld [vmem:[%s1 + $0x40] sm:$0xff]
  %v375 = vld [vmem:[%s1 + $0x48] sm:$0xff]
  %v376 = vld [vmem:[%s1 + $0x50] sm:$0xff]
  %v377 = vld [vmem:[%s1 + $0x58] sm:$0xff]
  %v378 = vld [vmem:[%s1 + $0x60] sm:$0xff]
  %v379 = vld [vmem:[%s1 + $0x68] sm:$0xff]
  %v380 = vld [vmem:[%s1 + $0x70] sm:$0xff]
  %v381 = vld [vmem:[%s1 + $0x78] sm:$0xff]
  %v382 = vld [vmem:[%s1 + $0x80] sm:$0xff]
  %v383 = vld [vmem:[%s1 + $0x88] sm:$0xff]
  %v384 = vld [vmem:[%s1 + $0x90] sm:$0xff]
  %v385 = vld [vmem:[%s1 + $0x98] sm:$0xff]
  %v386 = vld [vmem:[%s1 + $0xa0] sm:$0xff]
  %v387 = vld [vmem:[%s1 + $0xa8] sm:$0xff]
  %v388 = vld [vmem:[%s1 + $0xb0] sm:$0xff]
  %v389 = vld [vmem:[%s1 + $0xb8] sm:$0xff]
  %v390 = vld [vmem:[%s1 + $0xc0] sm:$0xff]
  %v391 = vld [vmem:[%s1 + $0xc8] sm:$0xff]
  %v392 = vld [vmem:[%s1 + $0xd0] sm:$0xff]
  %v393 = vld [vmem:[%s1 + $0xd8] sm:$0xff]
  %v394 = vld [vmem:[%s1 + $0xe0] sm:$0xff]
  %v395 = vld [vmem:[%s1 + $0xe8] sm:$0xff]
  %v396 = vld [vmem:[%s1 + $0xf0] sm:$0xff]
  %v397 = vld [vmem:[%s1 + $0xf8] sm:$0xff]
  %v430 = vunpack.c.l.b16 %v366
  %v431 = vunpack.c.h.b16 %v366
  %v432 = vunpack.c.l.b16 %v367
  %v433 = vunpack.c.h.b16 %v367
  %v434 = vunpack.c.l.b16 %v368
  %v435 = vunpack.c.h.b16 %v368
  %v436 = vunpack.c.l.b16 %v369
  %v437 = vunpack.c.h.b16 %v369
  %v438 = vunpack.c.l.b16 %v370
  %v439 = vunpack.c.h.b16 %v370
  %v440 = vunpack.c.l.b16 %v371
  %v441 = vunpack.c.h.b16 %v371
  %v442 = vunpack.c.l.b16 %v372
  %v443 = vunpack.c.h.b16 %v372
  %v444 = vunpack.c.l.b16 %v373
  %v445 = vunpack.c.h.b16 %v373
  %v446 = vunpack.c.l.b16 %v374
  %v447 = vunpack.c.h.b16 %v374
  %v448 = vunpack.c.l.b16 %v375
  %v449 = vunpack.c.h.b16 %v375
  %v450 = vunpack.c.l.b16 %v376
  %v451 = vunpack.c.h.b16 %v376
  %v452 = vunpack.c.l.b16 %v377
  %v453 = vunpack.c.h.b16 %v377
  %v454 = vunpack.c.l.b16 %v378
  %v455 = vunpack.c.h.b16 %v378
  %v456 = vunpack.c.l.b16 %v379
  %v457 = vunpack.c.h.b16 %v379
  %v458 = vunpack.c.l.b16 %v380
  %v459 = vunpack.c.h.b16 %v380
  %v460 = vunpack.c.l.b16 %v381
  %v461 = vunpack.c.h.b16 %v381
  %v462 = vunpack.c.l.b16 %v382
  %v463 = vunpack.c.h.b16 %v382
  %v464 = vunpack.c.l.b16 %v383
  %v465 = vunpack.c.h.b16 %v383
  %v466 = vunpack.c.l.b16 %v384
  %v467 = vunpack.c.h.b16 %v384
  %v468 = vunpack.c.l.b16 %v385
  %v469 = vunpack.c.h.b16 %v385
  %v470 = vunpack.c.l.b16 %v386
  %v471 = vunpack.c.h.b16 %v386
  %v472 = vunpack.c.l.b16 %v387
  %v473 = vunpack.c.h.b16 %v387
  %v474 = vunpack.c.l.b16 %v388
  %v475 = vunpack.c.h.b16 %v388
  %v476 = vunpack.c.l.b16 %v389
  %v477 = vunpack.c.h.b16 %v389
  %v478 = vunpack.c.l.b16 %v390
  %v479 = vunpack.c.h.b16 %v390
  %v480 = vunpack.c.l.b16 %v391
  %v481 = vunpack.c.h.b16 %v391
  %v482 = vunpack.c.l.b16 %v392
  %v483 = vunpack.c.h.b16 %v392
  %v484 = vunpack.c.l.b16 %v393
  %v485 = vunpack.c.h.b16 %v393
  %v486 = vunpack.c.l.b16 %v394
  %v487 = vunpack.c.h.b16 %v394
  %v488 = vunpack.c.l.b16 %v395
  %v489 = vunpack.c.h.b16 %v395
  %v490 = vunpack.c.l.b16 %v396
  %v491 = vunpack.c.h.b16 %v396
  %v492 = vunpack.c.l.b16 %v397
  %v493 = vunpack.c.h.b16 %v397
  %v494 = vpack.c.b16 %v432, %v430
  %v495 = vpack.c.b16 %v433, %v431
  %v496 = vpack.c.b16 %v436, %v434
  %v497 = vpack.c.b16 %v437, %v435
  %v498 = vpack.c.b16 %v440, %v438
  %v499 = vpack.c.b16 %v441, %v439
  %v500 = vpack.c.b16 %v444, %v442
  %v501 = vpack.c.b16 %v445, %v443
  %v502 = vpack.c.b16 %v448, %v446
  %v503 = vpack.c.b16 %v449, %v447
  %v504 = vpack.c.b16 %v452, %v450
  %v505 = vpack.c.b16 %v453, %v451
  %v506 = vpack.c.b16 %v456, %v454
  %v507 = vpack.c.b16 %v457, %v455
  %v508 = vpack.c.b16 %v460, %v458
  %v509 = vpack.c.b16 %v461, %v459
  %v510 = vpack.c.b16 %v464, %v462
  %v511 = vpack.c.b16 %v465, %v463
  %v512 = vpack.c.b16 %v468, %v466
  %v513 = vpack.c.b16 %v469, %v467
  %v514 = vpack.c.b16 %v472, %v470
  %v515 = vpack.c.b16 %v473, %v471
  %v516 = vpack.c.b16 %v476, %v474
  %v517 = vpack.c.b16 %v477, %v475
  %v518 = vpack.c.b16 %v480, %v478
  %v519 = vpack.c.b16 %v481, %v479
  %v520 = vpack.c.b16 %v484, %v482
  %v521 = vpack.c.b16 %v485, %v483
  %v522 = vpack.c.b16 %v488, %v486
  %v523 = vpack.c.b16 %v489, %v487
  %v524 = vpack.c.b16 %v492, %v490
  %v525 = vpack.c.b16 %v493, %v491
  %558 = vmatprep.subr.bf16.mxu0 %v495
  %559 = vmatpush1.bf16.msra.mxu0 %v494
  %560 = vmatprep.subr.bf16.mxu0 %v497
  %561 = vmatpush1.bf16.msra.mxu0 %v496
  %562 = vmatprep.subr.bf16.mxu0 %v499
  %563 = vmatpush1.bf16.msra.mxu0 %v498
  %564 = vmatprep.subr.bf16.mxu0 %v501
  %565 = vmatpush1.bf16.msra.mxu0 %v500
  %566 = vmatprep.subr.bf16.mxu0 %v503
  %567 = vmatpush1.bf16.msra.mxu0 %v502
  %568 = vmatprep.subr.bf16.mxu0 %v505
  %569 = vmatpush1.bf16.msra.mxu0 %v504
  %570 = vmatprep.subr.bf16.mxu0 %v507
  %571 = vmatpush1.bf16.msra.mxu0 %v506
  %572 = vmatprep.subr.bf16.mxu0 %v509
  %573 = vmatpush1.bf16.msra.mxu0 %v508
  %574 = vmatprep.subr.bf16.mxu0 %v511
  %575 = vmatpush1.bf16.msra.mxu0 %v510
  %576 = vmatprep.subr.bf16.mxu0 %v513
  %577 = vmatpush1.bf16.msra.mxu0 %v512
  %578 = vmatprep.subr.bf16.mxu0 %v515
  %579 = vmatpush1.bf16.msra.mxu0 %v514
  %580 = vmatprep.subr.bf16.mxu0 %v517
  %581 = vmatpush1.bf16.msra.mxu0 %v516
  %582 = vmatprep.subr.bf16.mxu0 %v519
  %583 = vmatpush1.bf16.msra.mxu0 %v518
  %584 = vmatprep.subr.bf16.mxu0 %v521
  %585 = vmatpush1.bf16.msra.mxu0 %v520
  %586 = vmatprep.subr.bf16.mxu0 %v523
  %587 = vmatpush1.bf16.msra.mxu0 %v522
  %588 = vmatprep.subr.bf16.mxu0 %v525
  %589 = vmatpush1.bf16.msra.mxu0 %v524
  %590 = vmatprep.mubr.bf16.mxu0 %v335
  %591 = vmatmul.mubr.bf16.gmra.mrb[0].mxu0 %v334
  %v592 = vpop.f32.mrb[0].mxu0
  %v593 = vadd.f32 0.0, %v592
  %v594 = vpop.f32.mrb[0].mxu0
  %v595 = vadd.f32 0.0, %v594
  %v596 = vpop.f32.mrb[0].mxu0
  %v597 = vadd.f32 0.0, %v596
  %v598 = vpop.f32.mrb[0].mxu0
  %v599 = vadd.f32 0.0, %v598
  %600 = vmatprep.mubr.bf16.mxu0 %v337
  %601 = vmatmul.mubr.bf16.gmra.mrb[0].mxu0 %v336
  %v602 = vpop.f32.mrb[0].mxu0
  %v603 = vadd.f32 0.0, %v602
  %v604 = vpop.f32.mrb[0].mxu0
  %v605 = vadd.f32 0.0, %v604
  %v606 = vpop.f32.mrb[0].mxu0
  %v607 = vadd.f32 0.0, %v606
  %v608 = vpop.f32.mrb[0].mxu0
  %v609 = vadd.f32 0.0, %v608
  %610 = vmatprep.mubr.bf16.mxu0 %v339
  %611 = vmatmul.mubr.bf16.gmra.mrb[0].mxu0 %v338
  %v612 = vpop.f32.mrb[0].mxu0
  %v613 = vadd.f32 0.0, %v612
  %v614 = vpop.f32.mrb[0].mxu0
  %v615 = vadd.f32 0.0, %v614
  %v616 = vpop.f32.mrb[0].mxu0
  %v617 = vadd.f32 0.0, %v616
  %v618 = vpop.f32.mrb[0].mxu0
  %v619 = vadd.f32 0.0, %v618
  %620 = vmatprep.mubr.bf16.mxu0 %v341
  %621 = vmatmul.mubr.bf16.gmra.mrb[0].mxu0 %v340
  %v622 = vpop.f32.mrb[0].mxu0
  %v623 = vadd.f32 0.0, %v622
  %v624 = vpop.f32.mrb[0].mxu0
  %v625 = vadd.f32 0.0, %v624
  %v626 = vpop.f32.mrb[0].mxu0
  %v627 = vadd.f32 0.0, %v626
  %v628 = vpop.f32.mrb[0].mxu0
  %v629 = vadd.f32 0.0, %v628
  %630 = vmatprep.mubr.bf16.mxu0 %v343
  %631 = vmatmul.mubr.bf16.gmra.mrb[0].mxu0 %v342
  %v632 = vpop.f32.mrb[0].mxu0
  %v633 = vadd.f32 0.0, %v632
  %v634 = vpop.f32.mrb[0].mxu0
  %v635 = vadd.f32 0.0, %v634
  %v636 = vpop.f32.mrb[0].mxu0
  %v637 = vadd.f32 0.0, %v636
  %v638 = vpop.f32.mrb[0].mxu0
  %v639 = vadd.f32 0.0, %v638
  %640 = vmatprep.mubr.bf16.mxu0 %v345
  %641 = vmatmul.mubr.bf16.gmra.mrb[0].mxu0 %v344
  %v642 = vpop.f32.mrb[0].mxu0
  %v643 = vadd.f32 0.0, %v642
  %v644 = vpop.f32.mrb[0].mxu0
  %v645 = vadd.f32 0.0, %v644
  %v646 = vpop.f32.mrb[0].mxu0
  %v647 = vadd.f32 0.0, %v646
  %v648 = vpop.f32.mrb[0].mxu0
  %v649 = vadd.f32 0.0, %v648
  %650 = vmatprep.mubr.bf16.mxu0 %v347
  %651 = vmatmul.mubr.bf16.gmra.mrb[0].mxu0 %v346
  %v652 = vpop.f32.mrb[0].mxu0
  %v653 = vadd.f32 0.0, %v652
  %v654 = vpop.f32.mrb[0].mxu0
  %v655 = vadd.f32 0.0, %v654
  %v656 = vpop.f32.mrb[0].mxu0
  %v657 = vadd.f32 0.0, %v656
  %v658 = vpop.f32.mrb[0].mxu0
  %v659 = vadd.f32 0.0, %v658
  %660 = vmatprep.mubr.bf16.mxu0 %v349
  %661 = vmatmul.mubr.bf16.gmra.mrb[0].mxu0 %v348
  %v662 = vpop.f32.mrb[0].mxu0
  %v663 = vadd.f32 0.0, %v662
  %v664 = vpop.f32.mrb[0].mxu0
  %v665 = vadd.f32 0.0, %v664
  %v666 = vpop.f32.mrb[0].mxu0
  %v667 = vadd.f32 0.0, %v666
  %v668 = vpop.f32.mrb[0].mxu0
  %v669 = vadd.f32 0.0, %v668
  %670 = vmatprep.mubr.bf16.mxu0 %v351
  %671 = vmatmul.mubr.bf16.gmra.mrb[0].mxu0 %v350
  %v672 = vpop.f32.mrb[0].mxu0
  %v673 = vadd.f32 0.0, %v672
  %v674 = vpop.f32.mrb[0].mxu0
  %v675 = vadd.f32 0.0, %v674
  %v676 = vpop.f32.mrb[0].mxu0
  %v677 = vadd.f32 0.0, %v676
  %v678 = vpop.f32.mrb[0].mxu0
  %v679 = vadd.f32 0.0, %v678
  %680 = vmatprep.mubr.bf16.mxu0 %v353
  %681 = vmatmul.mubr.bf16.gmra.mrb[0].mxu0 %v352
  %v682 = vpop.f32.mrb[0].mxu0
  %v683 = vadd.f32 0.0, %v682
  %v684 = vpop.f32.mrb[0].mxu0
  %v685 = vadd.f32 0.0, %v684
  %v686 = vpop.f32.mrb[0].mxu0
  %v687 = vadd.f32 0.0, %v686
  %v688 = vpop.f32.mrb[0].mxu0
  %v689 = vadd.f32 0.0, %v688
  %690 = vmatprep.mubr.bf16.mxu0 %v355
  %691 = vmatmul.mubr.bf16.gmra.mrb[0].mxu0 %v354
  %v692 = vpop.f32.mrb[0].mxu0
  %v693 = vadd.f32 0.0, %v692
  %v694 = vpop.f32.mrb[0].mxu0
  %v695 = vadd.f32 0.0, %v694
  %v696 = vpop.f32.mrb[0].mxu0
  %v697 = vadd.f32 0.0, %v696
  %v698 = vpop.f32.mrb[0].mxu0
  %v699 = vadd.f32 0.0, %v698
  %700 = vmatprep.mubr.bf16.mxu0 %v357
  %701 = vmatmul.mubr.bf16.gmra.mrb[0].mxu0 %v356
  %v702 = vpop.f32.mrb[0].mxu0
  %v703 = vadd.f32 0.0, %v702
  %v704 = vpop.f32.mrb[0].mxu0
  %v705 = vadd.f32 0.0, %v704
  %v706 = vpop.f32.mrb[0].mxu0
  %v707 = vadd.f32 0.0, %v706
  %v708 = vpop.f32.mrb[0].mxu0
  %v709 = vadd.f32 0.0, %v708
  %710 = vmatprep.mubr.bf16.mxu0 %v359
  %711 = vmatmul.mubr.bf16.gmra.mrb[0].mxu0 %v358
  %v712 = vpop.f32.mrb[0].mxu0
  %v713 = vadd.f32 0.0, %v712
  %v714 = vpop.f32.mrb[0].mxu0
  %v715 = vadd.f32 0.0, %v714
  %v716 = vpop.f32.mrb[0].mxu0
  %v717 = vadd.f32 0.0, %v716
  %v718 = vpop.f32.mrb[0].mxu0
  %v719 = vadd.f32 0.0, %v718
  %720 = vmatprep.mubr.bf16.mxu0 %v361
  %721 = vmatmul.mubr.bf16.gmra.mrb[0].mxu0 %v360
  %v722 = vpop.f32.mrb[0].mxu0
  %v723 = vadd.f32 0.0, %v722
  %v724 = vpop.f32.mrb[0].mxu0
  %v725 = vadd.f32 0.0, %v724
  %v726 = vpop.f32.mrb[0].mxu0
  %v727 = vadd.f32 0.0, %v726
  %v728 = vpop.f32.mrb[0].mxu0
  %v729 = vadd.f32 0.0, %v728
  %730 = vmatprep.mubr.bf16.mxu0 %v363
  %731 = vmatmul.mubr.bf16.gmra.mrb[0].mxu0 %v362
  %v732 = vpop.f32.mrb[0].mxu0
  %v733 = vadd.f32 0.0, %v732
  %v734 = vpop.f32.mrb[0].mxu0
  %v735 = vadd.f32 0.0, %v734
  %v736 = vpop.f32.mrb[0].mxu0
  %v737 = vadd.f32 0.0, %v736
  %v738 = vpop.f32.mrb[0].mxu0
  %v739 = vadd.f32 0.0, %v738
  %740 = vmatprep.mubr.bf16.mxu0 %v365
  %741 = vmatmul.mubr.bf16.gmra.mrb[0].mxu0 %v364
  %v742 = vpop.f32.mrb[0].mxu0
  %v743 = vadd.f32 0.0, %v742
  %v744 = vpop.f32.mrb[0].mxu0
  %v745 = vadd.f32 0.0, %v744
  %v746 = vpop.f32.mrb[0].mxu0
  %v747 = vadd.f32 0.0, %v746
  %v748 = vpop.f32.mrb[0].mxu0
  %v749 = vadd.f32 0.0, %v748
  %750 = vdwg.mxu0
  %v751 = vadd.f32 %v54, %v593
  %v752 = vadd.f32 %v55, %v595
  %v753 = vadd.f32 %v56, %v597
  %v754 = vadd.f32 %v57, %v599
  %v755 = vadd.f32 %v58, %v603
  %v756 = vadd.f32 %v59, %v605
  %v757 = vadd.f32 %v60, %v607
  %v758 = vadd.f32 %v61, %v609
  %v759 = vadd.f32 %v62, %v613
  %v760 = vadd.f32 %v63, %v615
  %v761 = vadd.f32 %v64, %v617
  %v762 = vadd.f32 %v65, %v619
  %v763 = vadd.f32 %v66, %v623
  %v764 = vadd.f32 %v67, %v625
  %v765 = vadd.f32 %v68, %v627
  %v766 = vadd.f32 %v69, %v629
  %v767 = vadd.f32 %v70, %v633
  %v768 = vadd.f32 %v71, %v635
  %v769 = vadd.f32 %v72, %v637
  %v770 = vadd.f32 %v73, %v639
  %v771 = vadd.f32 %v74, %v643
  %v772 = vadd.f32 %v75, %v645
  %v773 = vadd.f32 %v76, %v647
  %v774 = vadd.f32 %v77, %v649
  %v775 = vadd.f32 %v78, %v653
  %v776 = vadd.f32 %v79, %v655
  %v777 = vadd.f32 %v80, %v657
  %v778 = vadd.f32 %v81, %v659
  %v779 = vadd.f32 %v82, %v663
  %v780 = vadd.f32 %v83, %v665
  %v781 = vadd.f32 %v84, %v667
  %v782 = vadd.f32 %v85, %v669
  %v783 = vadd.f32 %v86, %v673
  %v784 = vadd.f32 %v87, %v675
  %v785 = vadd.f32 %v88, %v677
  %v786 = vadd.f32 %v89, %v679
  %v787 = vadd.f32 %v90, %v683
  %v788 = vadd.f32 %v91, %v685
  %v789 = vadd.f32 %v92, %v687
  %v790 = vadd.f32 %v93, %v689
  %v791 = vadd.f32 %v94, %v693
  %v792 = vadd.f32 %v95, %v695
  %v793 = vadd.f32 %v96, %v697
  %v794 = vadd.f32 %v97, %v699
  %v795 = vadd.f32 %v98, %v703
  %v796 = vadd.f32 %v99, %v705
  %v797 = vadd.f32 %v100, %v707
  %v798 = vadd.f32 %v101, %v709
  %v799 = vadd.f32 %v102, %v713
  %v800 = vadd.f32 %v103, %v715
  %v801 = vadd.f32 %v104, %v717
  %v802 = vadd.f32 %v105, %v719
  %v803 = vadd.f32 %v106, %v723
  %v804 = vadd.f32 %v107, %v725
  %v805 = vadd.f32 %v108, %v727
  %v806 = vadd.f32 %v109, %v729
  %v807 = vadd.f32 %v110, %v733
  %v808 = vadd.f32 %v111, %v735
  %v809 = vadd.f32 %v112, %v737
  %v810 = vadd.f32 %v113, %v739
  %v811 = vadd.f32 %v114, %v743
  %v812 = vadd.f32 %v115, %v745
  %v813 = vadd.f32 %v116, %v747
  %v814 = vadd.f32 %v117, %v749
  %v815 = vld [vmem:[%s4] sm:$0x3]
  %v817 = vlaneseq
  %v818 = vshrl.u32 %v817, 7
  %v819 = vsub.s32 0, %v818
  %v820 = vrot.slane %v815, %v819
  %v821 = vlaneseq
  %v822 = vshrl.u32 %v821, 7
  %v823 = vsub.s32 1, %v822
  %v824 = vrot.slane %v815, %v823
  %v827 = vadd.f32 %v751, %v820
  %v828 = vadd.f32 %v752, %v824
  %v829 = vadd.f32 %v753, %v820
  %v830 = vadd.f32 %v754, %v824
  %v831 = vadd.f32 %v755, %v820
  %v832 = vadd.f32 %v756, %v824
  %v833 = vadd.f32 %v757, %v820
  %v834 = vadd.f32 %v758, %v824
  %v835 = vadd.f32 %v759, %v820
  %v836 = vadd.f32 %v760, %v824
  %v837 = vadd.f32 %v761, %v820
  %v838 = vadd.f32 %v762, %v824
  %v839 = vadd.f32 %v763, %v820
  %v840 = vadd.f32 %v764, %v824
  %v841 = vadd.f32 %v765, %v820
  %v842 = vadd.f32 %v766, %v824
  %v843 = vadd.f32 %v767, %v820
  %v844 = vadd.f32 %v768, %v824
  %v845 = vadd.f32 %v769, %v820
  %v846 = vadd.f32 %v770, %v824
  %v847 = vadd.f32 %v771, %v820
  %v848 = vadd.f32 %v772, %v824
  %v849 = vadd.f32 %v773, %v820
  %v850 = vadd.f32 %v774, %v824
  %v851 = vadd.f32 %v775, %v820
  %v852 = vadd.f32 %v776, %v824
  %v853 = vadd.f32 %v777, %v820
  %v854 = vadd.f32 %v778, %v824
  %v855 = vadd.f32 %v779, %v820
  %v856 = vadd.f32 %v780, %v824
  %v857 = vadd.f32 %v781, %v820
  %v858 = vadd.f32 %v782, %v824
  %v859 = vadd.f32 %v783, %v820
  %v860 = vadd.f32 %v784, %v824
  %v861 = vadd.f32 %v785, %v820
  %v862 = vadd.f32 %v786, %v824
  %v863 = vadd.f32 %v787, %v820
  %v864 = vadd.f32 %v788, %v824
  %v865 = vadd.f32 %v789, %v820
  %v866 = vadd.f32 %v790, %v824
  %v867 = vadd.f32 %v791, %v820
  %v868 = vadd.f32 %v792, %v824
  %v869 = vadd.f32 %v793, %v820
  %v870 = vadd.f32 %v794, %v824
  %v871 = vadd.f32 %v795, %v820
  %v872 = vadd.f32 %v796, %v824
  %v873 = vadd.f32 %v797, %v820
  %v874 = vadd.f32 %v798, %v824
  %v875 = vadd.f32 %v799, %v820
  %v876 = vadd.f32 %v800, %v824
  %v877 = vadd.f32 %v801, %v820
  %v878 = vadd.f32 %v802, %v824
  %v879 = vadd.f32 %v803, %v820
  %v880 = vadd.f32 %v804, %v824
  %v881 = vadd.f32 %v805, %v820
  %v882 = vadd.f32 %v806, %v824
  %v883 = vadd.f32 %v807, %v820
  %v884 = vadd.f32 %v808, %v824
  %v885 = vadd.f32 %v809, %v820
  %v886 = vadd.f32 %v810, %v824
  %v887 = vadd.f32 %v811, %v820
  %v888 = vadd.f32 %v812, %v824
  %v889 = vadd.f32 %v813, %v820
  %v890 = vadd.f32 %v814, %v824
  %v891 = vpack.c.bf16 %v829, %v827
  %v892 = vpack.c.bf16 %v830, %v828
  %v893 = vpack.c.bf16 %v833, %v831
  %v894 = vpack.c.bf16 %v834, %v832
  %v895 = vpack.c.bf16 %v837, %v835
  %v896 = vpack.c.bf16 %v838, %v836
  %v897 = vpack.c.bf16 %v841, %v839
  %v898 = vpack.c.bf16 %v842, %v840
  %v899 = vpack.c.bf16 %v845, %v843
  %v900 = vpack.c.bf16 %v846, %v844
  %v901 = vpack.c.bf16 %v849, %v847
  %v902 = vpack.c.bf16 %v850, %v848
  %v903 = vpack.c.bf16 %v853, %v851
  %v904 = vpack.c.bf16 %v854, %v852
  %v905 = vpack.c.bf16 %v857, %v855
  %v906 = vpack.c.bf16 %v858, %v856
  %v907 = vpack.c.bf16 %v861, %v859
  %v908 = vpack.c.bf16 %v862, %v860
  %v909 = vpack.c.bf16 %v865, %v863
  %v910 = vpack.c.bf16 %v866, %v864
  %v911 = vpack.c.bf16 %v869, %v867
  %v912 = vpack.c.bf16 %v870, %v868
  %v913 = vpack.c.bf16 %v873, %v871
  %v914 = vpack.c.bf16 %v874, %v872
  %v915 = vpack.c.bf16 %v877, %v875
  %v916 = vpack.c.bf16 %v878, %v876
  %v917 = vpack.c.bf16 %v881, %v879
  %v918 = vpack.c.bf16 %v882, %v880
  %v919 = vpack.c.bf16 %v885, %v883
  %v920 = vpack.c.bf16 %v886, %v884
  %v921 = vpack.c.bf16 %v889, %v887
  %v922 = vpack.c.bf16 %v890, %v888
  %v955 = vunpack.c.l.b16 %v891
  %v956 = vunpack.c.l.b16 %v892
  %v957 = vunpack.c.h.b16 %v891
  %v958 = vunpack.c.h.b16 %v892
  %v959 = vunpack.c.l.b16 %v893
  %v960 = vunpack.c.l.b16 %v894
  %v961 = vunpack.c.h.b16 %v893
  %v962 = vunpack.c.h.b16 %v894
  %v963 = vunpack.c.l.b16 %v895
  %v964 = vunpack.c.l.b16 %v896
  %v965 = vunpack.c.h.b16 %v895
  %v966 = vunpack.c.h.b16 %v896
  %v967 = vunpack.c.l.b16 %v897
  %v968 = vunpack.c.l.b16 %v898
  %v969 = vunpack.c.h.b16 %v897
  %v970 = vunpack.c.h.b16 %v898
  %v971 = vunpack.c.l.b16 %v899
  %v972 = vunpack.c.l.b16 %v900
  %v973 = vunpack.c.h.b16 %v899
  %v974 = vunpack.c.h.b16 %v900
  %v975 = vunpack.c.l.b16 %v901
  %v976 = vunpack.c.l.b16 %v902
  %v977 = vunpack.c.h.b16 %v901
  %v978 = vunpack.c.h.b16 %v902
  %v979 = vunpack.c.l.b16 %v903
  %v980 = vunpack.c.l.b16 %v904
  %v981 = vunpack.c.h.b16 %v903
  %v982 = vunpack.c.h.b16 %v904
  %v983 = vunpack.c.l.b16 %v905
  %v984 = vunpack.c.l.b16 %v906
  %v985 = vunpack.c.h.b16 %v905
  %v986 = vunpack.c.h.b16 %v906
  %v987 = vunpack.c.l.b16 %v907
  %v988 = vunpack.c.l.b16 %v908
  %v989 = vunpack.c.h.b16 %v907
  %v990 = vunpack.c.h.b16 %v908
  %v991 = vunpack.c.l.b16 %v909
  %v992 = vunpack.c.l.b16 %v910
  %v993 = vunpack.c.h.b16 %v909
  %v994 = vunpack.c.h.b16 %v910
  %v995 = vunpack.c.l.b16 %v911
  %v996 = vunpack.c.l.b16 %v912
  %v997 = vunpack.c.h.b16 %v911
  %v998 = vunpack.c.h.b16 %v912
  %v999 = vunpack.c.l.b16 %v913
  %v1000 = vunpack.c.l.b16 %v914
  %v1001 = vunpack.c.h.b16 %v913
  %v1002 = vunpack.c.h.b16 %v914
  %v1003 = vunpack.c.l.b16 %v915
  %v1004 = vunpack.c.l.b16 %v916
  %v1005 = vunpack.c.h.b16 %v915
  %v1006 = vunpack.c.h.b16 %v916
  %v1007 = vunpack.c.l.b16 %v917
  %v1008 = vunpack.c.l.b16 %v918
  %v1009 = vunpack.c.h.b16 %v917
  %v1010 = vunpack.c.h.b16 %v918
  %v1011 = vunpack.c.l.b16 %v919
  %v1012 = vunpack.c.l.b16 %v920
  %v1013 = vunpack.c.h.b16 %v919
  %v1014 = vunpack.c.h.b16 %v920
  %v1015 = vunpack.c.l.b16 %v921
  %v1016 = vunpack.c.l.b16 %v922
  %v1017 = vunpack.c.h.b16 %v921
  %v1018 = vunpack.c.h.b16 %v922
  %v1019 = vpack.c.b16 %v956, %v955
  %v1020 = vpack.c.b16 %v958, %v957
  %v1021 = vpack.c.b16 %v960, %v959
  %v1022 = vpack.c.b16 %v962, %v961
  %v1023 = vpack.c.b16 %v964, %v963
  %v1024 = vpack.c.b16 %v966, %v965
  %v1025 = vpack.c.b16 %v968, %v967
  %v1026 = vpack.c.b16 %v970, %v969
  %v1027 = vpack.c.b16 %v972, %v971
  %v1028 = vpack.c.b16 %v974, %v973
  %v1029 = vpack.c.b16 %v976, %v975
  %v1030 = vpack.c.b16 %v978, %v977
  %v1031 = vpack.c.b16 %v980, %v979
  %v1032 = vpack.c.b16 %v982, %v981
  %v1033 = vpack.c.b16 %v984, %v983
  %v1034 = vpack.c.b16 %v986, %v985
  %v1035 = vpack.c.b16 %v988, %v987
  %v1036 = vpack.c.b16 %v990, %v989
  %v1037 = vpack.c.b16 %v992, %v991
  %v1038 = vpack.c.b16 %v994, %v993
  %v1039 = vpack.c.b16 %v996, %v995
  %v1040 = vpack.c.b16 %v998, %v997
  %v1041 = vpack.c.b16 %v1000, %v999
  %v1042 = vpack.c.b16 %v1002, %v1001
  %v1043 = vpack.c.b16 %v1004, %v1003
  %v1044 = vpack.c.b16 %v1006, %v1005
  %v1045 = vpack.c.b16 %v1008, %v1007
  %v1046 = vpack.c.b16 %v1010, %v1009
  %v1047 = vpack.c.b16 %v1012, %v1011
  %v1048 = vpack.c.b16 %v1014, %v1013
  %v1049 = vpack.c.b16 %v1016, %v1015
  %v1050 = vpack.c.b16 %v1018, %v1017
  %1083 = vst [vmem:[%s5] sm:$0xff] %v1019
  %1084 = vst [vmem:[%s5 + $0x8] sm:$0xff] %v1020
  %1085 = vst [vmem:[%s5 + $0x10] sm:$0xff] %v1021
  %1086 = vst [vmem:[%s5 + $0x18] sm:$0xff] %v1022
  %1087 = vst [vmem:[%s5 + $0x20] sm:$0xff] %v1023
  %1088 = vst [vmem:[%s5 + $0x28] sm:$0xff] %v1024
  %1089 = vst [vmem:[%s5 + $0x30] sm:$0xff] %v1025
  %1090 = vst [vmem:[%s5 + $0x38] sm:$0xff] %v1026
  %1091 = vst [vmem:[%s5 + $0x40] sm:$0xff] %v1027
  %1092 = vst [vmem:[%s5 + $0x48] sm:$0xff] %v1028
  %1093 = vst [vmem:[%s5 + $0x50] sm:$0xff] %v1029
  %1094 = vst [vmem:[%s5 + $0x58] sm:$0xff] %v1030
  %1095 = vst [vmem:[%s5 + $0x60] sm:$0xff] %v1031
  %1096 = vst [vmem:[%s5 + $0x68] sm:$0xff] %v1032
  %1097 = vst [vmem:[%s5 + $0x70] sm:$0xff] %v1033
  %1098 = vst [vmem:[%s5 + $0x78] sm:$0xff] %v1034
  %1099 = vst [vmem:[%s5 + $0x80] sm:$0xff] %v1035
  %1100 = vst [vmem:[%s5 + $0x88] sm:$0xff] %v1036
  %1101 = vst [vmem:[%s5 + $0x90] sm:$0xff] %v1037
  %1102 = vst [vmem:[%s5 + $0x98] sm:$0xff] %v1038
  %1103 = vst [vmem:[%s5 + $0xa0] sm:$0xff] %v1039
  %1104 = vst [vmem:[%s5 + $0xa8] sm:$0xff] %v1040
  %1105 = vst [vmem:[%s5 + $0xb0] sm:$0xff] %v1041
  %1106 = vst [vmem:[%s5 + $0xb8] sm:$0xff] %v1042
  %1107 = vst [vmem:[%s5 + $0xc0] sm:$0xff] %v1043
  %1108 = vst [vmem:[%s5 + $0xc8] sm:$0xff] %v1044
  %1109 = vst [vmem:[%s5 + $0xd0] sm:$0xff] %v1045
  %1110 = vst [vmem:[%s5 + $0xd8] sm:$0xff] %v1046
  %1111 = vst [vmem:[%s5 + $0xe0] sm:$0xff] %v1047
  %1112 = vst [vmem:[%s5 + $0xe8] sm:$0xff] %v1048
  %1113 = vst [vmem:[%s5 + $0xf0] sm:$0xff] %v1049
  %1114 = vst [vmem:[%s5 + $0xf8] sm:$0xff] %v1050
  %v1115 = vunpack.c.l.bf16 %v891
  %v1116 = vunpack.c.l.bf16 %v892
  %v1117 = vunpack.c.h.bf16 %v891
  %v1118 = vunpack.c.h.bf16 %v892
  %v1119 = vunpack.c.l.bf16 %v893
  %v1120 = vunpack.c.l.bf16 %v894
  %v1121 = vunpack.c.h.bf16 %v893
  %v1122 = vunpack.c.h.bf16 %v894
  %v1123 = vunpack.c.l.bf16 %v895
  %v1124 = vunpack.c.l.bf16 %v896
  %v1125 = vunpack.c.h.bf16 %v895
  %v1126 = vunpack.c.h.bf16 %v896
  %v1127 = vunpack.c.l.bf16 %v897
  %v1128 = vunpack.c.l.bf16 %v898
  %v1129 = vunpack.c.h.bf16 %v897
  %v1130 = vunpack.c.h.bf16 %v898
  %v1131 = vunpack.c.l.bf16 %v899
  %v1132 = vunpack.c.l.bf16 %v900
  %v1133 = vunpack.c.h.bf16 %v899
  %v1134 = vunpack.c.h.bf16 %v900
  %v1135 = vunpack.c.l.bf16 %v901
  %v1136 = vunpack.c.l.bf16 %v902
  %v1137 = vunpack.c.h.bf16 %v901
  %v1138 = vunpack.c.h.bf16 %v902
  %v1139 = vunpack.c.l.bf16 %v903
  %v1140 = vunpack.c.l.bf16 %v904
  %v1141 = vunpack.c.h.bf16 %v903
  %v1142 = vunpack.c.h.bf16 %v904
  %v1143 = vunpack.c.l.bf16 %v905
  %v1144 = vunpack.c.l.bf16 %v906
  %v1145 = vunpack.c.h.bf16 %v905
  %v1146 = vunpack.c.h.bf16 %v906
  %v1147 = vunpack.c.l.bf16 %v907
  %v1148 = vunpack.c.l.bf16 %v908
  %v1149 = vunpack.c.h.bf16 %v907
  %v1150 = vunpack.c.h.bf16 %v908
  %v1151 = vunpack.c.l.bf16 %v909
  %v1152 = vunpack.c.l.bf16 %v910
  %v1153 = vunpack.c.h.bf16 %v909
  %v1154 = vunpack.c.h.bf16 %v910
  %v1155 = vunpack.c.l.bf16 %v911
  %v1156 = vunpack.c.l.bf16 %v912
  %v1157 = vunpack.c.h.bf16 %v911
  %v1158 = vunpack.c.h.bf16 %v912
  %v1159 = vunpack.c.l.bf16 %v913
  %v1160 = vunpack.c.l.bf16 %v914
  %v1161 = vunpack.c.h.bf16 %v913
  %v1162 = vunpack.c.h.bf16 %v914
  %v1163 = vunpack.c.l.bf16 %v915
  %v1164 = vunpack.c.l.bf16 %v916
  %v1165 = vunpack.c.h.bf16 %v915
  %v1166 = vunpack.c.h.bf16 %v916
  %v1167 = vunpack.c.l.bf16 %v917
  %v1168 = vunpack.c.l.bf16 %v918
  %v1169 = vunpack.c.h.bf16 %v917
  %v1170 = vunpack.c.h.bf16 %v918
  %v1171 = vunpack.c.l.bf16 %v919
  %v1172 = vunpack.c.l.bf16 %v920
  %v1173 = vunpack.c.h.bf16 %v919
  %v1174 = vunpack.c.h.bf16 %v920
  %v1175 = vunpack.c.l.bf16 %v921
  %v1176 = vunpack.c.l.bf16 %v922
  %v1177 = vunpack.c.h.bf16 %v921
  %v1178 = vunpack.c.h.bf16 %v922
  %v1179 = vadd.f32 %v1115, %v1116
  %1180 = vadd.xlane.f32.xlu0 %v1179
  %v1181 = vpop.xlane.xlu0 %1180
  %v1182 = vadd.f32 %v1117, %v1118
  %1183 = vadd.xlane.f32.xlu0 %v1182
  %v1184 = vpop.xlane.xlu0 %1183
  %v1185 = vadd.f32 %v1119, %v1120
  %1186 = vadd.xlane.f32.xlu0 %v1185
  %v1187 = vpop.xlane.xlu0 %1186
  %v1188 = vadd.f32 %v1121, %v1122
  %1189 = vadd.xlane.f32.xlu0 %v1188
  %v1190 = vpop.xlane.xlu0 %1189
  %v1191 = vadd.f32 %v1123, %v1124
  %1192 = vadd.xlane.f32.xlu0 %v1191
  %v1193 = vpop.xlane.xlu0 %1192
  %v1194 = vadd.f32 %v1125, %v1126
  %1195 = vadd.xlane.f32.xlu0 %v1194
  %v1196 = vpop.xlane.xlu0 %1195
  %v1197 = vadd.f32 %v1127, %v1128
  %1198 = vadd.xlane.f32.xlu0 %v1197
  %v1199 = vpop.xlane.xlu0 %1198
  %v1200 = vadd.f32 %v1129, %v1130
  %1201 = vadd.xlane.f32.xlu0 %v1200
  %v1202 = vpop.xlane.xlu0 %1201
  %v1203 = vadd.f32 %v1131, %v1132
  %1204 = vadd.xlane.f32.xlu0 %v1203
  %v1205 = vpop.xlane.xlu0 %1204
  %v1206 = vadd.f32 %v1133, %v1134
  %1207 = vadd.xlane.f32.xlu0 %v1206
  %v1208 = vpop.xlane.xlu0 %1207
  %v1209 = vadd.f32 %v1135, %v1136
  %1210 = vadd.xlane.f32.xlu0 %v1209
  %v1211 = vpop.xlane.xlu0 %1210
  %v1212 = vadd.f32 %v1137, %v1138
  %1213 = vadd.xlane.f32.xlu0 %v1212
  %v1214 = vpop.xlane.xlu0 %1213
  %v1215 = vadd.f32 %v1139, %v1140
  %1216 = vadd.xlane.f32.xlu0 %v1215
  %v1217 = vpop.xlane.xlu0 %1216
  %v1218 = vadd.f32 %v1141, %v1142
  %1219 = vadd.xlane.f32.xlu0 %v1218
  %v1220 = vpop.xlane.xlu0 %1219
  %v1221 = vadd.f32 %v1143, %v1144
  %1222 = vadd.xlane.f32.xlu0 %v1221
  %v1223 = vpop.xlane.xlu0 %1222
  %v1224 = vadd.f32 %v1145, %v1146
  %1225 = vadd.xlane.f32.xlu0 %v1224
  %v1226 = vpop.xlane.xlu0 %1225
  %v1227 = vadd.f32 %v1147, %v1148
  %1228 = vadd.xlane.f32.xlu0 %v1227
  %v1229 = vpop.xlane.xlu0 %1228
  %v1230 = vadd.f32 %v1149, %v1150
  %1231 = vadd.xlane.f32.xlu0 %v1230
  %v1232 = vpop.xlane.xlu0 %1231
  %v1233 = vadd.f32 %v1151, %v1152
  %1234 = vadd.xlane.f32.xlu0 %v1233
  %v1235 = vpop.xlane.xlu0 %1234
  %v1236 = vadd.f32 %v1153, %v1154
  %1237 = vadd.xlane.f32.xlu0 %v1236
  %v1238 = vpop.xlane.xlu0 %1237
  %v1239 = vadd.f32 %v1155, %v1156
  %1240 = vadd.xlane.f32.xlu0 %v1239
  %v1241 = vpop.xlane.xlu0 %1240
  %v1242 = vadd.f32 %v1157, %v1158
  %1243 = vadd.xlane.f32.xlu0 %v1242
  %v1244 = vpop.xlane.xlu0 %1243
  %v1245 = vadd.f32 %v1159, %v1160
  %1246 = vadd.xlane.f32.xlu0 %v1245
  %v1247 = vpop.xlane.xlu0 %1246
  %v1248 = vadd.f32 %v1161, %v1162
  %1249 = vadd.xlane.f32.xlu0 %v1248
  %v1250 = vpop.xlane.xlu0 %1249
  %v1251 = vadd.f32 %v1163, %v1164
  %1252 = vadd.xlane.f32.xlu0 %v1251
  %v1253 = vpop.xlane.xlu0 %1252
  %v1254 = vadd.f32 %v1165, %v1166
  %1255 = vadd.xlane.f32.xlu0 %v1254
  %v1256 = vpop.xlane.xlu0 %1255
  %v1257 = vadd.f32 %v1167, %v1168
  %1258 = vadd.xlane.f32.xlu0 %v1257
  %v1259 = vpop.xlane.xlu0 %1258
  %v1260 = vadd.f32 %v1169, %v1170
  %1261 = vadd.xlane.f32.xlu0 %v1260
  %v1262 = vpop.xlane.xlu0 %1261
  %v1263 = vadd.f32 %v1171, %v1172
  %1264 = vadd.xlane.f32.xlu0 %v1263
  %v1265 = vpop.xlane.xlu0 %1264
  %v1266 = vadd.f32 %v1173, %v1174
  %1267 = vadd.xlane.f32.xlu0 %v1266
  %v1268 = vpop.xlane.xlu0 %1267
  %v1269 = vadd.f32 %v1175, %v1176
  %1270 = vadd.xlane.f32.xlu0 %v1269
  %v1271 = vpop.xlane.xlu0 %1270
  %v1272 = vadd.f32 %v1177, %v1178
  %1273 = vadd.xlane.f32.xlu0 %v1272
  %v1274 = vpop.xlane.xlu0 %1273
  %v1275 = vmul.f32 %v1115, %v1115
  %v1276 = vmul.f32 %v1116, %v1116
  %v1277 = vmul.f32 %v1117, %v1117
  %v1278 = vmul.f32 %v1118, %v1118
  %v1279 = vmul.f32 %v1119, %v1119
  %v1280 = vmul.f32 %v1120, %v1120
  %v1281 = vmul.f32 %v1121, %v1121
  %v1282 = vmul.f32 %v1122, %v1122
  %v1283 = vmul.f32 %v1123, %v1123
  %v1284 = vmul.f32 %v1124, %v1124
  %v1285 = vmul.f32 %v1125, %v1125
  %v1286 = vmul.f32 %v1126, %v1126
  %v1287 = vmul.f32 %v1127, %v1127
  %v1288 = vmul.f32 %v1128, %v1128
  %v1289 = vmul.f32 %v1129, %v1129
  %v1290 = vmul.f32 %v1130, %v1130
  %v1291 = vmul.f32 %v1131, %v1131
  %v1292 = vmul.f32 %v1132, %v1132
  %v1293 = vmul.f32 %v1133, %v1133
  %v1294 = vmul.f32 %v1134, %v1134
  %v1295 = vmul.f32 %v1135, %v1135
  %v1296 = vmul.f32 %v1136, %v1136
  %v1297 = vmul.f32 %v1137, %v1137
  %v1298 = vmul.f32 %v1138, %v1138
  %v1299 = vmul.f32 %v1139, %v1139
  %v1300 = vmul.f32 %v1140, %v1140
  %v1301 = vmul.f32 %v1141, %v1141
  %v1302 = vmul.f32 %v1142, %v1142
  %v1303 = vmul.f32 %v1143, %v1143
  %v1304 = vmul.f32 %v1144, %v1144
  %v1305 = vmul.f32 %v1145, %v1145
  %v1306 = vmul.f32 %v1146, %v1146
  %v1307 = vmul.f32 %v1147, %v1147
  %v1308 = vmul.f32 %v1148, %v1148
  %v1309 = vmul.f32 %v1149, %v1149
  %v1310 = vmul.f32 %v1150, %v1150
  %v1311 = vmul.f32 %v1151, %v1151
  %v1312 = vmul.f32 %v1152, %v1152
  %v1313 = vmul.f32 %v1153, %v1153
  %v1314 = vmul.f32 %v1154, %v1154
  %v1315 = vmul.f32 %v1155, %v1155
  %v1316 = vmul.f32 %v1156, %v1156
  %v1317 = vmul.f32 %v1157, %v1157
  %v1318 = vmul.f32 %v1158, %v1158
  %v1319 = vmul.f32 %v1159, %v1159
  %v1320 = vmul.f32 %v1160, %v1160
  %v1321 = vmul.f32 %v1161, %v1161
  %v1322 = vmul.f32 %v1162, %v1162
  %v1323 = vmul.f32 %v1163, %v1163
  %v1324 = vmul.f32 %v1164, %v1164
  %v1325 = vmul.f32 %v1165, %v1165
  %v1326 = vmul.f32 %v1166, %v1166
  %v1327 = vmul.f32 %v1167, %v1167
  %v1328 = vmul.f32 %v1168, %v1168
  %v1329 = vmul.f32 %v1169, %v1169
  %v1330 = vmul.f32 %v1170, %v1170
  %v1331 = vmul.f32 %v1171, %v1171
  %v1332 = vmul.f32 %v1172, %v1172
  %v1333 = vmul.f32 %v1173, %v1173
  %v1334 = vmul.f32 %v1174, %v1174
  %v1335 = vmul.f32 %v1175, %v1175
  %v1336 = vmul.f32 %v1176, %v1176
  %v1337 = vmul.f32 %v1177, %v1177
  %v1338 = vmul.f32 %v1178, %v1178
  %v1339 = vadd.f32 %v1275, %v1276
  %1340 = vadd.xlane.f32.xlu0 %v1339
  %v1341 = vpop.xlane.xlu0 %1340
  %v1342 = vadd.f32 %v1277, %v1278
  %1343 = vadd.xlane.f32.xlu0 %v1342
  %v1344 = vpop.xlane.xlu0 %1343
  %v1345 = vadd.f32 %v1279, %v1280
  %1346 = vadd.xlane.f32.xlu0 %v1345
  %v1347 = vpop.xlane.xlu0 %1346
  %v1348 = vadd.f32 %v1281, %v1282
  %1349 = vadd.xlane.f32.xlu0 %v1348
  %v1350 = vpop.xlane.xlu0 %1349
  %v1351 = vadd.f32 %v1283, %v1284
  %1352 = vadd.xlane.f32.xlu0 %v1351
  %v1353 = vpop.xlane.xlu0 %1352
  %v1354 = vadd.f32 %v1285, %v1286
  %1355 = vadd.xlane.f32.xlu0 %v1354
  %v1356 = vpop.xlane.xlu0 %1355
  %v1357 = vadd.f32 %v1287, %v1288
  %1358 = vadd.xlane.f32.xlu0 %v1357
  %v1359 = vpop.xlane.xlu0 %1358
  %v1360 = vadd.f32 %v1289, %v1290
  %1361 = vadd.xlane.f32.xlu0 %v1360
  %v1362 = vpop.xlane.xlu0 %1361
  %v1363 = vadd.f32 %v1291, %v1292
  %1364 = vadd.xlane.f32.xlu0 %v1363
  %v1365 = vpop.xlane.xlu0 %1364
  %v1366 = vadd.f32 %v1293, %v1294
  %1367 = vadd.xlane.f32.xlu0 %v1366
  %v1368 = vpop.xlane.xlu0 %1367
  %v1369 = vadd.f32 %v1295, %v1296
  %1370 = vadd.xlane.f32.xlu0 %v1369
  %v1371 = vpop.xlane.xlu0 %1370
  %v1372 = vadd.f32 %v1297, %v1298
  %1373 = vadd.xlane.f32.xlu0 %v1372
  %v1374 = vpop.xlane.xlu0 %1373
  %v1375 = vadd.f32 %v1299, %v1300
  %1376 = vadd.xlane.f32.xlu0 %v1375
  %v1377 = vpop.xlane.xlu0 %1376
  %v1378 = vadd.f32 %v1301, %v1302
  %1379 = vadd.xlane.f32.xlu0 %v1378
  %v1380 = vpop.xlane.xlu0 %1379
  %v1381 = vadd.f32 %v1303, %v1304
  %1382 = vadd.xlane.f32.xlu0 %v1381
  %v1383 = vpop.xlane.xlu0 %1382
  %v1384 = vadd.f32 %v1305, %v1306
  %1385 = vadd.xlane.f32.xlu0 %v1384
  %v1386 = vpop.xlane.xlu0 %1385
  %v1387 = vadd.f32 %v1307, %v1308
  %1388 = vadd.xlane.f32.xlu0 %v1387
  %v1389 = vpop.xlane.xlu0 %1388
  %v1390 = vadd.f32 %v1309, %v1310
  %1391 = vadd.xlane.f32.xlu0 %v1390
  %v1392 = vpop.xlane.xlu0 %1391
  %v1393 = vadd.f32 %v1311, %v1312
  %1394 = vadd.xlane.f32.xlu0 %v1393
  %v1395 = vpop.xlane.xlu0 %1394
  %v1396 = vadd.f32 %v1313, %v1314
  %1397 = vadd.xlane.f32.xlu0 %v1396
  %v1398 = vpop.xlane.xlu0 %1397
  %v1399 = vadd.f32 %v1315, %v1316
  %1400 = vadd.xlane.f32.xlu0 %v1399
  %v1401 = vpop.xlane.xlu0 %1400
  %v1402 = vadd.f32 %v1317, %v1318
  %1403 = vadd.xlane.f32.xlu0 %v1402
  %v1404 = vpop.xlane.xlu0 %1403
  %v1405 = vadd.f32 %v1319, %v1320
  %1406 = vadd.xlane.f32.xlu0 %v1405
  %v1407 = vpop.xlane.xlu0 %1406
  %v1408 = vadd.f32 %v1321, %v1322
  %1409 = vadd.xlane.f32.xlu0 %v1408
  %v1410 = vpop.xlane.xlu0 %1409
  %v1411 = vadd.f32 %v1323, %v1324
  %1412 = vadd.xlane.f32.xlu0 %v1411
  %v1413 = vpop.xlane.xlu0 %1412
  %v1414 = vadd.f32 %v1325, %v1326
  %1415 = vadd.xlane.f32.xlu0 %v1414
  %v1416 = vpop.xlane.xlu0 %1415
  %v1417 = vadd.f32 %v1327, %v1328
  %1418 = vadd.xlane.f32.xlu0 %v1417
  %v1419 = vpop.xlane.xlu0 %1418
  %v1420 = vadd.f32 %v1329, %v1330
  %1421 = vadd.xlane.f32.xlu0 %v1420
  %v1422 = vpop.xlane.xlu0 %1421
  %v1423 = vadd.f32 %v1331, %v1332
  %1424 = vadd.xlane.f32.xlu0 %v1423
  %v1425 = vpop.xlane.xlu0 %1424
  %v1426 = vadd.f32 %v1333, %v1334
  %1427 = vadd.xlane.f32.xlu0 %v1426
  %v1428 = vpop.xlane.xlu0 %1427
  %v1429 = vadd.f32 %v1335, %v1336
  %1430 = vadd.xlane.f32.xlu0 %v1429
  %v1431 = vpop.xlane.xlu0 %1430
  %v1432 = vadd.f32 %v1337, %v1338
  %1433 = vadd.xlane.f32.xlu0 %v1432
  %v1434 = vpop.xlane.xlu0 %1433
  %v1467 = vlaneseq
  %v1468 = vand.u32 %v1467, 127
  %v1469 = vlaneseq
  %v1470 = vshrl.u32 %v1469, 7
  %v1471 = vsub.s32 %v1468, %v1470
  %v1472 = vrot.slane %v1181, %v1471
  %v1473 = vadd.s32 %v1468, 4294967288
  %v1474 = vlaneseq
  %v1475 = vshrl.u32 %v1474, 7
  %v1476 = vsub.s32 %v1473, %v1475
  %v1477 = vrot.slane %v1184, %v1476
  %vm1478 = vcmask 130112
  %v1479 = vsel %vm1478, %v1477, %v1472
  %v1480 = vadd.s32 %v1468, 4294967280
  %v1481 = vlaneseq
  %v1482 = vshrl.u32 %v1481, 7
  %v1483 = vsub.s32 %v1480, %v1482
  %v1484 = vrot.slane %v1187, %v1483
  %vm1485 = vcmask 195712
  %v1486 = vsel %vm1485, %v1484, %v1479
  %v1487 = vadd.s32 %v1468, 4294967272
  %v1488 = vlaneseq
  %v1489 = vshrl.u32 %v1488, 7
  %v1490 = vsub.s32 %v1487, %v1489
  %v1491 = vrot.slane %v1190, %v1490
  %vm1492 = vcmask 261312
  %v1493 = vsel %vm1492, %v1491, %v1486
  %v1494 = vadd.s32 %v1468, 4294967264
  %v1495 = vlaneseq
  %v1496 = vshrl.u32 %v1495, 7
  %v1497 = vsub.s32 %v1494, %v1496
  %v1498 = vrot.slane %v1193, %v1497
  %vm1499 = vcmask 326912
  %v1500 = vsel %vm1499, %v1498, %v1493
  %v1501 = vadd.s32 %v1468, 4294967256
  %v1502 = vlaneseq
  %v1503 = vshrl.u32 %v1502, 7
  %v1504 = vsub.s32 %v1501, %v1503
  %v1505 = vrot.slane %v1196, %v1504
  %vm1506 = vcmask 392512
  %v1507 = vsel %vm1506, %v1505, %v1500
  %v1508 = vadd.s32 %v1468, 4294967248
  %v1509 = vlaneseq
  %v1510 = vshrl.u32 %v1509, 7
  %v1511 = vsub.s32 %v1508, %v1510
  %v1512 = vrot.slane %v1199, %v1511
  %vm1513 = vcmask 458112
  %v1514 = vsel %vm1513, %v1512, %v1507
  %v1515 = vadd.s32 %v1468, 4294967240
  %v1516 = vlaneseq
  %v1517 = vshrl.u32 %v1516, 7
  %v1518 = vsub.s32 %v1515, %v1517
  %v1519 = vrot.slane %v1202, %v1518
  %vm1520 = vcmask 523712
  %v1521 = vsel %vm1520, %v1519, %v1514
  %v1522 = vadd.s32 %v1468, 4294967232
  %v1523 = vlaneseq
  %v1524 = vshrl.u32 %v1523, 7
  %v1525 = vsub.s32 %v1522, %v1524
  %v1526 = vrot.slane %v1205, %v1525
  %vm1527 = vcmask 589312
  %v1528 = vsel %vm1527, %v1526, %v1521
  %v1529 = vadd.s32 %v1468, 4294967224
  %v1530 = vlaneseq
  %v1531 = vshrl.u32 %v1530, 7
  %v1532 = vsub.s32 %v1529, %v1531
  %v1533 = vrot.slane %v1208, %v1532
  %vm1534 = vcmask 654912
  %v1535 = vsel %vm1534, %v1533, %v1528
  %v1536 = vadd.s32 %v1468, 4294967216
  %v1537 = vlaneseq
  %v1538 = vshrl.u32 %v1537, 7
  %v1539 = vsub.s32 %v1536, %v1538
  %v1540 = vrot.slane %v1211, %v1539
  %vm1541 = vcmask 720512
  %v1542 = vsel %vm1541, %v1540, %v1535
  %v1543 = vadd.s32 %v1468, 4294967208
  %v1544 = vlaneseq
  %v1545 = vshrl.u32 %v1544, 7
  %v1546 = vsub.s32 %v1543, %v1545
  %v1547 = vrot.slane %v1214, %v1546
  %vm1548 = vcmask 786112
  %v1549 = vsel %vm1548, %v1547, %v1542
  %v1550 = vadd.s32 %v1468, 4294967200
  %v1551 = vlaneseq
  %v1552 = vshrl.u32 %v1551, 7
  %v1553 = vsub.s32 %v1550, %v1552
  %v1554 = vrot.slane %v1217, %v1553
  %vm1555 = vcmask 851712
  %v1556 = vsel %vm1555, %v1554, %v1549
  %v1557 = vadd.s32 %v1468, 4294967192
  %v1558 = vlaneseq
  %v1559 = vshrl.u32 %v1558, 7
  %v1560 = vsub.s32 %v1557, %v1559
  %v1561 = vrot.slane %v1220, %v1560
  %vm1562 = vcmask 917312
  %v1563 = vsel %vm1562, %v1561, %v1556
  %v1564 = vadd.s32 %v1468, 4294967184
  %v1565 = vlaneseq
  %v1566 = vshrl.u32 %v1565, 7
  %v1567 = vsub.s32 %v1564, %v1566
  %v1568 = vrot.slane %v1223, %v1567
  %vm1569 = vcmask 982912
  %v1570 = vsel %vm1569, %v1568, %v1563
  %v1571 = vadd.s32 %v1468, 4294967176
  %v1572 = vlaneseq
  %v1573 = vshrl.u32 %v1572, 7
  %v1574 = vsub.s32 %v1571, %v1573
  %v1575 = vrot.slane %v1226, %v1574
  %vm1576 = vcmask 1048512
  %v1577 = vsel %vm1576, %v1575, %v1570
  %v1578 = vlaneseq
  %v1579 = vshrl.u32 %v1578, 7
  %v1580 = vsub.s32 %v1468, %v1579
  %v1581 = vrot.slane %v1229, %v1580
  %v1582 = vlaneseq
  %v1583 = vshrl.u32 %v1582, 7
  %v1584 = vsub.s32 %v1473, %v1583
  %v1585 = vrot.slane %v1232, %v1584
  %v1586 = vsel %vm1478, %v1585, %v1581
  %v1587 = vlaneseq
  %v1588 = vshrl.u32 %v1587, 7
  %v1589 = vsub.s32 %v1480, %v1588
  %v1590 = vrot.slane %v1235, %v1589
  %v1591 = vsel %vm1485, %v1590, %v1586
  %v1592 = vlaneseq
  %v1593 = vshrl.u32 %v1592, 7
  %v1594 = vsub.s32 %v1487, %v1593
  %v1595 = vrot.slane %v1238, %v1594
  %v1596 = vsel %vm1492, %v1595, %v1591
  %v1597 = vlaneseq
  %v1598 = vshrl.u32 %v1597, 7
  %v1599 = vsub.s32 %v1494, %v1598
  %v1600 = vrot.slane %v1241, %v1599
  %v1601 = vsel %vm1499, %v1600, %v1596
  %v1602 = vlaneseq
  %v1603 = vshrl.u32 %v1602, 7
  %v1604 = vsub.s32 %v1501, %v1603
  %v1605 = vrot.slane %v1244, %v1604
  %v1606 = vsel %vm1506, %v1605, %v1601
  %v1607 = vlaneseq
  %v1608 = vshrl.u32 %v1607, 7
  %v1609 = vsub.s32 %v1508, %v1608
  %v1610 = vrot.slane %v1247, %v1609
  %v1611 = vsel %vm1513, %v1610, %v1606
  %v1612 = vlaneseq
  %v1613 = vshrl.u32 %v1612, 7
  %v1614 = vsub.s32 %v1515, %v1613
  %v1615 = vrot.slane %v1250, %v1614
  %v1616 = vsel %vm1520, %v1615, %v1611
  %v1617 = vlaneseq
  %v1618 = vshrl.u32 %v1617, 7
  %v1619 = vsub.s32 %v1522, %v1618
  %v1620 = vrot.slane %v1253, %v1619
  %v1621 = vsel %vm1527, %v1620, %v1616
  %v1622 = vlaneseq
  %v1623 = vshrl.u32 %v1622, 7
  %v1624 = vsub.s32 %v1529, %v1623
  %v1625 = vrot.slane %v1256, %v1624
  %v1626 = vsel %vm1534, %v1625, %v1621
  %v1627 = vlaneseq
  %v1628 = vshrl.u32 %v1627, 7
  %v1629 = vsub.s32 %v1536, %v1628
  %v1630 = vrot.slane %v1259, %v1629
  %v1631 = vsel %vm1541, %v1630, %v1626
  %v1632 = vlaneseq
  %v1633 = vshrl.u32 %v1632, 7
  %v1634 = vsub.s32 %v1543, %v1633
  %v1635 = vrot.slane %v1262, %v1634
  %v1636 = vsel %vm1548, %v1635, %v1631
  %v1637 = vlaneseq
  %v1638 = vshrl.u32 %v1637, 7
  %v1639 = vsub.s32 %v1550, %v1638
  %v1640 = vrot.slane %v1265, %v1639
  %v1641 = vsel %vm1555, %v1640, %v1636
  %v1642 = vlaneseq
  %v1643 = vshrl.u32 %v1642, 7
  %v1644 = vsub.s32 %v1557, %v1643
  %v1645 = vrot.slane %v1268, %v1644
  %v1646 = vsel %vm1562, %v1645, %v1641
  %v1647 = vlaneseq
  %v1648 = vshrl.u32 %v1647, 7
  %v1649 = vsub.s32 %v1564, %v1648
  %v1650 = vrot.slane %v1271, %v1649
  %v1651 = vsel %vm1569, %v1650, %v1646
  %v1652 = vlaneseq
  %v1653 = vshrl.u32 %v1652, 7
  %v1654 = vsub.s32 %v1571, %v1653
  %v1655 = vrot.slane %v1274, %v1654
  %v1656 = vsel %vm1576, %v1655, %v1651
  %v1691 = vlaneseq
  %v1692 = vshrl.u32 %v1691, 7
  %v1693 = vsub.s32 %v1468, %v1692
  %v1694 = vrot.slane %v1341, %v1693
  %v1695 = vlaneseq
  %v1696 = vshrl.u32 %v1695, 7
  %v1697 = vsub.s32 %v1473, %v1696
  %v1698 = vrot.slane %v1344, %v1697
  %v1699 = vsel %vm1478, %v1698, %v1694
  %v1700 = vlaneseq
  %v1701 = vshrl.u32 %v1700, 7
  %v1702 = vsub.s32 %v1480, %v1701
  %v1703 = vrot.slane %v1347, %v1702
  %v1704 = vsel %vm1485, %v1703, %v1699
  %v1705 = vlaneseq
  %v1706 = vshrl.u32 %v1705, 7
  %v1707 = vsub.s32 %v1487, %v1706
  %v1708 = vrot.slane %v1350, %v1707
  %v1709 = vsel %vm1492, %v1708, %v1704
  %v1710 = vlaneseq
  %v1711 = vshrl.u32 %v1710, 7
  %v1712 = vsub.s32 %v1494, %v1711
  %v1713 = vrot.slane %v1353, %v1712
  %v1714 = vsel %vm1499, %v1713, %v1709
  %v1715 = vlaneseq
  %v1716 = vshrl.u32 %v1715, 7
  %v1717 = vsub.s32 %v1501, %v1716
  %v1718 = vrot.slane %v1356, %v1717
  %v1719 = vsel %vm1506, %v1718, %v1714
  %v1720 = vlaneseq
  %v1721 = vshrl.u32 %v1720, 7
  %v1722 = vsub.s32 %v1508, %v1721
  %v1723 = vrot.slane %v1359, %v1722
  %v1724 = vsel %vm1513, %v1723, %v1719
  %v1725 = vlaneseq
  %v1726 = vshrl.u32 %v1725, 7
  %v1727 = vsub.s32 %v1515, %v1726
  %v1728 = vrot.slane %v1362, %v1727
  %v1729 = vsel %vm1520, %v1728, %v1724
  %v1730 = vlaneseq
  %v1731 = vshrl.u32 %v1730, 7
  %v1732 = vsub.s32 %v1522, %v1731
  %v1733 = vrot.slane %v1365, %v1732
  %v1734 = vsel %vm1527, %v1733, %v1729
  %v1735 = vlaneseq
  %v1736 = vshrl.u32 %v1735, 7
  %v1737 = vsub.s32 %v1529, %v1736
  %v1738 = vrot.slane %v1368, %v1737
  %v1739 = vsel %vm1534, %v1738, %v1734
  %v1740 = vlaneseq
  %v1741 = vshrl.u32 %v1740, 7
  %v1742 = vsub.s32 %v1536, %v1741
  %v1743 = vrot.slane %v1371, %v1742
  %v1744 = vsel %vm1541, %v1743, %v1739
  %v1745 = vlaneseq
  %v1746 = vshrl.u32 %v1745, 7
  %v1747 = vsub.s32 %v1543, %v1746
  %v1748 = vrot.slane %v1374, %v1747
  %v1749 = vsel %vm1548, %v1748, %v1744
  %v1750 = vlaneseq
  %v1751 = vshrl.u32 %v1750, 7
  %v1752 = vsub.s32 %v1550, %v1751
  %v1753 = vrot.slane %v1377, %v1752
  %v1754 = vsel %vm1555, %v1753, %v1749
  %v1755 = vlaneseq
  %v1756 = vshrl.u32 %v1755, 7
  %v1757 = vsub.s32 %v1557, %v1756
  %v1758 = vrot.slane %v1380, %v1757
  %v1759 = vsel %vm1562, %v1758, %v1754
  %v1760 = vlaneseq
  %v1761 = vshrl.u32 %v1760, 7
  %v1762 = vsub.s32 %v1564, %v1761
  %v1763 = vrot.slane %v1383, %v1762
  %v1764 = vsel %vm1569, %v1763, %v1759
  %v1765 = vlaneseq
  %v1766 = vshrl.u32 %v1765, 7
  %v1767 = vsub.s32 %v1571, %v1766
  %v1768 = vrot.slane %v1386, %v1767
  %v1769 = vsel %vm1576, %v1768, %v1764
  %v1770 = vlaneseq
  %v1771 = vshrl.u32 %v1770, 7
  %v1772 = vsub.s32 %v1468, %v1771
  %v1773 = vrot.slane %v1389, %v1772
  %v1774 = vlaneseq
  %v1775 = vshrl.u32 %v1774, 7
  %v1776 = vsub.s32 %v1473, %v1775
  %v1777 = vrot.slane %v1392, %v1776
  %v1778 = vsel %vm1478, %v1777, %v1773
  %v1779 = vlaneseq
  %v1780 = vshrl.u32 %v1779, 7
  %v1781 = vsub.s32 %v1480, %v1780
  %v1782 = vrot.slane %v1395, %v1781
  %v1783 = vsel %vm1485, %v1782, %v1778
  %v1784 = vlaneseq
  %v1785 = vshrl.u32 %v1784, 7
  %v1786 = vsub.s32 %v1487, %v1785
  %v1787 = vrot.slane %v1398, %v1786
  %v1788 = vsel %vm1492, %v1787, %v1783
  %v1789 = vlaneseq
  %v1790 = vshrl.u32 %v1789, 7
  %v1791 = vsub.s32 %v1494, %v1790
  %v1792 = vrot.slane %v1401, %v1791
  %v1793 = vsel %vm1499, %v1792, %v1788
  %v1794 = vlaneseq
  %v1795 = vshrl.u32 %v1794, 7
  %v1796 = vsub.s32 %v1501, %v1795
  %v1797 = vrot.slane %v1404, %v1796
  %v1798 = vsel %vm1506, %v1797, %v1793
  %v1799 = vlaneseq
  %v1800 = vshrl.u32 %v1799, 7
  %v1801 = vsub.s32 %v1508, %v1800
  %v1802 = vrot.slane %v1407, %v1801
  %v1803 = vsel %vm1513, %v1802, %v1798
  %v1804 = vlaneseq
  %v1805 = vshrl.u32 %v1804, 7
  %v1806 = vsub.s32 %v1515, %v1805
  %v1807 = vrot.slane %v1410, %v1806
  %v1808 = vsel %vm1520, %v1807, %v1803
  %v1809 = vlaneseq
  %v1810 = vshrl.u32 %v1809, 7
  %v1811 = vsub.s32 %v1522, %v1810
  %v1812 = vrot.slane %v1413, %v1811
  %v1813 = vsel %vm1527, %v1812, %v1808
  %v1814 = vlaneseq
  %v1815 = vshrl.u32 %v1814, 7
  %v1816 = vsub.s32 %v1529, %v1815
  %v1817 = vrot.slane %v1416, %v1816
  %v1818 = vsel %vm1534, %v1817, %v1813
  %v1819 = vlaneseq
  %v1820 = vshrl.u32 %v1819, 7
  %v1821 = vsub.s32 %v1536, %v1820
  %v1822 = vrot.slane %v1419, %v1821
  %v1823 = vsel %vm1541, %v1822, %v1818
  %v1824 = vlaneseq
  %v1825 = vshrl.u32 %v1824, 7
  %v1826 = vsub.s32 %v1543, %v1825
  %v1827 = vrot.slane %v1422, %v1826
  %v1828 = vsel %vm1548, %v1827, %v1823
  %v1829 = vlaneseq
  %v1830 = vshrl.u32 %v1829, 7
  %v1831 = vsub.s32 %v1550, %v1830
  %v1832 = vrot.slane %v1425, %v1831
  %v1833 = vsel %vm1555, %v1832, %v1828
  %v1834 = vlaneseq
  %v1835 = vshrl.u32 %v1834, 7
  %v1836 = vsub.s32 %v1557, %v1835
  %v1837 = vrot.slane %v1428, %v1836
  %v1838 = vsel %vm1562, %v1837, %v1833
  %v1839 = vlaneseq
  %v1840 = vshrl.u32 %v1839, 7
  %v1841 = vsub.s32 %v1564, %v1840
  %v1842 = vrot.slane %v1431, %v1841
  %v1843 = vsel %vm1569, %v1842, %v1838
  %v1844 = vlaneseq
  %v1845 = vshrl.u32 %v1844, 7
  %v1846 = vsub.s32 %v1571, %v1845
  %v1847 = vrot.slane %v1434, %v1846
  %v1848 = vsel %vm1576, %v1847, %v1843
  %vm1851 = vcmask 1040384
  %v1852 = vsel %vm1851, %v1577, %v1769
  %v1853 = vsel %vm1851, %v1656, %v1848
  %1854 = vst [vmem:[%s6] sm:$0x3] %v1852
  %1855 = vst [vmem:[%s6 + $0x2] sm:$0x3] %v1853
  // Predicated region
  $region22: #{oafilter.6} parent=0 // pred_check
    _
  $region23: #{oafilter.6} parent=0 // pred_check_branch
    %1857 = sbr.rel (0) target = $region25
  $region24: #{oafilter.6} parent=0 // pred_region
    _
  $region25: #{oafilter.6} parent=0 // pred_fallthru
    _
  // Predicated region
  $region26: #{oafilter.6} parent=0 // pred_check
    _
  $region27: #{oafilter.6} parent=0 // pred_check_branch
    %1859 = sbr.rel (0) target = $region29
  $region28: #{oafilter.6} parent=0 // pred_region
    _
  $region29: #{oafilter.6} parent=0 // pred_fallthru
    _
  // Predicated region
  $region30: #{oafilter.6} parent=0 // pred_check
    _
  $region31: #{oafilter.6} parent=0 // pred_check_branch
    %1861 = sbr.rel (0) target = $region33
  $region32: #{oafilter.6} parent=0 // pred_region
    _
  $region33: #{oafilter.6} parent=0 // pred_fallthru
    _
  // Predicated region
  $region34: #{oafilter.6} parent=0 // pred_check
    _
  $region35: #{oafilter.6} parent=0 // pred_check_branch
    %1863 = sbr.rel (0) target = $region37
  $region36: #{oafilter.6} parent=0 // pred_region
    _
  $region37: #{oafilter.6} parent=0 // pred_fallthru
    _

// kernel: oafilter.7
$region0: #{oafilter.7}
  #allocation0 [shape = 'u32[]', space=smem, size = 0x4, offset = 0x4, fixed_abs, tag = 'smem constant byte address 0x4 - core index']
  #allocation1 [shape = 'u32[144,128]{1,0:T(1,128)}', space=vmem, size = 0x12000, scoped, tag = 'internal scratch']
  %s0 = inlined_call_operand.vmem [shape: bf16[2,128,256], index: 0, kind: input, shape index: {}]
  %s1 = inlined_call_operand.vmem [shape: f32[2,128,256], index: 1, kind: input, shape index: {}]
  %s2 = inlined_call_operand.vmem [shape: f32[2,128,1], index: 2, kind: input, shape index: {}]
  %s3 = inlined_call_operand.vmem [shape: f32[2,128,1], index: 3, kind: input, shape index: {}]
  %s4 = inlined_call_operand.vmem [shape: bf16[128,128], index: 4, kind: input, shape index: {}]
  %s5 = inlined_call_operand.vmem [shape: f32[128,1], index: 5, kind: input, shape index: {}]
  %s6 = inlined_call_operand.vmem [shape: f32[2,128,256], index: 6, kind: output, shape index: {}]
  %s7 = sld [smem:[#allocation0]]
  $region34: #{oafilter.7} parent=0
    _
  %s9 = ssub.s32 1, %s7
  %s10 = scalar_select 0, %s9, %s7
  // Predicated region
  $region2: #{oafilter.7} parent=0 // pred_check
    _
  $region3: #{oafilter.7} parent=0 // pred_check_branch
    %12 = sbr.rel (0) target = $region5
  $region4: #{oafilter.7} parent=0 // pred_region
    _
  $region5: #{oafilter.7} parent=0 // pred_fallthru
    _
  // Predicated region
  $region6: #{oafilter.7} parent=0 // pred_check
    _
  $region7: #{oafilter.7} parent=0 // pred_check_branch
    %14 = sbr.rel (0) target = $region9
  $region8: #{oafilter.7} parent=0 // pred_region
    _
  $region9: #{oafilter.7} parent=0 // pred_fallthru
    _
  // Predicated region
  $region10: #{oafilter.7} parent=0 // pred_check
    _
  $region11: #{oafilter.7} parent=0 // pred_check_branch
    %16 = sbr.rel (0) target = $region13
  $region12: #{oafilter.7} parent=0 // pred_region
    _
  $region13: #{oafilter.7} parent=0 // pred_fallthru
    _
  // Predicated region
  $region14: #{oafilter.7} parent=0 // pred_check
    _
  $region15: #{oafilter.7} parent=0 // pred_check_branch
    %18 = sbr.rel (0) target = $region17
  $region16: #{oafilter.7} parent=0 // pred_region
    _
  $region17: #{oafilter.7} parent=0 // pred_fallthru
    _
  // Predicated region
  $region18: #{oafilter.7} parent=0 // pred_check
    _
  $region19: #{oafilter.7} parent=0 // pred_check_branch
    %20 = sbr.rel (0) target = $region21
  $region20: #{oafilter.7} parent=0 // pred_region
    _
  $region21: #{oafilter.7} parent=0 // pred_fallthru
    _
  // Predicated region
  $region22: #{oafilter.7} parent=0 // pred_check
    _
  $region23: #{oafilter.7} parent=0 // pred_check_branch
    %22 = sbr.rel (0) target = $region25
  $region24: #{oafilter.7} parent=0 // pred_region
    _
  $region25: #{oafilter.7} parent=0 // pred_fallthru
    _
  %v24 = vld [vmem:[%s4] sm:$0xf]
  %v25 = vld [vmem:[%s4 + $0x4] sm:$0xf]
  %v26 = vld [vmem:[%s4 + $0x8] sm:$0xf]
  %v27 = vld [vmem:[%s4 + $0xc] sm:$0xf]
  %v28 = vld [vmem:[%s4 + $0x10] sm:$0xf]
  %v29 = vld [vmem:[%s4 + $0x14] sm:$0xf]
  %v30 = vld [vmem:[%s4 + $0x18] sm:$0xf]
  %v31 = vld [vmem:[%s4 + $0x1c] sm:$0xf]
  %v32 = vld [vmem:[%s4 + $0x20] sm:$0xf]
  %v33 = vld [vmem:[%s4 + $0x24] sm:$0xf]
  %v34 = vld [vmem:[%s4 + $0x28] sm:$0xf]
  %v35 = vld [vmem:[%s4 + $0x2c] sm:$0xf]
  %v36 = vld [vmem:[%s4 + $0x30] sm:$0xf]
  %v37 = vld [vmem:[%s4 + $0x34] sm:$0xf]
  %v38 = vld [vmem:[%s4 + $0x38] sm:$0xf]
  %v39 = vld [vmem:[%s4 + $0x3c] sm:$0xf]
  %v40 = vld [vmem:[%s5] sm:$0xff]
  %v41 = vld [vmem:[%s5 + $0x8] sm:$0xff]
  %v42 = vld [vmem:[%s5 + $0x10] sm:$0xff]
  %v43 = vld [vmem:[%s5 + $0x18] sm:$0xff]
  %v44 = vld [vmem:[%s5 + $0x20] sm:$0xff]
  %v45 = vld [vmem:[%s5 + $0x28] sm:$0xff]
  %v46 = vld [vmem:[%s5 + $0x30] sm:$0xff]
  %v47 = vld [vmem:[%s5 + $0x38] sm:$0xff]
  %v48 = vld [vmem:[%s5 + $0x40] sm:$0xff]
  %v49 = vld [vmem:[%s5 + $0x48] sm:$0xff]
  %v50 = vld [vmem:[%s5 + $0x50] sm:$0xff]
  %v51 = vld [vmem:[%s5 + $0x58] sm:$0xff]
  %v52 = vld [vmem:[%s5 + $0x60] sm:$0xff]
  %v53 = vld [vmem:[%s5 + $0x68] sm:$0xff]
  %v54 = vld [vmem:[%s5 + $0x70] sm:$0xff]
  %v55 = vld [vmem:[%s5 + $0x78] sm:$0xff]
  %v56 = vld [vmem:[%s0] sm:$0xff]
  %v57 = vld [vmem:[%s0 + $0x8] sm:$0xff]
  %v58 = vld [vmem:[%s0 + $0x10] sm:$0xff]
  %v59 = vld [vmem:[%s0 + $0x18] sm:$0xff]
  %v60 = vld [vmem:[%s0 + $0x20] sm:$0xff]
  %v61 = vld [vmem:[%s0 + $0x28] sm:$0xff]
  %v62 = vld [vmem:[%s0 + $0x30] sm:$0xff]
  %v63 = vld [vmem:[%s0 + $0x38] sm:$0xff]
  %v64 = vld [vmem:[%s0 + $0x40] sm:$0xff]
  %v65 = vld [vmem:[%s0 + $0x48] sm:$0xff]
  %v66 = vld [vmem:[%s0 + $0x50] sm:$0xff]
  %v67 = vld [vmem:[%s0 + $0x58] sm:$0xff]
  %v68 = vld [vmem:[%s0 + $0x60] sm:$0xff]
  %v69 = vld [vmem:[%s0 + $0x68] sm:$0xff]
  %v70 = vld [vmem:[%s0 + $0x70] sm:$0xff]
  %v71 = vld [vmem:[%s0 + $0x78] sm:$0xff]
  %v72 = vunpack.c.l.bf16 %v56
  %v73 = vunpack.c.h.bf16 %v56
  %v74 = vunpack.c.l.bf16 %v57
  %v75 = vunpack.c.h.bf16 %v57
  %v76 = vunpack.c.l.bf16 %v58
  %v77 = vunpack.c.h.bf16 %v58
  %v78 = vunpack.c.l.bf16 %v59
  %v79 = vunpack.c.h.bf16 %v59
  %v80 = vunpack.c.l.bf16 %v60
  %v81 = vunpack.c.h.bf16 %v60
  %v82 = vunpack.c.l.bf16 %v61
  %v83 = vunpack.c.h.bf16 %v61
  %v84 = vunpack.c.l.bf16 %v62
  %v85 = vunpack.c.h.bf16 %v62
  %v86 = vunpack.c.l.bf16 %v63
  %v87 = vunpack.c.h.bf16 %v63
  %v88 = vunpack.c.l.bf16 %v64
  %v89 = vunpack.c.h.bf16 %v64
  %v90 = vunpack.c.l.bf16 %v65
  %v91 = vunpack.c.h.bf16 %v65
  %v92 = vunpack.c.l.bf16 %v66
  %v93 = vunpack.c.h.bf16 %v66
  %v94 = vunpack.c.l.bf16 %v67
  %v95 = vunpack.c.h.bf16 %v67
  %v96 = vunpack.c.l.bf16 %v68
  %v97 = vunpack.c.h.bf16 %v68
  %v98 = vunpack.c.l.bf16 %v69
  %v99 = vunpack.c.h.bf16 %v69
  %v100 = vunpack.c.l.bf16 %v70
  %v101 = vunpack.c.h.bf16 %v70
  %v102 = vunpack.c.l.bf16 %v71
  %v103 = vunpack.c.h.bf16 %v71
  %v104 = vld [vmem:[%s2] sm:$0xff]
  %v105 = vld [vmem:[%s2 + $0x8] sm:$0xff]
  %v106 = vld [vmem:[%s2 + $0x10] sm:$0xff]
  %v107 = vld [vmem:[%s2 + $0x18] sm:$0xff]
  %v108 = vld [vmem:[%s2 + $0x20] sm:$0xff]
  %v109 = vld [vmem:[%s2 + $0x28] sm:$0xff]
  %v110 = vld [vmem:[%s2 + $0x30] sm:$0xff]
  %v111 = vld [vmem:[%s2 + $0x38] sm:$0xff]
  %v112 = vld [vmem:[%s2 + $0x40] sm:$0xff]
  %v113 = vld [vmem:[%s2 + $0x48] sm:$0xff]
  %v114 = vld [vmem:[%s2 + $0x50] sm:$0xff]
  %v115 = vld [vmem:[%s2 + $0x58] sm:$0xff]
  %v116 = vld [vmem:[%s2 + $0x60] sm:$0xff]
  %v117 = vld [vmem:[%s2 + $0x68] sm:$0xff]
  %v118 = vld [vmem:[%s2 + $0x70] sm:$0xff]
  %v119 = vld [vmem:[%s2 + $0x78] sm:$0xff]
  %121 = vset.pattern.permute.xlu0 0
  %122 = vperm.xlu0 %121, %v104
  %v123 = vpop.permute.xlu0 %122
  %126 = vset.pattern.permute.xlu0 0
  %127 = vperm.xlu0 %126, %v105
  %v128 = vpop.permute.xlu0 %127
  %131 = vset.pattern.permute.xlu0 0
  %132 = vperm.xlu0 %131, %v106
  %v133 = vpop.permute.xlu0 %132
  %136 = vset.pattern.permute.xlu0 0
  %137 = vperm.xlu0 %136, %v107
  %v138 = vpop.permute.xlu0 %137
  %141 = vset.pattern.permute.xlu0 0
  %142 = vperm.xlu0 %141, %v108
  %v143 = vpop.permute.xlu0 %142
  %146 = vset.pattern.permute.xlu0 0
  %147 = vperm.xlu0 %146, %v109
  %v148 = vpop.permute.xlu0 %147
  %151 = vset.pattern.permute.xlu0 0
  %152 = vperm.xlu0 %151, %v110
  %v153 = vpop.permute.xlu0 %152
  %156 = vset.pattern.permute.xlu0 0
  %157 = vperm.xlu0 %156, %v111
  %v158 = vpop.permute.xlu0 %157
  %161 = vset.pattern.permute.xlu0 0
  %162 = vperm.xlu0 %161, %v112
  %v163 = vpop.permute.xlu0 %162
  %166 = vset.pattern.permute.xlu0 0
  %167 = vperm.xlu0 %166, %v113
  %v168 = vpop.permute.xlu0 %167
  %171 = vset.pattern.permute.xlu0 0
  %172 = vperm.xlu0 %171, %v114
  %v173 = vpop.permute.xlu0 %172
  %176 = vset.pattern.permute.xlu0 0
  %177 = vperm.xlu0 %176, %v115
  %v178 = vpop.permute.xlu0 %177
  %181 = vset.pattern.permute.xlu0 0
  %182 = vperm.xlu0 %181, %v116
  %v183 = vpop.permute.xlu0 %182
  %186 = vset.pattern.permute.xlu0 0
  %187 = vperm.xlu0 %186, %v117
  %v188 = vpop.permute.xlu0 %187
  %191 = vset.pattern.permute.xlu0 0
  %192 = vperm.xlu0 %191, %v118
  %v193 = vpop.permute.xlu0 %192
  %196 = vset.pattern.permute.xlu0 0
  %197 = vperm.xlu0 %196, %v119
  %v198 = vpop.permute.xlu0 %197
  %v200 = vmul.f32 %v72, %v123
  %v201 = vmul.f32 %v73, %v123
  %v202 = vmul.f32 %v74, %v128
  %v203 = vmul.f32 %v75, %v128
  %v204 = vmul.f32 %v76, %v133
  %v205 = vmul.f32 %v77, %v133
  %v206 = vmul.f32 %v78, %v138
  %v207 = vmul.f32 %v79, %v138
  %v208 = vmul.f32 %v80, %v143
  %v209 = vmul.f32 %v81, %v143
  %v210 = vmul.f32 %v82, %v148
  %v211 = vmul.f32 %v83, %v148
  %v212 = vmul.f32 %v84, %v153
  %v213 = vmul.f32 %v85, %v153
  %v214 = vmul.f32 %v86, %v158
  %v215 = vmul.f32 %v87, %v158
  %v216 = vmul.f32 %v88, %v163
  %v217 = vmul.f32 %v89, %v163
  %v218 = vmul.f32 %v90, %v168
  %v219 = vmul.f32 %v91, %v168
  %v220 = vmul.f32 %v92, %v173
  %v221 = vmul.f32 %v93, %v173
  %v222 = vmul.f32 %v94, %v178
  %v223 = vmul.f32 %v95, %v178
  %v224 = vmul.f32 %v96, %v183
  %v225 = vmul.f32 %v97, %v183
  %v226 = vmul.f32 %v98, %v188
  %v227 = vmul.f32 %v99, %v188
  %v228 = vmul.f32 %v100, %v193
  %v229 = vmul.f32 %v101, %v193
  %v230 = vmul.f32 %v102, %v198
  %v231 = vmul.f32 %v103, %v198
  %v232 = vld [vmem:[%s3] sm:$0xff]
  %v233 = vld [vmem:[%s3 + $0x8] sm:$0xff]
  %v234 = vld [vmem:[%s3 + $0x10] sm:$0xff]
  %v235 = vld [vmem:[%s3 + $0x18] sm:$0xff]
  %v236 = vld [vmem:[%s3 + $0x20] sm:$0xff]
  %v237 = vld [vmem:[%s3 + $0x28] sm:$0xff]
  %v238 = vld [vmem:[%s3 + $0x30] sm:$0xff]
  %v239 = vld [vmem:[%s3 + $0x38] sm:$0xff]
  %v240 = vld [vmem:[%s3 + $0x40] sm:$0xff]
  %v241 = vld [vmem:[%s3 + $0x48] sm:$0xff]
  %v242 = vld [vmem:[%s3 + $0x50] sm:$0xff]
  %v243 = vld [vmem:[%s3 + $0x58] sm:$0xff]
  %v244 = vld [vmem:[%s3 + $0x60] sm:$0xff]
  %v245 = vld [vmem:[%s3 + $0x68] sm:$0xff]
  %v246 = vld [vmem:[%s3 + $0x70] sm:$0xff]
  %v247 = vld [vmem:[%s3 + $0x78] sm:$0xff]
  %249 = vset.pattern.permute.xlu0 0
  %250 = vperm.xlu0 %249, %v232
  %v251 = vpop.permute.xlu0 %250
  %254 = vset.pattern.permute.xlu0 0
  %255 = vperm.xlu0 %254, %v233
  %v256 = vpop.permute.xlu0 %255
  %259 = vset.pattern.permute.xlu0 0
  %260 = vperm.xlu0 %259, %v234
  %v261 = vpop.permute.xlu0 %260
  %264 = vset.pattern.permute.xlu0 0
  %265 = vperm.xlu0 %264, %v235
  %v266 = vpop.permute.xlu0 %265
  %269 = vset.pattern.permute.xlu0 0
  %270 = vperm.xlu0 %269, %v236
  %v271 = vpop.permute.xlu0 %270
  %274 = vset.pattern.permute.xlu0 0
  %275 = vperm.xlu0 %274, %v237
  %v276 = vpop.permute.xlu0 %275
  %279 = vset.pattern.permute.xlu0 0
  %280 = vperm.xlu0 %279, %v238
  %v281 = vpop.permute.xlu0 %280
  %284 = vset.pattern.permute.xlu0 0
  %285 = vperm.xlu0 %284, %v239
  %v286 = vpop.permute.xlu0 %285
  %289 = vset.pattern.permute.xlu0 0
  %290 = vperm.xlu0 %289, %v240
  %v291 = vpop.permute.xlu0 %290
  %294 = vset.pattern.permute.xlu0 0
  %295 = vperm.xlu0 %294, %v241
  %v296 = vpop.permute.xlu0 %295
  %299 = vset.pattern.permute.xlu0 0
  %300 = vperm.xlu0 %299, %v242
  %v301 = vpop.permute.xlu0 %300
  %304 = vset.pattern.permute.xlu0 0
  %305 = vperm.xlu0 %304, %v243
  %v306 = vpop.permute.xlu0 %305
  %309 = vset.pattern.permute.xlu0 0
  %310 = vperm.xlu0 %309, %v244
  %v311 = vpop.permute.xlu0 %310
  %314 = vset.pattern.permute.xlu0 0
  %315 = vperm.xlu0 %314, %v245
  %v316 = vpop.permute.xlu0 %315
  %319 = vset.pattern.permute.xlu0 0
  %320 = vperm.xlu0 %319, %v246
  %v321 = vpop.permute.xlu0 %320
  %324 = vset.pattern.permute.xlu0 0
  %325 = vperm.xlu0 %324, %v247
  %v326 = vpop.permute.xlu0 %325
  %v328 = vadd.f32 %v200, %v251
  %v329 = vadd.f32 %v201, %v251
  %v330 = vadd.f32 %v202, %v256
  %v331 = vadd.f32 %v203, %v256
  %v332 = vadd.f32 %v204, %v261
  %v333 = vadd.f32 %v205, %v261
  %v334 = vadd.f32 %v206, %v266
  %v335 = vadd.f32 %v207, %v266
  %v336 = vadd.f32 %v208, %v271
  %v337 = vadd.f32 %v209, %v271
  %v338 = vadd.f32 %v210, %v276
  %v339 = vadd.f32 %v211, %v276
  %v340 = vadd.f32 %v212, %v281
  %v341 = vadd.f32 %v213, %v281
  %v342 = vadd.f32 %v214, %v286
  %v343 = vadd.f32 %v215, %v286
  %v344 = vadd.f32 %v216, %v291
  %v345 = vadd.f32 %v217, %v291
  %v346 = vadd.f32 %v218, %v296
  %v347 = vadd.f32 %v219, %v296
  %v348 = vadd.f32 %v220, %v301
  %v349 = vadd.f32 %v221, %v301
  %v350 = vadd.f32 %v222, %v306
  %v351 = vadd.f32 %v223, %v306
  %v352 = vadd.f32 %v224, %v311
  %v353 = vadd.f32 %v225, %v311
  %v354 = vadd.f32 %v226, %v316
  %v355 = vadd.f32 %v227, %v316
  %v356 = vadd.f32 %v228, %v321
  %v357 = vadd.f32 %v229, %v321
  %v358 = vadd.f32 %v230, %v326
  %v359 = vadd.f32 %v231, %v326
  %v360 = vmax.f32 %v328, 0.0
  %v361 = vmax.f32 %v329, 0.0
  %v362 = vmax.f32 %v330, 0.0
  %v363 = vmax.f32 %v331, 0.0
  %v364 = vmax.f32 %v332, 0.0
  %v365 = vmax.f32 %v333, 0.0
  %v366 = vmax.f32 %v334, 0.0
  %v367 = vmax.f32 %v335, 0.0
  %v368 = vmax.f32 %v336, 0.0
  %v369 = vmax.f32 %v337, 0.0
  %v370 = vmax.f32 %v338, 0.0
  %v371 = vmax.f32 %v339, 0.0
  %v372 = vmax.f32 %v340, 0.0
  %v373 = vmax.f32 %v341, 0.0
  %v374 = vmax.f32 %v342, 0.0
  %v375 = vmax.f32 %v343, 0.0
  %v376 = vmax.f32 %v344, 0.0
  %v377 = vmax.f32 %v345, 0.0
  %v378 = vmax.f32 %v346, 0.0
  %v379 = vmax.f32 %v347, 0.0
  %v380 = vmax.f32 %v348, 0.0
  %v381 = vmax.f32 %v349, 0.0
  %v382 = vmax.f32 %v350, 0.0
  %v383 = vmax.f32 %v351, 0.0
  %v384 = vmax.f32 %v352, 0.0
  %v385 = vmax.f32 %v353, 0.0
  %v386 = vmax.f32 %v354, 0.0
  %v387 = vmax.f32 %v355, 0.0
  %v388 = vmax.f32 %v356, 0.0
  %v389 = vmax.f32 %v357, 0.0
  %v390 = vmax.f32 %v358, 0.0
  %v391 = vmax.f32 %v359, 0.0
  %v392 = vpack.c.bf16 %v362, %v360
  %v393 = vpack.c.bf16 %v363, %v361
  %v394 = vpack.c.bf16 %v366, %v364
  %v395 = vpack.c.bf16 %v367, %v365
  %v396 = vpack.c.bf16 %v370, %v368
  %v397 = vpack.c.bf16 %v371, %v369
  %v398 = vpack.c.bf16 %v374, %v372
  %v399 = vpack.c.bf16 %v375, %v373
  %v400 = vpack.c.bf16 %v378, %v376
  %v401 = vpack.c.bf16 %v379, %v377
  %v402 = vpack.c.bf16 %v382, %v380
  %v403 = vpack.c.bf16 %v383, %v381
  %v404 = vpack.c.bf16 %v386, %v384
  %v405 = vpack.c.bf16 %v387, %v385
  %v406 = vpack.c.bf16 %v390, %v388
  %v407 = vpack.c.bf16 %v391, %v389
  %409 = vset.pattern.permute.xlu0 0
  %410 = vperm.xlu0 %409, %v40
  %v411 = vpop.permute.xlu0 %410
  %414 = vset.pattern.permute.xlu0 0
  %415 = vperm.xlu0 %414, %v41
  %v416 = vpop.permute.xlu0 %415
  %419 = vset.pattern.permute.xlu0 0
  %420 = vperm.xlu0 %419, %v42
  %v421 = vpop.permute.xlu0 %420
  %424 = vset.pattern.permute.xlu0 0
  %425 = vperm.xlu0 %424, %v43
  %v426 = vpop.permute.xlu0 %425
  %429 = vset.pattern.permute.xlu0 0
  %430 = vperm.xlu0 %429, %v44
  %v431 = vpop.permute.xlu0 %430
  %434 = vset.pattern.permute.xlu0 0
  %435 = vperm.xlu0 %434, %v45
  %v436 = vpop.permute.xlu0 %435
  %439 = vset.pattern.permute.xlu0 0
  %440 = vperm.xlu0 %439, %v46
  %v441 = vpop.permute.xlu0 %440
  %444 = vset.pattern.permute.xlu0 0
  %445 = vperm.xlu0 %444, %v47
  %v446 = vpop.permute.xlu0 %445
  %449 = vset.pattern.permute.xlu0 0
  %450 = vperm.xlu0 %449, %v48
  %v451 = vpop.permute.xlu0 %450
  %454 = vset.pattern.permute.xlu0 0
  %455 = vperm.xlu0 %454, %v49
  %v456 = vpop.permute.xlu0 %455
  %459 = vset.pattern.permute.xlu0 0
  %460 = vperm.xlu0 %459, %v50
  %v461 = vpop.permute.xlu0 %460
  %464 = vset.pattern.permute.xlu0 0
  %465 = vperm.xlu0 %464, %v51
  %v466 = vpop.permute.xlu0 %465
  %469 = vset.pattern.permute.xlu0 0
  %470 = vperm.xlu0 %469, %v52
  %v471 = vpop.permute.xlu0 %470
  %474 = vset.pattern.permute.xlu0 0
  %475 = vperm.xlu0 %474, %v53
  %v476 = vpop.permute.xlu0 %475
  %479 = vset.pattern.permute.xlu0 0
  %480 = vperm.xlu0 %479, %v54
  %v481 = vpop.permute.xlu0 %480
  %484 = vset.pattern.permute.xlu0 0
  %485 = vperm.xlu0 %484, %v55
  %v486 = vpop.permute.xlu0 %485
  %v504 = vunpack.c.l.b16 %v24
  %v505 = vunpack.c.l.b16 %v25
  %v506 = vunpack.c.l.b16 %v26
  %v507 = vunpack.c.l.b16 %v27
  %v508 = vunpack.c.l.b16 %v28
  %v509 = vunpack.c.l.b16 %v29
  %v510 = vunpack.c.l.b16 %v30
  %v511 = vunpack.c.l.b16 %v31
  %v512 = vunpack.c.l.b16 %v32
  %v513 = vunpack.c.l.b16 %v33
  %v514 = vunpack.c.l.b16 %v34
  %v515 = vunpack.c.l.b16 %v35
  %v516 = vunpack.c.l.b16 %v36
  %v517 = vunpack.c.l.b16 %v37
  %v518 = vunpack.c.l.b16 %v38
  %v519 = vunpack.c.l.b16 %v39
  %v520 = vpack.c.b16 %v505, %v504
  %v521 = vpack.c.b16 %v507, %v506
  %v522 = vpack.c.b16 %v509, %v508
  %v523 = vpack.c.b16 %v511, %v510
  %v524 = vpack.c.b16 %v513, %v512
  %v525 = vpack.c.b16 %v515, %v514
  %v526 = vpack.c.b16 %v517, %v516
  %v527 = vpack.c.b16 %v519, %v518
  %536 = vmatprep.subr.bf16.mxu0 %v393
  %537 = vmatpush1.bf16.msra.mxu0 %v392
  %538 = vmatprep.subr.bf16.mxu0 %v395
  %539 = vmatpush1.bf16.msra.mxu0 %v394
  %540 = vmatprep.subr.bf16.mxu0 %v397
  %541 = vmatpush1.bf16.msra.mxu0 %v396
  %542 = vmatprep.subr.bf16.mxu0 %v399
  %543 = vmatpush1.bf16.msra.mxu0 %v398
  %544 = vmatprep.subr.bf16.mxu0 %v401
  %545 = vmatpush1.bf16.msra.mxu0 %v400
  %546 = vmatprep.subr.bf16.mxu0 %v403
  %547 = vmatpush1.bf16.msra.mxu0 %v402
  %548 = vmatprep.subr.bf16.mxu0 %v405
  %549 = vmatpush1.bf16.msra.mxu0 %v404
  %550 = vmatprep.subr.bf16.mxu0 %v407
  %551 = vmatpush1.bf16.msra.mxu0 %v406
  %552 = vmatprep.subr.bf16.mxu0 0
  %553 = vmatpush1.bf16.msra.mxu0 0
  %554 = vmatprep.subr.bf16.mxu0 0
  %555 = vmatpush1.bf16.msra.mxu0 0
  %556 = vmatprep.subr.bf16.mxu0 0
  %557 = vmatpush1.bf16.msra.mxu0 0
  %558 = vmatprep.subr.bf16.mxu0 0
  %559 = vmatpush1.bf16.msra.mxu0 0
  %560 = vmatprep.subr.bf16.mxu0 0
  %561 = vmatpush1.bf16.msra.mxu0 0
  %562 = vmatprep.subr.bf16.mxu0 0
  %563 = vmatpush1.bf16.msra.mxu0 0
  %564 = vmatprep.subr.bf16.mxu0 0
  %565 = vmatpush1.bf16.msra.mxu0 0
  %566 = vmatprep.subr.bf16.mxu0 0
  %567 = vmatpush1.bf16.msra.mxu0 0
  %568 = vmatprep.mubr.bf16.mxu0 0
  %569 = vmatmul.mubr.bf16.gmra.mrb[0].mxu0 %v520
  %v570 = vpop.f32.mrb[0].mxu0
  %v571 = vadd.f32 %v411, %v570
  %v572 = vpop.f32.mrb[0].mxu0
  %v573 = vadd.f32 %v411, %v572
  %v574 = vpop.f32.mrb[0].mxu0
  %v575 = vadd.f32 %v416, %v574
  %v576 = vpop.f32.mrb[0].mxu0
  %v577 = vadd.f32 %v416, %v576
  %578 = vmatprep.mubr.bf16.mxu0 0
  %579 = vmatmul.mubr.bf16.gmra.mrb[0].mxu0 %v521
  %v580 = vpop.f32.mrb[0].mxu0
  %v581 = vadd.f32 %v421, %v580
  %v582 = vpop.f32.mrb[0].mxu0
  %v583 = vadd.f32 %v421, %v582
  %v584 = vpop.f32.mrb[0].mxu0
  %v585 = vadd.f32 %v426, %v584
  %v586 = vpop.f32.mrb[0].mxu0
  %v587 = vadd.f32 %v426, %v586
  %588 = vmatprep.mubr.bf16.mxu0 0
  %589 = vmatmul.mubr.bf16.gmra.mrb[0].mxu0 %v522
  %v590 = vpop.f32.mrb[0].mxu0
  %v591 = vadd.f32 %v431, %v590
  %v592 = vpop.f32.mrb[0].mxu0
  %v593 = vadd.f32 %v431, %v592
  %v594 = vpop.f32.mrb[0].mxu0
  %v595 = vadd.f32 %v436, %v594
  %v596 = vpop.f32.mrb[0].mxu0
  %v597 = vadd.f32 %v436, %v596
  %598 = vmatprep.mubr.bf16.mxu0 0
  %599 = vmatmul.mubr.bf16.gmra.mrb[0].mxu0 %v523
  %v600 = vpop.f32.mrb[0].mxu0
  %v601 = vadd.f32 %v441, %v600
  %v602 = vpop.f32.mrb[0].mxu0
  %v603 = vadd.f32 %v441, %v602
  %v604 = vpop.f32.mrb[0].mxu0
  %v605 = vadd.f32 %v446, %v604
  %v606 = vpop.f32.mrb[0].mxu0
  %v607 = vadd.f32 %v446, %v606
  %608 = vmatprep.mubr.bf16.mxu0 0
  %609 = vmatmul.mubr.bf16.gmra.mrb[0].mxu0 %v524
  %v610 = vpop.f32.mrb[0].mxu0
  %v611 = vadd.f32 %v451, %v610
  %v612 = vpop.f32.mrb[0].mxu0
  %v613 = vadd.f32 %v451, %v612
  %v614 = vpop.f32.mrb[0].mxu0
  %v615 = vadd.f32 %v456, %v614
  %v616 = vpop.f32.mrb[0].mxu0
  %v617 = vadd.f32 %v456, %v616
  %618 = vmatprep.mubr.bf16.mxu0 0
  %619 = vmatmul.mubr.bf16.gmra.mrb[0].mxu0 %v525
  %v620 = vpop.f32.mrb[0].mxu0
  %v621 = vadd.f32 %v461, %v620
  %v622 = vpop.f32.mrb[0].mxu0
  %v623 = vadd.f32 %v461, %v622
  %v624 = vpop.f32.mrb[0].mxu0
  %v625 = vadd.f32 %v466, %v624
  %v626 = vpop.f32.mrb[0].mxu0
  %v627 = vadd.f32 %v466, %v626
  %628 = vmatprep.mubr.bf16.mxu0 0
  %629 = vmatmul.mubr.bf16.gmra.mrb[0].mxu0 %v526
  %v630 = vpop.f32.mrb[0].mxu0
  %v631 = vadd.f32 %v471, %v630
  %v632 = vpop.f32.mrb[0].mxu0
  %v633 = vadd.f32 %v471, %v632
  %v634 = vpop.f32.mrb[0].mxu0
  %v635 = vadd.f32 %v476, %v634
  %v636 = vpop.f32.mrb[0].mxu0
  %v637 = vadd.f32 %v476, %v636
  %638 = vmatprep.mubr.bf16.mxu0 0
  %639 = vmatmul.mubr.bf16.gmra.mrb[0].mxu0 %v527
  %v640 = vpop.f32.mrb[0].mxu0
  %v641 = vadd.f32 %v481, %v640
  %v642 = vpop.f32.mrb[0].mxu0
  %v643 = vadd.f32 %v481, %v642
  %v644 = vpop.f32.mrb[0].mxu0
  %v645 = vadd.f32 %v486, %v644
  %v646 = vpop.f32.mrb[0].mxu0
  %v647 = vadd.f32 %v486, %v646
  %648 = vdwg.mxu0
  %v649 = vld [vmem:[%s1] sm:$0xff]
  %v650 = vld [vmem:[%s1 + $0x8] sm:$0xff]
  %v651 = vld [vmem:[%s1 + $0x10] sm:$0xff]
  %v652 = vld [vmem:[%s1 + $0x18] sm:$0xff]
  %v653 = vld [vmem:[%s1 + $0x20] sm:$0xff]
  %v654 = vld [vmem:[%s1 + $0x28] sm:$0xff]
  %v655 = vld [vmem:[%s1 + $0x30] sm:$0xff]
  %v656 = vld [vmem:[%s1 + $0x38] sm:$0xff]
  %v657 = vld [vmem:[%s1 + $0x40] sm:$0xff]
  %v658 = vld [vmem:[%s1 + $0x48] sm:$0xff]
  %v659 = vld [vmem:[%s1 + $0x50] sm:$0xff]
  %v660 = vld [vmem:[%s1 + $0x58] sm:$0xff]
  %v661 = vld [vmem:[%s1 + $0x60] sm:$0xff]
  %v662 = vld [vmem:[%s1 + $0x68] sm:$0xff]
  %v663 = vld [vmem:[%s1 + $0x70] sm:$0xff]
  %v664 = vld [vmem:[%s1 + $0x78] sm:$0xff]
  %v665 = vld [vmem:[%s1 + $0x80] sm:$0xff]
  %v666 = vld [vmem:[%s1 + $0x88] sm:$0xff]
  %v667 = vld [vmem:[%s1 + $0x90] sm:$0xff]
  %v668 = vld [vmem:[%s1 + $0x98] sm:$0xff]
  %v669 = vld [vmem:[%s1 + $0xa0] sm:$0xff]
  %v670 = vld [vmem:[%s1 + $0xa8] sm:$0xff]
  %v671 = vld [vmem:[%s1 + $0xb0] sm:$0xff]
  %v672 = vld [vmem:[%s1 + $0xb8] sm:$0xff]
  %v673 = vld [vmem:[%s1 + $0xc0] sm:$0xff]
  %v674 = vld [vmem:[%s1 + $0xc8] sm:$0xff]
  %v675 = vld [vmem:[%s1 + $0xd0] sm:$0xff]
  %v676 = vld [vmem:[%s1 + $0xd8] sm:$0xff]
  %v677 = vld [vmem:[%s1 + $0xe0] sm:$0xff]
  %v678 = vld [vmem:[%s1 + $0xe8] sm:$0xff]
  %v679 = vld [vmem:[%s1 + $0xf0] sm:$0xff]
  %v680 = vld [vmem:[%s1 + $0xf8] sm:$0xff]
  %v681 = vadd.f32 %v571, %v649
  %v682 = vadd.f32 %v573, %v650
  %v683 = vadd.f32 %v575, %v651
  %v684 = vadd.f32 %v577, %v652
  %v685 = vadd.f32 %v581, %v653
  %v686 = vadd.f32 %v583, %v654
  %v687 = vadd.f32 %v585, %v655
  %v688 = vadd.f32 %v587, %v656
  %v689 = vadd.f32 %v591, %v657
  %v690 = vadd.f32 %v593, %v658
  %v691 = vadd.f32 %v595, %v659
  %v692 = vadd.f32 %v597, %v660
  %v693 = vadd.f32 %v601, %v661
  %v694 = vadd.f32 %v603, %v662
  %v695 = vadd.f32 %v605, %v663
  %v696 = vadd.f32 %v607, %v664
  %v697 = vadd.f32 %v611, %v665
  %v698 = vadd.f32 %v613, %v666
  %v699 = vadd.f32 %v615, %v667
  %v700 = vadd.f32 %v617, %v668
  %v701 = vadd.f32 %v621, %v669
  %v702 = vadd.f32 %v623, %v670
  %v703 = vadd.f32 %v625, %v671
  %v704 = vadd.f32 %v627, %v672
  %v705 = vadd.f32 %v631, %v673
  %v706 = vadd.f32 %v633, %v674
  %v707 = vadd.f32 %v635, %v675
  %v708 = vadd.f32 %v637, %v676
  %v709 = vadd.f32 %v641, %v677
  %v710 = vadd.f32 %v643, %v678
  %v711 = vadd.f32 %v645, %v679
  %v712 = vadd.f32 %v647, %v680
  %713 = vst [vmem:[%s6] sm:$0xff] %v681
  %714 = vst [vmem:[%s6 + $0x8] sm:$0xff] %v682
  %715 = vst [vmem:[%s6 + $0x10] sm:$0xff] %v683
  %716 = vst [vmem:[%s6 + $0x18] sm:$0xff] %v684
  %717 = vst [vmem:[%s6 + $0x20] sm:$0xff] %v685
  %718 = vst [vmem:[%s6 + $0x28] sm:$0xff] %v686
  %719 = vst [vmem:[%s6 + $0x30] sm:$0xff] %v687
  %720 = vst [vmem:[%s6 + $0x38] sm:$0xff] %v688
  %721 = vst [vmem:[%s6 + $0x40] sm:$0xff] %v689
  %722 = vst [vmem:[%s6 + $0x48] sm:$0xff] %v690
  %723 = vst [vmem:[%s6 + $0x50] sm:$0xff] %v691
  %724 = vst [vmem:[%s6 + $0x58] sm:$0xff] %v692
  %725 = vst [vmem:[%s6 + $0x60] sm:$0xff] %v693
  %726 = vst [vmem:[%s6 + $0x68] sm:$0xff] %v694
  %727 = vst [vmem:[%s6 + $0x70] sm:$0xff] %v695
  %728 = vst [vmem:[%s6 + $0x78] sm:$0xff] %v696
  %729 = vst [vmem:[%s6 + $0x80] sm:$0xff] %v697
  %730 = vst [vmem:[%s6 + $0x88] sm:$0xff] %v698
  %731 = vst [vmem:[%s6 + $0x90] sm:$0xff] %v699
  %732 = vst [vmem:[%s6 + $0x98] sm:$0xff] %v700
  %733 = vst [vmem:[%s6 + $0xa0] sm:$0xff] %v701
  %734 = vst [vmem:[%s6 + $0xa8] sm:$0xff] %v702
  %735 = vst [vmem:[%s6 + $0xb0] sm:$0xff] %v703
  %736 = vst [vmem:[%s6 + $0xb8] sm:$0xff] %v704
  %737 = vst [vmem:[%s6 + $0xc0] sm:$0xff] %v705
  %738 = vst [vmem:[%s6 + $0xc8] sm:$0xff] %v706
  %739 = vst [vmem:[%s6 + $0xd0] sm:$0xff] %v707
  %740 = vst [vmem:[%s6 + $0xd8] sm:$0xff] %v708
  %741 = vst [vmem:[%s6 + $0xe0] sm:$0xff] %v709
  %742 = vst [vmem:[%s6 + $0xe8] sm:$0xff] %v710
  %743 = vst [vmem:[%s6 + $0xf0] sm:$0xff] %v711
  %744 = vst [vmem:[%s6 + $0xf8] sm:$0xff] %v712
  %s745 = scalar_lea.vmem %s0, 128
  %v746 = vld [vmem:[%s745] sm:$0xff]
  %v747 = vld [vmem:[%s745 + $0x8] sm:$0xff]
  %v748 = vld [vmem:[%s745 + $0x10] sm:$0xff]
  %v749 = vld [vmem:[%s745 + $0x18] sm:$0xff]
  %v750 = vld [vmem:[%s745 + $0x20] sm:$0xff]
  %v751 = vld [vmem:[%s745 + $0x28] sm:$0xff]
  %v752 = vld [vmem:[%s745 + $0x30] sm:$0xff]
  %v753 = vld [vmem:[%s745 + $0x38] sm:$0xff]
  %v754 = vld [vmem:[%s745 + $0x40] sm:$0xff]
  %v755 = vld [vmem:[%s745 + $0x48] sm:$0xff]
  %v756 = vld [vmem:[%s745 + $0x50] sm:$0xff]
  %v757 = vld [vmem:[%s745 + $0x58] sm:$0xff]
  %v758 = vld [vmem:[%s745 + $0x60] sm:$0xff]
  %v759 = vld [vmem:[%s745 + $0x68] sm:$0xff]
  %v760 = vld [vmem:[%s745 + $0x70] sm:$0xff]
  %v761 = vld [vmem:[%s745 + $0x78] sm:$0xff]
  %v762 = vunpack.c.l.bf16 %v746
  %v763 = vunpack.c.h.bf16 %v746
  %v764 = vunpack.c.l.bf16 %v747
  %v765 = vunpack.c.h.bf16 %v747
  %v766 = vunpack.c.l.bf16 %v748
  %v767 = vunpack.c.h.bf16 %v748
  %v768 = vunpack.c.l.bf16 %v749
  %v769 = vunpack.c.h.bf16 %v749
  %v770 = vunpack.c.l.bf16 %v750
  %v771 = vunpack.c.h.bf16 %v750
  %v772 = vunpack.c.l.bf16 %v751
  %v773 = vunpack.c.h.bf16 %v751
  %v774 = vunpack.c.l.bf16 %v752
  %v775 = vunpack.c.h.bf16 %v752
  %v776 = vunpack.c.l.bf16 %v753
  %v777 = vunpack.c.h.bf16 %v753
  %v778 = vunpack.c.l.bf16 %v754
  %v779 = vunpack.c.h.bf16 %v754
  %v780 = vunpack.c.l.bf16 %v755
  %v781 = vunpack.c.h.bf16 %v755
  %v782 = vunpack.c.l.bf16 %v756
  %v783 = vunpack.c.h.bf16 %v756
  %v784 = vunpack.c.l.bf16 %v757
  %v785 = vunpack.c.h.bf16 %v757
  %v786 = vunpack.c.l.bf16 %v758
  %v787 = vunpack.c.h.bf16 %v758
  %v788 = vunpack.c.l.bf16 %v759
  %v789 = vunpack.c.h.bf16 %v759
  %v790 = vunpack.c.l.bf16 %v760
  %v791 = vunpack.c.h.bf16 %v760
  %v792 = vunpack.c.l.bf16 %v761
  %v793 = vunpack.c.h.bf16 %v761
  %s794 = scalar_lea.vmem %s2, 128
  %v795 = vld [vmem:[%s794] sm:$0xff]
  %v796 = vld [vmem:[%s794 + $0x8] sm:$0xff]
  %v797 = vld [vmem:[%s794 + $0x10] sm:$0xff]
  %v798 = vld [vmem:[%s794 + $0x18] sm:$0xff]
  %v799 = vld [vmem:[%s794 + $0x20] sm:$0xff]
  %v800 = vld [vmem:[%s794 + $0x28] sm:$0xff]
  %v801 = vld [vmem:[%s794 + $0x30] sm:$0xff]
  %v802 = vld [vmem:[%s794 + $0x38] sm:$0xff]
  %v803 = vld [vmem:[%s794 + $0x40] sm:$0xff]
  %v804 = vld [vmem:[%s794 + $0x48] sm:$0xff]
  %v805 = vld [vmem:[%s794 + $0x50] sm:$0xff]
  %v806 = vld [vmem:[%s794 + $0x58] sm:$0xff]
  %v807 = vld [vmem:[%s794 + $0x60] sm:$0xff]
  %v808 = vld [vmem:[%s794 + $0x68] sm:$0xff]
  %v809 = vld [vmem:[%s794 + $0x70] sm:$0xff]
  %v810 = vld [vmem:[%s794 + $0x78] sm:$0xff]
  %812 = vset.pattern.permute.xlu0 0
  %813 = vperm.xlu0 %812, %v795
  %v814 = vpop.permute.xlu0 %813
  %817 = vset.pattern.permute.xlu0 0
  %818 = vperm.xlu0 %817, %v796
  %v819 = vpop.permute.xlu0 %818
  %822 = vset.pattern.permute.xlu0 0
  %823 = vperm.xlu0 %822, %v797
  %v824 = vpop.permute.xlu0 %823
  %827 = vset.pattern.permute.xlu0 0
  %828 = vperm.xlu0 %827, %v798
  %v829 = vpop.permute.xlu0 %828
  %832 = vset.pattern.permute.xlu0 0
  %833 = vperm.xlu0 %832, %v799
  %v834 = vpop.permute.xlu0 %833
  %837 = vset.pattern.permute.xlu0 0
  %838 = vperm.xlu0 %837, %v800
  %v839 = vpop.permute.xlu0 %838
  %842 = vset.pattern.permute.xlu0 0
  %843 = vperm.xlu0 %842, %v801
  %v844 = vpop.permute.xlu0 %843
  %847 = vset.pattern.permute.xlu0 0
  %848 = vperm.xlu0 %847, %v802
  %v849 = vpop.permute.xlu0 %848
  %852 = vset.pattern.permute.xlu0 0
  %853 = vperm.xlu0 %852, %v803
  %v854 = vpop.permute.xlu0 %853
  %857 = vset.pattern.permute.xlu0 0
  %858 = vperm.xlu0 %857, %v804
  %v859 = vpop.permute.xlu0 %858
  %862 = vset.pattern.permute.xlu0 0
  %863 = vperm.xlu0 %862, %v805
  %v864 = vpop.permute.xlu0 %863
  %867 = vset.pattern.permute.xlu0 0
  %868 = vperm.xlu0 %867, %v806
  %v869 = vpop.permute.xlu0 %868
  %872 = vset.pattern.permute.xlu0 0
  %873 = vperm.xlu0 %872, %v807
  %v874 = vpop.permute.xlu0 %873
  %877 = vset.pattern.permute.xlu0 0
  %878 = vperm.xlu0 %877, %v808
  %v879 = vpop.permute.xlu0 %878
  %882 = vset.pattern.permute.xlu0 0
  %883 = vperm.xlu0 %882, %v809
  %v884 = vpop.permute.xlu0 %883
  %887 = vset.pattern.permute.xlu0 0
  %888 = vperm.xlu0 %887, %v810
  %v889 = vpop.permute.xlu0 %888
  %v891 = vmul.f32 %v762, %v814
  %v892 = vmul.f32 %v763, %v814
  %v893 = vmul.f32 %v764, %v819
  %v894 = vmul.f32 %v765, %v819
  %v895 = vmul.f32 %v766, %v824
  %v896 = vmul.f32 %v767, %v824
  %v897 = vmul.f32 %v768, %v829
  %v898 = vmul.f32 %v769, %v829
  %v899 = vmul.f32 %v770, %v834
  %v900 = vmul.f32 %v771, %v834
  %v901 = vmul.f32 %v772, %v839
  %v902 = vmul.f32 %v773, %v839
  %v903 = vmul.f32 %v774, %v844
  %v904 = vmul.f32 %v775, %v844
  %v905 = vmul.f32 %v776, %v849
  %v906 = vmul.f32 %v777, %v849
  %v907 = vmul.f32 %v778, %v854
  %v908 = vmul.f32 %v779, %v854
  %v909 = vmul.f32 %v780, %v859
  %v910 = vmul.f32 %v781, %v859
  %v911 = vmul.f32 %v782, %v864
  %v912 = vmul.f32 %v783, %v864
  %v913 = vmul.f32 %v784, %v869
  %v914 = vmul.f32 %v785, %v869
  %v915 = vmul.f32 %v786, %v874
  %v916 = vmul.f32 %v787, %v874
  %v917 = vmul.f32 %v788, %v879
  %v918 = vmul.f32 %v789, %v879
  %v919 = vmul.f32 %v790, %v884
  %v920 = vmul.f32 %v791, %v884
  %v921 = vmul.f32 %v792, %v889
  %v922 = vmul.f32 %v793, %v889
  %s923 = scalar_lea.vmem %s3, 128
  %v924 = vld [vmem:[%s923] sm:$0xff]
  %v925 = vld [vmem:[%s923 + $0x8] sm:$0xff]
  %v926 = vld [vmem:[%s923 + $0x10] sm:$0xff]
  %v927 = vld [vmem:[%s923 + $0x18] sm:$0xff]
  %v928 = vld [vmem:[%s923 + $0x20] sm:$0xff]
  %v929 = vld [vmem:[%s923 + $0x28] sm:$0xff]
  %v930 = vld [vmem:[%s923 + $0x30] sm:$0xff]
  %v931 = vld [vmem:[%s923 + $0x38] sm:$0xff]
  %v932 = vld [vmem:[%s923 + $0x40] sm:$0xff]
  %v933 = vld [vmem:[%s923 + $0x48] sm:$0xff]
  %v934 = vld [vmem:[%s923 + $0x50] sm:$0xff]
  %v935 = vld [vmem:[%s923 + $0x58] sm:$0xff]
  %v936 = vld [vmem:[%s923 + $0x60] sm:$0xff]
  %v937 = vld [vmem:[%s923 + $0x68] sm:$0xff]
  %v938 = vld [vmem:[%s923 + $0x70] sm:$0xff]
  %v939 = vld [vmem:[%s923 + $0x78] sm:$0xff]
  %941 = vset.pattern.permute.xlu0 0
  %942 = vperm.xlu0 %941, %v924
  %v943 = vpop.permute.xlu0 %942
  %946 = vset.pattern.permute.xlu0 0
  %947 = vperm.xlu0 %946, %v925
  %v948 = vpop.permute.xlu0 %947
  %951 = vset.pattern.permute.xlu0 0
  %952 = vperm.xlu0 %951, %v926
  %v953 = vpop.permute.xlu0 %952
  %956 = vset.pattern.permute.xlu0 0
  %957 = vperm.xlu0 %956, %v927
  %v958 = vpop.permute.xlu0 %957
  %961 = vset.pattern.permute.xlu0 0
  %962 = vperm.xlu0 %961, %v928
  %v963 = vpop.permute.xlu0 %962
  %966 = vset.pattern.permute.xlu0 0
  %967 = vperm.xlu0 %966, %v929
  %v968 = vpop.permute.xlu0 %967
  %971 = vset.pattern.permute.xlu0 0
  %972 = vperm.xlu0 %971, %v930
  %v973 = vpop.permute.xlu0 %972
  %976 = vset.pattern.permute.xlu0 0
  %977 = vperm.xlu0 %976, %v931
  %v978 = vpop.permute.xlu0 %977
  %981 = vset.pattern.permute.xlu0 0
  %982 = vperm.xlu0 %981, %v932
  %v983 = vpop.permute.xlu0 %982
  %986 = vset.pattern.permute.xlu0 0
  %987 = vperm.xlu0 %986, %v933
  %v988 = vpop.permute.xlu0 %987
  %991 = vset.pattern.permute.xlu0 0
  %992 = vperm.xlu0 %991, %v934
  %v993 = vpop.permute.xlu0 %992
  %996 = vset.pattern.permute.xlu0 0
  %997 = vperm.xlu0 %996, %v935
  %v998 = vpop.permute.xlu0 %997
  %1001 = vset.pattern.permute.xlu0 0
  %1002 = vperm.xlu0 %1001, %v936
  %v1003 = vpop.permute.xlu0 %1002
  %1006 = vset.pattern.permute.xlu0 0
  %1007 = vperm.xlu0 %1006, %v937
  %v1008 = vpop.permute.xlu0 %1007
  %1011 = vset.pattern.permute.xlu0 0
  %1012 = vperm.xlu0 %1011, %v938
  %v1013 = vpop.permute.xlu0 %1012
  %1016 = vset.pattern.permute.xlu0 0
  %1017 = vperm.xlu0 %1016, %v939
  %v1018 = vpop.permute.xlu0 %1017
  %v1020 = vadd.f32 %v891, %v943
  %v1021 = vadd.f32 %v892, %v943
  %v1022 = vadd.f32 %v893, %v948
  %v1023 = vadd.f32 %v894, %v948
  %v1024 = vadd.f32 %v895, %v953
  %v1025 = vadd.f32 %v896, %v953
  %v1026 = vadd.f32 %v897, %v958
  %v1027 = vadd.f32 %v898, %v958
  %v1028 = vadd.f32 %v899, %v963
  %v1029 = vadd.f32 %v900, %v963
  %v1030 = vadd.f32 %v901, %v968
  %v1031 = vadd.f32 %v902, %v968
  %v1032 = vadd.f32 %v903, %v973
  %v1033 = vadd.f32 %v904, %v973
  %v1034 = vadd.f32 %v905, %v978
  %v1035 = vadd.f32 %v906, %v978
  %v1036 = vadd.f32 %v907, %v983
  %v1037 = vadd.f32 %v908, %v983
  %v1038 = vadd.f32 %v909, %v988
  %v1039 = vadd.f32 %v910, %v988
  %v1040 = vadd.f32 %v911, %v993
  %v1041 = vadd.f32 %v912, %v993
  %v1042 = vadd.f32 %v913, %v998
  %v1043 = vadd.f32 %v914, %v998
  %v1044 = vadd.f32 %v915, %v1003
  %v1045 = vadd.f32 %v916, %v1003
  %v1046 = vadd.f32 %v917, %v1008
  %v1047 = vadd.f32 %v918, %v1008
  %v1048 = vadd.f32 %v919, %v1013
  %v1049 = vadd.f32 %v920, %v1013
  %v1050 = vadd.f32 %v921, %v1018
  %v1051 = vadd.f32 %v922, %v1018
  %v1052 = vmax.f32 %v1020, 0.0
  %v1053 = vmax.f32 %v1021, 0.0
  %v1054 = vmax.f32 %v1022, 0.0
  %v1055 = vmax.f32 %v1023, 0.0
  %v1056 = vmax.f32 %v1024, 0.0
  %v1057 = vmax.f32 %v1025, 0.0
  %v1058 = vmax.f32 %v1026, 0.0
  %v1059 = vmax.f32 %v1027, 0.0
  %v1060 = vmax.f32 %v1028, 0.0
  %v1061 = vmax.f32 %v1029, 0.0
  %v1062 = vmax.f32 %v1030, 0.0
  %v1063 = vmax.f32 %v1031, 0.0
  %v1064 = vmax.f32 %v1032, 0.0
  %v1065 = vmax.f32 %v1033, 0.0
  %v1066 = vmax.f32 %v1034, 0.0
  %v1067 = vmax.f32 %v1035, 0.0
  %v1068 = vmax.f32 %v1036, 0.0
  %v1069 = vmax.f32 %v1037, 0.0
  %v1070 = vmax.f32 %v1038, 0.0
  %v1071 = vmax.f32 %v1039, 0.0
  %v1072 = vmax.f32 %v1040, 0.0
  %v1073 = vmax.f32 %v1041, 0.0
  %v1074 = vmax.f32 %v1042, 0.0
  %v1075 = vmax.f32 %v1043, 0.0
  %v1076 = vmax.f32 %v1044, 0.0
  %v1077 = vmax.f32 %v1045, 0.0
  %v1078 = vmax.f32 %v1046, 0.0
  %v1079 = vmax.f32 %v1047, 0.0
  %v1080 = vmax.f32 %v1048, 0.0
  %v1081 = vmax.f32 %v1049, 0.0
  %v1082 = vmax.f32 %v1050, 0.0
  %v1083 = vmax.f32 %v1051, 0.0
  %v1084 = vpack.c.bf16 %v1054, %v1052
  %v1085 = vpack.c.bf16 %v1055, %v1053
  %v1086 = vpack.c.bf16 %v1058, %v1056
  %v1087 = vpack.c.bf16 %v1059, %v1057
  %v1088 = vpack.c.bf16 %v1062, %v1060
  %v1089 = vpack.c.bf16 %v1063, %v1061
  %v1090 = vpack.c.bf16 %v1066, %v1064
  %v1091 = vpack.c.bf16 %v1067, %v1065
  %v1092 = vpack.c.bf16 %v1070, %v1068
  %v1093 = vpack.c.bf16 %v1071, %v1069
  %v1094 = vpack.c.bf16 %v1074, %v1072
  %v1095 = vpack.c.bf16 %v1075, %v1073
  %v1096 = vpack.c.bf16 %v1078, %v1076
  %v1097 = vpack.c.bf16 %v1079, %v1077
  %v1098 = vpack.c.bf16 %v1082, %v1080
  %v1099 = vpack.c.bf16 %v1083, %v1081
  %1100 = vmatprep.subr.bf16.mxu0 %v1085
  %1101 = vmatpush1.bf16.msra.mxu0 %v1084
  %1102 = vmatprep.subr.bf16.mxu0 %v1087
  %1103 = vmatpush1.bf16.msra.mxu0 %v1086
  %1104 = vmatprep.subr.bf16.mxu0 %v1089
  %1105 = vmatpush1.bf16.msra.mxu0 %v1088
  %1106 = vmatprep.subr.bf16.mxu0 %v1091
  %1107 = vmatpush1.bf16.msra.mxu0 %v1090
  %1108 = vmatprep.subr.bf16.mxu0 %v1093
  %1109 = vmatpush1.bf16.msra.mxu0 %v1092
  %1110 = vmatprep.subr.bf16.mxu0 %v1095
  %1111 = vmatpush1.bf16.msra.mxu0 %v1094
  %1112 = vmatprep.subr.bf16.mxu0 %v1097
  %1113 = vmatpush1.bf16.msra.mxu0 %v1096
  %1114 = vmatprep.subr.bf16.mxu0 %v1099
  %1115 = vmatpush1.bf16.msra.mxu0 %v1098
  %1116 = vmatprep.subr.bf16.mxu0 0
  %1117 = vmatpush1.bf16.msra.mxu0 0
  %1118 = vmatprep.subr.bf16.mxu0 0
  %1119 = vmatpush1.bf16.msra.mxu0 0
  %1120 = vmatprep.subr.bf16.mxu0 0
  %1121 = vmatpush1.bf16.msra.mxu0 0
  %1122 = vmatprep.subr.bf16.mxu0 0
  %1123 = vmatpush1.bf16.msra.mxu0 0
  %1124 = vmatprep.subr.bf16.mxu0 0
  %1125 = vmatpush1.bf16.msra.mxu0 0
  %1126 = vmatprep.subr.bf16.mxu0 0
  %1127 = vmatpush1.bf16.msra.mxu0 0
  %1128 = vmatprep.subr.bf16.mxu0 0
  %1129 = vmatpush1.bf16.msra.mxu0 0
  %1130 = vmatprep.subr.bf16.mxu0 0
  %1131 = vmatpush1.bf16.msra.mxu0 0
  %1132 = vmatprep.mubr.bf16.mxu0 0
  %1133 = vmatmul.mubr.bf16.gmra.mrb[0].mxu0 %v520
  %v1134 = vpop.f32.mrb[0].mxu0
  %v1135 = vadd.f32 %v411, %v1134
  %v1136 = vpop.f32.mrb[0].mxu0
  %v1137 = vadd.f32 %v411, %v1136
  %v1138 = vpop.f32.mrb[0].mxu0
  %v1139 = vadd.f32 %v416, %v1138
  %v1140 = vpop.f32.mrb[0].mxu0
  %v1141 = vadd.f32 %v416, %v1140
  %1142 = vmatprep.mubr.bf16.mxu0 0
  %1143 = vmatmul.mubr.bf16.gmra.mrb[0].mxu0 %v521
  %v1144 = vpop.f32.mrb[0].mxu0
  %v1145 = vadd.f32 %v421, %v1144
  %v1146 = vpop.f32.mrb[0].mxu0
  %v1147 = vadd.f32 %v421, %v1146
  %v1148 = vpop.f32.mrb[0].mxu0
  %v1149 = vadd.f32 %v426, %v1148
  %v1150 = vpop.f32.mrb[0].mxu0
  %v1151 = vadd.f32 %v426, %v1150
  %1152 = vmatprep.mubr.bf16.mxu0 0
  %1153 = vmatmul.mubr.bf16.gmra.mrb[0].mxu0 %v522
  %v1154 = vpop.f32.mrb[0].mxu0
  %v1155 = vadd.f32 %v431, %v1154
  %v1156 = vpop.f32.mrb[0].mxu0
  %v1157 = vadd.f32 %v431, %v1156
  %v1158 = vpop.f32.mrb[0].mxu0
  %v1159 = vadd.f32 %v436, %v1158
  %v1160 = vpop.f32.mrb[0].mxu0
  %v1161 = vadd.f32 %v436, %v1160
  %1162 = vmatprep.mubr.bf16.mxu0 0
  %1163 = vmatmul.mubr.bf16.gmra.mrb[0].mxu0 %v523
  %v1164 = vpop.f32.mrb[0].mxu0
  %v1165 = vadd.f32 %v441, %v1164
  %v1166 = vpop.f32.mrb[0].mxu0
  %v1167 = vadd.f32 %v441, %v1166
  %v1168 = vpop.f32.mrb[0].mxu0
  %v1169 = vadd.f32 %v446, %v1168
  %v1170 = vpop.f32.mrb[0].mxu0
  %v1171 = vadd.f32 %v446, %v1170
  %1172 = vmatprep.mubr.bf16.mxu0 0
  %1173 = vmatmul.mubr.bf16.gmra.mrb[0].mxu0 %v524
  %v1174 = vpop.f32.mrb[0].mxu0
  %v1175 = vadd.f32 %v451, %v1174
  %v1176 = vpop.f32.mrb[0].mxu0
  %v1177 = vadd.f32 %v451, %v1176
  %v1178 = vpop.f32.mrb[0].mxu0
  %v1179 = vadd.f32 %v456, %v1178
  %v1180 = vpop.f32.mrb[0].mxu0
  %v1181 = vadd.f32 %v456, %v1180
  %1182 = vmatprep.mubr.bf16.mxu0 0
  %1183 = vmatmul.mubr.bf16.gmra.mrb[0].mxu0 %v525
  %v1184 = vpop.f32.mrb[0].mxu0
  %v1185 = vadd.f32 %v461, %v1184
  %v1186 = vpop.f32.mrb[0].mxu0
  %v1187 = vadd.f32 %v461, %v1186
  %v1188 = vpop.f32.mrb[0].mxu0
  %v1189 = vadd.f32 %v466, %v1188
  %v1190 = vpop.f32.mrb[0].mxu0
  %v1191 = vadd.f32 %v466, %v1190
  %1192 = vmatprep.mubr.bf16.mxu0 0
  %1193 = vmatmul.mubr.bf16.gmra.mrb[0].mxu0 %v526
  %v1194 = vpop.f32.mrb[0].mxu0
  %v1195 = vadd.f32 %v471, %v1194
  %v1196 = vpop.f32.mrb[0].mxu0
  %v1197 = vadd.f32 %v471, %v1196
  %v1198 = vpop.f32.mrb[0].mxu0
  %v1199 = vadd.f32 %v476, %v1198
  %v1200 = vpop.f32.mrb[0].mxu0
  %v1201 = vadd.f32 %v476, %v1200
  %1202 = vmatprep.mubr.bf16.mxu0 0
  %1203 = vmatmul.mubr.bf16.gmra.mrb[0].mxu0 %v527
  %v1204 = vpop.f32.mrb[0].mxu0
  %v1205 = vadd.f32 %v481, %v1204
  %v1206 = vpop.f32.mrb[0].mxu0
  %v1207 = vadd.f32 %v481, %v1206
  %v1208 = vpop.f32.mrb[0].mxu0
  %v1209 = vadd.f32 %v486, %v1208
  %v1210 = vpop.f32.mrb[0].mxu0
  %v1211 = vadd.f32 %v486, %v1210
  %1212 = vdwg.mxu0
  %s1213 = scalar_lea.vmem %s1, 256
  %v1214 = vld [vmem:[%s1213] sm:$0xff]
  %v1215 = vld [vmem:[%s1213 + $0x8] sm:$0xff]
  %v1216 = vld [vmem:[%s1213 + $0x10] sm:$0xff]
  %v1217 = vld [vmem:[%s1213 + $0x18] sm:$0xff]
  %v1218 = vld [vmem:[%s1213 + $0x20] sm:$0xff]
  %v1219 = vld [vmem:[%s1213 + $0x28] sm:$0xff]
  %v1220 = vld [vmem:[%s1213 + $0x30] sm:$0xff]
  %v1221 = vld [vmem:[%s1213 + $0x38] sm:$0xff]
  %v1222 = vld [vmem:[%s1213 + $0x40] sm:$0xff]
  %v1223 = vld [vmem:[%s1213 + $0x48] sm:$0xff]
  %v1224 = vld [vmem:[%s1213 + $0x50] sm:$0xff]
  %v1225 = vld [vmem:[%s1213 + $0x58] sm:$0xff]
  %v1226 = vld [vmem:[%s1213 + $0x60] sm:$0xff]
  %v1227 = vld [vmem:[%s1213 + $0x68] sm:$0xff]
  %v1228 = vld [vmem:[%s1213 + $0x70] sm:$0xff]
  %v1229 = vld [vmem:[%s1213 + $0x78] sm:$0xff]
  %v1230 = vld [vmem:[%s1213 + $0x80] sm:$0xff]
  %v1231 = vld [vmem:[%s1213 + $0x88] sm:$0xff]
  %v1232 = vld [vmem:[%s1213 + $0x90] sm:$0xff]
  %v1233 = vld [vmem:[%s1213 + $0x98] sm:$0xff]
  %v1234 = vld [vmem:[%s1213 + $0xa0] sm:$0xff]
  %v1235 = vld [vmem:[%s1213 + $0xa8] sm:$0xff]
  %v1236 = vld [vmem:[%s1213 + $0xb0] sm:$0xff]
  %v1237 = vld [vmem:[%s1213 + $0xb8] sm:$0xff]
  %v1238 = vld [vmem:[%s1213 + $0xc0] sm:$0xff]
  %v1239 = vld [vmem:[%s1213 + $0xc8] sm:$0xff]
  %v1240 = vld [vmem:[%s1213 + $0xd0] sm:$0xff]
  %v1241 = vld [vmem:[%s1213 + $0xd8] sm:$0xff]
  %v1242 = vld [vmem:[%s1213 + $0xe0] sm:$0xff]
  %v1243 = vld [vmem:[%s1213 + $0xe8] sm:$0xff]
  %v1244 = vld [vmem:[%s1213 + $0xf0] sm:$0xff]
  %v1245 = vld [vmem:[%s1213 + $0xf8] sm:$0xff]
  %v1246 = vadd.f32 %v1135, %v1214
  %v1247 = vadd.f32 %v1137, %v1215
  %v1248 = vadd.f32 %v1139, %v1216
  %v1249 = vadd.f32 %v1141, %v1217
  %v1250 = vadd.f32 %v1145, %v1218
  %v1251 = vadd.f32 %v1147, %v1219
  %v1252 = vadd.f32 %v1149, %v1220
  %v1253 = vadd.f32 %v1151, %v1221
  %v1254 = vadd.f32 %v1155, %v1222
  %v1255 = vadd.f32 %v1157, %v1223
  %v1256 = vadd.f32 %v1159, %v1224
  %v1257 = vadd.f32 %v1161, %v1225
  %v1258 = vadd.f32 %v1165, %v1226
  %v1259 = vadd.f32 %v1167, %v1227
  %v1260 = vadd.f32 %v1169, %v1228
  %v1261 = vadd.f32 %v1171, %v1229
  %v1262 = vadd.f32 %v1175, %v1230
  %v1263 = vadd.f32 %v1177, %v1231
  %v1264 = vadd.f32 %v1179, %v1232
  %v1265 = vadd.f32 %v1181, %v1233
  %v1266 = vadd.f32 %v1185, %v1234
  %v1267 = vadd.f32 %v1187, %v1235
  %v1268 = vadd.f32 %v1189, %v1236
  %v1269 = vadd.f32 %v1191, %v1237
  %v1270 = vadd.f32 %v1195, %v1238
  %v1271 = vadd.f32 %v1197, %v1239
  %v1272 = vadd.f32 %v1199, %v1240
  %v1273 = vadd.f32 %v1201, %v1241
  %v1274 = vadd.f32 %v1205, %v1242
  %v1275 = vadd.f32 %v1207, %v1243
  %v1276 = vadd.f32 %v1209, %v1244
  %v1277 = vadd.f32 %v1211, %v1245
  %s1278 = scalar_lea.vmem %s6, 256
  %1279 = vst [vmem:[%s1278] sm:$0xff] %v1246
  %1280 = vst [vmem:[%s1278 + $0x8] sm:$0xff] %v1247
  %1281 = vst [vmem:[%s1278 + $0x10] sm:$0xff] %v1248
  %1282 = vst [vmem:[%s1278 + $0x18] sm:$0xff] %v1249
  %1283 = vst [vmem:[%s1278 + $0x20] sm:$0xff] %v1250
  %1284 = vst [vmem:[%s1278 + $0x28] sm:$0xff] %v1251
  %1285 = vst [vmem:[%s1278 + $0x30] sm:$0xff] %v1252
  %1286 = vst [vmem:[%s1278 + $0x38] sm:$0xff] %v1253
  %1287 = vst [vmem:[%s1278 + $0x40] sm:$0xff] %v1254
  %1288 = vst [vmem:[%s1278 + $0x48] sm:$0xff] %v1255
  %1289 = vst [vmem:[%s1278 + $0x50] sm:$0xff] %v1256
  %1290 = vst [vmem:[%s1278 + $0x58] sm:$0xff] %v1257
  %1291 = vst [vmem:[%s1278 + $0x60] sm:$0xff] %v1258
  %1292 = vst [vmem:[%s1278 + $0x68] sm:$0xff] %v1259
  %1293 = vst [vmem:[%s1278 + $0x70] sm:$0xff] %v1260
  %1294 = vst [vmem:[%s1278 + $0x78] sm:$0xff] %v1261
  %1295 = vst [vmem:[%s1278 + $0x80] sm:$0xff] %v1262
  %1296 = vst [vmem:[%s1278 + $0x88] sm:$0xff] %v1263
  %1297 = vst [vmem:[%s1278 + $0x90] sm:$0xff] %v1264
  %1298 = vst [vmem:[%s1278 + $0x98] sm:$0xff] %v1265
  %1299 = vst [vmem:[%s1278 + $0xa0] sm:$0xff] %v1266
  %1300 = vst [vmem:[%s1278 + $0xa8] sm:$0xff] %v1267
  %1301 = vst [vmem:[%s1278 + $0xb0] sm:$0xff] %v1268
  %1302 = vst [vmem:[%s1278 + $0xb8] sm:$0xff] %v1269
  %1303 = vst [vmem:[%s1278 + $0xc0] sm:$0xff] %v1270
  %1304 = vst [vmem:[%s1278 + $0xc8] sm:$0xff] %v1271
  %1305 = vst [vmem:[%s1278 + $0xd0] sm:$0xff] %v1272
  %1306 = vst [vmem:[%s1278 + $0xd8] sm:$0xff] %v1273
  %1307 = vst [vmem:[%s1278 + $0xe0] sm:$0xff] %v1274
  %1308 = vst [vmem:[%s1278 + $0xe8] sm:$0xff] %v1275
  %1309 = vst [vmem:[%s1278 + $0xf0] sm:$0xff] %v1276
  %1310 = vst [vmem:[%s1278 + $0xf8] sm:$0xff] %v1277
  // Predicated region
  $region26: #{oafilter.7} parent=0 // pred_check
    _
  $region27: #{oafilter.7} parent=0 // pred_check_branch
    %1312 = sbr.rel (0) target = $region29
  $region28: #{oafilter.7} parent=0 // pred_region
    _
  $region29: #{oafilter.7} parent=0 // pred_fallthru
    _
  // Predicated region
  $region30: #{oafilter.7} parent=0 // pred_check
    _
  $region31: #{oafilter.7} parent=0 // pred_check_branch
    %1314 = sbr.rel (0) target = $region33
  $region32: #{oafilter.7} parent=0 // pred_region
    _
  $region33: #{oafilter.7} parent=0 // pred_fallthru
    _

// kernel: oafilter.4
$region0: #{oafilter.4}
  #allocation0 [shape = 'u32[]', space=smem, size = 0x4, offset = 0x4, fixed_abs, tag = 'smem constant byte address 0x4 - core index']
  #allocation1 [shape = 'u32[144,128]{1,0:T(1,128)}', space=vmem, size = 0x12000, scoped, tag = 'internal scratch']
  %s0 = inlined_call_operand.vmem [shape: f32[2,128,256], index: 0, kind: input, shape index: {}]
  %s1 = inlined_call_operand.vmem [shape: f32[2,2,128], index: 1, kind: output, shape index: {}]
  %s2 = sld [smem:[#allocation0]]
  $region14: #{oafilter.4} parent=0
    _
  %s4 = ssub.s32 1, %s2
  %s5 = scalar_select 0, %s4, %s2
  // Predicated region
  $region2: #{oafilter.4} parent=0 // pred_check
    _
  $region3: #{oafilter.4} parent=0 // pred_check_branch
    %7 = sbr.rel (0) target = $region5
  $region4: #{oafilter.4} parent=0 // pred_region
    _
  $region5: #{oafilter.4} parent=0 // pred_fallthru
    _
  %v8 = vld [vmem:[%s0] sm:$0xff]
  %v9 = vld [vmem:[%s0 + $0x8] sm:$0xff]
  %v10 = vld [vmem:[%s0 + $0x10] sm:$0xff]
  %v11 = vld [vmem:[%s0 + $0x18] sm:$0xff]
  %v12 = vld [vmem:[%s0 + $0x20] sm:$0xff]
  %v13 = vld [vmem:[%s0 + $0x28] sm:$0xff]
  %v14 = vld [vmem:[%s0 + $0x30] sm:$0xff]
  %v15 = vld [vmem:[%s0 + $0x38] sm:$0xff]
  %v16 = vld [vmem:[%s0 + $0x40] sm:$0xff]
  %v17 = vld [vmem:[%s0 + $0x48] sm:$0xff]
  %v18 = vld [vmem:[%s0 + $0x50] sm:$0xff]
  %v19 = vld [vmem:[%s0 + $0x58] sm:$0xff]
  %v20 = vld [vmem:[%s0 + $0x60] sm:$0xff]
  %v21 = vld [vmem:[%s0 + $0x68] sm:$0xff]
  %v22 = vld [vmem:[%s0 + $0x70] sm:$0xff]
  %v23 = vld [vmem:[%s0 + $0x78] sm:$0xff]
  %v24 = vld [vmem:[%s0 + $0x80] sm:$0xff]
  %v25 = vld [vmem:[%s0 + $0x88] sm:$0xff]
  %v26 = vld [vmem:[%s0 + $0x90] sm:$0xff]
  %v27 = vld [vmem:[%s0 + $0x98] sm:$0xff]
  %v28 = vld [vmem:[%s0 + $0xa0] sm:$0xff]
  %v29 = vld [vmem:[%s0 + $0xa8] sm:$0xff]
  %v30 = vld [vmem:[%s0 + $0xb0] sm:$0xff]
  %v31 = vld [vmem:[%s0 + $0xb8] sm:$0xff]
  %v32 = vld [vmem:[%s0 + $0xc0] sm:$0xff]
  %v33 = vld [vmem:[%s0 + $0xc8] sm:$0xff]
  %v34 = vld [vmem:[%s0 + $0xd0] sm:$0xff]
  %v35 = vld [vmem:[%s0 + $0xd8] sm:$0xff]
  %v36 = vld [vmem:[%s0 + $0xe0] sm:$0xff]
  %v37 = vld [vmem:[%s0 + $0xe8] sm:$0xff]
  %v38 = vld [vmem:[%s0 + $0xf0] sm:$0xff]
  %v39 = vld [vmem:[%s0 + $0xf8] sm:$0xff]
  %v40 = vld [vmem:[%s0 + $0x100] sm:$0xff]
  %v41 = vld [vmem:[%s0 + $0x108] sm:$0xff]
  %v42 = vld [vmem:[%s0 + $0x110] sm:$0xff]
  %v43 = vld [vmem:[%s0 + $0x118] sm:$0xff]
  %v44 = vld [vmem:[%s0 + $0x120] sm:$0xff]
  %v45 = vld [vmem:[%s0 + $0x128] sm:$0xff]
  %v46 = vld [vmem:[%s0 + $0x130] sm:$0xff]
  %v47 = vld [vmem:[%s0 + $0x138] sm:$0xff]
  %v48 = vld [vmem:[%s0 + $0x140] sm:$0xff]
  %v49 = vld [vmem:[%s0 + $0x148] sm:$0xff]
  %v50 = vld [vmem:[%s0 + $0x150] sm:$0xff]
  %v51 = vld [vmem:[%s0 + $0x158] sm:$0xff]
  %v52 = vld [vmem:[%s0 + $0x160] sm:$0xff]
  %v53 = vld [vmem:[%s0 + $0x168] sm:$0xff]
  %v54 = vld [vmem:[%s0 + $0x170] sm:$0xff]
  %v55 = vld [vmem:[%s0 + $0x178] sm:$0xff]
  %v56 = vld [vmem:[%s0 + $0x180] sm:$0xff]
  %v57 = vld [vmem:[%s0 + $0x188] sm:$0xff]
  %v58 = vld [vmem:[%s0 + $0x190] sm:$0xff]
  %v59 = vld [vmem:[%s0 + $0x198] sm:$0xff]
  %v60 = vld [vmem:[%s0 + $0x1a0] sm:$0xff]
  %v61 = vld [vmem:[%s0 + $0x1a8] sm:$0xff]
  %v62 = vld [vmem:[%s0 + $0x1b0] sm:$0xff]
  %v63 = vld [vmem:[%s0 + $0x1b8] sm:$0xff]
  %v64 = vld [vmem:[%s0 + $0x1c0] sm:$0xff]
  %v65 = vld [vmem:[%s0 + $0x1c8] sm:$0xff]
  %v66 = vld [vmem:[%s0 + $0x1d0] sm:$0xff]
  %v67 = vld [vmem:[%s0 + $0x1d8] sm:$0xff]
  %v68 = vld [vmem:[%s0 + $0x1e0] sm:$0xff]
  %v69 = vld [vmem:[%s0 + $0x1e8] sm:$0xff]
  %v70 = vld [vmem:[%s0 + $0x1f0] sm:$0xff]
  %v71 = vld [vmem:[%s0 + $0x1f8] sm:$0xff]
  %v72 = vadd.f32 %v8, %v9
  %73 = vadd.xlane.f32.xlu0 %v72
  %v74 = vpop.xlane.xlu0 %73
  %v75 = vadd.f32 %v10, %v11
  %76 = vadd.xlane.f32.xlu0 %v75
  %v77 = vpop.xlane.xlu0 %76
  %v78 = vadd.f32 %v12, %v13
  %79 = vadd.xlane.f32.xlu0 %v78
  %v80 = vpop.xlane.xlu0 %79
  %v81 = vadd.f32 %v14, %v15
  %82 = vadd.xlane.f32.xlu0 %v81
  %v83 = vpop.xlane.xlu0 %82
  %v84 = vadd.f32 %v16, %v17
  %85 = vadd.xlane.f32.xlu0 %v84
  %v86 = vpop.xlane.xlu0 %85
  %v87 = vadd.f32 %v18, %v19
  %88 = vadd.xlane.f32.xlu0 %v87
  %v89 = vpop.xlane.xlu0 %88
  %v90 = vadd.f32 %v20, %v21
  %91 = vadd.xlane.f32.xlu0 %v90
  %v92 = vpop.xlane.xlu0 %91
  %v93 = vadd.f32 %v22, %v23
  %94 = vadd.xlane.f32.xlu0 %v93
  %v95 = vpop.xlane.xlu0 %94
  %v96 = vadd.f32 %v24, %v25
  %97 = vadd.xlane.f32.xlu0 %v96
  %v98 = vpop.xlane.xlu0 %97
  %v99 = vadd.f32 %v26, %v27
  %100 = vadd.xlane.f32.xlu0 %v99
  %v101 = vpop.xlane.xlu0 %100
  %v102 = vadd.f32 %v28, %v29
  %103 = vadd.xlane.f32.xlu0 %v102
  %v104 = vpop.xlane.xlu0 %103
  %v105 = vadd.f32 %v30, %v31
  %106 = vadd.xlane.f32.xlu0 %v105
  %v107 = vpop.xlane.xlu0 %106
  %v108 = vadd.f32 %v32, %v33
  %109 = vadd.xlane.f32.xlu0 %v108
  %v110 = vpop.xlane.xlu0 %109
  %v111 = vadd.f32 %v34, %v35
  %112 = vadd.xlane.f32.xlu0 %v111
  %v113 = vpop.xlane.xlu0 %112
  %v114 = vadd.f32 %v36, %v37
  %115 = vadd.xlane.f32.xlu0 %v114
  %v116 = vpop.xlane.xlu0 %115
  %v117 = vadd.f32 %v38, %v39
  %118 = vadd.xlane.f32.xlu0 %v117
  %v119 = vpop.xlane.xlu0 %118
  %v120 = vadd.f32 %v40, %v41
  %121 = vadd.xlane.f32.xlu0 %v120
  %v122 = vpop.xlane.xlu0 %121
  %v123 = vadd.f32 %v42, %v43
  %124 = vadd.xlane.f32.xlu0 %v123
  %v125 = vpop.xlane.xlu0 %124
  %v126 = vadd.f32 %v44, %v45
  %127 = vadd.xlane.f32.xlu0 %v126
  %v128 = vpop.xlane.xlu0 %127
  %v129 = vadd.f32 %v46, %v47
  %130 = vadd.xlane.f32.xlu0 %v129
  %v131 = vpop.xlane.xlu0 %130
  %v132 = vadd.f32 %v48, %v49
  %133 = vadd.xlane.f32.xlu0 %v132
  %v134 = vpop.xlane.xlu0 %133
  %v135 = vadd.f32 %v50, %v51
  %136 = vadd.xlane.f32.xlu0 %v135
  %v137 = vpop.xlane.xlu0 %136
  %v138 = vadd.f32 %v52, %v53
  %139 = vadd.xlane.f32.xlu0 %v138
  %v140 = vpop.xlane.xlu0 %139
  %v141 = vadd.f32 %v54, %v55
  %142 = vadd.xlane.f32.xlu0 %v141
  %v143 = vpop.xlane.xlu0 %142
  %v144 = vadd.f32 %v56, %v57
  %145 = vadd.xlane.f32.xlu0 %v144
  %v146 = vpop.xlane.xlu0 %145
  %v147 = vadd.f32 %v58, %v59
  %148 = vadd.xlane.f32.xlu0 %v147
  %v149 = vpop.xlane.xlu0 %148
  %v150 = vadd.f32 %v60, %v61
  %151 = vadd.xlane.f32.xlu0 %v150
  %v152 = vpop.xlane.xlu0 %151
  %v153 = vadd.f32 %v62, %v63
  %154 = vadd.xlane.f32.xlu0 %v153
  %v155 = vpop.xlane.xlu0 %154
  %v156 = vadd.f32 %v64, %v65
  %157 = vadd.xlane.f32.xlu0 %v156
  %v158 = vpop.xlane.xlu0 %157
  %v159 = vadd.f32 %v66, %v67
  %160 = vadd.xlane.f32.xlu0 %v159
  %v161 = vpop.xlane.xlu0 %160
  %v162 = vadd.f32 %v68, %v69
  %163 = vadd.xlane.f32.xlu0 %v162
  %v164 = vpop.xlane.xlu0 %163
  %v165 = vadd.f32 %v70, %v71
  %166 = vadd.xlane.f32.xlu0 %v165
  %v167 = vpop.xlane.xlu0 %166
  %v168 = vmul.f32 %v8, %v8
  %v169 = vmul.f32 %v9, %v9
  %v170 = vmul.f32 %v10, %v10
  %v171 = vmul.f32 %v11, %v11
  %v172 = vmul.f32 %v12, %v12
  %v173 = vmul.f32 %v13, %v13
  %v174 = vmul.f32 %v14, %v14
  %v175 = vmul.f32 %v15, %v15
  %v176 = vmul.f32 %v16, %v16
  %v177 = vmul.f32 %v17, %v17
  %v178 = vmul.f32 %v18, %v18
  %v179 = vmul.f32 %v19, %v19
  %v180 = vmul.f32 %v20, %v20
  %v181 = vmul.f32 %v21, %v21
  %v182 = vmul.f32 %v22, %v22
  %v183 = vmul.f32 %v23, %v23
  %v184 = vmul.f32 %v24, %v24
  %v185 = vmul.f32 %v25, %v25
  %v186 = vmul.f32 %v26, %v26
  %v187 = vmul.f32 %v27, %v27
  %v188 = vmul.f32 %v28, %v28
  %v189 = vmul.f32 %v29, %v29
  %v190 = vmul.f32 %v30, %v30
  %v191 = vmul.f32 %v31, %v31
  %v192 = vmul.f32 %v32, %v32
  %v193 = vmul.f32 %v33, %v33
  %v194 = vmul.f32 %v34, %v34
  %v195 = vmul.f32 %v35, %v35
  %v196 = vmul.f32 %v36, %v36
  %v197 = vmul.f32 %v37, %v37
  %v198 = vmul.f32 %v38, %v38
  %v199 = vmul.f32 %v39, %v39
  %v200 = vmul.f32 %v40, %v40
  %v201 = vmul.f32 %v41, %v41
  %v202 = vmul.f32 %v42, %v42
  %v203 = vmul.f32 %v43, %v43
  %v204 = vmul.f32 %v44, %v44
  %v205 = vmul.f32 %v45, %v45
  %v206 = vmul.f32 %v46, %v46
  %v207 = vmul.f32 %v47, %v47
  %v208 = vmul.f32 %v48, %v48
  %v209 = vmul.f32 %v49, %v49
  %v210 = vmul.f32 %v50, %v50
  %v211 = vmul.f32 %v51, %v51
  %v212 = vmul.f32 %v52, %v52
  %v213 = vmul.f32 %v53, %v53
  %v214 = vmul.f32 %v54, %v54
  %v215 = vmul.f32 %v55, %v55
  %v216 = vmul.f32 %v56, %v56
  %v217 = vmul.f32 %v57, %v57
  %v218 = vmul.f32 %v58, %v58
  %v219 = vmul.f32 %v59, %v59
  %v220 = vmul.f32 %v60, %v60
  %v221 = vmul.f32 %v61, %v61
  %v222 = vmul.f32 %v62, %v62
  %v223 = vmul.f32 %v63, %v63
  %v224 = vmul.f32 %v64, %v64
  %v225 = vmul.f32 %v65, %v65
  %v226 = vmul.f32 %v66, %v66
  %v227 = vmul.f32 %v67, %v67
  %v228 = vmul.f32 %v68, %v68
  %v229 = vmul.f32 %v69, %v69
  %v230 = vmul.f32 %v70, %v70
  %v231 = vmul.f32 %v71, %v71
  %v232 = vadd.f32 %v168, %v169
  %233 = vadd.xlane.f32.xlu0 %v232
  %v234 = vpop.xlane.xlu0 %233
  %v235 = vadd.f32 %v170, %v171
  %236 = vadd.xlane.f32.xlu0 %v235
  %v237 = vpop.xlane.xlu0 %236
  %v238 = vadd.f32 %v172, %v173
  %239 = vadd.xlane.f32.xlu0 %v238
  %v240 = vpop.xlane.xlu0 %239
  %v241 = vadd.f32 %v174, %v175
  %242 = vadd.xlane.f32.xlu0 %v241
  %v243 = vpop.xlane.xlu0 %242
  %v244 = vadd.f32 %v176, %v177
  %245 = vadd.xlane.f32.xlu0 %v244
  %v246 = vpop.xlane.xlu0 %245
  %v247 = vadd.f32 %v178, %v179
  %248 = vadd.xlane.f32.xlu0 %v247
  %v249 = vpop.xlane.xlu0 %248
  %v250 = vadd.f32 %v180, %v181
  %251 = vadd.xlane.f32.xlu0 %v250
  %v252 = vpop.xlane.xlu0 %251
  %v253 = vadd.f32 %v182, %v183
  %254 = vadd.xlane.f32.xlu0 %v253
  %v255 = vpop.xlane.xlu0 %254
  %v256 = vadd.f32 %v184, %v185
  %257 = vadd.xlane.f32.xlu0 %v256
  %v258 = vpop.xlane.xlu0 %257
  %v259 = vadd.f32 %v186, %v187
  %260 = vadd.xlane.f32.xlu0 %v259
  %v261 = vpop.xlane.xlu0 %260
  %v262 = vadd.f32 %v188, %v189
  %263 = vadd.xlane.f32.xlu0 %v262
  %v264 = vpop.xlane.xlu0 %263
  %v265 = vadd.f32 %v190, %v191
  %266 = vadd.xlane.f32.xlu0 %v265
  %v267 = vpop.xlane.xlu0 %266
  %v268 = vadd.f32 %v192, %v193
  %269 = vadd.xlane.f32.xlu0 %v268
  %v270 = vpop.xlane.xlu0 %269
  %v271 = vadd.f32 %v194, %v195
  %272 = vadd.xlane.f32.xlu0 %v271
  %v273 = vpop.xlane.xlu0 %272
  %v274 = vadd.f32 %v196, %v197
  %275 = vadd.xlane.f32.xlu0 %v274
  %v276 = vpop.xlane.xlu0 %275
  %v277 = vadd.f32 %v198, %v199
  %278 = vadd.xlane.f32.xlu0 %v277
  %v279 = vpop.xlane.xlu0 %278
  %v280 = vadd.f32 %v200, %v201
  %281 = vadd.xlane.f32.xlu0 %v280
  %v282 = vpop.xlane.xlu0 %281
  %v283 = vadd.f32 %v202, %v203
  %284 = vadd.xlane.f32.xlu0 %v283
  %v285 = vpop.xlane.xlu0 %284
  %v286 = vadd.f32 %v204, %v205
  %287 = vadd.xlane.f32.xlu0 %v286
  %v288 = vpop.xlane.xlu0 %287
  %v289 = vadd.f32 %v206, %v207
  %290 = vadd.xlane.f32.xlu0 %v289
  %v291 = vpop.xlane.xlu0 %290
  %v292 = vadd.f32 %v208, %v209
  %293 = vadd.xlane.f32.xlu0 %v292
  %v294 = vpop.xlane.xlu0 %293
  %v295 = vadd.f32 %v210, %v211
  %296 = vadd.xlane.f32.xlu0 %v295
  %v297 = vpop.xlane.xlu0 %296
  %v298 = vadd.f32 %v212, %v213
  %299 = vadd.xlane.f32.xlu0 %v298
  %v300 = vpop.xlane.xlu0 %299
  %v301 = vadd.f32 %v214, %v215
  %302 = vadd.xlane.f32.xlu0 %v301
  %v303 = vpop.xlane.xlu0 %302
  %v304 = vadd.f32 %v216, %v217
  %305 = vadd.xlane.f32.xlu0 %v304
  %v306 = vpop.xlane.xlu0 %305
  %v307 = vadd.f32 %v218, %v219
  %308 = vadd.xlane.f32.xlu0 %v307
  %v309 = vpop.xlane.xlu0 %308
  %v310 = vadd.f32 %v220, %v221
  %311 = vadd.xlane.f32.xlu0 %v310
  %v312 = vpop.xlane.xlu0 %311
  %v313 = vadd.f32 %v222, %v223
  %314 = vadd.xlane.f32.xlu0 %v313
  %v315 = vpop.xlane.xlu0 %314
  %v316 = vadd.f32 %v224, %v225
  %317 = vadd.xlane.f32.xlu0 %v316
  %v318 = vpop.xlane.xlu0 %317
  %v319 = vadd.f32 %v226, %v227
  %320 = vadd.xlane.f32.xlu0 %v319
  %v321 = vpop.xlane.xlu0 %320
  %v322 = vadd.f32 %v228, %v229
  %323 = vadd.xlane.f32.xlu0 %v322
  %v324 = vpop.xlane.xlu0 %323
  %v325 = vadd.f32 %v230, %v231
  %326 = vadd.xlane.f32.xlu0 %v325
  %v327 = vpop.xlane.xlu0 %326
  %v360 = vlaneseq
  %v361 = vand.u32 %v360, 127
  %v362 = vlaneseq
  %v363 = vshrl.u32 %v362, 7
  %v364 = vsub.s32 %v361, %v363
  %v365 = vrot.slane %v74, %v364
  %v366 = vadd.s32 %v361, 4294967288
  %v367 = vlaneseq
  %v368 = vshrl.u32 %v367, 7
  %v369 = vsub.s32 %v366, %v368
  %v370 = vrot.slane %v77, %v369
  %vm371 = vcmask 130112
  %v372 = vsel %vm371, %v370, %v365
  %v373 = vadd.s32 %v361, 4294967280
  %v374 = vlaneseq
  %v375 = vshrl.u32 %v374, 7
  %v376 = vsub.s32 %v373, %v375
  %v377 = vrot.slane %v80, %v376
  %vm378 = vcmask 195712
  %v379 = vsel %vm378, %v377, %v372
  %v380 = vadd.s32 %v361, 4294967272
  %v381 = vlaneseq
  %v382 = vshrl.u32 %v381, 7
  %v383 = vsub.s32 %v380, %v382
  %v384 = vrot.slane %v83, %v383
  %vm385 = vcmask 261312
  %v386 = vsel %vm385, %v384, %v379
  %v387 = vadd.s32 %v361, 4294967264
  %v388 = vlaneseq
  %v389 = vshrl.u32 %v388, 7
  %v390 = vsub.s32 %v387, %v389
  %v391 = vrot.slane %v86, %v390
  %vm392 = vcmask 326912
  %v393 = vsel %vm392, %v391, %v386
  %v394 = vadd.s32 %v361, 4294967256
  %v395 = vlaneseq
  %v396 = vshrl.u32 %v395, 7
  %v397 = vsub.s32 %v394, %v396
  %v398 = vrot.slane %v89, %v397
  %vm399 = vcmask 392512
  %v400 = vsel %vm399, %v398, %v393
  %v401 = vadd.s32 %v361, 4294967248
  %v402 = vlaneseq
  %v403 = vshrl.u32 %v402, 7
  %v404 = vsub.s32 %v401, %v403
  %v405 = vrot.slane %v92, %v404
  %vm406 = vcmask 458112
  %v407 = vsel %vm406, %v405, %v400
  %v408 = vadd.s32 %v361, 4294967240
  %v409 = vlaneseq
  %v410 = vshrl.u32 %v409, 7
  %v411 = vsub.s32 %v408, %v410
  %v412 = vrot.slane %v95, %v411
  %vm413 = vcmask 523712
  %v414 = vsel %vm413, %v412, %v407
  %v415 = vadd.s32 %v361, 4294967232
  %v416 = vlaneseq
  %v417 = vshrl.u32 %v416, 7
  %v418 = vsub.s32 %v415, %v417
  %v419 = vrot.slane %v98, %v418
  %vm420 = vcmask 589312
  %v421 = vsel %vm420, %v419, %v414
  %v422 = vadd.s32 %v361, 4294967224
  %v423 = vlaneseq
  %v424 = vshrl.u32 %v423, 7
  %v425 = vsub.s32 %v422, %v424
  %v426 = vrot.slane %v101, %v425
  %vm427 = vcmask 654912
  %v428 = vsel %vm427, %v426, %v421
  %v429 = vadd.s32 %v361, 4294967216
  %v430 = vlaneseq
  %v431 = vshrl.u32 %v430, 7
  %v432 = vsub.s32 %v429, %v431
  %v433 = vrot.slane %v104, %v432
  %vm434 = vcmask 720512
  %v435 = vsel %vm434, %v433, %v428
  %v436 = vadd.s32 %v361, 4294967208
  %v437 = vlaneseq
  %v438 = vshrl.u32 %v437, 7
  %v439 = vsub.s32 %v436, %v438
  %v440 = vrot.slane %v107, %v439
  %vm441 = vcmask 786112
  %v442 = vsel %vm441, %v440, %v435
  %v443 = vadd.s32 %v361, 4294967200
  %v444 = vlaneseq
  %v445 = vshrl.u32 %v444, 7
  %v446 = vsub.s32 %v443, %v445
  %v447 = vrot.slane %v110, %v446
  %vm448 = vcmask 851712
  %v449 = vsel %vm448, %v447, %v442
  %v450 = vadd.s32 %v361, 4294967192
  %v451 = vlaneseq
  %v452 = vshrl.u32 %v451, 7
  %v453 = vsub.s32 %v450, %v452
  %v454 = vrot.slane %v113, %v453
  %vm455 = vcmask 917312
  %v456 = vsel %vm455, %v454, %v449
  %v457 = vadd.s32 %v361, 4294967184
  %v458 = vlaneseq
  %v459 = vshrl.u32 %v458, 7
  %v460 = vsub.s32 %v457, %v459
  %v461 = vrot.slane %v116, %v460
  %vm462 = vcmask 982912
  %v463 = vsel %vm462, %v461, %v456
  %v464 = vadd.s32 %v361, 4294967176
  %v465 = vlaneseq
  %v466 = vshrl.u32 %v465, 7
  %v467 = vsub.s32 %v464, %v466
  %v468 = vrot.slane %v119, %v467
  %vm469 = vcmask 1048512
  %v470 = vsel %vm469, %v468, %v463
  %v471 = vlaneseq
  %v472 = vshrl.u32 %v471, 7
  %v473 = vsub.s32 %v361, %v472
  %v474 = vrot.slane %v122, %v473
  %v475 = vlaneseq
  %v476 = vshrl.u32 %v475, 7
  %v477 = vsub.s32 %v366, %v476
  %v478 = vrot.slane %v125, %v477
  %v479 = vsel %vm371, %v478, %v474
  %v480 = vlaneseq
  %v481 = vshrl.u32 %v480, 7
  %v482 = vsub.s32 %v373, %v481
  %v483 = vrot.slane %v128, %v482
  %v484 = vsel %vm378, %v483, %v479
  %v485 = vlaneseq
  %v486 = vshrl.u32 %v485, 7
  %v487 = vsub.s32 %v380, %v486
  %v488 = vrot.slane %v131, %v487
  %v489 = vsel %vm385, %v488, %v484
  %v490 = vlaneseq
  %v491 = vshrl.u32 %v490, 7
  %v492 = vsub.s32 %v387, %v491
  %v493 = vrot.slane %v134, %v492
  %v494 = vsel %vm392, %v493, %v489
  %v495 = vlaneseq
  %v496 = vshrl.u32 %v495, 7
  %v497 = vsub.s32 %v394, %v496
  %v498 = vrot.slane %v137, %v497
  %v499 = vsel %vm399, %v498, %v494
  %v500 = vlaneseq
  %v501 = vshrl.u32 %v500, 7
  %v502 = vsub.s32 %v401, %v501
  %v503 = vrot.slane %v140, %v502
  %v504 = vsel %vm406, %v503, %v499
  %v505 = vlaneseq
  %v506 = vshrl.u32 %v505, 7
  %v507 = vsub.s32 %v408, %v506
  %v508 = vrot.slane %v143, %v507
  %v509 = vsel %vm413, %v508, %v504
  %v510 = vlaneseq
  %v511 = vshrl.u32 %v510, 7
  %v512 = vsub.s32 %v415, %v511
  %v513 = vrot.slane %v146, %v512
  %v514 = vsel %vm420, %v513, %v509
  %v515 = vlaneseq
  %v516 = vshrl.u32 %v515, 7
  %v517 = vsub.s32 %v422, %v516
  %v518 = vrot.slane %v149, %v517
  %v519 = vsel %vm427, %v518, %v514
  %v520 = vlaneseq
  %v521 = vshrl.u32 %v520, 7
  %v522 = vsub.s32 %v429, %v521
  %v523 = vrot.slane %v152, %v522
  %v524 = vsel %vm434, %v523, %v519
  %v525 = vlaneseq
  %v526 = vshrl.u32 %v525, 7
  %v527 = vsub.s32 %v436, %v526
  %v528 = vrot.slane %v155, %v527
  %v529 = vsel %vm441, %v528, %v524
  %v530 = vlaneseq
  %v531 = vshrl.u32 %v530, 7
  %v532 = vsub.s32 %v443, %v531
  %v533 = vrot.slane %v158, %v532
  %v534 = vsel %vm448, %v533, %v529
  %v535 = vlaneseq
  %v536 = vshrl.u32 %v535, 7
  %v537 = vsub.s32 %v450, %v536
  %v538 = vrot.slane %v161, %v537
  %v539 = vsel %vm455, %v538, %v534
  %v540 = vlaneseq
  %v541 = vshrl.u32 %v540, 7
  %v542 = vsub.s32 %v457, %v541
  %v543 = vrot.slane %v164, %v542
  %v544 = vsel %vm462, %v543, %v539
  %v545 = vlaneseq
  %v546 = vshrl.u32 %v545, 7
  %v547 = vsub.s32 %v464, %v546
  %v548 = vrot.slane %v167, %v547
  %v549 = vsel %vm469, %v548, %v544
  %v584 = vlaneseq
  %v585 = vshrl.u32 %v584, 7
  %v586 = vsub.s32 %v361, %v585
  %v587 = vrot.slane %v234, %v586
  %v588 = vlaneseq
  %v589 = vshrl.u32 %v588, 7
  %v590 = vsub.s32 %v366, %v589
  %v591 = vrot.slane %v237, %v590
  %v592 = vsel %vm371, %v591, %v587
  %v593 = vlaneseq
  %v594 = vshrl.u32 %v593, 7
  %v595 = vsub.s32 %v373, %v594
  %v596 = vrot.slane %v240, %v595
  %v597 = vsel %vm378, %v596, %v592
  %v598 = vlaneseq
  %v599 = vshrl.u32 %v598, 7
  %v600 = vsub.s32 %v380, %v599
  %v601 = vrot.slane %v243, %v600
  %v602 = vsel %vm385, %v601, %v597
  %v603 = vlaneseq
  %v604 = vshrl.u32 %v603, 7
  %v605 = vsub.s32 %v387, %v604
  %v606 = vrot.slane %v246, %v605
  %v607 = vsel %vm392, %v606, %v602
  %v608 = vlaneseq
  %v609 = vshrl.u32 %v608, 7
  %v610 = vsub.s32 %v394, %v609
  %v611 = vrot.slane %v249, %v610
  %v612 = vsel %vm399, %v611, %v607
  %v613 = vlaneseq
  %v614 = vshrl.u32 %v613, 7
  %v615 = vsub.s32 %v401, %v614
  %v616 = vrot.slane %v252, %v615
  %v617 = vsel %vm406, %v616, %v612
  %v618 = vlaneseq
  %v619 = vshrl.u32 %v618, 7
  %v620 = vsub.s32 %v408, %v619
  %v621 = vrot.slane %v255, %v620
  %v622 = vsel %vm413, %v621, %v617
  %v623 = vlaneseq
  %v624 = vshrl.u32 %v623, 7
  %v625 = vsub.s32 %v415, %v624
  %v626 = vrot.slane %v258, %v625
  %v627 = vsel %vm420, %v626, %v622
  %v628 = vlaneseq
  %v629 = vshrl.u32 %v628, 7
  %v630 = vsub.s32 %v422, %v629
  %v631 = vrot.slane %v261, %v630
  %v632 = vsel %vm427, %v631, %v627
  %v633 = vlaneseq
  %v634 = vshrl.u32 %v633, 7
  %v635 = vsub.s32 %v429, %v634
  %v636 = vrot.slane %v264, %v635
  %v637 = vsel %vm434, %v636, %v632
  %v638 = vlaneseq
  %v639 = vshrl.u32 %v638, 7
  %v640 = vsub.s32 %v436, %v639
  %v641 = vrot.slane %v267, %v640
  %v642 = vsel %vm441, %v641, %v637
  %v643 = vlaneseq
  %v644 = vshrl.u32 %v643, 7
  %v645 = vsub.s32 %v443, %v644
  %v646 = vrot.slane %v270, %v645
  %v647 = vsel %vm448, %v646, %v642
  %v648 = vlaneseq
  %v649 = vshrl.u32 %v648, 7
  %v650 = vsub.s32 %v450, %v649
  %v651 = vrot.slane %v273, %v650
  %v652 = vsel %vm455, %v651, %v647
  %v653 = vlaneseq
  %v654 = vshrl.u32 %v653, 7
  %v655 = vsub.s32 %v457, %v654
  %v656 = vrot.slane %v276, %v655
  %v657 = vsel %vm462, %v656, %v652
  %v658 = vlaneseq
  %v659 = vshrl.u32 %v658, 7
  %v660 = vsub.s32 %v464, %v659
  %v661 = vrot.slane %v279, %v660
  %v662 = vsel %vm469, %v661, %v657
  %v663 = vlaneseq
  %v664 = vshrl.u32 %v663, 7
  %v665 = vsub.s32 %v361, %v664
  %v666 = vrot.slane %v282, %v665
  %v667 = vlaneseq
  %v668 = vshrl.u32 %v667, 7
  %v669 = vsub.s32 %v366, %v668
  %v670 = vrot.slane %v285, %v669
  %v671 = vsel %vm371, %v670, %v666
  %v672 = vlaneseq
  %v673 = vshrl.u32 %v672, 7
  %v674 = vsub.s32 %v373, %v673
  %v675 = vrot.slane %v288, %v674
  %v676 = vsel %vm378, %v675, %v671
  %v677 = vlaneseq
  %v678 = vshrl.u32 %v677, 7
  %v679 = vsub.s32 %v380, %v678
  %v680 = vrot.slane %v291, %v679
  %v681 = vsel %vm385, %v680, %v676
  %v682 = vlaneseq
  %v683 = vshrl.u32 %v682, 7
  %v684 = vsub.s32 %v387, %v683
  %v685 = vrot.slane %v294, %v684
  %v686 = vsel %vm392, %v685, %v681
  %v687 = vlaneseq
  %v688 = vshrl.u32 %v687, 7
  %v689 = vsub.s32 %v394, %v688
  %v690 = vrot.slane %v297, %v689
  %v691 = vsel %vm399, %v690, %v686
  %v692 = vlaneseq
  %v693 = vshrl.u32 %v692, 7
  %v694 = vsub.s32 %v401, %v693
  %v695 = vrot.slane %v300, %v694
  %v696 = vsel %vm406, %v695, %v691
  %v697 = vlaneseq
  %v698 = vshrl.u32 %v697, 7
  %v699 = vsub.s32 %v408, %v698
  %v700 = vrot.slane %v303, %v699
  %v701 = vsel %vm413, %v700, %v696
  %v702 = vlaneseq
  %v703 = vshrl.u32 %v702, 7
  %v704 = vsub.s32 %v415, %v703
  %v705 = vrot.slane %v306, %v704
  %v706 = vsel %vm420, %v705, %v701
  %v707 = vlaneseq
  %v708 = vshrl.u32 %v707, 7
  %v709 = vsub.s32 %v422, %v708
  %v710 = vrot.slane %v309, %v709
  %v711 = vsel %vm427, %v710, %v706
  %v712 = vlaneseq
  %v713 = vshrl.u32 %v712, 7
  %v714 = vsub.s32 %v429, %v713
  %v715 = vrot.slane %v312, %v714
  %v716 = vsel %vm434, %v715, %v711
  %v717 = vlaneseq
  %v718 = vshrl.u32 %v717, 7
  %v719 = vsub.s32 %v436, %v718
  %v720 = vrot.slane %v315, %v719
  %v721 = vsel %vm441, %v720, %v716
  %v722 = vlaneseq
  %v723 = vshrl.u32 %v722, 7
  %v724 = vsub.s32 %v443, %v723
  %v725 = vrot.slane %v318, %v724
  %v726 = vsel %vm448, %v725, %v721
  %v727 = vlaneseq
  %v728 = vshrl.u32 %v727, 7
  %v729 = vsub.s32 %v450, %v728
  %v730 = vrot.slane %v321, %v729
  %v731 = vsel %vm455, %v730, %v726
  %v732 = vlaneseq
  %v733 = vshrl.u32 %v732, 7
  %v734 = vsub.s32 %v457, %v733
  %v735 = vrot.slane %v324, %v734
  %v736 = vsel %vm462, %v735, %v731
  %v737 = vlaneseq
  %v738 = vshrl.u32 %v737, 7
  %v739 = vsub.s32 %v464, %v738
  %v740 = vrot.slane %v327, %v739
  %v741 = vsel %vm469, %v740, %v736
  %vm744 = vcmask 1040384
  %v745 = vsel %vm744, %v470, %v662
  %v746 = vsel %vm744, %v549, %v741
  %747 = vst [vmem:[%s1] sm:$0x3] %v745
  %748 = vst [vmem:[%s1 + $0x2] sm:$0x3] %v746
  // Predicated region
  $region6: #{oafilter.4} parent=0 // pred_check
    _
  $region7: #{oafilter.4} parent=0 // pred_check_branch
    %750 = sbr.rel (0) target = $region9
  $region8: #{oafilter.4} parent=0 // pred_region
    _
  $region9: #{oafilter.4} parent=0 // pred_fallthru
    _
  // Predicated region
  $region10: #{oafilter.4} parent=0 // pred_check
    _
  $region11: #{oafilter.4} parent=0 // pred_check_branch
    %752 = sbr.rel (0) target = $region13
  $region12: #{oafilter.4} parent=0 // pred_region
    _
  $region13: #{oafilter.4} parent=0 // pred_fallthru
    _

// kernel: oafilter.6
$region0: #{oafilter.6}
  #allocation0 [shape = 'u32[]', space=smem, size = 0x4, offset = 0x4, fixed_abs, tag = 'smem constant byte address 0x4 - core index']
  #allocation1 [shape = 'u32[144,128]{1,0:T(1,128)}', space=vmem, size = 0x12000, scoped, tag = 'internal scratch']
  %s0 = inlined_call_operand.vmem [shape: bf16[2,128,256], index: 0, kind: input, shape index: {}]
  %s1 = inlined_call_operand.vmem [shape: bf16[256,256], index: 1, kind: input, shape index: {}]
  %s2 = inlined_call_operand.vmem [shape: f32[1,256], index: 2, kind: input, shape index: {}]
  %s3 = inlined_call_operand.vmem [shape: f32[1,256], index: 3, kind: input, shape index: {}]
  %s4 = inlined_call_operand.vmem [shape: f32[1,256], index: 4, kind: input, shape index: {}]
  %s5 = inlined_call_operand.vmem [shape: bf16[2,128,256], index: 5, kind: output, shape index: {0}]
  %s6 = inlined_call_operand.vmem [shape: f32[2,2,128], index: 6, kind: output, shape index: {1}]
  %7 = xla_tuple %s5, %s6
  %s8 = sld [smem:[#allocation0]]
  $region38: #{oafilter.6} parent=0
    _
  %s10 = ssub.s32 1, %s8
  %s11 = scalar_select 0, %s10, %s8
  // Predicated region
  $region2: #{oafilter.6} parent=0 // pred_check
    _
  $region3: #{oafilter.6} parent=0 // pred_check_branch
    %13 = sbr.rel (0) target = $region5
  $region4: #{oafilter.6} parent=0 // pred_region
    _
  $region5: #{oafilter.6} parent=0 // pred_fallthru
    _
  // Predicated region
  $region6: #{oafilter.6} parent=0 // pred_check
    _
  $region7: #{oafilter.6} parent=0 // pred_check_branch
    %15 = sbr.rel (0) target = $region9
  $region8: #{oafilter.6} parent=0 // pred_region
    _
  $region9: #{oafilter.6} parent=0 // pred_fallthru
    _
  // Predicated region
  $region10: #{oafilter.6} parent=0 // pred_check
    _
  $region11: #{oafilter.6} parent=0 // pred_check_branch
    %17 = sbr.rel (0) target = $region13
  $region12: #{oafilter.6} parent=0 // pred_region
    _
  $region13: #{oafilter.6} parent=0 // pred_fallthru
    _
  // Predicated region
  $region14: #{oafilter.6} parent=0 // pred_check
    _
  $region15: #{oafilter.6} parent=0 // pred_check_branch
    %19 = sbr.rel (0) target = $region17
  $region16: #{oafilter.6} parent=0 // pred_region
    _
  $region17: #{oafilter.6} parent=0 // pred_fallthru
    _
  // Predicated region
  $region18: #{oafilter.6} parent=0 // pred_check
    _
  $region19: #{oafilter.6} parent=0 // pred_check_branch
    %21 = sbr.rel (0) target = $region21
  $region20: #{oafilter.6} parent=0 // pred_region
    _
  $region21: #{oafilter.6} parent=0 // pred_fallthru
    _
  %v22 = vld [vmem:[%s0] sm:$0xff]
  %v23 = vld [vmem:[%s0 + $0x8] sm:$0xff]
  %v24 = vld [vmem:[%s0 + $0x10] sm:$0xff]
  %v25 = vld [vmem:[%s0 + $0x18] sm:$0xff]
  %v26 = vld [vmem:[%s0 + $0x20] sm:$0xff]
  %v27 = vld [vmem:[%s0 + $0x28] sm:$0xff]
  %v28 = vld [vmem:[%s0 + $0x30] sm:$0xff]
  %v29 = vld [vmem:[%s0 + $0x38] sm:$0xff]
  %v30 = vld [vmem:[%s0 + $0x40] sm:$0xff]
  %v31 = vld [vmem:[%s0 + $0x48] sm:$0xff]
  %v32 = vld [vmem:[%s0 + $0x50] sm:$0xff]
  %v33 = vld [vmem:[%s0 + $0x58] sm:$0xff]
  %v34 = vld [vmem:[%s0 + $0x60] sm:$0xff]
  %v35 = vld [vmem:[%s0 + $0x68] sm:$0xff]
  %v36 = vld [vmem:[%s0 + $0x70] sm:$0xff]
  %v37 = vld [vmem:[%s0 + $0x78] sm:$0xff]
  %v38 = vld [vmem:[%s0 + $0x80] sm:$0xff]
  %v39 = vld [vmem:[%s0 + $0x88] sm:$0xff]
  %v40 = vld [vmem:[%s0 + $0x90] sm:$0xff]
  %v41 = vld [vmem:[%s0 + $0x98] sm:$0xff]
  %v42 = vld [vmem:[%s0 + $0xa0] sm:$0xff]
  %v43 = vld [vmem:[%s0 + $0xa8] sm:$0xff]
  %v44 = vld [vmem:[%s0 + $0xb0] sm:$0xff]
  %v45 = vld [vmem:[%s0 + $0xb8] sm:$0xff]
  %v46 = vld [vmem:[%s0 + $0xc0] sm:$0xff]
  %v47 = vld [vmem:[%s0 + $0xc8] sm:$0xff]
  %v48 = vld [vmem:[%s0 + $0xd0] sm:$0xff]
  %v49 = vld [vmem:[%s0 + $0xd8] sm:$0xff]
  %v50 = vld [vmem:[%s0 + $0xe0] sm:$0xff]
  %v51 = vld [vmem:[%s0 + $0xe8] sm:$0xff]
  %v52 = vld [vmem:[%s0 + $0xf0] sm:$0xff]
  %v53 = vld [vmem:[%s0 + $0xf8] sm:$0xff]
  %v54 = vunpack.c.l.bf16 %v22
  %v55 = vunpack.c.h.bf16 %v22
  %v56 = vunpack.c.l.bf16 %v23
  %v57 = vunpack.c.h.bf16 %v23
  %v58 = vunpack.c.l.bf16 %v24
  %v59 = vunpack.c.h.bf16 %v24
  %v60 = vunpack.c.l.bf16 %v25
  %v61 = vunpack.c.h.bf16 %v25
  %v62 = vunpack.c.l.bf16 %v26
  %v63 = vunpack.c.h.bf16 %v26
  %v64 = vunpack.c.l.bf16 %v27
  %v65 = vunpack.c.h.bf16 %v27
  %v66 = vunpack.c.l.bf16 %v28
  %v67 = vunpack.c.h.bf16 %v28
  %v68 = vunpack.c.l.bf16 %v29
  %v69 = vunpack.c.h.bf16 %v29
  %v70 = vunpack.c.l.bf16 %v30
  %v71 = vunpack.c.h.bf16 %v30
  %v72 = vunpack.c.l.bf16 %v31
  %v73 = vunpack.c.h.bf16 %v31
  %v74 = vunpack.c.l.bf16 %v32
  %v75 = vunpack.c.h.bf16 %v32
  %v76 = vunpack.c.l.bf16 %v33
  %v77 = vunpack.c.h.bf16 %v33
  %v78 = vunpack.c.l.bf16 %v34
  %v79 = vunpack.c.h.bf16 %v34
  %v80 = vunpack.c.l.bf16 %v35
  %v81 = vunpack.c.h.bf16 %v35
  %v82 = vunpack.c.l.bf16 %v36
  %v83 = vunpack.c.h.bf16 %v36
  %v84 = vunpack.c.l.bf16 %v37
  %v85 = vunpack.c.h.bf16 %v37
  %v86 = vunpack.c.l.bf16 %v38
  %v87 = vunpack.c.h.bf16 %v38
  %v88 = vunpack.c.l.bf16 %v39
  %v89 = vunpack.c.h.bf16 %v39
  %v90 = vunpack.c.l.bf16 %v40
  %v91 = vunpack.c.h.bf16 %v40
  %v92 = vunpack.c.l.bf16 %v41
  %v93 = vunpack.c.h.bf16 %v41
  %v94 = vunpack.c.l.bf16 %v42
  %v95 = vunpack.c.h.bf16 %v42
  %v96 = vunpack.c.l.bf16 %v43
  %v97 = vunpack.c.h.bf16 %v43
  %v98 = vunpack.c.l.bf16 %v44
  %v99 = vunpack.c.h.bf16 %v44
  %v100 = vunpack.c.l.bf16 %v45
  %v101 = vunpack.c.h.bf16 %v45
  %v102 = vunpack.c.l.bf16 %v46
  %v103 = vunpack.c.h.bf16 %v46
  %v104 = vunpack.c.l.bf16 %v47
  %v105 = vunpack.c.h.bf16 %v47
  %v106 = vunpack.c.l.bf16 %v48
  %v107 = vunpack.c.h.bf16 %v48
  %v108 = vunpack.c.l.bf16 %v49
  %v109 = vunpack.c.h.bf16 %v49
  %v110 = vunpack.c.l.bf16 %v50
  %v111 = vunpack.c.h.bf16 %v50
  %v112 = vunpack.c.l.bf16 %v51
  %v113 = vunpack.c.h.bf16 %v51
  %v114 = vunpack.c.l.bf16 %v52
  %v115 = vunpack.c.h.bf16 %v52
  %v116 = vunpack.c.l.bf16 %v53
  %v117 = vunpack.c.h.bf16 %v53
  %v118 = vld [vmem:[%s2] sm:$0x3]
  %v120 = vlaneseq
  %v121 = vshrl.u32 %v120, 7
  %v122 = vsub.s32 0, %v121
  %v123 = vrot.slane %v118, %v122
  %v124 = vlaneseq
  %v125 = vshrl.u32 %v124, 7
  %v126 = vsub.s32 1, %v125
  %v127 = vrot.slane %v118, %v126
  %v130 = vmul.f32 %v54, %v123
  %v131 = vmul.f32 %v55, %v127
  %v132 = vmul.f32 %v56, %v123
  %v133 = vmul.f32 %v57, %v127
  %v134 = vmul.f32 %v58, %v123
  %v135 = vmul.f32 %v59, %v127
  %v136 = vmul.f32 %v60, %v123
  %v137 = vmul.f32 %v61, %v127
  %v138 = vmul.f32 %v62, %v123
  %v139 = vmul.f32 %v63, %v127
  %v140 = vmul.f32 %v64, %v123
  %v141 = vmul.f32 %v65, %v127
  %v142 = vmul.f32 %v66, %v123
  %v143 = vmul.f32 %v67, %v127
  %v144 = vmul.f32 %v68, %v123
  %v145 = vmul.f32 %v69, %v127
  %v146 = vmul.f32 %v70, %v123
  %v147 = vmul.f32 %v71, %v127
  %v148 = vmul.f32 %v72, %v123
  %v149 = vmul.f32 %v73, %v127
  %v150 = vmul.f32 %v74, %v123
  %v151 = vmul.f32 %v75, %v127
  %v152 = vmul.f32 %v76, %v123
  %v153 = vmul.f32 %v77, %v127
  %v154 = vmul.f32 %v78, %v123
  %v155 = vmul.f32 %v79, %v127
  %v156 = vmul.f32 %v80, %v123
  %v157 = vmul.f32 %v81, %v127
  %v158 = vmul.f32 %v82, %v123
  %v159 = vmul.f32 %v83, %v127
  %v160 = vmul.f32 %v84, %v123
  %v161 = vmul.f32 %v85, %v127
  %v162 = vmul.f32 %v86, %v123
  %v163 = vmul.f32 %v87, %v127
  %v164 = vmul.f32 %v88, %v123
  %v165 = vmul.f32 %v89, %v127
  %v166 = vmul.f32 %v90, %v123
  %v167 = vmul.f32 %v91, %v127
  %v168 = vmul.f32 %v92, %v123
  %v169 = vmul.f32 %v93, %v127
  %v170 = vmul.f32 %v94, %v123
  %v171 = vmul.f32 %v95, %v127
  %v172 = vmul.f32 %v96, %v123
  %v173 = vmul.f32 %v97, %v127
  %v174 = vmul.f32 %v98, %v123
  %v175 = vmul.f32 %v99, %v127
  %v176 = vmul.f32 %v100, %v123
  %v177 = vmul.f32 %v101, %v127
  %v178 = vmul.f32 %v102, %v123
  %v179 = vmul.f32 %v103, %v127
  %v180 = vmul.f32 %v104, %v123
  %v181 = vmul.f32 %v105, %v127
  %v182 = vmul.f32 %v106, %v123
  %v183 = vmul.f32 %v107, %v127
  %v184 = vmul.f32 %v108, %v123
  %v185 = vmul.f32 %v109, %v127
  %v186 = vmul.f32 %v110, %v123
  %v187 = vmul.f32 %v111, %v127
  %v188 = vmul.f32 %v112, %v123
  %v189 = vmul.f32 %v113, %v127
  %v190 = vmul.f32 %v114, %v123
  %v191 = vmul.f32 %v115, %v127
  %v192 = vmul.f32 %v116, %v123
  %v193 = vmul.f32 %v117, %v127
  %v194 = vld [vmem:[%s3] sm:$0x3]
  %v196 = vlaneseq
  %v197 = vshrl.u32 %v196, 7
  %v198 = vsub.s32 0, %v197
  %v199 = vrot.slane %v194, %v198
  %v200 = vlaneseq
  %v201 = vshrl.u32 %v200, 7
  %v202 = vsub.s32 1, %v201
  %v203 = vrot.slane %v194, %v202
  %v206 = vadd.f32 %v130, %v199
  %v207 = vadd.f32 %v131, %v203
  %v208 = vadd.f32 %v132, %v199
  %v209 = vadd.f32 %v133, %v203
  %v210 = vadd.f32 %v134, %v199
  %v211 = vadd.f32 %v135, %v203
  %v212 = vadd.f32 %v136, %v199
  %v213 = vadd.f32 %v137, %v203
  %v214 = vadd.f32 %v138, %v199
  %v215 = vadd.f32 %v139, %v203
  %v216 = vadd.f32 %v140, %v199
  %v217 = vadd.f32 %v141, %v203
  %v218 = vadd.f32 %v142, %v199
  %v219 = vadd.f32 %v143, %v203
  %v220 = vadd.f32 %v144, %v199
  %v221 = vadd.f32 %v145, %v203
  %v222 = vadd.f32 %v146, %v199
  %v223 = vadd.f32 %v147, %v203
  %v224 = vadd.f32 %v148, %v199
  %v225 = vadd.f32 %v149, %v203
  %v226 = vadd.f32 %v150, %v199
  %v227 = vadd.f32 %v151, %v203
  %v228 = vadd.f32 %v152, %v199
  %v229 = vadd.f32 %v153, %v203
  %v230 = vadd.f32 %v154, %v199
  %v231 = vadd.f32 %v155, %v203
  %v232 = vadd.f32 %v156, %v199
  %v233 = vadd.f32 %v157, %v203
  %v234 = vadd.f32 %v158, %v199
  %v235 = vadd.f32 %v159, %v203
  %v236 = vadd.f32 %v160, %v199
  %v237 = vadd.f32 %v161, %v203
  %v238 = vadd.f32 %v162, %v199
  %v239 = vadd.f32 %v163, %v203
  %v240 = vadd.f32 %v164, %v199
  %v241 = vadd.f32 %v165, %v203
  %v242 = vadd.f32 %v166, %v199
  %v243 = vadd.f32 %v167, %v203
  %v244 = vadd.f32 %v168, %v199
  %v245 = vadd.f32 %v169, %v203
  %v246 = vadd.f32 %v170, %v199
  %v247 = vadd.f32 %v171, %v203
  %v248 = vadd.f32 %v172, %v199
  %v249 = vadd.f32 %v173, %v203
  %v250 = vadd.f32 %v174, %v199
  %v251 = vadd.f32 %v175, %v203
  %v252 = vadd.f32 %v176, %v199
  %v253 = vadd.f32 %v177, %v203
  %v254 = vadd.f32 %v178, %v199
  %v255 = vadd.f32 %v179, %v203
  %v256 = vadd.f32 %v180, %v199
  %v257 = vadd.f32 %v181, %v203
  %v258 = vadd.f32 %v182, %v199
  %v259 = vadd.f32 %v183, %v203
  %v260 = vadd.f32 %v184, %v199
  %v261 = vadd.f32 %v185, %v203
  %v262 = vadd.f32 %v186, %v199
  %v263 = vadd.f32 %v187, %v203
  %v264 = vadd.f32 %v188, %v199
  %v265 = vadd.f32 %v189, %v203
  %v266 = vadd.f32 %v190, %v199
  %v267 = vadd.f32 %v191, %v203
  %v268 = vadd.f32 %v192, %v199
  %v269 = vadd.f32 %v193, %v203
  %v270 = vmax.f32 %v206, 0.0
  %v271 = vmax.f32 %v207, 0.0
  %v272 = vmax.f32 %v208, 0.0
  %v273 = vmax.f32 %v209, 0.0
  %v274 = vmax.f32 %v210, 0.0
  %v275 = vmax.f32 %v211, 0.0
  %v276 = vmax.f32 %v212, 0.0
  %v277 = vmax.f32 %v213, 0.0
  %v278 = vmax.f32 %v214, 0.0
  %v279 = vmax.f32 %v215, 0.0
  %v280 = vmax.f32 %v216, 0.0
  %v281 = vmax.f32 %v217, 0.0
  %v282 = vmax.f32 %v218, 0.0
  %v283 = vmax.f32 %v219, 0.0
  %v284 = vmax.f32 %v220, 0.0
  %v285 = vmax.f32 %v221, 0.0
  %v286 = vmax.f32 %v222, 0.0
  %v287 = vmax.f32 %v223, 0.0
  %v288 = vmax.f32 %v224, 0.0
  %v289 = vmax.f32 %v225, 0.0
  %v290 = vmax.f32 %v226, 0.0
  %v291 = vmax.f32 %v227, 0.0
  %v292 = vmax.f32 %v228, 0.0
  %v293 = vmax.f32 %v229, 0.0
  %v294 = vmax.f32 %v230, 0.0
  %v295 = vmax.f32 %v231, 0.0
  %v296 = vmax.f32 %v232, 0.0
  %v297 = vmax.f32 %v233, 0.0
  %v298 = vmax.f32 %v234, 0.0
  %v299 = vmax.f32 %v235, 0.0
  %v300 = vmax.f32 %v236, 0.0
  %v301 = vmax.f32 %v237, 0.0
  %v302 = vmax.f32 %v238, 0.0
  %v303 = vmax.f32 %v239, 0.0
  %v304 = vmax.f32 %v240, 0.0
  %v305 = vmax.f32 %v241, 0.0
  %v306 = vmax.f32 %v242, 0.0
  %v307 = vmax.f32 %v243, 0.0
  %v308 = vmax.f32 %v244, 0.0
  %v309 = vmax.f32 %v245, 0.0
  %v310 = vmax.f32 %v246, 0.0
  %v311 = vmax.f32 %v247, 0.0
  %v312 = vmax.f32 %v248, 0.0
  %v313 = vmax.f32 %v249, 0.0
  %v314 = vmax.f32 %v250, 0.0
  %v315 = vmax.f32 %v251, 0.0
  %v316 = vmax.f32 %v252, 0.0
  %v317 = vmax.f32 %v253, 0.0
  %v318 = vmax.f32 %v254, 0.0
  %v319 = vmax.f32 %v255, 0.0
  %v320 = vmax.f32 %v256, 0.0
  %v321 = vmax.f32 %v257, 0.0
  %v322 = vmax.f32 %v258, 0.0
  %v323 = vmax.f32 %v259, 0.0
  %v324 = vmax.f32 %v260, 0.0
  %v325 = vmax.f32 %v261, 0.0
  %v326 = vmax.f32 %v262, 0.0
  %v327 = vmax.f32 %v263, 0.0
  %v328 = vmax.f32 %v264, 0.0
  %v329 = vmax.f32 %v265, 0.0
  %v330 = vmax.f32 %v266, 0.0
  %v331 = vmax.f32 %v267, 0.0
  %v332 = vmax.f32 %v268, 0.0
  %v333 = vmax.f32 %v269, 0.0
  %v334 = vpack.c.bf16 %v272, %v270
  %v335 = vpack.c.bf16 %v273, %v271
  %v336 = vpack.c.bf16 %v276, %v274
  %v337 = vpack.c.bf16 %v277, %v275
  %v338 = vpack.c.bf16 %v280, %v278
  %v339 = vpack.c.bf16 %v281, %v279
  %v340 = vpack.c.bf16 %v284, %v282
  %v341 = vpack.c.bf16 %v285, %v283
  %v342 = vpack.c.bf16 %v288, %v286
  %v343 = vpack.c.bf16 %v289, %v287
  %v344 = vpack.c.bf16 %v292, %v290
  %v345 = vpack.c.bf16 %v293, %v291
  %v346 = vpack.c.bf16 %v296, %v294
  %v347 = vpack.c.bf16 %v297, %v295
  %v348 = vpack.c.bf16 %v300, %v298
  %v349 = vpack.c.bf16 %v301, %v299
  %v350 = vpack.c.bf16 %v304, %v302
  %v351 = vpack.c.bf16 %v305, %v303
  %v352 = vpack.c.bf16 %v308, %v306
  %v353 = vpack.c.bf16 %v309, %v307
  %v354 = vpack.c.bf16 %v312, %v310
  %v355 = vpack.c.bf16 %v313, %v311
  %v356 = vpack.c.bf16 %v316, %v314
  %v357 = vpack.c.bf16 %v317, %v315
  %v358 = vpack.c.bf16 %v320, %v318
  %v359 = vpack.c.bf16 %v321, %v319
  %v360 = vpack.c.bf16 %v324, %v322
  %v361 = vpack.c.bf16 %v325, %v323
  %v362 = vpack.c.bf16 %v328, %v326
  %v363 = vpack.c.bf16 %v329, %v327
  %v364 = vpack.c.bf16 %v332, %v330
  %v365 = vpack.c.bf16 %v333, %v331
  %v366 = vld [vmem:[%s1] sm:$0xff]
  %v367 = vld [vmem:[%s1 + $0x8] sm:$0xff]
  %v368 = vld [vmem:[%s1 + $0x10] sm:$0xff]
  %v369 = vld [vmem:[%s1 + $0x18] sm:$0xff]
  %v370 = vld [vmem:[%s1 + $0x20] sm:$0xff]
  %v371 = vld [vmem:[%s1 + $0x28] sm:$0xff]
  %v372 = vld [vmem:[%s1 + $0x30] sm:$0xff]
  %v373 = vld [vmem:[%s1 + $0x38] sm:$0xff]
  %v374 = vld [vmem:[%s1 + $0x40] sm:$0xff]
  %v375 = vld [vmem:[%s1 + $0x48] sm:$0xff]
  %v376 = vld [vmem:[%s1 + $0x50] sm:$0xff]
  %v377 = vld [vmem:[%s1 + $0x58] sm:$0xff]
  %v378 = vld [vmem:[%s1 + $0x60] sm:$0xff]
  %v379 = vld [vmem:[%s1 + $0x68] sm:$0xff]
  %v380 = vld [vmem:[%s1 + $0x70] sm:$0xff]
  %v381 = vld [vmem:[%s1 + $0x78] sm:$0xff]
  %v382 = vld [vmem:[%s1 + $0x80] sm:$0xff]
  %v383 = vld [vmem:[%s1 + $0x88] sm:$0xff]
  %v384 = vld [vmem:[%s1 + $0x90] sm:$0xff]
  %v385 = vld [vmem:[%s1 + $0x98] sm:$0xff]
  %v386 = vld [vmem:[%s1 + $0xa0] sm:$0xff]
  %v387 = vld [vmem:[%s1 + $0xa8] sm:$0xff]
  %v388 = vld [vmem:[%s1 + $0xb0] sm:$0xff]
  %v389 = vld [vmem:[%s1 + $0xb8] sm:$0xff]
  %v390 = vld [vmem:[%s1 + $0xc0] sm:$0xff]
  %v391 = vld [vmem:[%s1 + $0xc8] sm:$0xff]
  %v392 = vld [vmem:[%s1 + $0xd0] sm:$0xff]
  %v393 = vld [vmem:[%s1 + $0xd8] sm:$0xff]
  %v394 = vld [vmem:[%s1 + $0xe0] sm:$0xff]
  %v395 = vld [vmem:[%s1 + $0xe8] sm:$0xff]
  %v396 = vld [vmem:[%s1 + $0xf0] sm:$0xff]
  %v397 = vld [vmem:[%s1 + $0xf8] sm:$0xff]
  %v430 = vunpack.c.l.b16 %v366
  %v431 = vunpack.c.h.b16 %v366
  %v432 = vunpack.c.l.b16 %v367
  %v433 = vunpack.c.h.b16 %v367
  %v434 = vunpack.c.l.b16 %v368
  %v435 = vunpack.c.h.b16 %v368
  %v436 = vunpack.c.l.b16 %v369
  %v437 = vunpack.c.h.b16 %v369
  %v438 = vunpack.c.l.b16 %v370
  %v439 = vunpack.c.h.b16 %v370
  %v440 = vunpack.c.l.b16 %v371
  %v441 = vunpack.c.h.b16 %v371
  %v442 = vunpack.c.l.b16 %v372
  %v443 = vunpack.c.h.b16 %v372
  %v444 = vunpack.c.l.b16 %v373
  %v445 = vunpack.c.h.b16 %v373
  %v446 = vunpack.c.l.b16 %v374
  %v447 = vunpack.c.h.b16 %v374
  %v448 = vunpack.c.l.b16 %v375
  %v449 = vunpack.c.h.b16 %v375
  %v450 = vunpack.c.l.b16 %v376
  %v451 = vunpack.c.h.b16 %v376
  %v452 = vunpack.c.l.b16 %v377
  %v453 = vunpack.c.h.b16 %v377
  %v454 = vunpack.c.l.b16 %v378
  %v455 = vunpack.c.h.b16 %v378
  %v456 = vunpack.c.l.b16 %v379
  %v457 = vunpack.c.h.b16 %v379
  %v458 = vunpack.c.l.b16 %v380
  %v459 = vunpack.c.h.b16 %v380
  %v460 = vunpack.c.l.b16 %v381
  %v461 = vunpack.c.h.b16 %v381
  %v462 = vunpack.c.l.b16 %v382
  %v463 = vunpack.c.h.b16 %v382
  %v464 = vunpack.c.l.b16 %v383
  %v465 = vunpack.c.h.b16 %v383
  %v466 = vunpack.c.l.b16 %v384
  %v467 = vunpack.c.h.b16 %v384
  %v468 = vunpack.c.l.b16 %v385
  %v469 = vunpack.c.h.b16 %v385
  %v470 = vunpack.c.l.b16 %v386
  %v471 = vunpack.c.h.b16 %v386
  %v472 = vunpack.c.l.b16 %v387
  %v473 = vunpack.c.h.b16 %v387
  %v474 = vunpack.c.l.b16 %v388
  %v475 = vunpack.c.h.b16 %v388
  %v476 = vunpack.c.l.b16 %v389
  %v477 = vunpack.c.h.b16 %v389
  %v478 = vunpack.c.l.b16 %v390
  %v479 = vunpack.c.h.b16 %v390
  %v480 = vunpack.c.l.b16 %v391
  %v481 = vunpack.c.h.b16 %v391
  %v482 = vunpack.c.l.b16 %v392
  %v483 = vunpack.c.h.b16 %v392
  %v484 = vunpack.c.l.b16 %v393
  %v485 = vunpack.c.h.b16 %v393
  %v486 = vunpack.c.l.b16 %v394
  %v487 = vunpack.c.h.b16 %v394
  %v488 = vunpack.c.l.b16 %v395
  %v489 = vunpack.c.h.b16 %v395
  %v490 = vunpack.c.l.b16 %v396
  %v491 = vunpack.c.h.b16 %v396
  %v492 = vunpack.c.l.b16 %v397
  %v493 = vunpack.c.h.b16 %v397
  %v494 = vpack.c.b16 %v432, %v430
  %v495 = vpack.c.b16 %v433, %v431
  %v496 = vpack.c.b16 %v436, %v434
  %v497 = vpack.c.b16 %v437, %v435
  %v498 = vpack.c.b16 %v440, %v438
  %v499 = vpack.c.b16 %v441, %v439
  %v500 = vpack.c.b16 %v444, %v442
  %v501 = vpack.c.b16 %v445, %v443
  %v502 = vpack.c.b16 %v448, %v446
  %v503 = vpack.c.b16 %v449, %v447
  %v504 = vpack.c.b16 %v452, %v450
  %v505 = vpack.c.b16 %v453, %v451
  %v506 = vpack.c.b16 %v456, %v454
  %v507 = vpack.c.b16 %v457, %v455
  %v508 = vpack.c.b16 %v460, %v458
  %v509 = vpack.c.b16 %v461, %v459
  %v510 = vpack.c.b16 %v464, %v462
  %v511 = vpack.c.b16 %v465, %v463
  %v512 = vpack.c.b16 %v468, %v466
  %v513 = vpack.c.b16 %v469, %v467
  %v514 = vpack.c.b16 %v472, %v470
  %v515 = vpack.c.b16 %v473, %v471
  %v516 = vpack.c.b16 %v476, %v474
  %v517 = vpack.c.b16 %v477, %v475
  %v518 = vpack.c.b16 %v480, %v478
  %v519 = vpack.c.b16 %v481, %v479
  %v520 = vpack.c.b16 %v484, %v482
  %v521 = vpack.c.b16 %v485, %v483
  %v522 = vpack.c.b16 %v488, %v486
  %v523 = vpack.c.b16 %v489, %v487
  %v524 = vpack.c.b16 %v492, %v490
  %v525 = vpack.c.b16 %v493, %v491
  %558 = vmatprep.subr.bf16.mxu0 %v495
  %559 = vmatpush1.bf16.msra.mxu0 %v494
  %560 = vmatprep.subr.bf16.mxu0 %v497
  %561 = vmatpush1.bf16.msra.mxu0 %v496
  %562 = vmatprep.subr.bf16.mxu0 %v499
  %563 = vmatpush1.bf16.msra.mxu0 %v498
  %564 = vmatprep.subr.bf16.mxu0 %v501
  %565 = vmatpush1.bf16.msra.mxu0 %v500
  %566 = vmatprep.subr.bf16.mxu0 %v503
  %567 = vmatpush1.bf16.msra.mxu0 %v502
  %568 = vmatprep.subr.bf16.mxu0 %v505
  %569 = vmatpush1.bf16.msra.mxu0 %v504
  %570 = vmatprep.subr.bf16.mxu0 %v507
  %571 = vmatpush1.bf16.msra.mxu0 %v506
  %572 = vmatprep.subr.bf16.mxu0 %v509
  %573 = vmatpush1.bf16.msra.mxu0 %v508
  %574 = vmatprep.subr.bf16.mxu0 %v511
  %575 = vmatpush1.bf16.msra.mxu0 %v510
  %576 = vmatprep.subr.bf16.mxu0 %v513
  %577 = vmatpush1.bf16.msra.mxu0 %v512
  %578 = vmatprep.subr.bf16.mxu0 %v515
  %579 = vmatpush1.bf16.msra.mxu0 %v514
  %580 = vmatprep.subr.bf16.mxu0 %v517
  %581 = vmatpush1.bf16.msra.mxu0 %v516
  %582 = vmatprep.subr.bf16.mxu0 %v519
  %583 = vmatpush1.bf16.msra.mxu0 %v518
  %584 = vmatprep.subr.bf16.mxu0 %v521
  %585 = vmatpush1.bf16.msra.mxu0 %v520
  %586 = vmatprep.subr.bf16.mxu0 %v523
  %587 = vmatpush1.bf16.msra.mxu0 %v522
  %588 = vmatprep.subr.bf16.mxu0 %v525
  %589 = vmatpush1.bf16.msra.mxu0 %v524
  %590 = vmatprep.mubr.bf16.mxu0 %v335
  %591 = vmatmul.mubr.bf16.gmra.mrb[0].mxu0 %v334
  %v592 = vpop.f32.mrb[0].mxu0
  %v593 = vadd.f32 0.0, %v592
  %v594 = vpop.f32.mrb[0].mxu0
  %v595 = vadd.f32 0.0, %v594
  %v596 = vpop.f32.mrb[0].mxu0
  %v597 = vadd.f32 0.0, %v596
  %v598 = vpop.f32.mrb[0].mxu0
  %v599 = vadd.f32 0.0, %v598
  %600 = vmatprep.mubr.bf16.mxu0 %v337
  %601 = vmatmul.mubr.bf16.gmra.mrb[0].mxu0 %v336
  %v602 = vpop.f32.mrb[0].mxu0
  %v603 = vadd.f32 0.0, %v602
  %v604 = vpop.f32.mrb[0].mxu0
  %v605 = vadd.f32 0.0, %v604
  %v606 = vpop.f32.mrb[0].mxu0
  %v607 = vadd.f32 0.0, %v606
  %v608 = vpop.f32.mrb[0].mxu0
  %v609 = vadd.f32 0.0, %v608
  %610 = vmatprep.mubr.bf16.mxu0 %v339
  %611 = vmatmul.mubr.bf16.gmra.mrb[0].mxu0 %v338
  %v612 = vpop.f32.mrb[0].mxu0
  %v613 = vadd.f32 0.0, %v612
  %v614 = vpop.f32.mrb[0].mxu0
  %v615 = vadd.f32 0.0, %v614
  %v616 = vpop.f32.mrb[0].mxu0
  %v617 = vadd.f32 0.0, %v616
  %v618 = vpop.f32.mrb[0].mxu0
  %v619 = vadd.f32 0.0, %v618
  %620 = vmatprep.mubr.bf16.mxu0 %v341
  %621 = vmatmul.mubr.bf16.gmra.mrb[0].mxu0 %v340
  %v622 = vpop.f32.mrb[0].mxu0
  %v623 = vadd.f32 0.0, %v622
  %v624 = vpop.f32.mrb[0].mxu0
  %v625 = vadd.f32 0.0, %v624
  %v626 = vpop.f32.mrb[0].mxu0
  %v627 = vadd.f32 0.0, %v626
  %v628 = vpop.f32.mrb[0].mxu0
  %v629 = vadd.f32 0.0, %v628
  %630 = vmatprep.mubr.bf16.mxu0 %v343
  %631 = vmatmul.mubr.bf16.gmra.mrb[0].mxu0 %v342
  %v632 = vpop.f32.mrb[0].mxu0
  %v633 = vadd.f32 0.0, %v632
  %v634 = vpop.f32.mrb[0].mxu0
  %v635 = vadd.f32 0.0, %v634
  %v636 = vpop.f32.mrb[0].mxu0
  %v637 = vadd.f32 0.0, %v636
  %v638 = vpop.f32.mrb[0].mxu0
  %v639 = vadd.f32 0.0, %v638
  %640 = vmatprep.mubr.bf16.mxu0 %v345
  %641 = vmatmul.mubr.bf16.gmra.mrb[0].mxu0 %v344
  %v642 = vpop.f32.mrb[0].mxu0
  %v643 = vadd.f32 0.0, %v642
  %v644 = vpop.f32.mrb[0].mxu0
  %v645 = vadd.f32 0.0, %v644
  %v646 = vpop.f32.mrb[0].mxu0
  %v647 = vadd.f32 0.0, %v646
  %v648 = vpop.f32.mrb[0].mxu0
  %v649 = vadd.f32 0.0, %v648
  %650 = vmatprep.mubr.bf16.mxu0 %v347
  %651 = vmatmul.mubr.bf16.gmra.mrb[0].mxu0 %v346
  %v652 = vpop.f32.mrb[0].mxu0
  %v653 = vadd.f32 0.0, %v652
  %v654 = vpop.f32.mrb[0].mxu0
  %v655 = vadd.f32 0.0, %v654
  %v656 = vpop.f32.mrb[0].mxu0
  %v657 = vadd.f32 0.0, %v656
  %v658 = vpop.f32.mrb[0].mxu0
  %v659 = vadd.f32 0.0, %v658
  %660 = vmatprep.mubr.bf16.mxu0 %v349
  %661 = vmatmul.mubr.bf16.gmra.mrb[0].mxu0 %v348
  %v662 = vpop.f32.mrb[0].mxu0
  %v663 = vadd.f32 0.0, %v662
  %v664 = vpop.f32.mrb[0].mxu0
  %v665 = vadd.f32 0.0, %v664
  %v666 = vpop.f32.mrb[0].mxu0
  %v667 = vadd.f32 0.0, %v666
  %v668 = vpop.f32.mrb[0].mxu0
  %v669 = vadd.f32 0.0, %v668
  %670 = vmatprep.mubr.bf16.mxu0 %v351
  %671 = vmatmul.mubr.bf16.gmra.mrb[0].mxu0 %v350
  %v672 = vpop.f32.mrb[0].mxu0
  %v673 = vadd.f32 0.0, %v672
  %v674 = vpop.f32.mrb[0].mxu0
  %v675 = vadd.f32 0.0, %v674
  %v676 = vpop.f32.mrb[0].mxu0
  %v677 = vadd.f32 0.0, %v676
  %v678 = vpop.f32.mrb[0].mxu0
  %v679 = vadd.f32 0.0, %v678
  %680 = vmatprep.mubr.bf16.mxu0 %v353
  %681 = vmatmul.mubr.bf16.gmra.mrb[0].mxu0 %v352
  %v682 = vpop.f32.mrb[0].mxu0
  %v683 = vadd.f32 0.0, %v682
  %v684 = vpop.f32.mrb[0].mxu0
  %v685 = vadd.f32 0.0, %v684
  %v686 = vpop.f32.mrb[0].mxu0
  %v687 = vadd.f32 0.0, %v686
  %v688 = vpop.f32.mrb[0].mxu0
  %v689 = vadd.f32 0.0, %v688
  %690 = vmatprep.mubr.bf16.mxu0 %v355
  %691 = vmatmul.mubr.bf16.gmra.mrb[0].mxu0 %v354
  %v692 = vpop.f32.mrb[0].mxu0
  %v693 = vadd.f32 0.0, %v692
  %v694 = vpop.f32.mrb[0].mxu0
  %v695 = vadd.f32 0.0, %v694
  %v696 = vpop.f32.mrb[0].mxu0
  %v697 = vadd.f32 0.0, %v696
  %v698 = vpop.f32.mrb[0].mxu0
  %v699 = vadd.f32 0.0, %v698
  %700 = vmatprep.mubr.bf16.mxu0 %v357
  %701 = vmatmul.mubr.bf16.gmra.mrb[0].mxu0 %v356
  %v702 = vpop.f32.mrb[0].mxu0
  %v703 = vadd.f32 0.0, %v702
  %v704 = vpop.f32.mrb[0].mxu0
  %v705 = vadd.f32 0.0, %v704
  %v706 = vpop.f32.mrb[0].mxu0
  %v707 = vadd.f32 0.0, %v706
  %v708 = vpop.f32.mrb[0].mxu0
  %v709 = vadd.f32 0.0, %v708
  %710 = vmatprep.mubr.bf16.mxu0 %v359
  %711 = vmatmul.mubr.bf16.gmra.mrb[0].mxu0 %v358
  %v712 = vpop.f32.mrb[0].mxu0
  %v713 = vadd.f32 0.0, %v712
  %v714 = vpop.f32.mrb[0].mxu0
  %v715 = vadd.f32 0.0, %v714
  %v716 = vpop.f32.mrb[0].mxu0
  %v717 = vadd.f32 0.0, %v716
  %v718 = vpop.f32.mrb[0].mxu0
  %v719 = vadd.f32 0.0, %v718
  %720 = vmatprep.mubr.bf16.mxu0 %v361
  %721 = vmatmul.mubr.bf16.gmra.mrb[0].mxu0 %v360
  %v722 = vpop.f32.mrb[0].mxu0
  %v723 = vadd.f32 0.0, %v722
  %v724 = vpop.f32.mrb[0].mxu0
  %v725 = vadd.f32 0.0, %v724
  %v726 = vpop.f32.mrb[0].mxu0
  %v727 = vadd.f32 0.0, %v726
  %v728 = vpop.f32.mrb[0].mxu0
  %v729 = vadd.f32 0.0, %v728
  %730 = vmatprep.mubr.bf16.mxu0 %v363
  %731 = vmatmul.mubr.bf16.gmra.mrb[0].mxu0 %v362
  %v732 = vpop.f32.mrb[0].mxu0
  %v733 = vadd.f32 0.0, %v732
  %v734 = vpop.f32.mrb[0].mxu0
  %v735 = vadd.f32 0.0, %v734
  %v736 = vpop.f32.mrb[0].mxu0
  %v737 = vadd.f32 0.0, %v736
  %v738 = vpop.f32.mrb[0].mxu0
  %v739 = vadd.f32 0.0, %v738
  %740 = vmatprep.mubr.bf16.mxu0 %v365
  %741 = vmatmul.mubr.bf16.gmra.mrb[0].mxu0 %v364
  %v742 = vpop.f32.mrb[0].mxu0
  %v743 = vadd.f32 0.0, %v742
  %v744 = vpop.f32.mrb[0].mxu0
  %v745 = vadd.f32 0.0, %v744
  %v746 = vpop.f32.mrb[0].mxu0
  %v747 = vadd.f32 0.0, %v746
  %v748 = vpop.f32.mrb[0].mxu0
  %v749 = vadd.f32 0.0, %v748
  %750 = vdwg.mxu0
  %v751 = vadd.f32 %v54, %v593
  %v752 = vadd.f32 %v55, %v595
  %v753 = vadd.f32 %v56, %v597
  %v754 = vadd.f32 %v57, %v599
  %v755 = vadd.f32 %v58, %v603
  %v756 = vadd.f32 %v59, %v605
  %v757 = vadd.f32 %v60, %v607
  %v758 = vadd.f32 %v61, %v609
  %v759 = vadd.f32 %v62, %v613
  %v760 = vadd.f32 %v63, %v615
  %v761 = vadd.f32 %v64, %v617
  %v762 = vadd.f32 %v65, %v619
  %v763 = vadd.f32 %v66, %v623
  %v764 = vadd.f32 %v67, %v625
  %v765 = vadd.f32 %v68, %v627
  %v766 = vadd.f32 %v69, %v629
  %v767 = vadd.f32 %v70, %v633
  %v768 = vadd.f32 %v71, %v635
  %v769 = vadd.f32 %v72, %v637
  %v770 = vadd.f32 %v73, %v639
  %v771 = vadd.f32 %v74, %v643
  %v772 = vadd.f32 %v75, %v645
  %v773 = vadd.f32 %v76, %v647
  %v774 = vadd.f32 %v77, %v649
  %v775 = vadd.f32 %v78, %v653
  %v776 = vadd.f32 %v79, %v655
  %v777 = vadd.f32 %v80, %v657
  %v778 = vadd.f32 %v81, %v659
  %v779 = vadd.f32 %v82, %v663
  %v780 = vadd.f32 %v83, %v665
  %v781 = vadd.f32 %v84, %v667
  %v782 = vadd.f32 %v85, %v669
  %v783 = vadd.f32 %v86, %v673
  %v784 = vadd.f32 %v87, %v675
  %v785 = vadd.f32 %v88, %v677
  %v786 = vadd.f32 %v89, %v679
  %v787 = vadd.f32 %v90, %v683
  %v788 = vadd.f32 %v91, %v685
  %v789 = vadd.f32 %v92, %v687
  %v790 = vadd.f32 %v93, %v689
  %v791 = vadd.f32 %v94, %v693
  %v792 = vadd.f32 %v95, %v695
  %v793 = vadd.f32 %v96, %v697
  %v794 = vadd.f32 %v97, %v699
  %v795 = vadd.f32 %v98, %v703
  %v796 = vadd.f32 %v99, %v705
  %v797 = vadd.f32 %v100, %v707
  %v798 = vadd.f32 %v101, %v709
  %v799 = vadd.f32 %v102, %v713
  %v800 = vadd.f32 %v103, %v715
  %v801 = vadd.f32 %v104, %v717
  %v802 = vadd.f32 %v105, %v719
  %v803 = vadd.f32 %v106, %v723
  %v804 = vadd.f32 %v107, %v725
  %v805 = vadd.f32 %v108, %v727
  %v806 = vadd.f32 %v109, %v729
  %v807 = vadd.f32 %v110, %v733
  %v808 = vadd.f32 %v111, %v735
  %v809 = vadd.f32 %v112, %v737
  %v810 = vadd.f32 %v113, %v739
  %v811 = vadd.f32 %v114, %v743
  %v812 = vadd.f32 %v115, %v745
  %v813 = vadd.f32 %v116, %v747
  %v814 = vadd.f32 %v117, %v749
  %v815 = vld [vmem:[%s4] sm:$0x3]
  %v817 = vlaneseq
  %v818 = vshrl.u32 %v817, 7
  %v819 = vsub.s32 0, %v818
  %v820 = vrot.slane %v815, %v819
  %v821 = vlaneseq
  %v822 = vshrl.u32 %v821, 7
  %v823 = vsub.s32 1, %v822
  %v824 = vrot.slane %v815, %v823
  %v827 = vadd.f32 %v751, %v820
  %v828 = vadd.f32 %v752, %v824
  %v829 = vadd.f32 %v753, %v820
  %v830 = vadd.f32 %v754, %v824
  %v831 = vadd.f32 %v755, %v820
  %v832 = vadd.f32 %v756, %v824
  %v833 = vadd.f32 %v757, %v820
  %v834 = vadd.f32 %v758, %v824
  %v835 = vadd.f32 %v759, %v820
  %v836 = vadd.f32 %v760, %v824
  %v837 = vadd.f32 %v761, %v820
  %v838 = vadd.f32 %v762, %v824
  %v839 = vadd.f32 %v763, %v820
  %v840 = vadd.f32 %v764, %v824
  %v841 = vadd.f32 %v765, %v820
  %v842 = vadd.f32 %v766, %v824
  %v843 = vadd.f32 %v767, %v820
  %v844 = vadd.f32 %v768, %v824
  %v845 = vadd.f32 %v769, %v820
  %v846 = vadd.f32 %v770, %v824
  %v847 = vadd.f32 %v771, %v820
  %v848 = vadd.f32 %v772, %v824
  %v849 = vadd.f32 %v773, %v820
  %v850 = vadd.f32 %v774, %v824
  %v851 = vadd.f32 %v775, %v820
  %v852 = vadd.f32 %v776, %v824
  %v853 = vadd.f32 %v777, %v820
  %v854 = vadd.f32 %v778, %v824
  %v855 = vadd.f32 %v779, %v820
  %v856 = vadd.f32 %v780, %v824
  %v857 = vadd.f32 %v781, %v820
  %v858 = vadd.f32 %v782, %v824
  %v859 = vadd.f32 %v783, %v820
  %v860 = vadd.f32 %v784, %v824
  %v861 = vadd.f32 %v785, %v820
  %v862 = vadd.f32 %v786, %v824
  %v863 = vadd.f32 %v787, %v820
  %v864 = vadd.f32 %v788, %v824
  %v865 = vadd.f32 %v789, %v820
  %v866 = vadd.f32 %v790, %v824
  %v867 = vadd.f32 %v791, %v820
  %v868 = vadd.f32 %v792, %v824
  %v869 = vadd.f32 %v793, %v820
  %v870 = vadd.f32 %v794, %v824
  %v871 = vadd.f32 %v795, %v820
  %v872 = vadd.f32 %v796, %v824
  %v873 = vadd.f32 %v797, %v820
  %v874 = vadd.f32 %v798, %v824
  %v875 = vadd.f32 %v799, %v820
  %v876 = vadd.f32 %v800, %v824
  %v877 = vadd.f32 %v801, %v820
  %v878 = vadd.f32 %v802, %v824
  %v879 = vadd.f32 %v803, %v820
  %v880 = vadd.f32 %v804, %v824
  %v881 = vadd.f32 %v805, %v820
  %v882 = vadd.f32 %v806, %v824
  %v883 = vadd.f32 %v807, %v820
  %v884 = vadd.f32 %v808, %v824
  %v885 = vadd.f32 %v809, %v820
  %v886 = vadd.f32 %v810, %v824
  %v887 = vadd.f32 %v811, %v820
  %v888 = vadd.f32 %v812, %v824
  %v889 = vadd.f32 %v813, %v820
  %v890 = vadd.f32 %v814, %v824
  %v891 = vpack.c.bf16 %v829, %v827
  %v892 = vpack.c.bf16 %v830, %v828
  %v893 = vpack.c.bf16 %v833, %v831
  %v894 = vpack.c.bf16 %v834, %v832
  %v895 = vpack.c.bf16 %v837, %v835
  %v896 = vpack.c.bf16 %v838, %v836
  %v897 = vpack.c.bf16 %v841, %v839
  %v898 = vpack.c.bf16 %v842, %v840
  %v899 = vpack.c.bf16 %v845, %v843
  %v900 = vpack.c.bf16 %v846, %v844
  %v901 = vpack.c.bf16 %v849, %v847
  %v902 = vpack.c.bf16 %v850, %v848
  %v903 = vpack.c.bf16 %v853, %v851
  %v904 = vpack.c.bf16 %v854, %v852
  %v905 = vpack.c.bf16 %v857, %v855
  %v906 = vpack.c.bf16 %v858, %v856
  %v907 = vpack.c.bf16 %v861, %v859
  %v908 = vpack.c.bf16 %v862, %v860
  %v909 = vpack.c.bf16 %v865, %v863
  %v910 = vpack.c.bf16 %v866, %v864
  %v911 = vpack.c.bf16 %v869, %v867
  %v912 = vpack.c.bf16 %v870, %v868
  %v913 = vpack.c.bf16 %v873, %v871
  %v914 = vpack.c.bf16 %v874, %v872
  %v915 = vpack.c.bf16 %v877, %v875
  %v916 = vpack.c.bf16 %v878, %v876
  %v917 = vpack.c.bf16 %v881, %v879
  %v918 = vpack.c.bf16 %v882, %v880
  %v919 = vpack.c.bf16 %v885, %v883
  %v920 = vpack.c.bf16 %v886, %v884
  %v921 = vpack.c.bf16 %v889, %v887
  %v922 = vpack.c.bf16 %v890, %v888
  %v955 = vunpack.c.l.b16 %v891
  %v956 = vunpack.c.l.b16 %v892
  %v957 = vunpack.c.h.b16 %v891
  %v958 = vunpack.c.h.b16 %v892
  %v959 = vunpack.c.l.b16 %v893
  %v960 = vunpack.c.l.b16 %v894
  %v961 = vunpack.c.h.b16 %v893
  %v962 = vunpack.c.h.b16 %v894
  %v963 = vunpack.c.l.b16 %v895
  %v964 = vunpack.c.l.b16 %v896
  %v965 = vunpack.c.h.b16 %v895
  %v966 = vunpack.c.h.b16 %v896
  %v967 = vunpack.c.l.b16 %v897
  %v968 = vunpack.c.l.b16 %v898
  %v969 = vunpack.c.h.b16 %v897
  %v970 = vunpack.c.h.b16 %v898
  %v971 = vunpack.c.l.b16 %v899
  %v972 = vunpack.c.l.b16 %v900
  %v973 = vunpack.c.h.b16 %v899
  %v974 = vunpack.c.h.b16 %v900
  %v975 = vunpack.c.l.b16 %v901
  %v976 = vunpack.c.l.b16 %v902
  %v977 = vunpack.c.h.b16 %v901
  %v978 = vunpack.c.h.b16 %v902
  %v979 = vunpack.c.l.b16 %v903
  %v980 = vunpack.c.l.b16 %v904
  %v981 = vunpack.c.h.b16 %v903
  %v982 = vunpack.c.h.b16 %v904
  %v983 = vunpack.c.l.b16 %v905
  %v984 = vunpack.c.l.b16 %v906
  %v985 = vunpack.c.h.b16 %v905
  %v986 = vunpack.c.h.b16 %v906
  %v987 = vunpack.c.l.b16 %v907
  %v988 = vunpack.c.l.b16 %v908
  %v989 = vunpack.c.h.b16 %v907
  %v990 = vunpack.c.h.b16 %v908
  %v991 = vunpack.c.l.b16 %v909
  %v992 = vunpack.c.l.b16 %v910
  %v993 = vunpack.c.h.b16 %v909
  %v994 = vunpack.c.h.b16 %v910
  %v995 = vunpack.c.l.b16 %v911
  %v996 = vunpack.c.l.b16 %v912
  %v997 = vunpack.c.h.b16 %v911
  %v998 = vunpack.c.h.b16 %v912
  %v999 = vunpack.c.l.b16 %v913
  %v1000 = vunpack.c.l.b16 %v914
  %v1001 = vunpack.c.h.b16 %v913
  %v1002 = vunpack.c.h.b16 %v914
  %v1003 = vunpack.c.l.b16 %v915
  %v1004 = vunpack.c.l.b16 %v916
  %v1005 = vunpack.c.h.b16 %v915
  %v1006 = vunpack.c.h.b16 %v916
  %v1007 = vunpack.c.l.b16 %v917
  %v1008 = vunpack.c.l.b16 %v918
  %v1009 = vunpack.c.h.b16 %v917
  %v1010 = vunpack.c.h.b16 %v918
  %v1011 = vunpack.c.l.b16 %v919
  %v1012 = vunpack.c.l.b16 %v920
  %v1013 = vunpack.c.h.b16 %v919
  %v1014 = vunpack.c.h.b16 %v920
  %v1015 = vunpack.c.l.b16 %v921
  %v1016 = vunpack.c.l.b16 %v922
  %v1017 = vunpack.c.h.b16 %v921
  %v1018 = vunpack.c.h.b16 %v922
  %v1019 = vpack.c.b16 %v956, %v955
  %v1020 = vpack.c.b16 %v958, %v957
  %v1021 = vpack.c.b16 %v960, %v959
  %v1022 = vpack.c.b16 %v962, %v961
  %v1023 = vpack.c.b16 %v964, %v963
  %v1024 = vpack.c.b16 %v966, %v965
  %v1025 = vpack.c.b16 %v968, %v967
  %v1026 = vpack.c.b16 %v970, %v969
  %v1027 = vpack.c.b16 %v972, %v971
  %v1028 = vpack.c.b16 %v974, %v973
  %v1029 = vpack.c.b16 %v976, %v975
  %v1030 = vpack.c.b16 %v978, %v977
  %v1031 = vpack.c.b16 %v980, %v979
  %v1032 = vpack.c.b16 %v982, %v981
  %v1033 = vpack.c.b16 %v984, %v983
  %v1034 = vpack.c.b16 %v986, %v985
  %v1035 = vpack.c.b16 %v988, %v987
  %v1036 = vpack.c.b16 %v990, %v989
  %v1037 = vpack.c.b16 %v992, %v991
  %v1038 = vpack.c.b16 %v994, %v993
  %v1039 = vpack.c.b16 %v996, %v995
  %v1040 = vpack.c.b16 %v998, %v997
  %v1041 = vpack.c.b16 %v1000, %v999
  %v1042 = vpack.c.b16 %v1002, %v1001
  %v1043 = vpack.c.b16 %v1004, %v1003
  %v1044 = vpack.c.b16 %v1006, %v1005
  %v1045 = vpack.c.b16 %v1008, %v1007
  %v1046 = vpack.c.b16 %v1010, %v1009
  %v1047 = vpack.c.b16 %v1012, %v1011
  %v1048 = vpack.c.b16 %v1014, %v1013
  %v1049 = vpack.c.b16 %v1016, %v1015
  %v1050 = vpack.c.b16 %v1018, %v1017
  %1083 = vst [vmem:[%s5] sm:$0xff] %v1019
  %1084 = vst [vmem:[%s5 + $0x8] sm:$0xff] %v1020
  %1085 = vst [vmem:[%s5 + $0x10] sm:$0xff] %v1021
  %1086 = vst [vmem:[%s5 + $0x18] sm:$0xff] %v1022
  %1087 = vst [vmem:[%s5 + $0x20] sm:$0xff] %v1023
  %1088 = vst [vmem:[%s5 + $0x28] sm:$0xff] %v1024
  %1089 = vst [vmem:[%s5 + $0x30] sm:$0xff] %v1025
  %1090 = vst [vmem:[%s5 + $0x38] sm:$0xff] %v1026
  %1091 = vst [vmem:[%s5 + $0x40] sm:$0xff] %v1027
  %1092 = vst [vmem:[%s5 + $0x48] sm:$0xff] %v1028
  %1093 = vst [vmem:[%s5 + $0x50] sm:$0xff] %v1029
  %1094 = vst [vmem:[%s5 + $0x58] sm:$0xff] %v1030
  %1095 = vst [vmem:[%s5 + $0x60] sm:$0xff] %v1031
  %1096 = vst [vmem:[%s5 + $0x68] sm:$0xff] %v1032
  %1097 = vst [vmem:[%s5 + $0x70] sm:$0xff] %v1033
  %1098 = vst [vmem:[%s5 + $0x78] sm:$0xff] %v1034
  %1099 = vst [vmem:[%s5 + $0x80] sm:$0xff] %v1035
  %1100 = vst [vmem:[%s5 + $0x88] sm:$0xff] %v1036
  %1101 = vst [vmem:[%s5 + $0x90] sm:$0xff] %v1037
  %1102 = vst [vmem:[%s5 + $0x98] sm:$0xff] %v1038
  %1103 = vst [vmem:[%s5 + $0xa0] sm:$0xff] %v1039
  %1104 = vst [vmem:[%s5 + $0xa8] sm:$0xff] %v1040
  %1105 = vst [vmem:[%s5 + $0xb0] sm:$0xff] %v1041
  %1106 = vst [vmem:[%s5 + $0xb8] sm:$0xff] %v1042
  %1107 = vst [vmem:[%s5 + $0xc0] sm:$0xff] %v1043
  %1108 = vst [vmem:[%s5 + $0xc8] sm:$0xff] %v1044
  %1109 = vst [vmem:[%s5 + $0xd0] sm:$0xff] %v1045
  %1110 = vst [vmem:[%s5 + $0xd8] sm:$0xff] %v1046
  %1111 = vst [vmem:[%s5 + $0xe0] sm:$0xff] %v1047
  %1112 = vst [vmem:[%s5 + $0xe8] sm:$0xff] %v1048
  %1113 = vst [vmem:[%s5 + $0xf0] sm:$0xff] %v1049
  %1114 = vst [vmem:[%s5 + $0xf8] sm:$0xff] %v1050
  %v1115 = vunpack.c.l.bf16 %v891
  %v1116 = vunpack.c.l.bf16 %v892
  %v1117 = vunpack.c.h.bf16 %v891
  %v1118 = vunpack.c.h.bf16 %v892
  %v1119 = vunpack.c.l.bf16 %v893
  %v1120 = vunpack.c.l.bf16 %v894
  %v1121 = vunpack.c.h.bf16 %v893
  %v1122 = vunpack.c.h.bf16 %v894
  %v1123 = vunpack.c.l.bf16 %v895
  %v1124 = vunpack.c.l.bf16 %v896
  %v1125 = vunpack.c.h.bf16 %v895
  %v1126 = vunpack.c.h.bf16 %v896
  %v1127 = vunpack.c.l.bf16 %v897
  %v1128 = vunpack.c.l.bf16 %v898
  %v1129 = vunpack.c.h.bf16 %v897
  %v1130 = vunpack.c.h.bf16 %v898
  %v1131 = vunpack.c.l.bf16 %v899
  %v1132 = vunpack.c.l.bf16 %v900
  %v1133 = vunpack.c.h.bf16 %v899
  %v1134 = vunpack.c.h.bf16 %v900
  %v1135 = vunpack.c.l.bf16 %v901
  %v1136 = vunpack.c.l.bf16 %v902
  %v1137 = vunpack.c.h.bf16 %v901
  %v1138 = vunpack.c.h.bf16 %v902
  %v1139 = vunpack.c.l.bf16 %v903
  %v1140 = vunpack.c.l.bf16 %v904
  %v1141 = vunpack.c.h.bf16 %v903
  %v1142 = vunpack.c.h.bf16 %v904
  %v1143 = vunpack.c.l.bf16 %v905
  %v1144 = vunpack.c.l.bf16 %v906
  %v1145 = vunpack.c.h.bf16 %v905
  %v1146 = vunpack.c.h.bf16 %v906
  %v1147 = vunpack.c.l.bf16 %v907
  %v1148 = vunpack.c.l.bf16 %v908
  %v1149 = vunpack.c.h.bf16 %v907
  %v1150 = vunpack.c.h.bf16 %v908
  %v1151 = vunpack.c.l.bf16 %v909
  %v1152 = vunpack.c.l.bf16 %v910
  %v1153 = vunpack.c.h.bf16 %v909
  %v1154 = vunpack.c.h.bf16 %v910
  %v1155 = vunpack.c.l.bf16 %v911
  %v1156 = vunpack.c.l.bf16 %v912
  %v1157 = vunpack.c.h.bf16 %v911
  %v1158 = vunpack.c.h.bf16 %v912
  %v1159 = vunpack.c.l.bf16 %v913
  %v1160 = vunpack.c.l.bf16 %v914
  %v1161 = vunpack.c.h.bf16 %v913
  %v1162 = vunpack.c.h.bf16 %v914
  %v1163 = vunpack.c.l.bf16 %v915
  %v1164 = vunpack.c.l.bf16 %v916
  %v1165 = vunpack.c.h.bf16 %v915
  %v1166 = vunpack.c.h.bf16 %v916
  %v1167 = vunpack.c.l.bf16 %v917
  %v1168 = vunpack.c.l.bf16 %v918
  %v1169 = vunpack.c.h.bf16 %v917
  %v1170 = vunpack.c.h.bf16 %v918
  %v1171 = vunpack.c.l.bf16 %v919
  %v1172 = vunpack.c.l.bf16 %v920
  %v1173 = vunpack.c.h.bf16 %v919
  %v1174 = vunpack.c.h.bf16 %v920
  %v1175 = vunpack.c.l.bf16 %v921
  %v1176 = vunpack.c.l.bf16 %v922
  %v1177 = vunpack.c.h.bf16 %v921
  %v1178 = vunpack.c.h.bf16 %v922
  %v1179 = vadd.f32 %v1115, %v1116
  %1180 = vadd.xlane.f32.xlu0 %v1179
  %v1181 = vpop.xlane.xlu0 %1180
  %v1182 = vadd.f32 %v1117, %v1118
  %1183 = vadd.xlane.f32.xlu0 %v1182
  %v1184 = vpop.xlane.xlu0 %1183
  %v1185 = vadd.f32 %v1119, %v1120
  %1186 = vadd.xlane.f32.xlu0 %v1185
  %v1187 = vpop.xlane.xlu0 %1186
  %v1188 = vadd.f32 %v1121, %v1122
  %1189 = vadd.xlane.f32.xlu0 %v1188
  %v1190 = vpop.xlane.xlu0 %1189
  %v1191 = vadd.f32 %v1123, %v1124
  %1192 = vadd.xlane.f32.xlu0 %v1191
  %v1193 = vpop.xlane.xlu0 %1192
  %v1194 = vadd.f32 %v1125, %v1126
  %1195 = vadd.xlane.f32.xlu0 %v1194
  %v1196 = vpop.xlane.xlu0 %1195
  %v1197 = vadd.f32 %v1127, %v1128
  %1198 = vadd.xlane.f32.xlu0 %v1197
  %v1199 = vpop.xlane.xlu0 %1198
  %v1200 = vadd.f32 %v1129, %v1130
  %1201 = vadd.xlane.f32.xlu0 %v1200
  %v1202 = vpop.xlane.xlu0 %1201
  %v1203 = vadd.f32 %v1131, %v1132
  %1204 = vadd.xlane.f32.xlu0 %v1203
  %v1205 = vpop.xlane.xlu0 %1204
  %v1206 = vadd.f32 %v1133, %v1134
  %1207 = vadd.xlane.f32.xlu0 %v1206
  %v1208 = vpop.xlane.xlu0 %1207
  %v1209 = vadd.f32 %v1135, %v1136
  %1210 = vadd.xlane.f32.xlu0 %v1209
  %v1211 = vpop.xlane.xlu0 %1210
  %v1212 = vadd.f32 %v1137, %v1138
  %1213 = vadd.xlane.f32.xlu0 %v1212
  %v1214 = vpop.xlane.xlu0 %1213
  %v1215 = vadd.f32 %v1139, %v1140
  %1216 = vadd.xlane.f32.xlu0 %v1215
  %v1217 = vpop.xlane.xlu0 %1216
  %v1218 = vadd.f32 %v1141, %v1142
  %1219 = vadd.xlane.f32.xlu0 %v1218
  %v1220 = vpop.xlane.xlu0 %1219
  %v1221 = vadd.f32 %v1143, %v1144
  %1222 = vadd.xlane.f32.xlu0 %v1221
  %v1223 = vpop.xlane.xlu0 %1222
  %v1224 = vadd.f32 %v1145, %v1146
  %1225 = vadd.xlane.f32.xlu0 %v1224
  %v1226 = vpop.xlane.xlu0 %1225
  %v1227 = vadd.f32 %v1147, %v1148
  %1228 = vadd.xlane.f32.xlu0 %v1227
  %v1229 = vpop.xlane.xlu0 %1228
  %v1230 = vadd.f32 %v1149, %v1150
  %1231 = vadd.xlane.f32.xlu0 %v1230
  %v1232 = vpop.xlane.xlu0 %1231
  %v1233 = vadd.f32 %v1151, %v1152
  %1234 = vadd.xlane.f32.xlu0 %v1233
  %v1235 = vpop.xlane.xlu0 %1234
  %v1236 = vadd.f32 %v1153, %v1154
  %1237 = vadd.xlane.f32.xlu0 %v1236
  %v1238 = vpop.xlane.xlu0 %1237
  %v1239 = vadd.f32 %v1155, %v1156
  %1240 = vadd.xlane.f32.xlu0 %v1239
  %v1241 = vpop.xlane.xlu0 %1240
  %v1242 = vadd.f32 %v1157, %v1158
  %1243 = vadd.xlane.f32.xlu0 %v1242
  %v1244 = vpop.xlane.xlu0 %1243
  %v1245 = vadd.f32 %v1159, %v1160
  %1246 = vadd.xlane.f32.xlu0 %v1245
  %v1247 = vpop.xlane.xlu0 %1246
  %v1248 = vadd.f32 %v1161, %v1162
  %1249 = vadd.xlane.f32.xlu0 %v1248
  %v1250 = vpop.xlane.xlu0 %1249
  %v1251 = vadd.f32 %v1163, %v1164
  %1252 = vadd.xlane.f32.xlu0 %v1251
  %v1253 = vpop.xlane.xlu0 %1252
  %v1254 = vadd.f32 %v1165, %v1166
  %1255 = vadd.xlane.f32.xlu0 %v1254
  %v1256 = vpop.xlane.xlu0 %1255
  %v1257 = vadd.f32 %v1167, %v1168
  %1258 = vadd.xlane.f32.xlu0 %v1257
  %v1259 = vpop.xlane.xlu0 %1258
  %v1260 = vadd.f32 %v1169, %v1170
  %1261 = vadd.xlane.f32.xlu0 %v1260
  %v1262 = vpop.xlane.xlu0 %1261
  %v1263 = vadd.f32 %v1171, %v1172
  %1264 = vadd.xlane.f32.xlu0 %v1263
  %v1265 = vpop.xlane.xlu0 %1264
  %v1266 = vadd.f32 %v1173, %v1174
  %1267 = vadd.xlane.f32.xlu0 %v1266
  %v1268 = vpop.xlane.xlu0 %1267
  %v1269 = vadd.f32 %v1175, %v1176
  %1270 = vadd.xlane.f32.xlu0 %v1269
  %v1271 = vpop.xlane.xlu0 %1270
  %v1272 = vadd.f32 %v1177, %v1178
  %1273 = vadd.xlane.f32.xlu0 %v1272
  %v1274 = vpop.xlane.xlu0 %1273
  %v1275 = vmul.f32 %v1115, %v1115
  %v1276 = vmul.f32 %v1116, %v1116
  %v1277 = vmul.f32 %v1117, %v1117
  %v1278 = vmul.f32 %v1118, %v1118
  %v1279 = vmul.f32 %v1119, %v1119
  %v1280 = vmul.f32 %v1120, %v1120
  %v1281 = vmul.f32 %v1121, %v1121
  %v1282 = vmul.f32 %v1122, %v1122
  %v1283 = vmul.f32 %v1123, %v1123
  %v1284 = vmul.f32 %v1124, %v1124
  %v1285 = vmul.f32 %v1125, %v1125
  %v1286 = vmul.f32 %v1126, %v1126
  %v1287 = vmul.f32 %v1127, %v1127
  %v1288 = vmul.f32 %v1128, %v1128
  %v1289 = vmul.f32 %v1129, %v1129
  %v1290 = vmul.f32 %v1130, %v1130
  %v1291 = vmul.f32 %v1131, %v1131
  %v1292 = vmul.f32 %v1132, %v1132
  %v1293 = vmul.f32 %v1133, %v1133
  %v1294 = vmul.f32 %v1134, %v1134
  %v1295 = vmul.f32 %v1135, %v1135
  %v1296 = vmul.f32 %v1136, %v1136
  %v1297 = vmul.f32 %v1137, %v1137
  %v1298 = vmul.f32 %v1138, %v1138
  %v1299 = vmul.f32 %v1139, %v1139
  %v1300 = vmul.f32 %v1140, %v1140
  %v1301 = vmul.f32 %v1141, %v1141
  %v1302 = vmul.f32 %v1142, %v1142
  %v1303 = vmul.f32 %v1143, %v1143
  %v1304 = vmul.f32 %v1144, %v1144
  %v1305 = vmul.f32 %v1145, %v1145
  %v1306 = vmul.f32 %v1146, %v1146
  %v1307 = vmul.f32 %v1147, %v1147
  %v1308 = vmul.f32 %v1148, %v1148
  %v1309 = vmul.f32 %v1149, %v1149
  %v1310 = vmul.f32 %v1150, %v1150
  %v1311 = vmul.f32 %v1151, %v1151
  %v1312 = vmul.f32 %v1152, %v1152
  %v1313 = vmul.f32 %v1153, %v1153
  %v1314 = vmul.f32 %v1154, %v1154
  %v1315 = vmul.f32 %v1155, %v1155
  %v1316 = vmul.f32 %v1156, %v1156
  %v1317 = vmul.f32 %v1157, %v1157
  %v1318 = vmul.f32 %v1158, %v1158
  %v1319 = vmul.f32 %v1159, %v1159
  %v1320 = vmul.f32 %v1160, %v1160
  %v1321 = vmul.f32 %v1161, %v1161
  %v1322 = vmul.f32 %v1162, %v1162
  %v1323 = vmul.f32 %v1163, %v1163
  %v1324 = vmul.f32 %v1164, %v1164
  %v1325 = vmul.f32 %v1165, %v1165
  %v1326 = vmul.f32 %v1166, %v1166
  %v1327 = vmul.f32 %v1167, %v1167
  %v1328 = vmul.f32 %v1168, %v1168
  %v1329 = vmul.f32 %v1169, %v1169
  %v1330 = vmul.f32 %v1170, %v1170
  %v1331 = vmul.f32 %v1171, %v1171
  %v1332 = vmul.f32 %v1172, %v1172
  %v1333 = vmul.f32 %v1173, %v1173
  %v1334 = vmul.f32 %v1174, %v1174
  %v1335 = vmul.f32 %v1175, %v1175
  %v1336 = vmul.f32 %v1176, %v1176
  %v1337 = vmul.f32 %v1177, %v1177
  %v1338 = vmul.f32 %v1178, %v1178
  %v1339 = vadd.f32 %v1275, %v1276
  %1340 = vadd.xlane.f32.xlu0 %v1339
  %v1341 = vpop.xlane.xlu0 %1340
  %v1342 = vadd.f32 %v1277, %v1278
  %1343 = vadd.xlane.f32.xlu0 %v1342
  %v1344 = vpop.xlane.xlu0 %1343
  %v1345 = vadd.f32 %v1279, %v1280
  %1346 = vadd.xlane.f32.xlu0 %v1345
  %v1347 = vpop.xlane.xlu0 %1346
  %v1348 = vadd.f32 %v1281, %v1282
  %1349 = vadd.xlane.f32.xlu0 %v1348
  %v1350 = vpop.xlane.xlu0 %1349
  %v1351 = vadd.f32 %v1283, %v1284
  %1352 = vadd.xlane.f32.xlu0 %v1351
  %v1353 = vpop.xlane.xlu0 %1352
  %v1354 = vadd.f32 %v1285, %v1286
  %1355 = vadd.xlane.f32.xlu0 %v1354
  %v1356 = vpop.xlane.xlu0 %1355
  %v1357 = vadd.f32 %v1287, %v1288
  %1358 = vadd.xlane.f32.xlu0 %v1357
  %v1359 = vpop.xlane.xlu0 %1358
  %v1360 = vadd.f32 %v1289, %v1290
  %1361 = vadd.xlane.f32.xlu0 %v1360
  %v1362 = vpop.xlane.xlu0 %1361
  %v1363 = vadd.f32 %v1291, %v1292
  %1364 = vadd.xlane.f32.xlu0 %v1363
  %v1365 = vpop.xlane.xlu0 %1364
  %v1366 = vadd.f32 %v1293, %v1294
  %1367 = vadd.xlane.f32.xlu0 %v1366
  %v1368 = vpop.xlane.xlu0 %1367
  %v1369 = vadd.f32 %v1295, %v1296
  %1370 = vadd.xlane.f32.xlu0 %v1369
  %v1371 = vpop.xlane.xlu0 %1370
  %v1372 = vadd.f32 %v1297, %v1298
  %1373 = vadd.xlane.f32.xlu0 %v1372
  %v1374 = vpop.xlane.xlu0 %1373
  %v1375 = vadd.f32 %v1299, %v1300
  %1376 = vadd.xlane.f32.xlu0 %v1375
  %v1377 = vpop.xlane.xlu0 %1376
  %v1378 = vadd.f32 %v1301, %v1302
  %1379 = vadd.xlane.f32.xlu0 %v1378
  %v1380 = vpop.xlane.xlu0 %1379
  %v1381 = vadd.f32 %v1303, %v1304
  %1382 = vadd.xlane.f32.xlu0 %v1381
  %v1383 = vpop.xlane.xlu0 %1382
  %v1384 = vadd.f32 %v1305, %v1306
  %1385 = vadd.xlane.f32.xlu0 %v1384
  %v1386 = vpop.xlane.xlu0 %1385
  %v1387 = vadd.f32 %v1307, %v1308
  %1388 = vadd.xlane.f32.xlu0 %v1387
  %v1389 = vpop.xlane.xlu0 %1388
  %v1390 = vadd.f32 %v1309, %v1310
  %1391 = vadd.xlane.f32.xlu0 %v1390
  %v1392 = vpop.xlane.xlu0 %1391
  %v1393 = vadd.f32 %v1311, %v1312
  %1394 = vadd.xlane.f32.xlu0 %v1393
  %v1395 = vpop.xlane.xlu0 %1394
  %v1396 = vadd.f32 %v1313, %v1314
  %1397 = vadd.xlane.f32.xlu0 %v1396
  %v1398 = vpop.xlane.xlu0 %1397
  %v1399 = vadd.f32 %v1315, %v1316
  %1400 = vadd.xlane.f32.xlu0 %v1399
  %v1401 = vpop.xlane.xlu0 %1400
  %v1402 = vadd.f32 %v1317, %v1318
  %1403 = vadd.xlane.f32.xlu0 %v1402
  %v1404 = vpop.xlane.xlu0 %1403
  %v1405 = vadd.f32 %v1319, %v1320
  %1406 = vadd.xlane.f32.xlu0 %v1405
  %v1407 = vpop.xlane.xlu0 %1406
  %v1408 = vadd.f32 %v1321, %v1322
  %1409 = vadd.xlane.f32.xlu0 %v1408
  %v1410 = vpop.xlane.xlu0 %1409
  %v1411 = vadd.f32 %v1323, %v1324
  %1412 = vadd.xlane.f32.xlu0 %v1411
  %v1413 = vpop.xlane.xlu0 %1412
  %v1414 = vadd.f32 %v1325, %v1326
  %1415 = vadd.xlane.f32.xlu0 %v1414
  %v1416 = vpop.xlane.xlu0 %1415
  %v1417 = vadd.f32 %v1327, %v1328
  %1418 = vadd.xlane.f32.xlu0 %v1417
  %v1419 = vpop.xlane.xlu0 %1418
  %v1420 = vadd.f32 %v1329, %v1330
  %1421 = vadd.xlane.f32.xlu0 %v1420
  %v1422 = vpop.xlane.xlu0 %1421
  %v1423 = vadd.f32 %v1331, %v1332
  %1424 = vadd.xlane.f32.xlu0 %v1423
  %v1425 = vpop.xlane.xlu0 %1424
  %v1426 = vadd.f32 %v1333, %v1334
  %1427 = vadd.xlane.f32.xlu0 %v1426
  %v1428 = vpop.xlane.xlu0 %1427
  %v1429 = vadd.f32 %v1335, %v1336
  %1430 = vadd.xlane.f32.xlu0 %v1429
  %v1431 = vpop.xlane.xlu0 %1430
  %v1432 = vadd.f32 %v1337, %v1338
  %1433 = vadd.xlane.f32.xlu0 %v1432
  %v1434 = vpop.xlane.xlu0 %1433
  %v1467 = vlaneseq
  %v1468 = vand.u32 %v1467, 127
  %v1469 = vlaneseq
  %v1470 = vshrl.u32 %v1469, 7
  %v1471 = vsub.s32 %v1468, %v1470
  %v1472 = vrot.slane %v1181, %v1471
  %v1473 = vadd.s32 %v1468, 4294967288
  %v1474 = vlaneseq
  %v1475 = vshrl.u32 %v1474, 7
  %v1476 = vsub.s32 %v1473, %v1475
  %v1477 = vrot.slane %v1184, %v1476
  %vm1478 = vcmask 130112
  %v1479 = vsel %vm1478, %v1477, %v1472
  %v1480 = vadd.s32 %v1468, 4294967280
  %v1481 = vlaneseq
  %v1482 = vshrl.u32 %v1481, 7
  %v1483 = vsub.s32 %v1480, %v1482
  %v1484 = vrot.slane %v1187, %v1483
  %vm1485 = vcmask 195712
  %v1486 = vsel %vm1485, %v1484, %v1479
  %v1487 = vadd.s32 %v1468, 4294967272
  %v1488 = vlaneseq
  %v1489 = vshrl.u32 %v1488, 7
  %v1490 = vsub.s32 %v1487, %v1489
  %v1491 = vrot.slane %v1190, %v1490
  %vm1492 = vcmask 261312
  %v1493 = vsel %vm1492, %v1491, %v1486
  %v1494 = vadd.s32 %v1468, 4294967264
  %v1495 = vlaneseq
  %v1496 = vshrl.u32 %v1495, 7
  %v1497 = vsub.s32 %v1494, %v1496
  %v1498 = vrot.slane %v1193, %v1497
  %vm1499 = vcmask 326912
  %v1500 = vsel %vm1499, %v1498, %v1493
  %v1501 = vadd.s32 %v1468, 4294967256
  %v1502 = vlaneseq
  %v1503 = vshrl.u32 %v1502, 7
  %v1504 = vsub.s32 %v1501, %v1503
  %v1505 = vrot.slane %v1196, %v1504
  %vm1506 = vcmask 392512
  %v1507 = vsel %vm1506, %v1505, %v1500
  %v1508 = vadd.s32 %v1468, 4294967248
  %v1509 = vlaneseq
  %v1510 = vshrl.u32 %v1509, 7
  %v1511 = vsub.s32 %v1508, %v1510
  %v1512 = vrot.slane %v1199, %v1511
  %vm1513 = vcmask 458112
  %v1514 = vsel %vm1513, %v1512, %v1507
  %v1515 = vadd.s32 %v1468, 4294967240
  %v1516 = vlaneseq
  %v1517 = vshrl.u32 %v1516, 7
  %v1518 = vsub.s32 %v1515, %v1517
  %v1519 = vrot.slane %v1202, %v1518
  %vm1520 = vcmask 523712
  %v1521 = vsel %vm1520, %v1519, %v1514
  %v1522 = vadd.s32 %v1468, 4294967232
  %v1523 = vlaneseq
  %v1524 = vshrl.u32 %v1523, 7
  %v1525 = vsub.s32 %v1522, %v1524
  %v1526 = vrot.slane %v1205, %v1525
  %vm1527 = vcmask 589312
  %v1528 = vsel %vm1527, %v1526, %v1521
  %v1529 = vadd.s32 %v1468, 4294967224
  %v1530 = vlaneseq
  %v1531 = vshrl.u32 %v1530, 7
  %v1532 = vsub.s32 %v1529, %v1531
  %v1533 = vrot.slane %v1208, %v1532
  %vm1534 = vcmask 654912
  %v1535 = vsel %vm1534, %v1533, %v1528
  %v1536 = vadd.s32 %v1468, 4294967216
  %v1537 = vlaneseq
  %v1538 = vshrl.u32 %v1537, 7
  %v1539 = vsub.s32 %v1536, %v1538
  %v1540 = vrot.slane %v1211, %v1539
  %vm1541 = vcmask 720512
  %v1542 = vsel %vm1541, %v1540, %v1535
  %v1543 = vadd.s32 %v1468, 4294967208
  %v1544 = vlaneseq
  %v1545 = vshrl.u32 %v1544, 7
  %v1546 = vsub.s32 %v1543, %v1545
  %v1547 = vrot.slane %v1214, %v1546
  %vm1548 = vcmask 786112
  %v1549 = vsel %vm1548, %v1547, %v1542
  %v1550 = vadd.s32 %v1468, 4294967200
  %v1551 = vlaneseq
  %v1552 = vshrl.u32 %v1551, 7
  %v1553 = vsub.s32 %v1550, %v1552
  %v1554 = vrot.slane %v1217, %v1553
  %vm1555 = vcmask 851712
  %v1556 = vsel %vm1555, %v1554, %v1549
  %v1557 = vadd.s32 %v1468, 4294967192
  %v1558 = vlaneseq
  %v1559 = vshrl.u32 %v1558, 7
  %v1560 = vsub.s32 %v1557, %v1559
  %v1561 = vrot.slane %v1220, %v1560
  %vm1562 = vcmask 917312
  %v1563 = vsel %vm1562, %v1561, %v1556
  %v1564 = vadd.s32 %v1468, 4294967184
  %v1565 = vlaneseq
  %v1566 = vshrl.u32 %v1565, 7
  %v1567 = vsub.s32 %v1564, %v1566
  %v1568 = vrot.slane %v1223, %v1567
  %vm1569 = vcmask 982912
  %v1570 = vsel %vm1569, %v1568, %v1563
  %v1571 = vadd.s32 %v1468, 4294967176
  %v1572 = vlaneseq
  %v1573 = vshrl.u32 %v1572, 7
  %v1574 = vsub.s32 %v1571, %v1573
  %v1575 = vrot.slane %v1226, %v1574
  %vm1576 = vcmask 1048512
  %v1577 = vsel %vm1576, %v1575, %v1570
  %v1578 = vlaneseq
  %v1579 = vshrl.u32 %v1578, 7
  %v1580 = vsub.s32 %v1468, %v1579
  %v1581 = vrot.slane %v1229, %v1580
  %v1582 = vlaneseq
  %v1583 = vshrl.u32 %v1582, 7
  %v1584 = vsub.s32 %v1473, %v1583
  %v1585 = vrot.slane %v1232, %v1584
  %v1586 = vsel %vm1478, %v1585, %v1581
  %v1587 = vlaneseq
  %v1588 = vshrl.u32 %v1587, 7
  %v1589 = vsub.s32 %v1480, %v1588
  %v1590 = vrot.slane %v1235, %v1589
  %v1591 = vsel %vm1485, %v1590, %v1586
  %v1592 = vlaneseq
  %v1593 = vshrl.u32 %v1592, 7
  %v1594 = vsub.s32 %v1487, %v1593
  %v1595 = vrot.slane %v1238, %v1594
  %v1596 = vsel %vm1492, %v1595, %v1591
  %v1597 = vlaneseq
  %v1598 = vshrl.u32 %v1597, 7
  %v1599 = vsub.s32 %v1494, %v1598
  %v1600 = vrot.slane %v1241, %v1599
  %v1601 = vsel %vm1499, %v1600, %v1596
  %v1602 = vlaneseq
  %v1603 = vshrl.u32 %v1602, 7
  %v1604 = vsub.s32 %v1501, %v1603
  %v1605 = vrot.slane %v1244, %v1604
  %v1606 = vsel %vm1506, %v1605, %v1601
  %v1607 = vlaneseq
  %v1608 = vshrl.u32 %v1607, 7
  %v1609 = vsub.s32 %v1508, %v1608
  %v1610 = vrot.slane %v1247, %v1609
  %v1611 = vsel %vm1513, %v1610, %v1606
  %v1612 = vlaneseq
  %v1613 = vshrl.u32 %v1612, 7
  %v1614 = vsub.s32 %v1515, %v1613
  %v1615 = vrot.slane %v1250, %v1614
  %v1616 = vsel %vm1520, %v1615, %v1611
  %v1617 = vlaneseq
  %v1618 = vshrl.u32 %v1617, 7
  %v1619 = vsub.s32 %v1522, %v1618
  %v1620 = vrot.slane %v1253, %v1619
  %v1621 = vsel %vm1527, %v1620, %v1616
  %v1622 = vlaneseq
  %v1623 = vshrl.u32 %v1622, 7
  %v1624 = vsub.s32 %v1529, %v1623
  %v1625 = vrot.slane %v1256, %v1624
  %v1626 = vsel %vm1534, %v1625, %v1621
  %v1627 = vlaneseq
  %v1628 = vshrl.u32 %v1627, 7
  %v1629 = vsub.s32 %v1536, %v1628
  %v1630 = vrot.slane %v1259, %v1629
  %v1631 = vsel %vm1541, %v1630, %v1626
  %v1632 = vlaneseq
  %v1633 = vshrl.u32 %v1632, 7
  %v1634 = vsub.s32 %v1543, %v1633
  %v1635 = vrot.slane %v1262, %v1634
  %v1636 = vsel %vm1548, %v1635, %v1631
  %v1637 = vlaneseq
  %v1638 = vshrl.u32 %v1637, 7
  %v1639 = vsub.s32 %v1550, %v1638
  %v1640 = vrot.slane %v1265, %v1639
  %v1641 = vsel %vm1555, %v1640, %v1636
  %v1642 = vlaneseq
  %v1643 = vshrl.u32 %v1642, 7
  %v1644 = vsub.s32 %v1557, %v1643
  %v1645 = vrot.slane %v1268, %v1644
  %v1646 = vsel %vm1562, %v1645, %v1641
  %v1647 = vlaneseq
  %v1648 = vshrl.u32 %v1647, 7
  %v1649 = vsub.s32 %v1564, %v1648
  %v1650 = vrot.slane %v1271, %v1649
  %v1651 = vsel %vm1569, %v1650, %v1646
  %v1652 = vlaneseq
  %v1653 = vshrl.u32 %v1652, 7
  %v1654 = vsub.s32 %v1571, %v1653
  %v1655 = vrot.slane %v1274, %v1654
  %v1656 = vsel %vm1576, %v1655, %v1651
  %v1691 = vlaneseq
  %v1692 = vshrl.u32 %v1691, 7
  %v1693 = vsub.s32 %v1468, %v1692
  %v1694 = vrot.slane %v1341, %v1693
  %v1695 = vlaneseq
  %v1696 = vshrl.u32 %v1695, 7
  %v1697 = vsub.s32 %v1473, %v1696
  %v1698 = vrot.slane %v1344, %v1697
  %v1699 = vsel %vm1478, %v1698, %v1694
  %v1700 = vlaneseq
  %v1701 = vshrl.u32 %v1700, 7
  %v1702 = vsub.s32 %v1480, %v1701
  %v1703 = vrot.slane %v1347, %v1702
  %v1704 = vsel %vm1485, %v1703, %v1699
  %v1705 = vlaneseq
  %v1706 = vshrl.u32 %v1705, 7
  %v1707 = vsub.s32 %v1487, %v1706
  %v1708 = vrot.slane %v1350, %v1707
  %v1709 = vsel %vm1492, %v1708, %v1704
  %v1710 = vlaneseq
  %v1711 = vshrl.u32 %v1710, 7
  %v1712 = vsub.s32 %v1494, %v1711
  %v1713 = vrot.slane %v1353, %v1712
  %v1714 = vsel %vm1499, %v1713, %v1709
  %v1715 = vlaneseq
  %v1716 = vshrl.u32 %v1715, 7
  %v1717 = vsub.s32 %v1501, %v1716
  %v1718 = vrot.slane %v1356, %v1717
  %v1719 = vsel %vm1506, %v1718, %v1714
  %v1720 = vlaneseq
  %v1721 = vshrl.u32 %v1720, 7
  %v1722 = vsub.s32 %v1508, %v1721
  %v1723 = vrot.slane %v1359, %v1722
  %v1724 = vsel %vm1513, %v1723, %v1719
  %v1725 = vlaneseq
  %v1726 = vshrl.u32 %v1725, 7
  %v1727 = vsub.s32 %v1515, %v1726
  %v1728 = vrot.slane %v1362, %v1727
  %v1729 = vsel %vm1520, %v1728, %v1724
  %v1730 = vlaneseq
  %v1731 = vshrl.u32 %v1730, 7
  %v1732 = vsub.s32 %v1522, %v1731
  %v1733 = vrot.slane %v1365, %v1732
  %v1734 = vsel %vm1527, %v1733, %v1729
  %v1735 = vlaneseq
  %v1736 = vshrl.u32 %v1735, 7
  %v1737 = vsub.s32 %v1529, %v1736
  %v1738 = vrot.slane %v1368, %v1737
  %v1739 = vsel %vm1534, %v1738, %v1734
  %v1740 = vlaneseq
  %v1741 = vshrl.u32 %v1740, 7
  %v1742 = vsub.s32 %v1536, %v1741
  %v1743 = vrot.slane %v1371, %v1742
  %v1744 = vsel %vm1541, %v1743, %v1739
  %v1745 = vlaneseq
  %v1746 = vshrl.u32 %v1745, 7
  %v1747 = vsub.s32 %v1543, %v1746
  %v1748 = vrot.slane %v1374, %v1747
  %v1749 = vsel %vm1548, %v1748, %v1744
  %v1750 = vlaneseq
  %v1751 = vshrl.u32 %v1750, 7
  %v1752 = vsub.s32 %v1550, %v1751
  %v1753 = vrot.slane %v1377, %v1752
  %v1754 = vsel %vm1555, %v1753, %v1749
  %v1755 = vlaneseq
  %v1756 = vshrl.u32 %v1755, 7
  %v1757 = vsub.s32 %v1557, %v1756
  %v1758 = vrot.slane %v1380, %v1757
  %v1759 = vsel %vm1562, %v1758, %v1754
  %v1760 = vlaneseq
  %v1761 = vshrl.u32 %v1760, 7
  %v1762 = vsub.s32 %v1564, %v1761
  %v1763 = vrot.slane %v1383, %v1762
  %v1764 = vsel %vm1569, %v1763, %v1759
  %v1765 = vlaneseq
  %v1766 = vshrl.u32 %v1765, 7
  %v1767 = vsub.s32 %v1571, %v1766
  %v1768 = vrot.slane %v1386, %v1767
  %v1769 = vsel %vm1576, %v1768, %v1764
  %v1770 = vlaneseq
  %v1771 = vshrl.u32 %v1770, 7
  %v1772 = vsub.s32 %v1468, %v1771
  %v1773 = vrot.slane %v1389, %v1772
  %v1774 = vlaneseq
  %v1775 = vshrl.u32 %v1774, 7
  %v1776 = vsub.s32 %v1473, %v1775
  %v1777 = vrot.slane %v1392, %v1776
  %v1778 = vsel %vm1478, %v1777, %v1773
  %v1779 = vlaneseq
  %v1780 = vshrl.u32 %v1779, 7
  %v1781 = vsub.s32 %v1480, %v1780
  %v1782 = vrot.slane %v1395, %v1781
  %v1783 = vsel %vm1485, %v1782, %v1778
  %v1784 = vlaneseq
  %v1785 = vshrl.u32 %v1784, 7
  %v1786 = vsub.s32 %v1487, %v1785
  %v1787 = vrot.slane %v1398, %v1786
  %v1788 = vsel %vm1492, %v1787, %v1783
  %v1789 = vlaneseq
  %v1790 = vshrl.u32 %v1789, 7
  %v1791 = vsub.s32 %v1494, %v1790
  %v1792 = vrot.slane %v1401, %v1791
  %v1793 = vsel %vm1499, %v1792, %v1788
  %v1794 = vlaneseq
  %v1795 = vshrl.u32 %v1794, 7
  %v1796 = vsub.s32 %v1501, %v1795
  %v1797 = vrot.slane %v1404, %v1796
  %v1798 = vsel %vm1506, %v1797, %v1793
  %v1799 = vlaneseq
  %v1800 = vshrl.u32 %v1799, 7
  %v1801 = vsub.s32 %v1508, %v1800
  %v1802 = vrot.slane %v1407, %v1801
  %v1803 = vsel %vm1513, %v1802, %v1798
  %v1804 = vlaneseq
  %v1805 = vshrl.u32 %v1804, 7
  %v1806 = vsub.s32 %v1515, %v1805
  %v1807 = vrot.slane %v1410, %v1806
  %v1808 = vsel %vm1520, %v1807, %v1803
  %v1809 = vlaneseq
  %v1810 = vshrl.u32 %v1809, 7
  %v1811 = vsub.s32 %v1522, %v1810
  %v1812 = vrot.slane %v1413, %v1811
  %v1813 = vsel %vm1527, %v1812, %v1808
  %v1814 = vlaneseq
  %v1815 = vshrl.u32 %v1814, 7
  %v1816 = vsub.s32 %v1529, %v1815
  %v1817 = vrot.slane %v1416, %v1816
  %v1818 = vsel %vm1534, %v1817, %v1813
  %v1819 = vlaneseq
  %v1820 = vshrl.u32 %v1819, 7
  %v1821 = vsub.s32 %v1536, %v1820
  %v1822 = vrot.slane %v1419, %v1821
  %v1823 = vsel %vm1541, %v1822, %v1818
  %v1824 = vlaneseq
  %v1825 = vshrl.u32 %v1824, 7
  %v1826 = vsub.s32 %v1543, %v1825
  %v1827 = vrot.slane %v1422, %v1826
  %v1828 = vsel %vm1548, %v1827, %v1823
  %v1829 = vlaneseq
  %v1830 = vshrl.u32 %v1829, 7
  %v1831 = vsub.s32 %v1550, %v1830
  %v1832 = vrot.slane %v1425, %v1831
  %v1833 = vsel %vm1555, %v1832, %v1828
  %v1834 = vlaneseq
  %v1835 = vshrl.u32 %v1834, 7
  %v1836 = vsub.s32 %v1557, %v1835
  %v1837 = vrot.slane %v1428, %v1836
  %v1838 = vsel %vm1562, %v1837, %v1833
  %v1839 = vlaneseq
  %v1840 = vshrl.u32 %v1839, 7
  %v1841 = vsub.s32 %v1564, %v1840
  %v1842 = vrot.slane %v1431, %v1841
  %v1843 = vsel %vm1569, %v1842, %v1838
  %v1844 = vlaneseq
  %v1845 = vshrl.u32 %v1844, 7
  %v1846 = vsub.s32 %v1571, %v1845
  %v1847 = vrot.slane %v1434, %v1846
  %v1848 = vsel %vm1576, %v1847, %v1843
  %vm1851 = vcmask 1040384
  %v1852 = vsel %vm1851, %v1577, %v1769
  %v1853 = vsel %vm1851, %v1656, %v1848
  %1854 = vst [vmem:[%s6] sm:$0x3] %v1852
  %1855 = vst [vmem:[%s6 + $0x2] sm:$0x3] %v1853
  // Predicated region
  $region22: #{oafilter.6} parent=0 // pred_check
    _
  $region23: #{oafilter.6} parent=0 // pred_check_branch
    %1857 = sbr.rel (0) target = $region25
  $region24: #{oafilter.6} parent=0 // pred_region
    _
  $region25: #{oafilter.6} parent=0 // pred_fallthru
    _
  // Predicated region
  $region26: #{oafilter.6} parent=0 // pred_check
    _
  $region27: #{oafilter.6} parent=0 // pred_check_branch
    %1859 = sbr.rel (0) target = $region29
  $region28: #{oafilter.6} parent=0 // pred_region
    _
  $region29: #{oafilter.6} parent=0 // pred_fallthru
    _
  // Predicated region
  $region30: #{oafilter.6} parent=0 // pred_check
    _
  $region31: #{oafilter.6} parent=0 // pred_check_branch
    %1861 = sbr.rel (0) target = $region33
  $region32: #{oafilter.6} parent=0 // pred_region
    _
  $region33: #{oafilter.6} parent=0 // pred_fallthru
    _
  // Predicated region
  $region34: #{oafilter.6} parent=0 // pred_check
    _
  $region35: #{oafilter.6} parent=0 // pred_check_branch
    %1863 = sbr.rel (0) target = $region37
  $region36: #{oafilter.6} parent=0 // pred_region
    _
  $region37: #{oafilter.6} parent=0 // pred_fallthru
    _

// kernel: oafilter.5
$region0: #{oafilter.5}
  #allocation0 [shape = 'u32[]', space=smem, size = 0x4, offset = 0x4, fixed_abs, tag = 'smem constant byte address 0x4 - core index']
  #allocation1 [shape = 'u32[144,128]{1,0:T(1,128)}', space=vmem, size = 0x12000, scoped, tag = 'internal scratch']
  %s0 = inlined_call_operand.vmem [shape: f32[2,128,256], index: 0, kind: input, shape index: {}]
  %s1 = inlined_call_operand.vmem [shape: f32[2,128,1], index: 1, kind: input, shape index: {}]
  %s2 = inlined_call_operand.vmem [shape: f32[2,128,1], index: 2, kind: input, shape index: {}]
  %s3 = inlined_call_operand.vmem [shape: bf16[128,128], index: 3, kind: input, shape index: {}]
  %s4 = inlined_call_operand.vmem [shape: f32[128,1], index: 4, kind: input, shape index: {}]
  %s5 = inlined_call_operand.vmem [shape: bf16[2,128,256], index: 5, kind: output, shape index: {0}]
  %s6 = inlined_call_operand.vmem [shape: f32[2,2,256], index: 6, kind: output, shape index: {1}]
  %7 = xla_tuple %s5, %s6
  %s8 = sld [smem:[#allocation0]]
  $region38: #{oafilter.5} parent=0
    _
  %s10 = ssub.s32 1, %s8
  %s11 = scalar_select 0, %s10, %s8
  // Predicated region
  $region2: #{oafilter.5} parent=0 // pred_check
    _
  $region3: #{oafilter.5} parent=0 // pred_check_branch
    %13 = sbr.rel (0) target = $region5
  $region4: #{oafilter.5} parent=0 // pred_region
    _
  $region5: #{oafilter.5} parent=0 // pred_fallthru
    _
  // Predicated region
  $region6: #{oafilter.5} parent=0 // pred_check
    _
  $region7: #{oafilter.5} parent=0 // pred_check_branch
    %15 = sbr.rel (0) target = $region9
  $region8: #{oafilter.5} parent=0 // pred_region
    _
  $region9: #{oafilter.5} parent=0 // pred_fallthru
    _
  // Predicated region
  $region10: #{oafilter.5} parent=0 // pred_check
    _
  $region11: #{oafilter.5} parent=0 // pred_check_branch
    %17 = sbr.rel (0) target = $region13
  $region12: #{oafilter.5} parent=0 // pred_region
    _
  $region13: #{oafilter.5} parent=0 // pred_fallthru
    _
  // Predicated region
  $region14: #{oafilter.5} parent=0 // pred_check
    _
  $region15: #{oafilter.5} parent=0 // pred_check_branch
    %19 = sbr.rel (0) target = $region17
  $region16: #{oafilter.5} parent=0 // pred_region
    _
  $region17: #{oafilter.5} parent=0 // pred_fallthru
    _
  // Predicated region
  $region18: #{oafilter.5} parent=0 // pred_check
    _
  $region19: #{oafilter.5} parent=0 // pred_check_branch
    %21 = sbr.rel (0) target = $region21
  $region20: #{oafilter.5} parent=0 // pred_region
    _
  $region21: #{oafilter.5} parent=0 // pred_fallthru
    _
  %v23 = vld [vmem:[%s3] sm:$0xf]
  %v24 = vld [vmem:[%s3 + $0x4] sm:$0xf]
  %v25 = vld [vmem:[%s3 + $0x8] sm:$0xf]
  %v26 = vld [vmem:[%s3 + $0xc] sm:$0xf]
  %v27 = vld [vmem:[%s3 + $0x10] sm:$0xf]
  %v28 = vld [vmem:[%s3 + $0x14] sm:$0xf]
  %v29 = vld [vmem:[%s3 + $0x18] sm:$0xf]
  %v30 = vld [vmem:[%s3 + $0x1c] sm:$0xf]
  %v31 = vld [vmem:[%s3 + $0x20] sm:$0xf]
  %v32 = vld [vmem:[%s3 + $0x24] sm:$0xf]
  %v33 = vld [vmem:[%s3 + $0x28] sm:$0xf]
  %v34 = vld [vmem:[%s3 + $0x2c] sm:$0xf]
  %v35 = vld [vmem:[%s3 + $0x30] sm:$0xf]
  %v36 = vld [vmem:[%s3 + $0x34] sm:$0xf]
  %v37 = vld [vmem:[%s3 + $0x38] sm:$0xf]
  %v38 = vld [vmem:[%s3 + $0x3c] sm:$0xf]
  %v39 = vld [vmem:[%s4] sm:$0xff]
  %v40 = vld [vmem:[%s4 + $0x8] sm:$0xff]
  %v41 = vld [vmem:[%s4 + $0x10] sm:$0xff]
  %v42 = vld [vmem:[%s4 + $0x18] sm:$0xff]
  %v43 = vld [vmem:[%s4 + $0x20] sm:$0xff]
  %v44 = vld [vmem:[%s4 + $0x28] sm:$0xff]
  %v45 = vld [vmem:[%s4 + $0x30] sm:$0xff]
  %v46 = vld [vmem:[%s4 + $0x38] sm:$0xff]
  %v47 = vld [vmem:[%s4 + $0x40] sm:$0xff]
  %v48 = vld [vmem:[%s4 + $0x48] sm:$0xff]
  %v49 = vld [vmem:[%s4 + $0x50] sm:$0xff]
  %v50 = vld [vmem:[%s4 + $0x58] sm:$0xff]
  %v51 = vld [vmem:[%s4 + $0x60] sm:$0xff]
  %v52 = vld [vmem:[%s4 + $0x68] sm:$0xff]
  %v53 = vld [vmem:[%s4 + $0x70] sm:$0xff]
  %v54 = vld [vmem:[%s4 + $0x78] sm:$0xff]
  %v55 = vld [vmem:[%s0] sm:$0xff]
  %v56 = vld [vmem:[%s0 + $0x8] sm:$0xff]
  %v57 = vld [vmem:[%s0 + $0x10] sm:$0xff]
  %v58 = vld [vmem:[%s0 + $0x18] sm:$0xff]
  %v59 = vld [vmem:[%s0 + $0x20] sm:$0xff]
  %v60 = vld [vmem:[%s0 + $0x28] sm:$0xff]
  %v61 = vld [vmem:[%s0 + $0x30] sm:$0xff]
  %v62 = vld [vmem:[%s0 + $0x38] sm:$0xff]
  %v63 = vld [vmem:[%s0 + $0x40] sm:$0xff]
  %v64 = vld [vmem:[%s0 + $0x48] sm:$0xff]
  %v65 = vld [vmem:[%s0 + $0x50] sm:$0xff]
  %v66 = vld [vmem:[%s0 + $0x58] sm:$0xff]
  %v67 = vld [vmem:[%s0 + $0x60] sm:$0xff]
  %v68 = vld [vmem:[%s0 + $0x68] sm:$0xff]
  %v69 = vld [vmem:[%s0 + $0x70] sm:$0xff]
  %v70 = vld [vmem:[%s0 + $0x78] sm:$0xff]
  %v71 = vld [vmem:[%s0 + $0x80] sm:$0xff]
  %v72 = vld [vmem:[%s0 + $0x88] sm:$0xff]
  %v73 = vld [vmem:[%s0 + $0x90] sm:$0xff]
  %v74 = vld [vmem:[%s0 + $0x98] sm:$0xff]
  %v75 = vld [vmem:[%s0 + $0xa0] sm:$0xff]
  %v76 = vld [vmem:[%s0 + $0xa8] sm:$0xff]
  %v77 = vld [vmem:[%s0 + $0xb0] sm:$0xff]
  %v78 = vld [vmem:[%s0 + $0xb8] sm:$0xff]
  %v79 = vld [vmem:[%s0 + $0xc0] sm:$0xff]
  %v80 = vld [vmem:[%s0 + $0xc8] sm:$0xff]
  %v81 = vld [vmem:[%s0 + $0xd0] sm:$0xff]
  %v82 = vld [vmem:[%s0 + $0xd8] sm:$0xff]
  %v83 = vld [vmem:[%s0 + $0xe0] sm:$0xff]
  %v84 = vld [vmem:[%s0 + $0xe8] sm:$0xff]
  %v85 = vld [vmem:[%s0 + $0xf0] sm:$0xff]
  %v86 = vld [vmem:[%s0 + $0xf8] sm:$0xff]
  %v87 = vld [vmem:[%s1] sm:$0xff]
  %v88 = vld [vmem:[%s1 + $0x8] sm:$0xff]
  %v89 = vld [vmem:[%s1 + $0x10] sm:$0xff]
  %v90 = vld [vmem:[%s1 + $0x18] sm:$0xff]
  %v91 = vld [vmem:[%s1 + $0x20] sm:$0xff]
  %v92 = vld [vmem:[%s1 + $0x28] sm:$0xff]
  %v93 = vld [vmem:[%s1 + $0x30] sm:$0xff]
  %v94 = vld [vmem:[%s1 + $0x38] sm:$0xff]
  %v95 = vld [vmem:[%s1 + $0x40] sm:$0xff]
  %v96 = vld [vmem:[%s1 + $0x48] sm:$0xff]
  %v97 = vld [vmem:[%s1 + $0x50] sm:$0xff]
  %v98 = vld [vmem:[%s1 + $0x58] sm:$0xff]
  %v99 = vld [vmem:[%s1 + $0x60] sm:$0xff]
  %v100 = vld [vmem:[%s1 + $0x68] sm:$0xff]
  %v101 = vld [vmem:[%s1 + $0x70] sm:$0xff]
  %v102 = vld [vmem:[%s1 + $0x78] sm:$0xff]
  %104 = vset.pattern.permute.xlu0 0
  %105 = vperm.xlu0 %104, %v87
  %v106 = vpop.permute.xlu0 %105
  %109 = vset.pattern.permute.xlu0 0
  %110 = vperm.xlu0 %109, %v88
  %v111 = vpop.permute.xlu0 %110
  %114 = vset.pattern.permute.xlu0 0
  %115 = vperm.xlu0 %114, %v89
  %v116 = vpop.permute.xlu0 %115
  %119 = vset.pattern.permute.xlu0 0
  %120 = vperm.xlu0 %119, %v90
  %v121 = vpop.permute.xlu0 %120
  %124 = vset.pattern.permute.xlu0 0
  %125 = vperm.xlu0 %124, %v91
  %v126 = vpop.permute.xlu0 %125
  %129 = vset.pattern.permute.xlu0 0
  %130 = vperm.xlu0 %129, %v92
  %v131 = vpop.permute.xlu0 %130
  %134 = vset.pattern.permute.xlu0 0
  %135 = vperm.xlu0 %134, %v93
  %v136 = vpop.permute.xlu0 %135
  %139 = vset.pattern.permute.xlu0 0
  %140 = vperm.xlu0 %139, %v94
  %v141 = vpop.permute.xlu0 %140
  %144 = vset.pattern.permute.xlu0 0
  %145 = vperm.xlu0 %144, %v95
  %v146 = vpop.permute.xlu0 %145
  %149 = vset.pattern.permute.xlu0 0
  %150 = vperm.xlu0 %149, %v96
  %v151 = vpop.permute.xlu0 %150
  %154 = vset.pattern.permute.xlu0 0
  %155 = vperm.xlu0 %154, %v97
  %v156 = vpop.permute.xlu0 %155
  %159 = vset.pattern.permute.xlu0 0
  %160 = vperm.xlu0 %159, %v98
  %v161 = vpop.permute.xlu0 %160
  %164 = vset.pattern.permute.xlu0 0
  %165 = vperm.xlu0 %164, %v99
  %v166 = vpop.permute.xlu0 %165
  %169 = vset.pattern.permute.xlu0 0
  %170 = vperm.xlu0 %169, %v100
  %v171 = vpop.permute.xlu0 %170
  %174 = vset.pattern.permute.xlu0 0
  %175 = vperm.xlu0 %174, %v101
  %v176 = vpop.permute.xlu0 %175
  %179 = vset.pattern.permute.xlu0 0
  %180 = vperm.xlu0 %179, %v102
  %v181 = vpop.permute.xlu0 %180
  %v183 = vmul.f32 %v55, %v106
  %v184 = vmul.f32 %v56, %v106
  %v185 = vmul.f32 %v57, %v111
  %v186 = vmul.f32 %v58, %v111
  %v187 = vmul.f32 %v59, %v116
  %v188 = vmul.f32 %v60, %v116
  %v189 = vmul.f32 %v61, %v121
  %v190 = vmul.f32 %v62, %v121
  %v191 = vmul.f32 %v63, %v126
  %v192 = vmul.f32 %v64, %v126
  %v193 = vmul.f32 %v65, %v131
  %v194 = vmul.f32 %v66, %v131
  %v195 = vmul.f32 %v67, %v136
  %v196 = vmul.f32 %v68, %v136
  %v197 = vmul.f32 %v69, %v141
  %v198 = vmul.f32 %v70, %v141
  %v199 = vmul.f32 %v71, %v146
  %v200 = vmul.f32 %v72, %v146
  %v201 = vmul.f32 %v73, %v151
  %v202 = vmul.f32 %v74, %v151
  %v203 = vmul.f32 %v75, %v156
  %v204 = vmul.f32 %v76, %v156
  %v205 = vmul.f32 %v77, %v161
  %v206 = vmul.f32 %v78, %v161
  %v207 = vmul.f32 %v79, %v166
  %v208 = vmul.f32 %v80, %v166
  %v209 = vmul.f32 %v81, %v171
  %v210 = vmul.f32 %v82, %v171
  %v211 = vmul.f32 %v83, %v176
  %v212 = vmul.f32 %v84, %v176
  %v213 = vmul.f32 %v85, %v181
  %v214 = vmul.f32 %v86, %v181
  %v215 = vld [vmem:[%s2] sm:$0xff]
  %v216 = vld [vmem:[%s2 + $0x8] sm:$0xff]
  %v217 = vld [vmem:[%s2 + $0x10] sm:$0xff]
  %v218 = vld [vmem:[%s2 + $0x18] sm:$0xff]
  %v219 = vld [vmem:[%s2 + $0x20] sm:$0xff]
  %v220 = vld [vmem:[%s2 + $0x28] sm:$0xff]
  %v221 = vld [vmem:[%s2 + $0x30] sm:$0xff]
  %v222 = vld [vmem:[%s2 + $0x38] sm:$0xff]
  %v223 = vld [vmem:[%s2 + $0x40] sm:$0xff]
  %v224 = vld [vmem:[%s2 + $0x48] sm:$0xff]
  %v225 = vld [vmem:[%s2 + $0x50] sm:$0xff]
  %v226 = vld [vmem:[%s2 + $0x58] sm:$0xff]
  %v227 = vld [vmem:[%s2 + $0x60] sm:$0xff]
  %v228 = vld [vmem:[%s2 + $0x68] sm:$0xff]
  %v229 = vld [vmem:[%s2 + $0x70] sm:$0xff]
  %v230 = vld [vmem:[%s2 + $0x78] sm:$0xff]
  %232 = vset.pattern.permute.xlu0 0
  %233 = vperm.xlu0 %232, %v215
  %v234 = vpop.permute.xlu0 %233
  %237 = vset.pattern.permute.xlu0 0
  %238 = vperm.xlu0 %237, %v216
  %v239 = vpop.permute.xlu0 %238
  %242 = vset.pattern.permute.xlu0 0
  %243 = vperm.xlu0 %242, %v217
  %v244 = vpop.permute.xlu0 %243
  %247 = vset.pattern.permute.xlu0 0
  %248 = vperm.xlu0 %247, %v218
  %v249 = vpop.permute.xlu0 %248
  %252 = vset.pattern.permute.xlu0 0
  %253 = vperm.xlu0 %252, %v219
  %v254 = vpop.permute.xlu0 %253
  %257 = vset.pattern.permute.xlu0 0
  %258 = vperm.xlu0 %257, %v220
  %v259 = vpop.permute.xlu0 %258
  %262 = vset.pattern.permute.xlu0 0
  %263 = vperm.xlu0 %262, %v221
  %v264 = vpop.permute.xlu0 %263
  %267 = vset.pattern.permute.xlu0 0
  %268 = vperm.xlu0 %267, %v222
  %v269 = vpop.permute.xlu0 %268
  %272 = vset.pattern.permute.xlu0 0
  %273 = vperm.xlu0 %272, %v223
  %v274 = vpop.permute.xlu0 %273
  %277 = vset.pattern.permute.xlu0 0
  %278 = vperm.xlu0 %277, %v224
  %v279 = vpop.permute.xlu0 %278
  %282 = vset.pattern.permute.xlu0 0
  %283 = vperm.xlu0 %282, %v225
  %v284 = vpop.permute.xlu0 %283
  %287 = vset.pattern.permute.xlu0 0
  %288 = vperm.xlu0 %287, %v226
  %v289 = vpop.permute.xlu0 %288
  %292 = vset.pattern.permute.xlu0 0
  %293 = vperm.xlu0 %292, %v227
  %v294 = vpop.permute.xlu0 %293
  %297 = vset.pattern.permute.xlu0 0
  %298 = vperm.xlu0 %297, %v228
  %v299 = vpop.permute.xlu0 %298
  %302 = vset.pattern.permute.xlu0 0
  %303 = vperm.xlu0 %302, %v229
  %v304 = vpop.permute.xlu0 %303
  %307 = vset.pattern.permute.xlu0 0
  %308 = vperm.xlu0 %307, %v230
  %v309 = vpop.permute.xlu0 %308
  %v311 = vadd.f32 %v183, %v234
  %v312 = vadd.f32 %v184, %v234
  %v313 = vadd.f32 %v185, %v239
  %v314 = vadd.f32 %v186, %v239
  %v315 = vadd.f32 %v187, %v244
  %v316 = vadd.f32 %v188, %v244
  %v317 = vadd.f32 %v189, %v249
  %v318 = vadd.f32 %v190, %v249
  %v319 = vadd.f32 %v191, %v254
  %v320 = vadd.f32 %v192, %v254
  %v321 = vadd.f32 %v193, %v259
  %v322 = vadd.f32 %v194, %v259
  %v323 = vadd.f32 %v195, %v264
  %v324 = vadd.f32 %v196, %v264
  %v325 = vadd.f32 %v197, %v269
  %v326 = vadd.f32 %v198, %v269
  %v327 = vadd.f32 %v199, %v274
  %v328 = vadd.f32 %v200, %v274
  %v329 = vadd.f32 %v201, %v279
  %v330 = vadd.f32 %v202, %v279
  %v331 = vadd.f32 %v203, %v284
  %v332 = vadd.f32 %v204, %v284
  %v333 = vadd.f32 %v205, %v289
  %v334 = vadd.f32 %v206, %v289
  %v335 = vadd.f32 %v207, %v294
  %v336 = vadd.f32 %v208, %v294
  %v337 = vadd.f32 %v209, %v299
  %v338 = vadd.f32 %v210, %v299
  %v339 = vadd.f32 %v211, %v304
  %v340 = vadd.f32 %v212, %v304
  %v341 = vadd.f32 %v213, %v309
  %v342 = vadd.f32 %v214, %v309
  %v343 = vmax.f32 %v311, 0.0
  %v344 = vmax.f32 %v312, 0.0
  %v345 = vmax.f32 %v313, 0.0
  %v346 = vmax.f32 %v314, 0.0
  %v347 = vmax.f32 %v315, 0.0
  %v348 = vmax.f32 %v316, 0.0
  %v349 = vmax.f32 %v317, 0.0
  %v350 = vmax.f32 %v318, 0.0
  %v351 = vmax.f32 %v319, 0.0
  %v352 = vmax.f32 %v320, 0.0
  %v353 = vmax.f32 %v321, 0.0
  %v354 = vmax.f32 %v322, 0.0
  %v355 = vmax.f32 %v323, 0.0
  %v356 = vmax.f32 %v324, 0.0
  %v357 = vmax.f32 %v325, 0.0
  %v358 = vmax.f32 %v326, 0.0
  %v359 = vmax.f32 %v327, 0.0
  %v360 = vmax.f32 %v328, 0.0
  %v361 = vmax.f32 %v329, 0.0
  %v362 = vmax.f32 %v330, 0.0
  %v363 = vmax.f32 %v331, 0.0
  %v364 = vmax.f32 %v332, 0.0
  %v365 = vmax.f32 %v333, 0.0
  %v366 = vmax.f32 %v334, 0.0
  %v367 = vmax.f32 %v335, 0.0
  %v368 = vmax.f32 %v336, 0.0
  %v369 = vmax.f32 %v337, 0.0
  %v370 = vmax.f32 %v338, 0.0
  %v371 = vmax.f32 %v339, 0.0
  %v372 = vmax.f32 %v340, 0.0
  %v373 = vmax.f32 %v341, 0.0
  %v374 = vmax.f32 %v342, 0.0
  %v375 = vpack.c.bf16 %v345, %v343
  %v376 = vpack.c.bf16 %v346, %v344
  %v377 = vpack.c.bf16 %v349, %v347
  %v378 = vpack.c.bf16 %v350, %v348
  %v379 = vpack.c.bf16 %v353, %v351
  %v380 = vpack.c.bf16 %v354, %v352
  %v381 = vpack.c.bf16 %v357, %v355
  %v382 = vpack.c.bf16 %v358, %v356
  %v383 = vpack.c.bf16 %v361, %v359
  %v384 = vpack.c.bf16 %v362, %v360
  %v385 = vpack.c.bf16 %v365, %v363
  %v386 = vpack.c.bf16 %v366, %v364
  %v387 = vpack.c.bf16 %v369, %v367
  %v388 = vpack.c.bf16 %v370, %v368
  %v389 = vpack.c.bf16 %v373, %v371
  %v390 = vpack.c.bf16 %v374, %v372
  %392 = vset.pattern.permute.xlu0 0
  %393 = vperm.xlu0 %392, %v39
  %v394 = vpop.permute.xlu0 %393
  %397 = vset.pattern.permute.xlu0 0
  %398 = vperm.xlu0 %397, %v40
  %v399 = vpop.permute.xlu0 %398
  %402 = vset.pattern.permute.xlu0 0
  %403 = vperm.xlu0 %402, %v41
  %v404 = vpop.permute.xlu0 %403
  %407 = vset.pattern.permute.xlu0 0
  %408 = vperm.xlu0 %407, %v42
  %v409 = vpop.permute.xlu0 %408
  %412 = vset.pattern.permute.xlu0 0
  %413 = vperm.xlu0 %412, %v43
  %v414 = vpop.permute.xlu0 %413
  %417 = vset.pattern.permute.xlu0 0
  %418 = vperm.xlu0 %417, %v44
  %v419 = vpop.permute.xlu0 %418
  %422 = vset.pattern.permute.xlu0 0
  %423 = vperm.xlu0 %422, %v45
  %v424 = vpop.permute.xlu0 %423
  %427 = vset.pattern.permute.xlu0 0
  %428 = vperm.xlu0 %427, %v46
  %v429 = vpop.permute.xlu0 %428
  %432 = vset.pattern.permute.xlu0 0
  %433 = vperm.xlu0 %432, %v47
  %v434 = vpop.permute.xlu0 %433
  %437 = vset.pattern.permute.xlu0 0
  %438 = vperm.xlu0 %437, %v48
  %v439 = vpop.permute.xlu0 %438
  %442 = vset.pattern.permute.xlu0 0
  %443 = vperm.xlu0 %442, %v49
  %v444 = vpop.permute.xlu0 %443
  %447 = vset.pattern.permute.xlu0 0
  %448 = vperm.xlu0 %447, %v50
  %v449 = vpop.permute.xlu0 %448
  %452 = vset.pattern.permute.xlu0 0
  %453 = vperm.xlu0 %452, %v51
  %v454 = vpop.permute.xlu0 %453
  %457 = vset.pattern.permute.xlu0 0
  %458 = vperm.xlu0 %457, %v52
  %v459 = vpop.permute.xlu0 %458
  %462 = vset.pattern.permute.xlu0 0
  %463 = vperm.xlu0 %462, %v53
  %v464 = vpop.permute.xlu0 %463
  %467 = vset.pattern.permute.xlu0 0
  %468 = vperm.xlu0 %467, %v54
  %v469 = vpop.permute.xlu0 %468
  %v487 = vunpack.c.l.b16 %v23
  %v488 = vunpack.c.l.b16 %v24
  %v489 = vunpack.c.l.b16 %v25
  %v490 = vunpack.c.l.b16 %v26
  %v491 = vunpack.c.l.b16 %v27
  %v492 = vunpack.c.l.b16 %v28
  %v493 = vunpack.c.l.b16 %v29
  %v494 = vunpack.c.l.b16 %v30
  %v495 = vunpack.c.l.b16 %v31
  %v496 = vunpack.c.l.b16 %v32
  %v497 = vunpack.c.l.b16 %v33
  %v498 = vunpack.c.l.b16 %v34
  %v499 = vunpack.c.l.b16 %v35
  %v500 = vunpack.c.l.b16 %v36
  %v501 = vunpack.c.l.b16 %v37
  %v502 = vunpack.c.l.b16 %v38
  %v503 = vpack.c.b16 %v488, %v487
  %v504 = vpack.c.b16 %v490, %v489
  %v505 = vpack.c.b16 %v492, %v491
  %v506 = vpack.c.b16 %v494, %v493
  %v507 = vpack.c.b16 %v496, %v495
  %v508 = vpack.c.b16 %v498, %v497
  %v509 = vpack.c.b16 %v500, %v499
  %v510 = vpack.c.b16 %v502, %v501
  %519 = vmatprep.subr.bf16.mxu0 %v376
  %520 = vmatpush1.bf16.msra.mxu0 %v375
  %521 = vmatprep.subr.bf16.mxu0 %v378
  %522 = vmatpush1.bf16.msra.mxu0 %v377
  %523 = vmatprep.subr.bf16.mxu0 %v380
  %524 = vmatpush1.bf16.msra.mxu0 %v379
  %525 = vmatprep.subr.bf16.mxu0 %v382
  %526 = vmatpush1.bf16.msra.mxu0 %v381
  %527 = vmatprep.subr.bf16.mxu0 %v384
  %528 = vmatpush1.bf16.msra.mxu0 %v383
  %529 = vmatprep.subr.bf16.mxu0 %v386
  %530 = vmatpush1.bf16.msra.mxu0 %v385
  %531 = vmatprep.subr.bf16.mxu0 %v388
  %532 = vmatpush1.bf16.msra.mxu0 %v387
  %533 = vmatprep.subr.bf16.mxu0 %v390
  %534 = vmatpush1.bf16.msra.mxu0 %v389
  %535 = vmatprep.subr.bf16.mxu0 0
  %536 = vmatpush1.bf16.msra.mxu0 0
  %537 = vmatprep.subr.bf16.mxu0 0
  %538 = vmatpush1.bf16.msra.mxu0 0
  %539 = vmatprep.subr.bf16.mxu0 0
  %540 = vmatpush1.bf16.msra.mxu0 0
  %541 = vmatprep.subr.bf16.mxu0 0
  %542 = vmatpush1.bf16.msra.mxu0 0
  %543 = vmatprep.subr.bf16.mxu0 0
  %544 = vmatpush1.bf16.msra.mxu0 0
  %545 = vmatprep.subr.bf16.mxu0 0
  %546 = vmatpush1.bf16.msra.mxu0 0
  %547 = vmatprep.subr.bf16.mxu0 0
  %548 = vmatpush1.bf16.msra.mxu0 0
  %549 = vmatprep.subr.bf16.mxu0 0
  %550 = vmatpush1.bf16.msra.mxu0 0
  %551 = vmatprep.mubr.bf16.mxu0 0
  %552 = vmatmul.mubr.bf16.gmra.mrb[0].mxu0 %v503
  %v553 = vpop.f32.mrb[0].mxu0
  %v554 = vadd.f32 %v394, %v553
  %v555 = vpop.f32.mrb[0].mxu0
  %v556 = vadd.f32 %v394, %v555
  %v557 = vpop.f32.mrb[0].mxu0
  %v558 = vadd.f32 %v399, %v557
  %v559 = vpop.f32.mrb[0].mxu0
  %v560 = vadd.f32 %v399, %v559
  %561 = vmatprep.mubr.bf16.mxu0 0
  %562 = vmatmul.mubr.bf16.gmra.mrb[0].mxu0 %v504
  %v563 = vpop.f32.mrb[0].mxu0
  %v564 = vadd.f32 %v404, %v563
  %v565 = vpop.f32.mrb[0].mxu0
  %v566 = vadd.f32 %v404, %v565
  %v567 = vpop.f32.mrb[0].mxu0
  %v568 = vadd.f32 %v409, %v567
  %v569 = vpop.f32.mrb[0].mxu0
  %v570 = vadd.f32 %v409, %v569
  %571 = vmatprep.mubr.bf16.mxu0 0
  %572 = vmatmul.mubr.bf16.gmra.mrb[0].mxu0 %v505
  %v573 = vpop.f32.mrb[0].mxu0
  %v574 = vadd.f32 %v414, %v573
  %v575 = vpop.f32.mrb[0].mxu0
  %v576 = vadd.f32 %v414, %v575
  %v577 = vpop.f32.mrb[0].mxu0
  %v578 = vadd.f32 %v419, %v577
  %v579 = vpop.f32.mrb[0].mxu0
  %v580 = vadd.f32 %v419, %v579
  %581 = vmatprep.mubr.bf16.mxu0 0
  %582 = vmatmul.mubr.bf16.gmra.mrb[0].mxu0 %v506
  %v583 = vpop.f32.mrb[0].mxu0
  %v584 = vadd.f32 %v424, %v583
  %v585 = vpop.f32.mrb[0].mxu0
  %v586 = vadd.f32 %v424, %v585
  %v587 = vpop.f32.mrb[0].mxu0
  %v588 = vadd.f32 %v429, %v587
  %v589 = vpop.f32.mrb[0].mxu0
  %v590 = vadd.f32 %v429, %v589
  %591 = vmatprep.mubr.bf16.mxu0 0
  %592 = vmatmul.mubr.bf16.gmra.mrb[0].mxu0 %v507
  %v593 = vpop.f32.mrb[0].mxu0
  %v594 = vadd.f32 %v434, %v593
  %v595 = vpop.f32.mrb[0].mxu0
  %v596 = vadd.f32 %v434, %v595
  %v597 = vpop.f32.mrb[0].mxu0
  %v598 = vadd.f32 %v439, %v597
  %v599 = vpop.f32.mrb[0].mxu0
  %v600 = vadd.f32 %v439, %v599
  %601 = vmatprep.mubr.bf16.mxu0 0
  %602 = vmatmul.mubr.bf16.gmra.mrb[0].mxu0 %v508
  %v603 = vpop.f32.mrb[0].mxu0
  %v604 = vadd.f32 %v444, %v603
  %v605 = vpop.f32.mrb[0].mxu0
  %v606 = vadd.f32 %v444, %v605
  %v607 = vpop.f32.mrb[0].mxu0
  %v608 = vadd.f32 %v449, %v607
  %v609 = vpop.f32.mrb[0].mxu0
  %v610 = vadd.f32 %v449, %v609
  %611 = vmatprep.mubr.bf16.mxu0 0
  %612 = vmatmul.mubr.bf16.gmra.mrb[0].mxu0 %v509
  %v613 = vpop.f32.mrb[0].mxu0
  %v614 = vadd.f32 %v454, %v613
  %v615 = vpop.f32.mrb[0].mxu0
  %v616 = vadd.f32 %v454, %v615
  %v617 = vpop.f32.mrb[0].mxu0
  %v618 = vadd.f32 %v459, %v617
  %v619 = vpop.f32.mrb[0].mxu0
  %v620 = vadd.f32 %v459, %v619
  %621 = vmatprep.mubr.bf16.mxu0 0
  %622 = vmatmul.mubr.bf16.gmra.mrb[0].mxu0 %v510
  %v623 = vpop.f32.mrb[0].mxu0
  %v624 = vadd.f32 %v464, %v623
  %v625 = vpop.f32.mrb[0].mxu0
  %v626 = vadd.f32 %v464, %v625
  %v627 = vpop.f32.mrb[0].mxu0
  %v628 = vadd.f32 %v469, %v627
  %v629 = vpop.f32.mrb[0].mxu0
  %v630 = vadd.f32 %v469, %v629
  %631 = vdwg.mxu0
  %v632 = vpack.c.bf16 %v558, %v554
  %v633 = vpack.c.bf16 %v560, %v556
  %v634 = vpack.c.bf16 %v568, %v564
  %v635 = vpack.c.bf16 %v570, %v566
  %v636 = vpack.c.bf16 %v578, %v574
  %v637 = vpack.c.bf16 %v580, %v576
  %v638 = vpack.c.bf16 %v588, %v584
  %v639 = vpack.c.bf16 %v590, %v586
  %v640 = vpack.c.bf16 %v598, %v594
  %v641 = vpack.c.bf16 %v600, %v596
  %v642 = vpack.c.bf16 %v608, %v604
  %v643 = vpack.c.bf16 %v610, %v606
  %v644 = vpack.c.bf16 %v618, %v614
  %v645 = vpack.c.bf16 %v620, %v616
  %v646 = vpack.c.bf16 %v628, %v624
  %v647 = vpack.c.bf16 %v630, %v626
  %v664 = vunpack.c.l.b16 %v632
  %v665 = vunpack.c.l.b16 %v633
  %v666 = vunpack.c.h.b16 %v632
  %v667 = vunpack.c.h.b16 %v633
  %v668 = vunpack.c.l.b16 %v634
  %v669 = vunpack.c.l.b16 %v635
  %v670 = vunpack.c.h.b16 %v634
  %v671 = vunpack.c.h.b16 %v635
  %v672 = vunpack.c.l.b16 %v636
  %v673 = vunpack.c.l.b16 %v637
  %v674 = vunpack.c.h.b16 %v636
  %v675 = vunpack.c.h.b16 %v637
  %v676 = vunpack.c.l.b16 %v638
  %v677 = vunpack.c.l.b16 %v639
  %v678 = vunpack.c.h.b16 %v638
  %v679 = vunpack.c.h.b16 %v639
  %v680 = vunpack.c.l.b16 %v640
  %v681 = vunpack.c.l.b16 %v641
  %v682 = vunpack.c.h.b16 %v640
  %v683 = vunpack.c.h.b16 %v641
  %v684 = vunpack.c.l.b16 %v642
  %v685 = vunpack.c.l.b16 %v643
  %v686 = vunpack.c.h.b16 %v642
  %v687 = vunpack.c.h.b16 %v643
  %v688 = vunpack.c.l.b16 %v644
  %v689 = vunpack.c.l.b16 %v645
  %v690 = vunpack.c.h.b16 %v644
  %v691 = vunpack.c.h.b16 %v645
  %v692 = vunpack.c.l.b16 %v646
  %v693 = vunpack.c.l.b16 %v647
  %v694 = vunpack.c.h.b16 %v646
  %v695 = vunpack.c.h.b16 %v647
  %v696 = vpack.c.b16 %v665, %v664
  %v697 = vpack.c.b16 %v667, %v666
  %v698 = vpack.c.b16 %v669, %v668
  %v699 = vpack.c.b16 %v671, %v670
  %v700 = vpack.c.b16 %v673, %v672
  %v701 = vpack.c.b16 %v675, %v674
  %v702 = vpack.c.b16 %v677, %v676
  %v703 = vpack.c.b16 %v679, %v678
  %v704 = vpack.c.b16 %v681, %v680
  %v705 = vpack.c.b16 %v683, %v682
  %v706 = vpack.c.b16 %v685, %v684
  %v707 = vpack.c.b16 %v687, %v686
  %v708 = vpack.c.b16 %v689, %v688
  %v709 = vpack.c.b16 %v691, %v690
  %v710 = vpack.c.b16 %v693, %v692
  %v711 = vpack.c.b16 %v695, %v694
  %728 = vst [vmem:[%s5] sm:$0xff] %v696
  %729 = vst [vmem:[%s5 + $0x8] sm:$0xff] %v697
  %730 = vst [vmem:[%s5 + $0x10] sm:$0xff] %v698
  %731 = vst [vmem:[%s5 + $0x18] sm:$0xff] %v699
  %732 = vst [vmem:[%s5 + $0x20] sm:$0xff] %v700
  %733 = vst [vmem:[%s5 + $0x28] sm:$0xff] %v701
  %734 = vst [vmem:[%s5 + $0x30] sm:$0xff] %v702
  %735 = vst [vmem:[%s5 + $0x38] sm:$0xff] %v703
  %736 = vst [vmem:[%s5 + $0x40] sm:$0xff] %v704
  %737 = vst [vmem:[%s5 + $0x48] sm:$0xff] %v705
  %738 = vst [vmem:[%s5 + $0x50] sm:$0xff] %v706
  %739 = vst [vmem:[%s5 + $0x58] sm:$0xff] %v707
  %740 = vst [vmem:[%s5 + $0x60] sm:$0xff] %v708
  %741 = vst [vmem:[%s5 + $0x68] sm:$0xff] %v709
  %742 = vst [vmem:[%s5 + $0x70] sm:$0xff] %v710
  %743 = vst [vmem:[%s5 + $0x78] sm:$0xff] %v711
  %v744 = vunpack.c.l.bf16 %v632
  %v745 = vunpack.c.l.bf16 %v633
  %v746 = vunpack.c.h.bf16 %v632
  %v747 = vunpack.c.h.bf16 %v633
  %v748 = vunpack.c.l.bf16 %v634
  %v749 = vunpack.c.l.bf16 %v635
  %v750 = vunpack.c.h.bf16 %v634
  %v751 = vunpack.c.h.bf16 %v635
  %v752 = vunpack.c.l.bf16 %v636
  %v753 = vunpack.c.l.bf16 %v637
  %v754 = vunpack.c.h.bf16 %v636
  %v755 = vunpack.c.h.bf16 %v637
  %v756 = vunpack.c.l.bf16 %v638
  %v757 = vunpack.c.l.bf16 %v639
  %v758 = vunpack.c.h.bf16 %v638
  %v759 = vunpack.c.h.bf16 %v639
  %v760 = vunpack.c.l.bf16 %v640
  %v761 = vunpack.c.l.bf16 %v641
  %v762 = vunpack.c.h.bf16 %v640
  %v763 = vunpack.c.h.bf16 %v641
  %v764 = vunpack.c.l.bf16 %v642
  %v765 = vunpack.c.l.bf16 %v643
  %v766 = vunpack.c.h.bf16 %v642
  %v767 = vunpack.c.h.bf16 %v643
  %v768 = vunpack.c.l.bf16 %v644
  %v769 = vunpack.c.l.bf16 %v645
  %v770 = vunpack.c.h.bf16 %v644
  %v771 = vunpack.c.h.bf16 %v645
  %v772 = vunpack.c.l.bf16 %v646
  %v773 = vunpack.c.l.bf16 %v647
  %v774 = vunpack.c.h.bf16 %v646
  %v775 = vunpack.c.h.bf16 %v647
  %v776 = vadd.f32 %v744, %v746
  %v777 = vadd.f32 %v776, %v748
  %v778 = vadd.f32 %v777, %v750
  %v779 = vadd.f32 %v778, %v752
  %v780 = vadd.f32 %v779, %v754
  %v781 = vadd.f32 %v780, %v756
  %v782 = vadd.f32 %v781, %v758
  %v783 = vadd.f32 %v782, %v760
  %v784 = vadd.f32 %v783, %v762
  %v785 = vadd.f32 %v784, %v764
  %v786 = vadd.f32 %v785, %v766
  %v787 = vadd.f32 %v786, %v768
  %v788 = vadd.f32 %v787, %v770
  %v789 = vadd.f32 %v788, %v772
  %v790 = vadd.f32 %v789, %v774
  %v791 = vrot.slane %v790, 4
  %v792 = vadd.f32 %v790, %v791
  %v793 = vrot.slane %v792, 2
  %v794 = vadd.f32 %v792, %v793
  %v795 = vrot.slane %v794, 1
  %v796 = vadd.f32 %v794, %v795
  %v797 = vadd.f32 %v745, %v747
  %v798 = vadd.f32 %v797, %v749
  %v799 = vadd.f32 %v798, %v751
  %v800 = vadd.f32 %v799, %v753
  %v801 = vadd.f32 %v800, %v755
  %v802 = vadd.f32 %v801, %v757
  %v803 = vadd.f32 %v802, %v759
  %v804 = vadd.f32 %v803, %v761
  %v805 = vadd.f32 %v804, %v763
  %v806 = vadd.f32 %v805, %v765
  %v807 = vadd.f32 %v806, %v767
  %v808 = vadd.f32 %v807, %v769
  %v809 = vadd.f32 %v808, %v771
  %v810 = vadd.f32 %v809, %v773
  %v811 = vadd.f32 %v810, %v775
  %v812 = vrot.slane %v811, 4
  %v813 = vadd.f32 %v811, %v812
  %v814 = vrot.slane %v813, 2
  %v815 = vadd.f32 %v813, %v814
  %v816 = vrot.slane %v815, 1
  %v817 = vadd.f32 %v815, %v816
  %v818 = vmul.f32 %v744, %v744
  %v819 = vmul.f32 %v745, %v745
  %v820 = vmul.f32 %v746, %v746
  %v821 = vmul.f32 %v747, %v747
  %v822 = vmul.f32 %v748, %v748
  %v823 = vmul.f32 %v749, %v749
  %v824 = vmul.f32 %v750, %v750
  %v825 = vmul.f32 %v751, %v751
  %v826 = vmul.f32 %v752, %v752
  %v827 = vmul.f32 %v753, %v753
  %v828 = vmul.f32 %v754, %v754
  %v829 = vmul.f32 %v755, %v755
  %v830 = vmul.f32 %v756, %v756
  %v831 = vmul.f32 %v757, %v757
  %v832 = vmul.f32 %v758, %v758
  %v833 = vmul.f32 %v759, %v759
  %v834 = vmul.f32 %v760, %v760
  %v835 = vmul.f32 %v761, %v761
  %v836 = vmul.f32 %v762, %v762
  %v837 = vmul.f32 %v763, %v763
  %v838 = vmul.f32 %v764, %v764
  %v839 = vmul.f32 %v765, %v765
  %v840 = vmul.f32 %v766, %v766
  %v841 = vmul.f32 %v767, %v767
  %v842 = vmul.f32 %v768, %v768
  %v843 = vmul.f32 %v769, %v769
  %v844 = vmul.f32 %v770, %v770
  %v845 = vmul.f32 %v771, %v771
  %v846 = vmul.f32 %v772, %v772
  %v847 = vmul.f32 %v773, %v773
  %v848 = vmul.f32 %v774, %v774
  %v849 = vmul.f32 %v775, %v775
  %v850 = vadd.f32 %v818, %v820
  %v851 = vadd.f32 %v850, %v822
  %v852 = vadd.f32 %v851, %v824
  %v853 = vadd.f32 %v852, %v826
  %v854 = vadd.f32 %v853, %v828
  %v855 = vadd.f32 %v854, %v830
  %v856 = vadd.f32 %v855, %v832
  %v857 = vadd.f32 %v856, %v834
  %v858 = vadd.f32 %v857, %v836
  %v859 = vadd.f32 %v858, %v838
  %v860 = vadd.f32 %v859, %v840
  %v861 = vadd.f32 %v860, %v842
  %v862 = vadd.f32 %v861, %v844
  %v863 = vadd.f32 %v862, %v846
  %v864 = vadd.f32 %v863, %v848
  %v865 = vrot.slane %v864, 4
  %v866 = vadd.f32 %v864, %v865
  %v867 = vrot.slane %v866, 2
  %v868 = vadd.f32 %v866, %v867
  %v869 = vrot.slane %v868, 1
  %v870 = vadd.f32 %v868, %v869
  %v871 = vadd.f32 %v819, %v821
  %v872 = vadd.f32 %v871, %v823
  %v873 = vadd.f32 %v872, %v825
  %v874 = vadd.f32 %v873, %v827
  %v875 = vadd.f32 %v874, %v829
  %v876 = vadd.f32 %v875, %v831
  %v877 = vadd.f32 %v876, %v833
  %v878 = vadd.f32 %v877, %v835
  %v879 = vadd.f32 %v878, %v837
  %v880 = vadd.f32 %v879, %v839
  %v881 = vadd.f32 %v880, %v841
  %v882 = vadd.f32 %v881, %v843
  %v883 = vadd.f32 %v882, %v845
  %v884 = vadd.f32 %v883, %v847
  %v885 = vadd.f32 %v884, %v849
  %v886 = vrot.slane %v885, 4
  %v887 = vadd.f32 %v885, %v886
  %v888 = vrot.slane %v887, 2
  %v889 = vadd.f32 %v887, %v888
  %v890 = vrot.slane %v889, 1
  %v891 = vadd.f32 %v889, %v890
  %vm892 = vcmask 1040384
  %v893 = vsel %vm892, %v796, %v870
  %v894 = vsel %vm892, %v817, %v891
  %v897 = vcombine.low %v893, %v894
  %v899 = vunpack.c.l.s4 1983009808
  %v900 = vunpack.c.0.s8 %v899
  %v901 = vlaneseq
  %v902 = vshrl.u32 %v901, 7
  %v903 = vsub.s32 %v900, %v902
  %v904 = vrot.slane %v897, %v903
  %906 = vst [vmem:[%s6] sm:$0xf] %v904
  %s907 = scalar_lea.vmem %s0, 256
  %v908 = vld [vmem:[%s907] sm:$0xff]
  %v909 = vld [vmem:[%s907 + $0x8] sm:$0xff]
  %v910 = vld [vmem:[%s907 + $0x10] sm:$0xff]
  %v911 = vld [vmem:[%s907 + $0x18] sm:$0xff]
  %v912 = vld [vmem:[%s907 + $0x20] sm:$0xff]
  %v913 = vld [vmem:[%s907 + $0x28] sm:$0xff]
  %v914 = vld [vmem:[%s907 + $0x30] sm:$0xff]
  %v915 = vld [vmem:[%s907 + $0x38] sm:$0xff]
  %v916 = vld [vmem:[%s907 + $0x40] sm:$0xff]
  %v917 = vld [vmem:[%s907 + $0x48] sm:$0xff]
  %v918 = vld [vmem:[%s907 + $0x50] sm:$0xff]
  %v919 = vld [vmem:[%s907 + $0x58] sm:$0xff]
  %v920 = vld [vmem:[%s907 + $0x60] sm:$0xff]
  %v921 = vld [vmem:[%s907 + $0x68] sm:$0xff]
  %v922 = vld [vmem:[%s907 + $0x70] sm:$0xff]
  %v923 = vld [vmem:[%s907 + $0x78] sm:$0xff]
  %v924 = vld [vmem:[%s907 + $0x80] sm:$0xff]
  %v925 = vld [vmem:[%s907 + $0x88] sm:$0xff]
  %v926 = vld [vmem:[%s907 + $0x90] sm:$0xff]
  %v927 = vld [vmem:[%s907 + $0x98] sm:$0xff]
  %v928 = vld [vmem:[%s907 + $0xa0] sm:$0xff]
  %v929 = vld [vmem:[%s907 + $0xa8] sm:$0xff]
  %v930 = vld [vmem:[%s907 + $0xb0] sm:$0xff]
  %v931 = vld [vmem:[%s907 + $0xb8] sm:$0xff]
  %v932 = vld [vmem:[%s907 + $0xc0] sm:$0xff]
  %v933 = vld [vmem:[%s907 + $0xc8] sm:$0xff]
  %v934 = vld [vmem:[%s907 + $0xd0] sm:$0xff]
  %v935 = vld [vmem:[%s907 + $0xd8] sm:$0xff]
  %v936 = vld [vmem:[%s907 + $0xe0] sm:$0xff]
  %v937 = vld [vmem:[%s907 + $0xe8] sm:$0xff]
  %v938 = vld [vmem:[%s907 + $0xf0] sm:$0xff]
  %v939 = vld [vmem:[%s907 + $0xf8] sm:$0xff]
  %s940 = scalar_lea.vmem %s1, 128
  %v941 = vld [vmem:[%s940] sm:$0xff]
  %v942 = vld [vmem:[%s940 + $0x8] sm:$0xff]
  %v943 = vld [vmem:[%s940 + $0x10] sm:$0xff]
  %v944 = vld [vmem:[%s940 + $0x18] sm:$0xff]
  %v945 = vld [vmem:[%s940 + $0x20] sm:$0xff]
  %v946 = vld [vmem:[%s940 + $0x28] sm:$0xff]
  %v947 = vld [vmem:[%s940 + $0x30] sm:$0xff]
  %v948 = vld [vmem:[%s940 + $0x38] sm:$0xff]
  %v949 = vld [vmem:[%s940 + $0x40] sm:$0xff]
  %v950 = vld [vmem:[%s940 + $0x48] sm:$0xff]
  %v951 = vld [vmem:[%s940 + $0x50] sm:$0xff]
  %v952 = vld [vmem:[%s940 + $0x58] sm:$0xff]
  %v953 = vld [vmem:[%s940 + $0x60] sm:$0xff]
  %v954 = vld [vmem:[%s940 + $0x68] sm:$0xff]
  %v955 = vld [vmem:[%s940 + $0x70] sm:$0xff]
  %v956 = vld [vmem:[%s940 + $0x78] sm:$0xff]
  %958 = vset.pattern.permute.xlu0 0
  %959 = vperm.xlu0 %958, %v941
  %v960 = vpop.permute.xlu0 %959
  %963 = vset.pattern.permute.xlu0 0
  %964 = vperm.xlu0 %963, %v942
  %v965 = vpop.permute.xlu0 %964
  %968 = vset.pattern.permute.xlu0 0
  %969 = vperm.xlu0 %968, %v943
  %v970 = vpop.permute.xlu0 %969
  %973 = vset.pattern.permute.xlu0 0
  %974 = vperm.xlu0 %973, %v944
  %v975 = vpop.permute.xlu0 %974
  %978 = vset.pattern.permute.xlu0 0
  %979 = vperm.xlu0 %978, %v945
  %v980 = vpop.permute.xlu0 %979
  %983 = vset.pattern.permute.xlu0 0
  %984 = vperm.xlu0 %983, %v946
  %v985 = vpop.permute.xlu0 %984
  %988 = vset.pattern.permute.xlu0 0
  %989 = vperm.xlu0 %988, %v947
  %v990 = vpop.permute.xlu0 %989
  %993 = vset.pattern.permute.xlu0 0
  %994 = vperm.xlu0 %993, %v948
  %v995 = vpop.permute.xlu0 %994
  %998 = vset.pattern.permute.xlu0 0
  %999 = vperm.xlu0 %998, %v949
  %v1000 = vpop.permute.xlu0 %999
  %1003 = vset.pattern.permute.xlu0 0
  %1004 = vperm.xlu0 %1003, %v950
  %v1005 = vpop.permute.xlu0 %1004
  %1008 = vset.pattern.permute.xlu0 0
  %1009 = vperm.xlu0 %1008, %v951
  %v1010 = vpop.permute.xlu0 %1009
  %1013 = vset.pattern.permute.xlu0 0
  %1014 = vperm.xlu0 %1013, %v952
  %v1015 = vpop.permute.xlu0 %1014
  %1018 = vset.pattern.permute.xlu0 0
  %1019 = vperm.xlu0 %1018, %v953
  %v1020 = vpop.permute.xlu0 %1019
  %1023 = vset.pattern.permute.xlu0 0
  %1024 = vperm.xlu0 %1023, %v954
  %v1025 = vpop.permute.xlu0 %1024
  %1028 = vset.pattern.permute.xlu0 0
  %1029 = vperm.xlu0 %1028, %v955
  %v1030 = vpop.permute.xlu0 %1029
  %1033 = vset.pattern.permute.xlu0 0
  %1034 = vperm.xlu0 %1033, %v956
  %v1035 = vpop.permute.xlu0 %1034
  %v1037 = vmul.f32 %v908, %v960
  %v1038 = vmul.f32 %v909, %v960
  %v1039 = vmul.f32 %v910, %v965
  %v1040 = vmul.f32 %v911, %v965
  %v1041 = vmul.f32 %v912, %v970
  %v1042 = vmul.f32 %v913, %v970
  %v1043 = vmul.f32 %v914, %v975
  %v1044 = vmul.f32 %v915, %v975
  %v1045 = vmul.f32 %v916, %v980
  %v1046 = vmul.f32 %v917, %v980
  %v1047 = vmul.f32 %v918, %v985
  %v1048 = vmul.f32 %v919, %v985
  %v1049 = vmul.f32 %v920, %v990
  %v1050 = vmul.f32 %v921, %v990
  %v1051 = vmul.f32 %v922, %v995
  %v1052 = vmul.f32 %v923, %v995
  %v1053 = vmul.f32 %v924, %v1000
  %v1054 = vmul.f32 %v925, %v1000
  %v1055 = vmul.f32 %v926, %v1005
  %v1056 = vmul.f32 %v927, %v1005
  %v1057 = vmul.f32 %v928, %v1010
  %v1058 = vmul.f32 %v929, %v1010
  %v1059 = vmul.f32 %v930, %v1015
  %v1060 = vmul.f32 %v931, %v1015
  %v1061 = vmul.f32 %v932, %v1020
  %v1062 = vmul.f32 %v933, %v1020
  %v1063 = vmul.f32 %v934, %v1025
  %v1064 = vmul.f32 %v935, %v1025
  %v1065 = vmul.f32 %v936, %v1030
  %v1066 = vmul.f32 %v937, %v1030
  %v1067 = vmul.f32 %v938, %v1035
  %v1068 = vmul.f32 %v939, %v1035
  %s1069 = scalar_lea.vmem %s2, 128
  %v1070 = vld [vmem:[%s1069] sm:$0xff]
  %v1071 = vld [vmem:[%s1069 + $0x8] sm:$0xff]
  %v1072 = vld [vmem:[%s1069 + $0x10] sm:$0xff]
  %v1073 = vld [vmem:[%s1069 + $0x18] sm:$0xff]
  %v1074 = vld [vmem:[%s1069 + $0x20] sm:$0xff]
  %v1075 = vld [vmem:[%s1069 + $0x28] sm:$0xff]
  %v1076 = vld [vmem:[%s1069 + $0x30] sm:$0xff]
  %v1077 = vld [vmem:[%s1069 + $0x38] sm:$0xff]
  %v1078 = vld [vmem:[%s1069 + $0x40] sm:$0xff]
  %v1079 = vld [vmem:[%s1069 + $0x48] sm:$0xff]
  %v1080 = vld [vmem:[%s1069 + $0x50] sm:$0xff]
  %v1081 = vld [vmem:[%s1069 + $0x58] sm:$0xff]
  %v1082 = vld [vmem:[%s1069 + $0x60] sm:$0xff]
  %v1083 = vld [vmem:[%s1069 + $0x68] sm:$0xff]
  %v1084 = vld [vmem:[%s1069 + $0x70] sm:$0xff]
  %v1085 = vld [vmem:[%s1069 + $0x78] sm:$0xff]
  %1087 = vset.pattern.permute.xlu0 0
  %1088 = vperm.xlu0 %1087, %v1070
  %v1089 = vpop.permute.xlu0 %1088
  %1092 = vset.pattern.permute.xlu0 0
  %1093 = vperm.xlu0 %1092, %v1071
  %v1094 = vpop.permute.xlu0 %1093
  %1097 = vset.pattern.permute.xlu0 0
  %1098 = vperm.xlu0 %1097, %v1072
  %v1099 = vpop.permute.xlu0 %1098
  %1102 = vset.pattern.permute.xlu0 0
  %1103 = vperm.xlu0 %1102, %v1073
  %v1104 = vpop.permute.xlu0 %1103
  %1107 = vset.pattern.permute.xlu0 0
  %1108 = vperm.xlu0 %1107, %v1074
  %v1109 = vpop.permute.xlu0 %1108
  %1112 = vset.pattern.permute.xlu0 0
  %1113 = vperm.xlu0 %1112, %v1075
  %v1114 = vpop.permute.xlu0 %1113
  %1117 = vset.pattern.permute.xlu0 0
  %1118 = vperm.xlu0 %1117, %v1076
  %v1119 = vpop.permute.xlu0 %1118
  %1122 = vset.pattern.permute.xlu0 0
  %1123 = vperm.xlu0 %1122, %v1077
  %v1124 = vpop.permute.xlu0 %1123
  %1127 = vset.pattern.permute.xlu0 0
  %1128 = vperm.xlu0 %1127, %v1078
  %v1129 = vpop.permute.xlu0 %1128
  %1132 = vset.pattern.permute.xlu0 0
  %1133 = vperm.xlu0 %1132, %v1079
  %v1134 = vpop.permute.xlu0 %1133
  %1137 = vset.pattern.permute.xlu0 0
  %1138 = vperm.xlu0 %1137, %v1080
  %v1139 = vpop.permute.xlu0 %1138
  %1142 = vset.pattern.permute.xlu0 0
  %1143 = vperm.xlu0 %1142, %v1081
  %v1144 = vpop.permute.xlu0 %1143
  %1147 = vset.pattern.permute.xlu0 0
  %1148 = vperm.xlu0 %1147, %v1082
  %v1149 = vpop.permute.xlu0 %1148
  %1152 = vset.pattern.permute.xlu0 0
  %1153 = vperm.xlu0 %1152, %v1083
  %v1154 = vpop.permute.xlu0 %1153
  %1157 = vset.pattern.permute.xlu0 0
  %1158 = vperm.xlu0 %1157, %v1084
  %v1159 = vpop.permute.xlu0 %1158
  %1162 = vset.pattern.permute.xlu0 0
  %1163 = vperm.xlu0 %1162, %v1085
  %v1164 = vpop.permute.xlu0 %1163
  %v1166 = vadd.f32 %v1037, %v1089
  %v1167 = vadd.f32 %v1038, %v1089
  %v1168 = vadd.f32 %v1039, %v1094
  %v1169 = vadd.f32 %v1040, %v1094
  %v1170 = vadd.f32 %v1041, %v1099
  %v1171 = vadd.f32 %v1042, %v1099
  %v1172 = vadd.f32 %v1043, %v1104
  %v1173 = vadd.f32 %v1044, %v1104
  %v1174 = vadd.f32 %v1045, %v1109
  %v1175 = vadd.f32 %v1046, %v1109
  %v1176 = vadd.f32 %v1047, %v1114
  %v1177 = vadd.f32 %v1048, %v1114
  %v1178 = vadd.f32 %v1049, %v1119
  %v1179 = vadd.f32 %v1050, %v1119
  %v1180 = vadd.f32 %v1051, %v1124
  %v1181 = vadd.f32 %v1052, %v1124
  %v1182 = vadd.f32 %v1053, %v1129
  %v1183 = vadd.f32 %v1054, %v1129
  %v1184 = vadd.f32 %v1055, %v1134
  %v1185 = vadd.f32 %v1056, %v1134
  %v1186 = vadd.f32 %v1057, %v1139
  %v1187 = vadd.f32 %v1058, %v1139
  %v1188 = vadd.f32 %v1059, %v1144
  %v1189 = vadd.f32 %v1060, %v1144
  %v1190 = vadd.f32 %v1061, %v1149
  %v1191 = vadd.f32 %v1062, %v1149
  %v1192 = vadd.f32 %v1063, %v1154
  %v1193 = vadd.f32 %v1064, %v1154
  %v1194 = vadd.f32 %v1065, %v1159
  %v1195 = vadd.f32 %v1066, %v1159
  %v1196 = vadd.f32 %v1067, %v1164
  %v1197 = vadd.f32 %v1068, %v1164
  %v1198 = vmax.f32 %v1166, 0.0
  %v1199 = vmax.f32 %v1167, 0.0
  %v1200 = vmax.f32 %v1168, 0.0
  %v1201 = vmax.f32 %v1169, 0.0
  %v1202 = vmax.f32 %v1170, 0.0
  %v1203 = vmax.f32 %v1171, 0.0
  %v1204 = vmax.f32 %v1172, 0.0
  %v1205 = vmax.f32 %v1173, 0.0
  %v1206 = vmax.f32 %v1174, 0.0
  %v1207 = vmax.f32 %v1175, 0.0
  %v1208 = vmax.f32 %v1176, 0.0
  %v1209 = vmax.f32 %v1177, 0.0
  %v1210 = vmax.f32 %v1178, 0.0
  %v1211 = vmax.f32 %v1179, 0.0
  %v1212 = vmax.f32 %v1180, 0.0
  %v1213 = vmax.f32 %v1181, 0.0
  %v1214 = vmax.f32 %v1182, 0.0
  %v1215 = vmax.f32 %v1183, 0.0
  %v1216 = vmax.f32 %v1184, 0.0
  %v1217 = vmax.f32 %v1185, 0.0
  %v1218 = vmax.f32 %v1186, 0.0
  %v1219 = vmax.f32 %v1187, 0.0
  %v1220 = vmax.f32 %v1188, 0.0
  %v1221 = vmax.f32 %v1189, 0.0
  %v1222 = vmax.f32 %v1190, 0.0
  %v1223 = vmax.f32 %v1191, 0.0
  %v1224 = vmax.f32 %v1192, 0.0
  %v1225 = vmax.f32 %v1193, 0.0
  %v1226 = vmax.f32 %v1194, 0.0
  %v1227 = vmax.f32 %v1195, 0.0
  %v1228 = vmax.f32 %v1196, 0.0
  %v1229 = vmax.f32 %v1197, 0.0
  %v1230 = vpack.c.bf16 %v1200, %v1198
  %v1231 = vpack.c.bf16 %v1201, %v1199
  %v1232 = vpack.c.bf16 %v1204, %v1202
  %v1233 = vpack.c.bf16 %v1205, %v1203
  %v1234 = vpack.c.bf16 %v1208, %v1206
  %v1235 = vpack.c.bf16 %v1209, %v1207
  %v1236 = vpack.c.bf16 %v1212, %v1210
  %v1237 = vpack.c.bf16 %v1213, %v1211
  %v1238 = vpack.c.bf16 %v1216, %v1214
  %v1239 = vpack.c.bf16 %v1217, %v1215
  %v1240 = vpack.c.bf16 %v1220, %v1218
  %v1241 = vpack.c.bf16 %v1221, %v1219
  %v1242 = vpack.c.bf16 %v1224, %v1222
  %v1243 = vpack.c.bf16 %v1225, %v1223
  %v1244 = vpack.c.bf16 %v1228, %v1226
  %v1245 = vpack.c.bf16 %v1229, %v1227
  %1246 = vmatprep.subr.bf16.mxu0 %v1231
  %1247 = vmatpush1.bf16.msra.mxu0 %v1230
  %1248 = vmatprep.subr.bf16.mxu0 %v1233
  %1249 = vmatpush1.bf16.msra.mxu0 %v1232
  %1250 = vmatprep.subr.bf16.mxu0 %v1235
  %1251 = vmatpush1.bf16.msra.mxu0 %v1234
  %1252 = vmatprep.subr.bf16.mxu0 %v1237
  %1253 = vmatpush1.bf16.msra.mxu0 %v1236
  %1254 = vmatprep.subr.bf16.mxu0 %v1239
  %1255 = vmatpush1.bf16.msra.mxu0 %v1238
  %1256 = vmatprep.subr.bf16.mxu0 %v1241
  %1257 = vmatpush1.bf16.msra.mxu0 %v1240
  %1258 = vmatprep.subr.bf16.mxu0 %v1243
  %1259 = vmatpush1.bf16.msra.mxu0 %v1242
  %1260 = vmatprep.subr.bf16.mxu0 %v1245
  %1261 = vmatpush1.bf16.msra.mxu0 %v1244
  %1262 = vmatprep.subr.bf16.mxu0 0
  %1263 = vmatpush1.bf16.msra.mxu0 0
  %1264 = vmatprep.subr.bf16.mxu0 0
  %1265 = vmatpush1.bf16.msra.mxu0 0
  %1266 = vmatprep.subr.bf16.mxu0 0
  %1267 = vmatpush1.bf16.msra.mxu0 0
  %1268 = vmatprep.subr.bf16.mxu0 0
  %1269 = vmatpush1.bf16.msra.mxu0 0
  %1270 = vmatprep.subr.bf16.mxu0 0
  %1271 = vmatpush1.bf16.msra.mxu0 0
  %1272 = vmatprep.subr.bf16.mxu0 0
  %1273 = vmatpush1.bf16.msra.mxu0 0
  %1274 = vmatprep.subr.bf16.mxu0 0
  %1275 = vmatpush1.bf16.msra.mxu0 0
  %1276 = vmatprep.subr.bf16.mxu0 0
  %1277 = vmatpush1.bf16.msra.mxu0 0
  %1278 = vmatprep.mubr.bf16.mxu0 0
  %1279 = vmatmul.mubr.bf16.gmra.mrb[0].mxu0 %v503
  %v1280 = vpop.f32.mrb[0].mxu0
  %v1281 = vadd.f32 %v394, %v1280
  %v1282 = vpop.f32.mrb[0].mxu0
  %v1283 = vadd.f32 %v394, %v1282
  %v1284 = vpop.f32.mrb[0].mxu0
  %v1285 = vadd.f32 %v399, %v1284
  %v1286 = vpop.f32.mrb[0].mxu0
  %v1287 = vadd.f32 %v399, %v1286
  %1288 = vmatprep.mubr.bf16.mxu0 0
  %1289 = vmatmul.mubr.bf16.gmra.mrb[0].mxu0 %v504
  %v1290 = vpop.f32.mrb[0].mxu0
  %v1291 = vadd.f32 %v404, %v1290
  %v1292 = vpop.f32.mrb[0].mxu0
  %v1293 = vadd.f32 %v404, %v1292
  %v1294 = vpop.f32.mrb[0].mxu0
  %v1295 = vadd.f32 %v409, %v1294
  %v1296 = vpop.f32.mrb[0].mxu0
  %v1297 = vadd.f32 %v409, %v1296
  %1298 = vmatprep.mubr.bf16.mxu0 0
  %1299 = vmatmul.mubr.bf16.gmra.mrb[0].mxu0 %v505
  %v1300 = vpop.f32.mrb[0].mxu0
  %v1301 = vadd.f32 %v414, %v1300
  %v1302 = vpop.f32.mrb[0].mxu0
  %v1303 = vadd.f32 %v414, %v1302
  %v1304 = vpop.f32.mrb[0].mxu0
  %v1305 = vadd.f32 %v419, %v1304
  %v1306 = vpop.f32.mrb[0].mxu0
  %v1307 = vadd.f32 %v419, %v1306
  %1308 = vmatprep.mubr.bf16.mxu0 0
  %1309 = vmatmul.mubr.bf16.gmra.mrb[0].mxu0 %v506
  %v1310 = vpop.f32.mrb[0].mxu0
  %v1311 = vadd.f32 %v424, %v1310
  %v1312 = vpop.f32.mrb[0].mxu0
  %v1313 = vadd.f32 %v424, %v1312
  %v1314 = vpop.f32.mrb[0].mxu0
  %v1315 = vadd.f32 %v429, %v1314
  %v1316 = vpop.f32.mrb[0].mxu0
  %v1317 = vadd.f32 %v429, %v1316
  %1318 = vmatprep.mubr.bf16.mxu0 0
  %1319 = vmatmul.mubr.bf16.gmra.mrb[0].mxu0 %v507
  %v1320 = vpop.f32.mrb[0].mxu0
  %v1321 = vadd.f32 %v434, %v1320
  %v1322 = vpop.f32.mrb[0].mxu0
  %v1323 = vadd.f32 %v434, %v1322
  %v1324 = vpop.f32.mrb[0].mxu0
  %v1325 = vadd.f32 %v439, %v1324
  %v1326 = vpop.f32.mrb[0].mxu0
  %v1327 = vadd.f32 %v439, %v1326
  %1328 = vmatprep.mubr.bf16.mxu0 0
  %1329 = vmatmul.mubr.bf16.gmra.mrb[0].mxu0 %v508
  %v1330 = vpop.f32.mrb[0].mxu0
  %v1331 = vadd.f32 %v444, %v1330
  %v1332 = vpop.f32.mrb[0].mxu0
  %v1333 = vadd.f32 %v444, %v1332
  %v1334 = vpop.f32.mrb[0].mxu0
  %v1335 = vadd.f32 %v449, %v1334
  %v1336 = vpop.f32.mrb[0].mxu0
  %v1337 = vadd.f32 %v449, %v1336
  %1338 = vmatprep.mubr.bf16.mxu0 0
  %1339 = vmatmul.mubr.bf16.gmra.mrb[0].mxu0 %v509
  %v1340 = vpop.f32.mrb[0].mxu0
  %v1341 = vadd.f32 %v454, %v1340
  %v1342 = vpop.f32.mrb[0].mxu0
  %v1343 = vadd.f32 %v454, %v1342
  %v1344 = vpop.f32.mrb[0].mxu0
  %v1345 = vadd.f32 %v459, %v1344
  %v1346 = vpop.f32.mrb[0].mxu0
  %v1347 = vadd.f32 %v459, %v1346
  %1348 = vmatprep.mubr.bf16.mxu0 0
  %1349 = vmatmul.mubr.bf16.gmra.mrb[0].mxu0 %v510
  %v1350 = vpop.f32.mrb[0].mxu0
  %v1351 = vadd.f32 %v464, %v1350
  %v1352 = vpop.f32.mrb[0].mxu0
  %v1353 = vadd.f32 %v464, %v1352
  %v1354 = vpop.f32.mrb[0].mxu0
  %v1355 = vadd.f32 %v469, %v1354
  %v1356 = vpop.f32.mrb[0].mxu0
  %v1357 = vadd.f32 %v469, %v1356
  %1358 = vdwg.mxu0
  %v1359 = vpack.c.bf16 %v1285, %v1281
  %v1360 = vpack.c.bf16 %v1287, %v1283
  %v1361 = vpack.c.bf16 %v1295, %v1291
  %v1362 = vpack.c.bf16 %v1297, %v1293
  %v1363 = vpack.c.bf16 %v1305, %v1301
  %v1364 = vpack.c.bf16 %v1307, %v1303
  %v1365 = vpack.c.bf16 %v1315, %v1311
  %v1366 = vpack.c.bf16 %v1317, %v1313
  %v1367 = vpack.c.bf16 %v1325, %v1321
  %v1368 = vpack.c.bf16 %v1327, %v1323
  %v1369 = vpack.c.bf16 %v1335, %v1331
  %v1370 = vpack.c.bf16 %v1337, %v1333
  %v1371 = vpack.c.bf16 %v1345, %v1341
  %v1372 = vpack.c.bf16 %v1347, %v1343
  %v1373 = vpack.c.bf16 %v1355, %v1351
  %v1374 = vpack.c.bf16 %v1357, %v1353
  %v1391 = vunpack.c.l.b16 %v1359
  %v1392 = vunpack.c.l.b16 %v1360
  %v1393 = vunpack.c.h.b16 %v1359
  %v1394 = vunpack.c.h.b16 %v1360
  %v1395 = vunpack.c.l.b16 %v1361
  %v1396 = vunpack.c.l.b16 %v1362
  %v1397 = vunpack.c.h.b16 %v1361
  %v1398 = vunpack.c.h.b16 %v1362
  %v1399 = vunpack.c.l.b16 %v1363
  %v1400 = vunpack.c.l.b16 %v1364
  %v1401 = vunpack.c.h.b16 %v1363
  %v1402 = vunpack.c.h.b16 %v1364
  %v1403 = vunpack.c.l.b16 %v1365
  %v1404 = vunpack.c.l.b16 %v1366
  %v1405 = vunpack.c.h.b16 %v1365
  %v1406 = vunpack.c.h.b16 %v1366
  %v1407 = vunpack.c.l.b16 %v1367
  %v1408 = vunpack.c.l.b16 %v1368
  %v1409 = vunpack.c.h.b16 %v1367
  %v1410 = vunpack.c.h.b16 %v1368
  %v1411 = vunpack.c.l.b16 %v1369
  %v1412 = vunpack.c.l.b16 %v1370
  %v1413 = vunpack.c.h.b16 %v1369
  %v1414 = vunpack.c.h.b16 %v1370
  %v1415 = vunpack.c.l.b16 %v1371
  %v1416 = vunpack.c.l.b16 %v1372
  %v1417 = vunpack.c.h.b16 %v1371
  %v1418 = vunpack.c.h.b16 %v1372
  %v1419 = vunpack.c.l.b16 %v1373
  %v1420 = vunpack.c.l.b16 %v1374
  %v1421 = vunpack.c.h.b16 %v1373
  %v1422 = vunpack.c.h.b16 %v1374
  %v1423 = vpack.c.b16 %v1392, %v1391
  %v1424 = vpack.c.b16 %v1394, %v1393
  %v1425 = vpack.c.b16 %v1396, %v1395
  %v1426 = vpack.c.b16 %v1398, %v1397
  %v1427 = vpack.c.b16 %v1400, %v1399
  %v1428 = vpack.c.b16 %v1402, %v1401
  %v1429 = vpack.c.b16 %v1404, %v1403
  %v1430 = vpack.c.b16 %v1406, %v1405
  %v1431 = vpack.c.b16 %v1408, %v1407
  %v1432 = vpack.c.b16 %v1410, %v1409
  %v1433 = vpack.c.b16 %v1412, %v1411
  %v1434 = vpack.c.b16 %v1414, %v1413
  %v1435 = vpack.c.b16 %v1416, %v1415
  %v1436 = vpack.c.b16 %v1418, %v1417
  %v1437 = vpack.c.b16 %v1420, %v1419
  %v1438 = vpack.c.b16 %v1422, %v1421
  %s1455 = scalar_lea.vmem %s5, 128
  %1456 = vst [vmem:[%s1455] sm:$0xff] %v1423
  %1457 = vst [vmem:[%s1455 + $0x8] sm:$0xff] %v1424
  %1458 = vst [vmem:[%s1455 + $0x10] sm:$0xff] %v1425
  %1459 = vst [vmem:[%s1455 + $0x18] sm:$0xff] %v1426
  %1460 = vst [vmem:[%s1455 + $0x20] sm:$0xff] %v1427
  %1461 = vst [vmem:[%s1455 + $0x28] sm:$0xff] %v1428
  %1462 = vst [vmem:[%s1455 + $0x30] sm:$0xff] %v1429
  %1463 = vst [vmem:[%s1455 + $0x38] sm:$0xff] %v1430
  %1464 = vst [vmem:[%s1455 + $0x40] sm:$0xff] %v1431
  %1465 = vst [vmem:[%s1455 + $0x48] sm:$0xff] %v1432
  %1466 = vst [vmem:[%s1455 + $0x50] sm:$0xff] %v1433
  %1467 = vst [vmem:[%s1455 + $0x58] sm:$0xff] %v1434
  %1468 = vst [vmem:[%s1455 + $0x60] sm:$0xff] %v1435
  %1469 = vst [vmem:[%s1455 + $0x68] sm:$0xff] %v1436
  %1470 = vst [vmem:[%s1455 + $0x70] sm:$0xff] %v1437
  %1471 = vst [vmem:[%s1455 + $0x78] sm:$0xff] %v1438
  %v1472 = vunpack.c.l.bf16 %v1359
  %v1473 = vunpack.c.l.bf16 %v1360
  %v1474 = vunpack.c.h.bf16 %v1359
  %v1475 = vunpack.c.h.bf16 %v1360
  %v1476 = vunpack.c.l.bf16 %v1361
  %v1477 = vunpack.c.l.bf16 %v1362
  %v1478 = vunpack.c.h.bf16 %v1361
  %v1479 = vunpack.c.h.bf16 %v1362
  %v1480 = vunpack.c.l.bf16 %v1363
  %v1481 = vunpack.c.l.bf16 %v1364
  %v1482 = vunpack.c.h.bf16 %v1363
  %v1483 = vunpack.c.h.bf16 %v1364
  %v1484 = vunpack.c.l.bf16 %v1365
  %v1485 = vunpack.c.l.bf16 %v1366
  %v1486 = vunpack.c.h.bf16 %v1365
  %v1487 = vunpack.c.h.bf16 %v1366
  %v1488 = vunpack.c.l.bf16 %v1367
  %v1489 = vunpack.c.l.bf16 %v1368
  %v1490 = vunpack.c.h.bf16 %v1367
  %v1491 = vunpack.c.h.bf16 %v1368
  %v1492 = vunpack.c.l.bf16 %v1369
  %v1493 = vunpack.c.l.bf16 %v1370
  %v1494 = vunpack.c.h.bf16 %v1369
  %v1495 = vunpack.c.h.bf16 %v1370
  %v1496 = vunpack.c.l.bf16 %v1371
  %v1497 = vunpack.c.l.bf16 %v1372
  %v1498 = vunpack.c.h.bf16 %v1371
  %v1499 = vunpack.c.h.bf16 %v1372
  %v1500 = vunpack.c.l.bf16 %v1373
  %v1501 = vunpack.c.l.bf16 %v1374
  %v1502 = vunpack.c.h.bf16 %v1373
  %v1503 = vunpack.c.h.bf16 %v1374
  %v1504 = vadd.f32 %v1472, %v1474
  %v1505 = vadd.f32 %v1504, %v1476
  %v1506 = vadd.f32 %v1505, %v1478
  %v1507 = vadd.f32 %v1506, %v1480
  %v1508 = vadd.f32 %v1507, %v1482
  %v1509 = vadd.f32 %v1508, %v1484
  %v1510 = vadd.f32 %v1509, %v1486
  %v1511 = vadd.f32 %v1510, %v1488
  %v1512 = vadd.f32 %v1511, %v1490
  %v1513 = vadd.f32 %v1512, %v1492
  %v1514 = vadd.f32 %v1513, %v1494
  %v1515 = vadd.f32 %v1514, %v1496
  %v1516 = vadd.f32 %v1515, %v1498
  %v1517 = vadd.f32 %v1516, %v1500
  %v1518 = vadd.f32 %v1517, %v1502
  %v1519 = vrot.slane %v1518, 4
  %v1520 = vadd.f32 %v1518, %v1519
  %v1521 = vrot.slane %v1520, 2
  %v1522 = vadd.f32 %v1520, %v1521
  %v1523 = vrot.slane %v1522, 1
  %v1524 = vadd.f32 %v1522, %v1523
  %v1525 = vadd.f32 %v1473, %v1475
  %v1526 = vadd.f32 %v1525, %v1477
  %v1527 = vadd.f32 %v1526, %v1479
  %v1528 = vadd.f32 %v1527, %v1481
  %v1529 = vadd.f32 %v1528, %v1483
  %v1530 = vadd.f32 %v1529, %v1485
  %v1531 = vadd.f32 %v1530, %v1487
  %v1532 = vadd.f32 %v1531, %v1489
  %v1533 = vadd.f32 %v1532, %v1491
  %v1534 = vadd.f32 %v1533, %v1493
  %v1535 = vadd.f32 %v1534, %v1495
  %v1536 = vadd.f32 %v1535, %v1497
  %v1537 = vadd.f32 %v1536, %v1499
  %v1538 = vadd.f32 %v1537, %v1501
  %v1539 = vadd.f32 %v1538, %v1503
  %v1540 = vrot.slane %v1539, 4
  %v1541 = vadd.f32 %v1539, %v1540
  %v1542 = vrot.slane %v1541, 2
  %v1543 = vadd.f32 %v1541, %v1542
  %v1544 = vrot.slane %v1543, 1
  %v1545 = vadd.f32 %v1543, %v1544
  %v1546 = vmul.f32 %v1472, %v1472
  %v1547 = vmul.f32 %v1473, %v1473
  %v1548 = vmul.f32 %v1474, %v1474
  %v1549 = vmul.f32 %v1475, %v1475
  %v1550 = vmul.f32 %v1476, %v1476
  %v1551 = vmul.f32 %v1477, %v1477
  %v1552 = vmul.f32 %v1478, %v1478
  %v1553 = vmul.f32 %v1479, %v1479
  %v1554 = vmul.f32 %v1480, %v1480
  %v1555 = vmul.f32 %v1481, %v1481
  %v1556 = vmul.f32 %v1482, %v1482
  %v1557 = vmul.f32 %v1483, %v1483
  %v1558 = vmul.f32 %v1484, %v1484
  %v1559 = vmul.f32 %v1485, %v1485
  %v1560 = vmul.f32 %v1486, %v1486
  %v1561 = vmul.f32 %v1487, %v1487
  %v1562 = vmul.f32 %v1488, %v1488
  %v1563 = vmul.f32 %v1489, %v1489
  %v1564 = vmul.f32 %v1490, %v1490
  %v1565 = vmul.f32 %v1491, %v1491
  %v1566 = vmul.f32 %v1492, %v1492
  %v1567 = vmul.f32 %v1493, %v1493
  %v1568 = vmul.f32 %v1494, %v1494
  %v1569 = vmul.f32 %v1495, %v1495
  %v1570 = vmul.f32 %v1496, %v1496
  %v1571 = vmul.f32 %v1497, %v1497
  %v1572 = vmul.f32 %v1498, %v1498
  %v1573 = vmul.f32 %v1499, %v1499
  %v1574 = vmul.f32 %v1500, %v1500
  %v1575 = vmul.f32 %v1501, %v1501
  %v1576 = vmul.f32 %v1502, %v1502
  %v1577 = vmul.f32 %v1503, %v1503
  %v1578 = vadd.f32 %v1546, %v1548
  %v1579 = vadd.f32 %v1578, %v1550
  %v1580 = vadd.f32 %v1579, %v1552
  %v1581 = vadd.f32 %v1580, %v1554
  %v1582 = vadd.f32 %v1581, %v1556
  %v1583 = vadd.f32 %v1582, %v1558
  %v1584 = vadd.f32 %v1583, %v1560
  %v1585 = vadd.f32 %v1584, %v1562
  %v1586 = vadd.f32 %v1585, %v1564
  %v1587 = vadd.f32 %v1586, %v1566
  %v1588 = vadd.f32 %v1587, %v1568
  %v1589 = vadd.f32 %v1588, %v1570
  %v1590 = vadd.f32 %v1589, %v1572
  %v1591 = vadd.f32 %v1590, %v1574
  %v1592 = vadd.f32 %v1591, %v1576
  %v1593 = vrot.slane %v1592, 4
  %v1594 = vadd.f32 %v1592, %v1593
  %v1595 = vrot.slane %v1594, 2
  %v1596 = vadd.f32 %v1594, %v1595
  %v1597 = vrot.slane %v1596, 1
  %v1598 = vadd.f32 %v1596, %v1597
  %v1599 = vadd.f32 %v1547, %v1549
  %v1600 = vadd.f32 %v1599, %v1551
  %v1601 = vadd.f32 %v1600, %v1553
  %v1602 = vadd.f32 %v1601, %v1555
  %v1603 = vadd.f32 %v1602, %v1557
  %v1604 = vadd.f32 %v1603, %v1559
  %v1605 = vadd.f32 %v1604, %v1561
  %v1606 = vadd.f32 %v1605, %v1563
  %v1607 = vadd.f32 %v1606, %v1565
  %v1608 = vadd.f32 %v1607, %v1567
  %v1609 = vadd.f32 %v1608, %v1569
  %v1610 = vadd.f32 %v1609, %v1571
  %v1611 = vadd.f32 %v1610, %v1573
  %v1612 = vadd.f32 %v1611, %v1575
  %v1613 = vadd.f32 %v1612, %v1577
  %v1614 = vrot.slane %v1613, 4
  %v1615 = vadd.f32 %v1613, %v1614
  %v1616 = vrot.slane %v1615, 2
  %v1617 = vadd.f32 %v1615, %v1616
  %v1618 = vrot.slane %v1617, 1
  %v1619 = vadd.f32 %v1617, %v1618
  %v1620 = vsel %vm892, %v1524, %v1598
  %v1621 = vsel %vm892, %v1545, %v1619
  %v1624 = vcombine.low %v1620, %v1621
  %v1626 = vunpack.c.l.s4 1983009808
  %v1627 = vunpack.c.0.s8 %v1626
  %v1628 = vlaneseq
  %v1629 = vshrl.u32 %v1628, 7
  %v1630 = vsub.s32 %v1627, %v1629
  %v1631 = vrot.slane %v1624, %v1630
  %s1633 = scalar_lea.vmem %s6, 4
  %1634 = vst [vmem:[%s1633] sm:$0xf] %v1631
  // Predicated region
  $region22: #{oafilter.5} parent=0 // pred_check
    _
  $region23: #{oafilter.5} parent=0 // pred_check_branch
    %1636 = sbr.rel (0) target = $region25
  $region24: #{oafilter.5} parent=0 // pred_region
    _
  $region25: #{oafilter.5} parent=0 // pred_fallthru
    _
  // Predicated region
  $region26: #{oafilter.5} parent=0 // pred_check
    _
  $region27: #{oafilter.5} parent=0 // pred_check_branch
    %1638 = sbr.rel (0) target = $region29
  $region28: #{oafilter.5} parent=0 // pred_region
    _
  $region29: #{oafilter.5} parent=0 // pred_fallthru
    _
  // Predicated region
  $region30: #{oafilter.5} parent=0 // pred_check
    _
  $region31: #{oafilter.5} parent=0 // pred_check_branch
    %1640 = sbr.rel (0) target = $region33
  $region32: #{oafilter.5} parent=0 // pred_region
    _
  $region33: #{oafilter.5} parent=0 // pred_fallthru
    _
  // Predicated region
  $region34: #{oafilter.5} parent=0 // pred_check
    _
  $region35: #{oafilter.5} parent=0 // pred_check_branch
    %1642 = sbr.rel (0) target = $region37
  $region36: #{oafilter.5} parent=0 // pred_region
    _
  $region37: #{oafilter.5} parent=0 // pred_fallthru
    _

// kernel: oafilter.7
$region0: #{oafilter.7}
  #allocation0 [shape = 'u32[]', space=smem, size = 0x4, offset = 0x4, fixed_abs, tag = 'smem constant byte address 0x4 - core index']
  #allocation1 [shape = 'u32[144,128]{1,0:T(1,128)}', space=vmem, size = 0x12000, scoped, tag = 'internal scratch']
  %s0 = inlined_call_operand.vmem [shape: bf16[2,128,256], index: 0, kind: input, shape index: {}]
  %s1 = inlined_call_operand.vmem [shape: f32[2,128,256], index: 1, kind: input, shape index: {}]
  %s2 = inlined_call_operand.vmem [shape: f32[2,128,1], index: 2, kind: input, shape index: {}]
  %s3 = inlined_call_operand.vmem [shape: f32[2,128,1], index: 3, kind: input, shape index: {}]
  %s4 = inlined_call_operand.vmem [shape: bf16[128,128], index: 4, kind: input, shape index: {}]
  %s5 = inlined_call_operand.vmem [shape: f32[128,1], index: 5, kind: input, shape index: {}]
  %s6 = inlined_call_operand.vmem [shape: f32[2,128,256], index: 6, kind: output, shape index: {}]
  %s7 = sld [smem:[#allocation0]]
  $region34: #{oafilter.7} parent=0
    _
  %s9 = ssub.s32 1, %s7
  %s10 = scalar_select 0, %s9, %s7
  // Predicated region
  $region2: #{oafilter.7} parent=0 // pred_check
    _
  $region3: #{oafilter.7} parent=0 // pred_check_branch
    %12 = sbr.rel (0) target = $region5
  $region4: #{oafilter.7} parent=0 // pred_region
    _
  $region5: #{oafilter.7} parent=0 // pred_fallthru
    _
  // Predicated region
  $region6: #{oafilter.7} parent=0 // pred_check
    _
  $region7: #{oafilter.7} parent=0 // pred_check_branch
    %14 = sbr.rel (0) target = $region9
  $region8: #{oafilter.7} parent=0 // pred_region
    _
  $region9: #{oafilter.7} parent=0 // pred_fallthru
    _
  // Predicated region
  $region10: #{oafilter.7} parent=0 // pred_check
    _
  $region11: #{oafilter.7} parent=0 // pred_check_branch
    %16 = sbr.rel (0) target = $region13
  $region12: #{oafilter.7} parent=0 // pred_region
    _
  $region13: #{oafilter.7} parent=0 // pred_fallthru
    _
  // Predicated region
  $region14: #{oafilter.7} parent=0 // pred_check
    _
  $region15: #{oafilter.7} parent=0 // pred_check_branch
    %18 = sbr.rel (0) target = $region17
  $region16: #{oafilter.7} parent=0 // pred_region
    _
  $region17: #{oafilter.7} parent=0 // pred_fallthru
    _
  // Predicated region
  $region18: #{oafilter.7} parent=0 // pred_check
    _
  $region19: #{oafilter.7} parent=0 // pred_check_branch
    %20 = sbr.rel (0) target = $region21
  $region20: #{oafilter.7} parent=0 // pred_region
    _
  $region21: #{oafilter.7} parent=0 // pred_fallthru
    _
  // Predicated region
  $region22: #{oafilter.7} parent=0 // pred_check
    _
  $region23: #{oafilter.7} parent=0 // pred_check_branch
    %22 = sbr.rel (0) target = $region25
  $region24: #{oafilter.7} parent=0 // pred_region
    _
  $region25: #{oafilter.7} parent=0 // pred_fallthru
    _
  %v24 = vld [vmem:[%s4] sm:$0xf]
  %v25 = vld [vmem:[%s4 + $0x4] sm:$0xf]
  %v26 = vld [vmem:[%s4 + $0x8] sm:$0xf]
  %v27 = vld [vmem:[%s4 + $0xc] sm:$0xf]
  %v28 = vld [vmem:[%s4 + $0x10] sm:$0xf]
  %v29 = vld [vmem:[%s4 + $0x14] sm:$0xf]
  %v30 = vld [vmem:[%s4 + $0x18] sm:$0xf]
  %v31 = vld [vmem:[%s4 + $0x1c] sm:$0xf]
  %v32 = vld [vmem:[%s4 + $0x20] sm:$0xf]
  %v33 = vld [vmem:[%s4 + $0x24] sm:$0xf]
  %v34 = vld [vmem:[%s4 + $0x28] sm:$0xf]
  %v35 = vld [vmem:[%s4 + $0x2c] sm:$0xf]
  %v36 = vld [vmem:[%s4 + $0x30] sm:$0xf]
  %v37 = vld [vmem:[%s4 + $0x34] sm:$0xf]
  %v38 = vld [vmem:[%s4 + $0x38] sm:$0xf]
  %v39 = vld [vmem:[%s4 + $0x3c] sm:$0xf]
  %v40 = vld [vmem:[%s5] sm:$0xff]
  %v41 = vld [vmem:[%s5 + $0x8] sm:$0xff]
  %v42 = vld [vmem:[%s5 + $0x10] sm:$0xff]
  %v43 = vld [vmem:[%s5 + $0x18] sm:$0xff]
  %v44 = vld [vmem:[%s5 + $0x20] sm:$0xff]
  %v45 = vld [vmem:[%s5 + $0x28] sm:$0xff]
  %v46 = vld [vmem:[%s5 + $0x30] sm:$0xff]
  %v47 = vld [vmem:[%s5 + $0x38] sm:$0xff]
  %v48 = vld [vmem:[%s5 + $0x40] sm:$0xff]
  %v49 = vld [vmem:[%s5 + $0x48] sm:$0xff]
  %v50 = vld [vmem:[%s5 + $0x50] sm:$0xff]
  %v51 = vld [vmem:[%s5 + $0x58] sm:$0xff]
  %v52 = vld [vmem:[%s5 + $0x60] sm:$0xff]
  %v53 = vld [vmem:[%s5 + $0x68] sm:$0xff]
  %v54 = vld [vmem:[%s5 + $0x70] sm:$0xff]
  %v55 = vld [vmem:[%s5 + $0x78] sm:$0xff]
  %v56 = vld [vmem:[%s0] sm:$0xff]
  %v57 = vld [vmem:[%s0 + $0x8] sm:$0xff]
  %v58 = vld [vmem:[%s0 + $0x10] sm:$0xff]
  %v59 = vld [vmem:[%s0 + $0x18] sm:$0xff]
  %v60 = vld [vmem:[%s0 + $0x20] sm:$0xff]
  %v61 = vld [vmem:[%s0 + $0x28] sm:$0xff]
  %v62 = vld [vmem:[%s0 + $0x30] sm:$0xff]
  %v63 = vld [vmem:[%s0 + $0x38] sm:$0xff]
  %v64 = vld [vmem:[%s0 + $0x40] sm:$0xff]
  %v65 = vld [vmem:[%s0 + $0x48] sm:$0xff]
  %v66 = vld [vmem:[%s0 + $0x50] sm:$0xff]
  %v67 = vld [vmem:[%s0 + $0x58] sm:$0xff]
  %v68 = vld [vmem:[%s0 + $0x60] sm:$0xff]
  %v69 = vld [vmem:[%s0 + $0x68] sm:$0xff]
  %v70 = vld [vmem:[%s0 + $0x70] sm:$0xff]
  %v71 = vld [vmem:[%s0 + $0x78] sm:$0xff]
  %v72 = vunpack.c.l.bf16 %v56
  %v73 = vunpack.c.h.bf16 %v56
  %v74 = vunpack.c.l.bf16 %v57
  %v75 = vunpack.c.h.bf16 %v57
  %v76 = vunpack.c.l.bf16 %v58
  %v77 = vunpack.c.h.bf16 %v58
  %v78 = vunpack.c.l.bf16 %v59
  %v79 = vunpack.c.h.bf16 %v59
  %v80 = vunpack.c.l.bf16 %v60
  %v81 = vunpack.c.h.bf16 %v60
  %v82 = vunpack.c.l.bf16 %v61
  %v83 = vunpack.c.h.bf16 %v61
  %v84 = vunpack.c.l.bf16 %v62
  %v85 = vunpack.c.h.bf16 %v62
  %v86 = vunpack.c.l.bf16 %v63
  %v87 = vunpack.c.h.bf16 %v63
  %v88 = vunpack.c.l.bf16 %v64
  %v89 = vunpack.c.h.bf16 %v64
  %v90 = vunpack.c.l.bf16 %v65
  %v91 = vunpack.c.h.bf16 %v65
  %v92 = vunpack.c.l.bf16 %v66
  %v93 = vunpack.c.h.bf16 %v66
  %v94 = vunpack.c.l.bf16 %v67
  %v95 = vunpack.c.h.bf16 %v67
  %v96 = vunpack.c.l.bf16 %v68
  %v97 = vunpack.c.h.bf16 %v68
  %v98 = vunpack.c.l.bf16 %v69
  %v99 = vunpack.c.h.bf16 %v69
  %v100 = vunpack.c.l.bf16 %v70
  %v101 = vunpack.c.h.bf16 %v70
  %v102 = vunpack.c.l.bf16 %v71
  %v103 = vunpack.c.h.bf16 %v71
  %v104 = vld [vmem:[%s2] sm:$0xff]
  %v105 = vld [vmem:[%s2 + $0x8] sm:$0xff]
  %v106 = vld [vmem:[%s2 + $0x10] sm:$0xff]
  %v107 = vld [vmem:[%s2 + $0x18] sm:$0xff]
  %v108 = vld [vmem:[%s2 + $0x20] sm:$0xff]
  %v109 = vld [vmem:[%s2 + $0x28] sm:$0xff]
  %v110 = vld [vmem:[%s2 + $0x30] sm:$0xff]
  %v111 = vld [vmem:[%s2 + $0x38] sm:$0xff]
  %v112 = vld [vmem:[%s2 + $0x40] sm:$0xff]
  %v113 = vld [vmem:[%s2 + $0x48] sm:$0xff]
  %v114 = vld [vmem:[%s2 + $0x50] sm:$0xff]
  %v115 = vld [vmem:[%s2 + $0x58] sm:$0xff]
  %v116 = vld [vmem:[%s2 + $0x60] sm:$0xff]
  %v117 = vld [vmem:[%s2 + $0x68] sm:$0xff]
  %v118 = vld [vmem:[%s2 + $0x70] sm:$0xff]
  %v119 = vld [vmem:[%s2 + $0x78] sm:$0xff]
  %121 = vset.pattern.permute.xlu0 0
  %122 = vperm.xlu0 %121, %v104
  %v123 = vpop.permute.xlu0 %122
  %126 = vset.pattern.permute.xlu0 0
  %127 = vperm.xlu0 %126, %v105
  %v128 = vpop.permute.xlu0 %127
  %131 = vset.pattern.permute.xlu0 0
  %132 = vperm.xlu0 %131, %v106
  %v133 = vpop.permute.xlu0 %132
  %136 = vset.pattern.permute.xlu0 0
  %137 = vperm.xlu0 %136, %v107
  %v138 = vpop.permute.xlu0 %137
  %141 = vset.pattern.permute.xlu0 0
  %142 = vperm.xlu0 %141, %v108
  %v143 = vpop.permute.xlu0 %142
  %146 = vset.pattern.permute.xlu0 0
  %147 = vperm.xlu0 %146, %v109
  %v148 = vpop.permute.xlu0 %147
  %151 = vset.pattern.permute.xlu0 0
  %152 = vperm.xlu0 %151, %v110
  %v153 = vpop.permute.xlu0 %152
  %156 = vset.pattern.permute.xlu0 0
  %157 = vperm.xlu0 %156, %v111
  %v158 = vpop.permute.xlu0 %157
  %161 = vset.pattern.permute.xlu0 0
  %162 = vperm.xlu0 %161, %v112
  %v163 = vpop.permute.xlu0 %162
  %166 = vset.pattern.permute.xlu0 0
  %167 = vperm.xlu0 %166, %v113
  %v168 = vpop.permute.xlu0 %167
  %171 = vset.pattern.permute.xlu0 0
  %172 = vperm.xlu0 %171, %v114
  %v173 = vpop.permute.xlu0 %172
  %176 = vset.pattern.permute.xlu0 0
  %177 = vperm.xlu0 %176, %v115
  %v178 = vpop.permute.xlu0 %177
  %181 = vset.pattern.permute.xlu0 0
  %182 = vperm.xlu0 %181, %v116
  %v183 = vpop.permute.xlu0 %182
  %186 = vset.pattern.permute.xlu0 0
  %187 = vperm.xlu0 %186, %v117
  %v188 = vpop.permute.xlu0 %187
  %191 = vset.pattern.permute.xlu0 0
  %192 = vperm.xlu0 %191, %v118
  %v193 = vpop.permute.xlu0 %192
  %196 = vset.pattern.permute.xlu0 0
  %197 = vperm.xlu0 %196, %v119
  %v198 = vpop.permute.xlu0 %197
  %v200 = vmul.f32 %v72, %v123
  %v201 = vmul.f32 %v73, %v123
  %v202 = vmul.f32 %v74, %v128
  %v203 = vmul.f32 %v75, %v128
  %v204 = vmul.f32 %v76, %v133
  %v205 = vmul.f32 %v77, %v133
  %v206 = vmul.f32 %v78, %v138
  %v207 = vmul.f32 %v79, %v138
  %v208 = vmul.f32 %v80, %v143
  %v209 = vmul.f32 %v81, %v143
  %v210 = vmul.f32 %v82, %v148
  %v211 = vmul.f32 %v83, %v148
  %v212 = vmul.f32 %v84, %v153
  %v213 = vmul.f32 %v85, %v153
  %v214 = vmul.f32 %v86, %v158
  %v215 = vmul.f32 %v87, %v158
  %v216 = vmul.f32 %v88, %v163
  %v217 = vmul.f32 %v89, %v163
  %v218 = vmul.f32 %v90, %v168
  %v219 = vmul.f32 %v91, %v168
  %v220 = vmul.f32 %v92, %v173
  %v221 = vmul.f32 %v93, %v173
  %v222 = vmul.f32 %v94, %v178
  %v223 = vmul.f32 %v95, %v178
  %v224 = vmul.f32 %v96, %v183
  %v225 = vmul.f32 %v97, %v183
  %v226 = vmul.f32 %v98, %v188
  %v227 = vmul.f32 %v99, %v188
  %v228 = vmul.f32 %v100, %v193
  %v229 = vmul.f32 %v101, %v193
  %v230 = vmul.f32 %v102, %v198
  %v231 = vmul.f32 %v103, %v198
  %v232 = vld [vmem:[%s3] sm:$0xff]
  %v233 = vld [vmem:[%s3 + $0x8] sm:$0xff]
  %v234 = vld [vmem:[%s3 + $0x10] sm:$0xff]
  %v235 = vld [vmem:[%s3 + $0x18] sm:$0xff]
  %v236 = vld [vmem:[%s3 + $0x20] sm:$0xff]
  %v237 = vld [vmem:[%s3 + $0x28] sm:$0xff]
  %v238 = vld [vmem:[%s3 + $0x30] sm:$0xff]
  %v239 = vld [vmem:[%s3 + $0x38] sm:$0xff]
  %v240 = vld [vmem:[%s3 + $0x40] sm:$0xff]
  %v241 = vld [vmem:[%s3 + $0x48] sm:$0xff]
  %v242 = vld [vmem:[%s3 + $0x50] sm:$0xff]
  %v243 = vld [vmem:[%s3 + $0x58] sm:$0xff]
  %v244 = vld [vmem:[%s3 + $0x60] sm:$0xff]
  %v245 = vld [vmem:[%s3 + $0x68] sm:$0xff]
  %v246 = vld [vmem:[%s3 + $0x70] sm:$0xff]
  %v247 = vld [vmem:[%s3 + $0x78] sm:$0xff]
  %249 = vset.pattern.permute.xlu0 0
  %250 = vperm.xlu0 %249, %v232
  %v251 = vpop.permute.xlu0 %250
  %254 = vset.pattern.permute.xlu0 0
  %255 = vperm.xlu0 %254, %v233
  %v256 = vpop.permute.xlu0 %255
  %259 = vset.pattern.permute.xlu0 0
  %260 = vperm.xlu0 %259, %v234
  %v261 = vpop.permute.xlu0 %260
  %264 = vset.pattern.permute.xlu0 0
  %265 = vperm.xlu0 %264, %v235
  %v266 = vpop.permute.xlu0 %265
  %269 = vset.pattern.permute.xlu0 0
  %270 = vperm.xlu0 %269, %v236
  %v271 = vpop.permute.xlu0 %270
  %274 = vset.pattern.permute.xlu0 0
  %275 = vperm.xlu0 %274, %v237
  %v276 = vpop.permute.xlu0 %275
  %279 = vset.pattern.permute.xlu0 0
  %280 = vperm.xlu0 %279, %v238
  %v281 = vpop.permute.xlu0 %280
  %284 = vset.pattern.permute.xlu0 0
  %285 = vperm.xlu0 %284, %v239
  %v286 = vpop.permute.xlu0 %285
  %289 = vset.pattern.permute.xlu0 0
  %290 = vperm.xlu0 %289, %v240
  %v291 = vpop.permute.xlu0 %290
  %294 = vset.pattern.permute.xlu0 0
  %295 = vperm.xlu0 %294, %v241
  %v296 = vpop.permute.xlu0 %295
  %299 = vset.pattern.permute.xlu0 0
  %300 = vperm.xlu0 %299, %v242
  %v301 = vpop.permute.xlu0 %300
  %304 = vset.pattern.permute.xlu0 0
  %305 = vperm.xlu0 %304, %v243
  %v306 = vpop.permute.xlu0 %305
  %309 = vset.pattern.permute.xlu0 0
  %310 = vperm.xlu0 %309, %v244
  %v311 = vpop.permute.xlu0 %310
  %314 = vset.pattern.permute.xlu0 0
  %315 = vperm.xlu0 %314, %v245
  %v316 = vpop.permute.xlu0 %315
  %319 = vset.pattern.permute.xlu0 0
  %320 = vperm.xlu0 %319, %v246
  %v321 = vpop.permute.xlu0 %320
  %324 = vset.pattern.permute.xlu0 0
  %325 = vperm.xlu0 %324, %v247
  %v326 = vpop.permute.xlu0 %325
  %v328 = vadd.f32 %v200, %v251
  %v329 = vadd.f32 %v201, %v251
  %v330 = vadd.f32 %v202, %v256
  %v331 = vadd.f32 %v203, %v256
  %v332 = vadd.f32 %v204, %v261
  %v333 = vadd.f32 %v205, %v261
  %v334 = vadd.f32 %v206, %v266
  %v335 = vadd.f32 %v207, %v266
  %v336 = vadd.f32 %v208, %v271
  %v337 = vadd.f32 %v209, %v271
  %v338 = vadd.f32 %v210, %v276
  %v339 = vadd.f32 %v211, %v276
  %v340 = vadd.f32 %v212, %v281
  %v341 = vadd.f32 %v213, %v281
  %v342 = vadd.f32 %v214, %v286
  %v343 = vadd.f32 %v215, %v286
  %v344 = vadd.f32 %v216, %v291
  %v345 = vadd.f32 %v217, %v291
  %v346 = vadd.f32 %v218, %v296
  %v347 = vadd.f32 %v219, %v296
  %v348 = vadd.f32 %v220, %v301
  %v349 = vadd.f32 %v221, %v301
  %v350 = vadd.f32 %v222, %v306
  %v351 = vadd.f32 %v223, %v306
  %v352 = vadd.f32 %v224, %v311
  %v353 = vadd.f32 %v225, %v311
  %v354 = vadd.f32 %v226, %v316
  %v355 = vadd.f32 %v227, %v316
  %v356 = vadd.f32 %v228, %v321
  %v357 = vadd.f32 %v229, %v321
  %v358 = vadd.f32 %v230, %v326
  %v359 = vadd.f32 %v231, %v326
  %v360 = vmax.f32 %v328, 0.0
  %v361 = vmax.f32 %v329, 0.0
  %v362 = vmax.f32 %v330, 0.0
  %v363 = vmax.f32 %v331, 0.0
  %v364 = vmax.f32 %v332, 0.0
  %v365 = vmax.f32 %v333, 0.0
  %v366 = vmax.f32 %v334, 0.0
  %v367 = vmax.f32 %v335, 0.0
  %v368 = vmax.f32 %v336, 0.0
  %v369 = vmax.f32 %v337, 0.0
  %v370 = vmax.f32 %v338, 0.0
  %v371 = vmax.f32 %v339, 0.0
  %v372 = vmax.f32 %v340, 0.0
  %v373 = vmax.f32 %v341, 0.0
  %v374 = vmax.f32 %v342, 0.0
  %v375 = vmax.f32 %v343, 0.0
  %v376 = vmax.f32 %v344, 0.0
  %v377 = vmax.f32 %v345, 0.0
  %v378 = vmax.f32 %v346, 0.0
  %v379 = vmax.f32 %v347, 0.0
  %v380 = vmax.f32 %v348, 0.0
  %v381 = vmax.f32 %v349, 0.0
  %v382 = vmax.f32 %v350, 0.0
  %v383 = vmax.f32 %v351, 0.0
  %v384 = vmax.f32 %v352, 0.0
  %v385 = vmax.f32 %v353, 0.0
  %v386 = vmax.f32 %v354, 0.0
  %v387 = vmax.f32 %v355, 0.0
  %v388 = vmax.f32 %v356, 0.0
  %v389 = vmax.f32 %v357, 0.0
  %v390 = vmax.f32 %v358, 0.0
  %v391 = vmax.f32 %v359, 0.0
  %v392 = vpack.c.bf16 %v362, %v360
  %v393 = vpack.c.bf16 %v363, %v361
  %v394 = vpack.c.bf16 %v366, %v364
  %v395 = vpack.c.bf16 %v367, %v365
  %v396 = vpack.c.bf16 %v370, %v368
  %v397 = vpack.c.bf16 %v371, %v369
  %v398 = vpack.c.bf16 %v374, %v372
  %v399 = vpack.c.bf16 %v375, %v373
  %v400 = vpack.c.bf16 %v378, %v376
  %v401 = vpack.c.bf16 %v379, %v377
  %v402 = vpack.c.bf16 %v382, %v380
  %v403 = vpack.c.bf16 %v383, %v381
  %v404 = vpack.c.bf16 %v386, %v384
  %v405 = vpack.c.bf16 %v387, %v385
  %v406 = vpack.c.bf16 %v390, %v388
  %v407 = vpack.c.bf16 %v391, %v389
  %409 = vset.pattern.permute.xlu0 0
  %410 = vperm.xlu0 %409, %v40
  %v411 = vpop.permute.xlu0 %410
  %414 = vset.pattern.permute.xlu0 0
  %415 = vperm.xlu0 %414, %v41
  %v416 = vpop.permute.xlu0 %415
  %419 = vset.pattern.permute.xlu0 0
  %420 = vperm.xlu0 %419, %v42
  %v421 = vpop.permute.xlu0 %420
  %424 = vset.pattern.permute.xlu0 0
  %425 = vperm.xlu0 %424, %v43
  %v426 = vpop.permute.xlu0 %425
  %429 = vset.pattern.permute.xlu0 0
  %430 = vperm.xlu0 %429, %v44
  %v431 = vpop.permute.xlu0 %430
  %434 = vset.pattern.permute.xlu0 0
  %435 = vperm.xlu0 %434, %v45
  %v436 = vpop.permute.xlu0 %435
  %439 = vset.pattern.permute.xlu0 0
  %440 = vperm.xlu0 %439, %v46
  %v441 = vpop.permute.xlu0 %440
  %444 = vset.pattern.permute.xlu0 0
  %445 = vperm.xlu0 %444, %v47
  %v446 = vpop.permute.xlu0 %445
  %449 = vset.pattern.permute.xlu0 0
  %450 = vperm.xlu0 %449, %v48
  %v451 = vpop.permute.xlu0 %450
  %454 = vset.pattern.permute.xlu0 0
  %455 = vperm.xlu0 %454, %v49
  %v456 = vpop.permute.xlu0 %455
  %459 = vset.pattern.permute.xlu0 0
  %460 = vperm.xlu0 %459, %v50
  %v461 = vpop.permute.xlu0 %460
  %464 = vset.pattern.permute.xlu0 0
  %465 = vperm.xlu0 %464, %v51
  %v466 = vpop.permute.xlu0 %465
  %469 = vset.pattern.permute.xlu0 0
  %470 = vperm.xlu0 %469, %v52
  %v471 = vpop.permute.xlu0 %470
  %474 = vset.pattern.permute.xlu0 0
  %475 = vperm.xlu0 %474, %v53
  %v476 = vpop.permute.xlu0 %475
  %479 = vset.pattern.permute.xlu0 0
  %480 = vperm.xlu0 %479, %v54
  %v481 = vpop.permute.xlu0 %480
  %484 = vset.pattern.permute.xlu0 0
  %485 = vperm.xlu0 %484, %v55
  %v486 = vpop.permute.xlu0 %485
  %v504 = vunpack.c.l.b16 %v24
  %v505 = vunpack.c.l.b16 %v25
  %v506 = vunpack.c.l.b16 %v26
  %v507 = vunpack.c.l.b16 %v27
  %v508 = vunpack.c.l.b16 %v28
  %v509 = vunpack.c.l.b16 %v29
  %v510 = vunpack.c.l.b16 %v30
  %v511 = vunpack.c.l.b16 %v31
  %v512 = vunpack.c.l.b16 %v32
  %v513 = vunpack.c.l.b16 %v33
  %v514 = vunpack.c.l.b16 %v34
  %v515 = vunpack.c.l.b16 %v35
  %v516 = vunpack.c.l.b16 %v36
  %v517 = vunpack.c.l.b16 %v37
  %v518 = vunpack.c.l.b16 %v38
  %v519 = vunpack.c.l.b16 %v39
  %v520 = vpack.c.b16 %v505, %v504
  %v521 = vpack.c.b16 %v507, %v506
  %v522 = vpack.c.b16 %v509, %v508
  %v523 = vpack.c.b16 %v511, %v510
  %v524 = vpack.c.b16 %v513, %v512
  %v525 = vpack.c.b16 %v515, %v514
  %v526 = vpack.c.b16 %v517, %v516
  %v527 = vpack.c.b16 %v519, %v518
  %536 = vmatprep.subr.bf16.mxu0 %v393
  %537 = vmatpush1.bf16.msra.mxu0 %v392
  %538 = vmatprep.subr.bf16.mxu0 %v395
  %539 = vmatpush1.bf16.msra.mxu0 %v394
  %540 = vmatprep.subr.bf16.mxu0 %v397
  %541 = vmatpush1.bf16.msra.mxu0 %v396
  %542 = vmatprep.subr.bf16.mxu0 %v399
  %543 = vmatpush1.bf16.msra.mxu0 %v398
  %544 = vmatprep.subr.bf16.mxu0 %v401
  %545 = vmatpush1.bf16.msra.mxu0 %v400
  %546 = vmatprep.subr.bf16.mxu0 %v403
  %547 = vmatpush1.bf16.msra.mxu0 %v402
  %548 = vmatprep.subr.bf16.mxu0 %v405
  %549 = vmatpush1.bf16.msra.mxu0 %v404
  %550 = vmatprep.subr.bf16.mxu0 %v407
  %551 = vmatpush1.bf16.msra.mxu0 %v406
  %552 = vmatprep.subr.bf16.mxu0 0
  %553 = vmatpush1.bf16.msra.mxu0 0
  %554 = vmatprep.subr.bf16.mxu0 0
  %555 = vmatpush1.bf16.msra.mxu0 0
  %556 = vmatprep.subr.bf16.mxu0 0
  %557 = vmatpush1.bf16.msra.mxu0 0
  %558 = vmatprep.subr.bf16.mxu0 0
  %559 = vmatpush1.bf16.msra.mxu0 0
  %560 = vmatprep.subr.bf16.mxu0 0
  %561 = vmatpush1.bf16.msra.mxu0 0
  %562 = vmatprep.subr.bf16.mxu0 0
  %563 = vmatpush1.bf16.msra.mxu0 0
  %564 = vmatprep.subr.bf16.mxu0 0
  %565 = vmatpush1.bf16.msra.mxu0 0
  %566 = vmatprep.subr.bf16.mxu0 0
  %567 = vmatpush1.bf16.msra.mxu0 0
  %568 = vmatprep.mubr.bf16.mxu0 0
  %569 = vmatmul.mubr.bf16.gmra.mrb[0].mxu0 %v520
  %v570 = vpop.f32.mrb[0].mxu0
  %v571 = vadd.f32 %v411, %v570
  %v572 = vpop.f32.mrb[0].mxu0
  %v573 = vadd.f32 %v411, %v572
  %v574 = vpop.f32.mrb[0].mxu0
  %v575 = vadd.f32 %v416, %v574
  %v576 = vpop.f32.mrb[0].mxu0
  %v577 = vadd.f32 %v416, %v576
  %578 = vmatprep.mubr.bf16.mxu0 0
  %579 = vmatmul.mubr.bf16.gmra.mrb[0].mxu0 %v521
  %v580 = vpop.f32.mrb[0].mxu0
  %v581 = vadd.f32 %v421, %v580
  %v582 = vpop.f32.mrb[0].mxu0
  %v583 = vadd.f32 %v421, %v582
  %v584 = vpop.f32.mrb[0].mxu0
  %v585 = vadd.f32 %v426, %v584
  %v586 = vpop.f32.mrb[0].mxu0
  %v587 = vadd.f32 %v426, %v586
  %588 = vmatprep.mubr.bf16.mxu0 0
  %589 = vmatmul.mubr.bf16.gmra.mrb[0].mxu0 %v522
  %v590 = vpop.f32.mrb[0].mxu0
  %v591 = vadd.f32 %v431, %v590
  %v592 = vpop.f32.mrb[0].mxu0
  %v593 = vadd.f32 %v431, %v592
  %v594 = vpop.f32.mrb[0].mxu0
  %v595 = vadd.f32 %v436, %v594
  %v596 = vpop.f32.mrb[0].mxu0
  %v597 = vadd.f32 %v436, %v596
  %598 = vmatprep.mubr.bf16.mxu0 0
  %599 = vmatmul.mubr.bf16.gmra.mrb[0].mxu0 %v523
  %v600 = vpop.f32.mrb[0].mxu0
  %v601 = vadd.f32 %v441, %v600
  %v602 = vpop.f32.mrb[0].mxu0
  %v603 = vadd.f32 %v441, %v602
  %v604 = vpop.f32.mrb[0].mxu0
  %v605 = vadd.f32 %v446, %v604
  %v606 = vpop.f32.mrb[0].mxu0
  %v607 = vadd.f32 %v446, %v606
  %608 = vmatprep.mubr.bf16.mxu0 0
  %609 = vmatmul.mubr.bf16.gmra.mrb[0].mxu0 %v524
  %v610 = vpop.f32.mrb[0].mxu0
  %v611 = vadd.f32 %v451, %v610
  %v612 = vpop.f32.mrb[0].mxu0
  %v613 = vadd.f32 %v451, %v612
  %v614 = vpop.f32.mrb[0].mxu0
  %v615 = vadd.f32 %v456, %v614
  %v616 = vpop.f32.mrb[0].mxu0
  %v617 = vadd.f32 %v456, %v616
  %618 = vmatprep.mubr.bf16.mxu0 0
  %619 = vmatmul.mubr.bf16.gmra.mrb[0].mxu0 %v525
  %v620 = vpop.f32.mrb[0].mxu0
  %v621 = vadd.f32 %v461, %v620
  %v622 = vpop.f32.mrb[0].mxu0
  %v623 = vadd.f32 %v461, %v622
  %v624 = vpop.f32.mrb[0].mxu0
  %v625 = vadd.f32 %v466, %v624
  %v626 = vpop.f32.mrb[0].mxu0
  %v627 = vadd.f32 %v466, %v626
  %628 = vmatprep.mubr.bf16.mxu0 0
  %629 = vmatmul.mubr.bf16.gmra.mrb[0].mxu0 %v526
  %v630 = vpop.f32.mrb[0].mxu0
  %v631 = vadd.f32 %v471, %v630
  %v632 = vpop.f32.mrb[0].mxu0
  %v633 = vadd.f32 %v471, %v632
  %v634 = vpop.f32.mrb[0].mxu0
  %v635 = vadd.f32 %v476, %v634
  %v636 = vpop.f32.mrb[0].mxu0
  %v637 = vadd.f32 %v476, %v636
  %638 = vmatprep.mubr.bf16.mxu0 0
  %639 = vmatmul.mubr.bf16.gmra.mrb[0].mxu0 %v527
  %v640 = vpop.f32.mrb[0].mxu0
  %v641 = vadd.f32 %v481, %v640
  %v642 = vpop.f32.mrb[0].mxu0
  %v643 = vadd.f32 %v481, %v642
  %v644 = vpop.f32.mrb[0].mxu0
  %v645 = vadd.f32 %v486, %v644
  %v646 = vpop.f32.mrb[0].mxu0
  %v647 = vadd.f32 %v486, %v646
  %648 = vdwg.mxu0
  %v649 = vld [vmem:[%s1] sm:$0xff]
  %v650 = vld [vmem:[%s1 + $0x8] sm:$0xff]
  %v651 = vld [vmem:[%s1 + $0x10] sm:$0xff]
  %v652 = vld [vmem:[%s1 + $0x18] sm:$0xff]
  %v653 = vld [vmem:[%s1 + $0x20] sm:$0xff]
  %v654 = vld [vmem:[%s1 + $0x28] sm:$0xff]
  %v655 = vld [vmem:[%s1 + $0x30] sm:$0xff]
  %v656 = vld [vmem:[%s1 + $0x38] sm:$0xff]
  %v657 = vld [vmem:[%s1 + $0x40] sm:$0xff]
  %v658 = vld [vmem:[%s1 + $0x48] sm:$0xff]
  %v659 = vld [vmem:[%s1 + $0x50] sm:$0xff]
  %v660 = vld [vmem:[%s1 + $0x58] sm:$0xff]
  %v661 = vld [vmem:[%s1 + $0x60] sm:$0xff]
  %v662 = vld [vmem:[%s1 + $0x68] sm:$0xff]
  %v663 = vld [vmem:[%s1 + $0x70] sm:$0xff]
  %v664 = vld [vmem:[%s1 + $0x78] sm:$0xff]
  %v665 = vld [vmem:[%s1 + $0x80] sm:$0xff]
  %v666 = vld [vmem:[%s1 + $0x88] sm:$0xff]
  %v667 = vld [vmem:[%s1 + $0x90] sm:$0xff]
  %v668 = vld [vmem:[%s1 + $0x98] sm:$0xff]
  %v669 = vld [vmem:[%s1 + $0xa0] sm:$0xff]
  %v670 = vld [vmem:[%s1 + $0xa8] sm:$0xff]
  %v671 = vld [vmem:[%s1 + $0xb0] sm:$0xff]
  %v672 = vld [vmem:[%s1 + $0xb8] sm:$0xff]
  %v673 = vld [vmem:[%s1 + $0xc0] sm:$0xff]
  %v674 = vld [vmem:[%s1 + $0xc8] sm:$0xff]
  %v675 = vld [vmem:[%s1 + $0xd0] sm:$0xff]
  %v676 = vld [vmem:[%s1 + $0xd8] sm:$0xff]
  %v677 = vld [vmem:[%s1 + $0xe0] sm:$0xff]
  %v678 = vld [vmem:[%s1 + $0xe8] sm:$0xff]
  %v679 = vld [vmem:[%s1 + $0xf0] sm:$0xff]
  %v680 = vld [vmem:[%s1 + $0xf8] sm:$0xff]
  %v681 = vadd.f32 %v571, %v649
  %v682 = vadd.f32 %v573, %v650
  %v683 = vadd.f32 %v575, %v651
  %v684 = vadd.f32 %v577, %v652
  %v685 = vadd.f32 %v581, %v653
  %v686 = vadd.f32 %v583, %v654
  %v687 = vadd.f32 %v585, %v655
  %v688 = vadd.f32 %v587, %v656
  %v689 = vadd.f32 %v591, %v657
  %v690 = vadd.f32 %v593, %v658
  %v691 = vadd.f32 %v595, %v659
  %v692 = vadd.f32 %v597, %v660
  %v693 = vadd.f32 %v601, %v661
  %v694 = vadd.f32 %v603, %v662
  %v695 = vadd.f32 %v605, %v663
  %v696 = vadd.f32 %v607, %v664
  %v697 = vadd.f32 %v611, %v665
  %v698 = vadd.f32 %v613, %v666
  %v699 = vadd.f32 %v615, %v667
  %v700 = vadd.f32 %v617, %v668
  %v701 = vadd.f32 %v621, %v669
  %v702 = vadd.f32 %v623, %v670
  %v703 = vadd.f32 %v625, %v671
  %v704 = vadd.f32 %v627, %v672
  %v705 = vadd.f32 %v631, %v673
  %v706 = vadd.f32 %v633, %v674
  %v707 = vadd.f32 %v635, %v675
  %v708 = vadd.f32 %v637, %v676
  %v709 = vadd.f32 %v641, %v677
  %v710 = vadd.f32 %v643, %v678
  %v711 = vadd.f32 %v645, %v679
  %v712 = vadd.f32 %v647, %v680
  %713 = vst [vmem:[%s6] sm:$0xff] %v681
  %714 = vst [vmem:[%s6 + $0x8] sm:$0xff] %v682
  %715 = vst [vmem:[%s6 + $0x10] sm:$0xff] %v683
  %716 = vst [vmem:[%s6 + $0x18] sm:$0xff] %v684
  %717 = vst [vmem:[%s6 + $0x20] sm:$0xff] %v685
  %718 = vst [vmem:[%s6 + $0x28] sm:$0xff] %v686
  %719 = vst [vmem:[%s6 + $0x30] sm:$0xff] %v687
  %720 = vst [vmem:[%s6 + $0x38] sm:$0xff] %v688
  %721 = vst [vmem:[%s6 + $0x40] sm:$0xff] %v689
  %722 = vst [vmem:[%s6 + $0x48] sm:$0xff] %v690
  %723 = vst [vmem:[%s6 + $0x50] sm:$0xff] %v691
  %724 = vst [vmem:[%s6 + $0x58] sm:$0xff] %v692
  %725 = vst [vmem:[%s6 + $0x60] sm:$0xff] %v693
  %726 = vst [vmem:[%s6 + $0x68] sm:$0xff] %v694
  %727 = vst [vmem:[%s6 + $0x70] sm:$0xff] %v695
  %728 = vst [vmem:[%s6 + $0x78] sm:$0xff] %v696
  %729 = vst [vmem:[%s6 + $0x80] sm:$0xff] %v697
  %730 = vst [vmem:[%s6 + $0x88] sm:$0xff] %v698
  %731 = vst [vmem:[%s6 + $0x90] sm:$0xff] %v699
  %732 = vst [vmem:[%s6 + $0x98] sm:$0xff] %v700
  %733 = vst [vmem:[%s6 + $0xa0] sm:$0xff] %v701
  %734 = vst [vmem:[%s6 + $0xa8] sm:$0xff] %v702
  %735 = vst [vmem:[%s6 + $0xb0] sm:$0xff] %v703
  %736 = vst [vmem:[%s6 + $0xb8] sm:$0xff] %v704
  %737 = vst [vmem:[%s6 + $0xc0] sm:$0xff] %v705
  %738 = vst [vmem:[%s6 + $0xc8] sm:$0xff] %v706
  %739 = vst [vmem:[%s6 + $0xd0] sm:$0xff] %v707
  %740 = vst [vmem:[%s6 + $0xd8] sm:$0xff] %v708
  %741 = vst [vmem:[%s6 + $0xe0] sm:$0xff] %v709
  %742 = vst [vmem:[%s6 + $0xe8] sm:$0xff] %v710
  %743 = vst [vmem:[%s6 + $0xf0] sm:$0xff] %v711
  %744 = vst [vmem:[%s6 + $0xf8] sm:$0xff] %v712
  %s745 = scalar_lea.vmem %s0, 128
  %v746 = vld [vmem:[%s745] sm:$0xff]
  %v747 = vld [vmem:[%s745 + $0x8] sm:$0xff]
  %v748 = vld [vmem:[%s745 + $0x10] sm:$0xff]
  %v749 = vld [vmem:[%s745 + $0x18] sm:$0xff]
  %v750 = vld [vmem:[%s745 + $0x20] sm:$0xff]
  %v751 = vld [vmem:[%s745 + $0x28] sm:$0xff]
  %v752 = vld [vmem:[%s745 + $0x30] sm:$0xff]
  %v753 = vld [vmem:[%s745 + $0x38] sm:$0xff]
  %v754 = vld [vmem:[%s745 + $0x40] sm:$0xff]
  %v755 = vld [vmem:[%s745 + $0x48] sm:$0xff]
  %v756 = vld [vmem:[%s745 + $0x50] sm:$0xff]
  %v757 = vld [vmem:[%s745 + $0x58] sm:$0xff]
  %v758 = vld [vmem:[%s745 + $0x60] sm:$0xff]
  %v759 = vld [vmem:[%s745 + $0x68] sm:$0xff]
  %v760 = vld [vmem:[%s745 + $0x70] sm:$0xff]
  %v761 = vld [vmem:[%s745 + $0x78] sm:$0xff]
  %v762 = vunpack.c.l.bf16 %v746
  %v763 = vunpack.c.h.bf16 %v746
  %v764 = vunpack.c.l.bf16 %v747
  %v765 = vunpack.c.h.bf16 %v747
  %v766 = vunpack.c.l.bf16 %v748
  %v767 = vunpack.c.h.bf16 %v748
  %v768 = vunpack.c.l.bf16 %v749
  %v769 = vunpack.c.h.bf16 %v749
  %v770 = vunpack.c.l.bf16 %v750
  %v771 = vunpack.c.h.bf16 %v750
  %v772 = vunpack.c.l.bf16 %v751
  %v773 = vunpack.c.h.bf16 %v751
  %v774 = vunpack.c.l.bf16 %v752
  %v775 = vunpack.c.h.bf16 %v752
  %v776 = vunpack.c.l.bf16 %v753
  %v777 = vunpack.c.h.bf16 %v753
  %v778 = vunpack.c.l.bf16 %v754
  %v779 = vunpack.c.h.bf16 %v754
  %v780 = vunpack.c.l.bf16 %v755
  %v781 = vunpack.c.h.bf16 %v755
  %v782 = vunpack.c.l.bf16 %v756
  %v783 = vunpack.c.h.bf16 %v756
  %v784 = vunpack.c.l.bf16 %v757
  %v785 = vunpack.c.h.bf16 %v757
  %v786 = vunpack.c.l.bf16 %v758
  %v787 = vunpack.c.h.bf16 %v758
  %v788 = vunpack.c.l.bf16 %v759
  %v789 = vunpack.c.h.bf16 %v759
  %v790 = vunpack.c.l.bf16 %v760
  %v791 = vunpack.c.h.bf16 %v760
  %v792 = vunpack.c.l.bf16 %v761
  %v793 = vunpack.c.h.bf16 %v761
  %s794 = scalar_lea.vmem %s2, 128
  %v795 = vld [vmem:[%s794] sm:$0xff]
  %v796 = vld [vmem:[%s794 + $0x8] sm:$0xff]
  %v797 = vld [vmem:[%s794 + $0x10] sm:$0xff]
  %v798 = vld [vmem:[%s794 + $0x18] sm:$0xff]
  %v799 = vld [vmem:[%s794 + $0x20] sm:$0xff]
  %v800 = vld [vmem:[%s794 + $0x28] sm:$0xff]
  %v801 = vld [vmem:[%s794 + $0x30] sm:$0xff]
  %v802 = vld [vmem:[%s794 + $0x38] sm:$0xff]
  %v803 = vld [vmem:[%s794 + $0x40] sm:$0xff]
  %v804 = vld [vmem:[%s794 + $0x48] sm:$0xff]
  %v805 = vld [vmem:[%s794 + $0x50] sm:$0xff]
  %v806 = vld [vmem:[%s794 + $0x58] sm:$0xff]
  %v807 = vld [vmem:[%s794 + $0x60] sm:$0xff]
  %v808 = vld [vmem:[%s794 + $0x68] sm:$0xff]
  %v809 = vld [vmem:[%s794 + $0x70] sm:$0xff]
  %v810 = vld [vmem:[%s794 + $0x78] sm:$0xff]
  %812 = vset.pattern.permute.xlu0 0
  %813 = vperm.xlu0 %812, %v795
  %v814 = vpop.permute.xlu0 %813
  %817 = vset.pattern.permute.xlu0 0
  %818 = vperm.xlu0 %817, %v796
  %v819 = vpop.permute.xlu0 %818
  %822 = vset.pattern.permute.xlu0 0
  %823 = vperm.xlu0 %822, %v797
  %v824 = vpop.permute.xlu0 %823
  %827 = vset.pattern.permute.xlu0 0
  %828 = vperm.xlu0 %827, %v798
  %v829 = vpop.permute.xlu0 %828
  %832 = vset.pattern.permute.xlu0 0
  %833 = vperm.xlu0 %832, %v799
  %v834 = vpop.permute.xlu0 %833
  %837 = vset.pattern.permute.xlu0 0
  %838 = vperm.xlu0 %837, %v800
  %v839 = vpop.permute.xlu0 %838
  %842 = vset.pattern.permute.xlu0 0
  %843 = vperm.xlu0 %842, %v801
  %v844 = vpop.permute.xlu0 %843
  %847 = vset.pattern.permute.xlu0 0
  %848 = vperm.xlu0 %847, %v802
  %v849 = vpop.permute.xlu0 %848
  %852 = vset.pattern.permute.xlu0 0
  %853 = vperm.xlu0 %852, %v803
  %v854 = vpop.permute.xlu0 %853
  %857 = vset.pattern.permute.xlu0 0
  %858 = vperm.xlu0 %857, %v804
  %v859 = vpop.permute.xlu0 %858
  %862 = vset.pattern.permute.xlu0 0
  %863 = vperm.xlu0 %862, %v805
  %v864 = vpop.permute.xlu0 %863
  %867 = vset.pattern.permute.xlu0 0
  %868 = vperm.xlu0 %867, %v806
  %v869 = vpop.permute.xlu0 %868
  %872 = vset.pattern.permute.xlu0 0
  %873 = vperm.xlu0 %872, %v807
  %v874 = vpop.permute.xlu0 %873
  %877 = vset.pattern.permute.xlu0 0
  %878 = vperm.xlu0 %877, %v808
  %v879 = vpop.permute.xlu0 %878
  %882 = vset.pattern.permute.xlu0 0
  %883 = vperm.xlu0 %882, %v809
  %v884 = vpop.permute.xlu0 %883
  %887 = vset.pattern.permute.xlu0 0
  %888 = vperm.xlu0 %887, %v810
  %v889 = vpop.permute.xlu0 %888
  %v891 = vmul.f32 %v762, %v814
  %v892 = vmul.f32 %v763, %v814
  %v893 = vmul.f32 %v764, %v819
  %v894 = vmul.f32 %v765, %v819
  %v895 = vmul.f32 %v766, %v824
  %v896 = vmul.f32 %v767, %v824
  %v897 = vmul.f32 %v768, %v829
  %v898 = vmul.f32 %v769, %v829
  %v899 = vmul.f32 %v770, %v834
  %v900 = vmul.f32 %v771, %v834
  %v901 = vmul.f32 %v772, %v839
  %v902 = vmul.f32 %v773, %v839
  %v903 = vmul.f32 %v774, %v844
  %v904 = vmul.f32 %v775, %v844
  %v905 = vmul.f32 %v776, %v849
  %v906 = vmul.f32 %v777, %v849
  %v907 = vmul.f32 %v778, %v854
  %v908 = vmul.f32 %v779, %v854
  %v909 = vmul.f32 %v780, %v859
  %v910 = vmul.f32 %v781, %v859
  %v911 = vmul.f32 %v782, %v864
  %v912 = vmul.f32 %v783, %v864
  %v913 = vmul.f32 %v784, %v869
  %v914 = vmul.f32 %v785, %v869
  %v915 = vmul.f32 %v786, %v874
  %v916 = vmul.f32 %v787, %v874
  %v917 = vmul.f32 %v788, %v879
  %v918 = vmul.f32 %v789, %v879
  %v919 = vmul.f32 %v790, %v884
  %v920 = vmul.f32 %v791, %v884
  %v921 = vmul.f32 %v792, %v889
  %v922 = vmul.f32 %v793, %v889
  %s923 = scalar_lea.vmem %s3, 128
  %v924 = vld [vmem:[%s923] sm:$0xff]
  %v925 = vld [vmem:[%s923 + $0x8] sm:$0xff]
  %v926 = vld [vmem:[%s923 + $0x10] sm:$0xff]
  %v927 = vld [vmem:[%s923 + $0x18] sm:$0xff]
  %v928 = vld [vmem:[%s923 + $0x20] sm:$0xff]
  %v929 = vld [vmem:[%s923 + $0x28] sm:$0xff]
  %v930 = vld [vmem:[%s923 + $0x30] sm:$0xff]
  %v931 = vld [vmem:[%s923 + $0x38] sm:$0xff]
  %v932 = vld [vmem:[%s923 + $0x40] sm:$0xff]
  %v933 = vld [vmem:[%s923 + $0x48] sm:$0xff]
  %v934 = vld [vmem:[%s923 + $0x50] sm:$0xff]
  %v935 = vld [vmem:[%s923 + $0x58] sm:$0xff]
  %v936 = vld [vmem:[%s923 + $0x60] sm:$0xff]
  %v937 = vld [vmem:[%s923 + $0x68] sm:$0xff]
  %v938 = vld [vmem:[%s923 + $0x70] sm:$0xff]
  %v939 = vld [vmem:[%s923 + $0x78] sm:$0xff]
  %941 = vset.pattern.permute.xlu0 0
  %942 = vperm.xlu0 %941, %v924
  %v943 = vpop.permute.xlu0 %942
  %946 = vset.pattern.permute.xlu0 0
  %947 = vperm.xlu0 %946, %v925
  %v948 = vpop.permute.xlu0 %947
  %951 = vset.pattern.permute.xlu0 0
  %952 = vperm.xlu0 %951, %v926
  %v953 = vpop.permute.xlu0 %952
  %956 = vset.pattern.permute.xlu0 0
  %957 = vperm.xlu0 %956, %v927
  %v958 = vpop.permute.xlu0 %957
  %961 = vset.pattern.permute.xlu0 0
  %962 = vperm.xlu0 %961, %v928
  %v963 = vpop.permute.xlu0 %962
  %966 = vset.pattern.permute.xlu0 0
  %967 = vperm.xlu0 %966, %v929
  %v968 = vpop.permute.xlu0 %967
  %971 = vset.pattern.permute.xlu0 0
  %972 = vperm.xlu0 %971, %v930
  %v973 = vpop.permute.xlu0 %972
  %976 = vset.pattern.permute.xlu0 0
  %977 = vperm.xlu0 %976, %v931
  %v978 = vpop.permute.xlu0 %977
  %981 = vset.pattern.permute.xlu0 0
  %982 = vperm.xlu0 %981, %v932
  %v983 = vpop.permute.xlu0 %982
  %986 = vset.pattern.permute.xlu0 0
  %987 = vperm.xlu0 %986, %v933
  %v988 = vpop.permute.xlu0 %987
  %991 = vset.pattern.permute.xlu0 0
  %992 = vperm.xlu0 %991, %v934
  %v993 = vpop.permute.xlu0 %992
  %996 = vset.pattern.permute.xlu0 0
  %997 = vperm.xlu0 %996, %v935
  %v998 = vpop.permute.xlu0 %997
  %1001 = vset.pattern.permute.xlu0 0
  %1002 = vperm.xlu0 %1001, %v936
  %v1003 = vpop.permute.xlu0 %1002
  %1006 = vset.pattern.permute.xlu0 0
  %1007 = vperm.xlu0 %1006, %v937
  %v1008 = vpop.permute.xlu0 %1007
  %1011 = vset.pattern.permute.xlu0 0
  %1012 = vperm.xlu0 %1011, %v938
  %v1013 = vpop.permute.xlu0 %1012
  %1016 = vset.pattern.permute.xlu0 0
  %1017 = vperm.xlu0 %1016, %v939
  %v1018 = vpop.permute.xlu0 %1017
  %v1020 = vadd.f32 %v891, %v943
  %v1021 = vadd.f32 %v892, %v943
  %v1022 = vadd.f32 %v893, %v948
  %v1023 = vadd.f32 %v894, %v948
  %v1024 = vadd.f32 %v895, %v953
  %v1025 = vadd.f32 %v896, %v953
  %v1026 = vadd.f32 %v897, %v958
  %v1027 = vadd.f32 %v898, %v958
  %v1028 = vadd.f32 %v899, %v963
  %v1029 = vadd.f32 %v900, %v963
  %v1030 = vadd.f32 %v901, %v968
  %v1031 = vadd.f32 %v902, %v968
  %v1032 = vadd.f32 %v903, %v973
  %v1033 = vadd.f32 %v904, %v973
  %v1034 = vadd.f32 %v905, %v978
  %v1035 = vadd.f32 %v906, %v978
  %v1036 = vadd.f32 %v907, %v983
  %v1037 = vadd.f32 %v908, %v983
  %v1038 = vadd.f32 %v909, %v988
  %v1039 = vadd.f32 %v910, %v988
  %v1040 = vadd.f32 %v911, %v993
  %v1041 = vadd.f32 %v912, %v993
  %v1042 = vadd.f32 %v913, %v998
  %v1043 = vadd.f32 %v914, %v998
  %v1044 = vadd.f32 %v915, %v1003
  %v1045 = vadd.f32 %v916, %v1003
  %v1046 = vadd.f32 %v917, %v1008
  %v1047 = vadd.f32 %v918, %v1008
  %v1048 = vadd.f32 %v919, %v1013
  %v1049 = vadd.f32 %v920, %v1013
  %v1050 = vadd.f32 %v921, %v1018
  %v1051 = vadd.f32 %v922, %v1018
  %v1052 = vmax.f32 %v1020, 0.0
  %v1053 = vmax.f32 %v1021, 0.0
  %v1054 = vmax.f32 %v1022, 0.0
  %v1055 = vmax.f32 %v1023, 0.0
  %v1056 = vmax.f32 %v1024, 0.0
  %v1057 = vmax.f32 %v1025, 0.0
  %v1058 = vmax.f32 %v1026, 0.0
  %v1059 = vmax.f32 %v1027, 0.0
  %v1060 = vmax.f32 %v1028, 0.0
  %v1061 = vmax.f32 %v1029, 0.0
  %v1062 = vmax.f32 %v1030, 0.0
  %v1063 = vmax.f32 %v1031, 0.0
  %v1064 = vmax.f32 %v1032, 0.0
  %v1065 = vmax.f32 %v1033, 0.0
  %v1066 = vmax.f32 %v1034, 0.0
  %v1067 = vmax.f32 %v1035, 0.0
  %v1068 = vmax.f32 %v1036, 0.0
  %v1069 = vmax.f32 %v1037, 0.0
  %v1070 = vmax.f32 %v1038, 0.0
  %v1071 = vmax.f32 %v1039, 0.0
  %v1072 = vmax.f32 %v1040, 0.0
  %v1073 = vmax.f32 %v1041, 0.0
  %v1074 = vmax.f32 %v1042, 0.0
  %v1075 = vmax.f32 %v1043, 0.0
  %v1076 = vmax.f32 %v1044, 0.0
  %v1077 = vmax.f32 %v1045, 0.0
  %v1078 = vmax.f32 %v1046, 0.0
  %v1079 = vmax.f32 %v1047, 0.0
  %v1080 = vmax.f32 %v1048, 0.0
  %v1081 = vmax.f32 %v1049, 0.0
  %v1082 = vmax.f32 %v1050, 0.0
  %v1083 = vmax.f32 %v1051, 0.0
  %v1084 = vpack.c.bf16 %v1054, %v1052
  %v1085 = vpack.c.bf16 %v1055, %v1053
  %v1086 = vpack.c.bf16 %v1058, %v1056
  %v1087 = vpack.c.bf16 %v1059, %v1057
  %v1088 = vpack.c.bf16 %v1062, %v1060
  %v1089 = vpack.c.bf16 %v1063, %v1061
  %v1090 = vpack.c.bf16 %v1066, %v1064
  %v1091 = vpack.c.bf16 %v1067, %v1065
  %v1092 = vpack.c.bf16 %v1070, %v1068
  %v1093 = vpack.c.bf16 %v1071, %v1069
  %v1094 = vpack.c.bf16 %v1074, %v1072
  %v1095 = vpack.c.bf16 %v1075, %v1073
  %v1096 = vpack.c.bf16 %v1078, %v1076
  %v1097 = vpack.c.bf16 %v1079, %v1077
  %v1098 = vpack.c.bf16 %v1082, %v1080
  %v1099 = vpack.c.bf16 %v1083, %v1081
  %1100 = vmatprep.subr.bf16.mxu0 %v1085
  %1101 = vmatpush1.bf16.msra.mxu0 %v1084
  %1102 = vmatprep.subr.bf16.mxu0 %v1087
  %1103 = vmatpush1.bf16.msra.mxu0 %v1086
  %1104 = vmatprep.subr.bf16.mxu0 %v1089
  %1105 = vmatpush1.bf16.msra.mxu0 %v1088
  %1106 = vmatprep.subr.bf16.mxu0 %v1091
  %1107 = vmatpush1.bf16.msra.mxu0 %v1090
  %1108 = vmatprep.subr.bf16.mxu0 %v1093
  %1109 = vmatpush1.bf16.msra.mxu0 %v1092
  %1110 = vmatprep.subr.bf16.mxu0 %v1095
  %1111 = vmatpush1.bf16.msra.mxu0 %v1094
  %1112 = vmatprep.subr.bf16.mxu0 %v1097
  %1113 = vmatpush1.bf16.msra.mxu0 %v1096
  %1114 = vmatprep.subr.bf16.mxu0 %v1099
  %1115 = vmatpush1.bf16.msra.mxu0 %v1098
  %1116 = vmatprep.subr.bf16.mxu0 0
  %1117 = vmatpush1.bf16.msra.mxu0 0
  %1118 = vmatprep.subr.bf16.mxu0 0
  %1119 = vmatpush1.bf16.msra.mxu0 0
  %1120 = vmatprep.subr.bf16.mxu0 0
  %1121 = vmatpush1.bf16.msra.mxu0 0
  %1122 = vmatprep.subr.bf16.mxu0 0
  %1123 = vmatpush1.bf16.msra.mxu0 0
  %1124 = vmatprep.subr.bf16.mxu0 0
  %1125 = vmatpush1.bf16.msra.mxu0 0
  %1126 = vmatprep.subr.bf16.mxu0 0
  %1127 = vmatpush1.bf16.msra.mxu0 0
  %1128 = vmatprep.subr.bf16.mxu0 0
  %1129 = vmatpush1.bf16.msra.mxu0 0
  %1130 = vmatprep.subr.bf16.mxu0 0
  %1131 = vmatpush1.bf16.msra.mxu0 0
  %1132 = vmatprep.mubr.bf16.mxu0 0
  %1133 = vmatmul.mubr.bf16.gmra.mrb[0].mxu0 %v520
  %v1134 = vpop.f32.mrb[0].mxu0
  %v1135 = vadd.f32 %v411, %v1134
  %v1136 = vpop.f32.mrb[0].mxu0
  %v1137 = vadd.f32 %v411, %v1136
  %v1138 = vpop.f32.mrb[0].mxu0
  %v1139 = vadd.f32 %v416, %v1138
  %v1140 = vpop.f32.mrb[0].mxu0
  %v1141 = vadd.f32 %v416, %v1140
  %1142 = vmatprep.mubr.bf16.mxu0 0
  %1143 = vmatmul.mubr.bf16.gmra.mrb[0].mxu0 %v521
  %v1144 = vpop.f32.mrb[0].mxu0
  %v1145 = vadd.f32 %v421, %v1144
  %v1146 = vpop.f32.mrb[0].mxu0
  %v1147 = vadd.f32 %v421, %v1146
  %v1148 = vpop.f32.mrb[0].mxu0
  %v1149 = vadd.f32 %v426, %v1148
  %v1150 = vpop.f32.mrb[0].mxu0
  %v1151 = vadd.f32 %v426, %v1150
  %1152 = vmatprep.mubr.bf16.mxu0 0
  %1153 = vmatmul.mubr.bf16.gmra.mrb[0].mxu0 %v522
  %v1154 = vpop.f32.mrb[0].mxu0
  %v1155 = vadd.f32 %v431, %v1154
  %v1156 = vpop.f32.mrb[0].mxu0
  %v1157 = vadd.f32 %v431, %v1156
  %v1158 = vpop.f32.mrb[0].mxu0
  %v1159 = vadd.f32 %v436, %v1158
  %v1160 = vpop.f32.mrb[0].mxu0
  %v1161 = vadd.f32 %v436, %v1160
  %1162 = vmatprep.mubr.bf16.mxu0 0
  %1163 = vmatmul.mubr.bf16.gmra.mrb[0].mxu0 %v523
  %v1164 = vpop.f32.mrb[0].mxu0
  %v1165 = vadd.f32 %v441, %v1164
  %v1166 = vpop.f32.mrb[0].mxu0
  %v1167 = vadd.f32 %v441, %v1166
  %v1168 = vpop.f32.mrb[0].mxu0
  %v1169 = vadd.f32 %v446, %v1168
  %v1170 = vpop.f32.mrb[0].mxu0
  %v1171 = vadd.f32 %v446, %v1170
  %1172 = vmatprep.mubr.bf16.mxu0 0
  %1173 = vmatmul.mubr.bf16.gmra.mrb[0].mxu0 %v524
  %v1174 = vpop.f32.mrb[0].mxu0
  %v1175 = vadd.f32 %v451, %v1174
  %v1176 = vpop.f32.mrb[0].mxu0
  %v1177 = vadd.f32 %v451, %v1176
  %v1178 = vpop.f32.mrb[0].mxu0
  %v1179 = vadd.f32 %v456, %v1178
  %v1180 = vpop.f32.mrb[0].mxu0
  %v1181 = vadd.f32 %v456, %v1180
  %1182 = vmatprep.mubr.bf16.mxu0 0
  %1183 = vmatmul.mubr.bf16.gmra.mrb[0].mxu0 %v525
  %v1184 = vpop.f32.mrb[0].mxu0
  %v1185 = vadd.f32 %v461, %v1184
  %v1186 = vpop.f32.mrb[0].mxu0
  %v1187 = vadd.f32 %v461, %v1186
  %v1188 = vpop.f32.mrb[0].mxu0
  %v1189 = vadd.f32 %v466, %v1188
  %v1190 = vpop.f32.mrb[0].mxu0
  %v1191 = vadd.f32 %v466, %v1190
  %1192 = vmatprep.mubr.bf16.mxu0 0
  %1193 = vmatmul.mubr.bf16.gmra.mrb[0].mxu0 %v526
  %v1194 = vpop.f32.mrb[0].mxu0
  %v1195 = vadd.f32 %v471, %v1194
  %v1196 = vpop.f32.mrb[0].mxu0
  %v1197 = vadd.f32 %v471, %v1196
  %v1198 = vpop.f32.mrb[0].mxu0
  %v1199 = vadd.f32 %v476, %v1198
  %v1200 = vpop.f32.mrb[0].mxu0
  %v1201 = vadd.f32 %v476, %v1200
  %1202 = vmatprep.mubr.bf16.mxu0 0
  %1203 = vmatmul.mubr.bf16.gmra.mrb[0].mxu0 %v527
  %v1204 = vpop.f32.mrb[0].mxu0
  %v1205 = vadd.f32 %v481, %v1204
  %v1206 = vpop.f32.mrb[0].mxu0
  %v1207 = vadd.f32 %v481, %v1206
  %v1208 = vpop.f32.mrb[0].mxu0
  %v1209 = vadd.f32 %v486, %v1208
  %v1210 = vpop.f32.mrb[0].mxu0
  %v1211 = vadd.f32 %v486, %v1210
  %1212 = vdwg.mxu0
  %s1213 = scalar_lea.vmem %s1, 256
  %v1214 = vld [vmem:[%s1213] sm:$0xff]
  %v1215 = vld [vmem:[%s1213 + $0x8] sm:$0xff]
  %v1216 = vld [vmem:[%s1213 + $0x10] sm:$0xff]
  %v1217 = vld [vmem:[%s1213 + $0x18] sm:$0xff]
  %v1218 = vld [vmem:[%s1213 + $0x20] sm:$0xff]
  %v1219 = vld [vmem:[%s1213 + $0x28] sm:$0xff]
  %v1220 = vld [vmem:[%s1213 + $0x30] sm:$0xff]
  %v1221 = vld [vmem:[%s1213 + $0x38] sm:$0xff]
  %v1222 = vld [vmem:[%s1213 + $0x40] sm:$0xff]
  %v1223 = vld [vmem:[%s1213 + $0x48] sm:$0xff]
  %v1224 = vld [vmem:[%s1213 + $0x50] sm:$0xff]
  %v1225 = vld [vmem:[%s1213 + $0x58] sm:$0xff]
  %v1226 = vld [vmem:[%s1213 + $0x60] sm:$0xff]
  %v1227 = vld [vmem:[%s1213 + $0x68] sm:$0xff]
  %v1228 = vld [vmem:[%s1213 + $0x70] sm:$0xff]
  %v1229 = vld [vmem:[%s1213 + $0x78] sm:$0xff]
  %v1230 = vld [vmem:[%s1213 + $0x80] sm:$0xff]
  %v1231 = vld [vmem:[%s1213 + $0x88] sm:$0xff]
  %v1232 = vld [vmem:[%s1213 + $0x90] sm:$0xff]
  %v1233 = vld [vmem:[%s1213 + $0x98] sm:$0xff]
  %v1234 = vld [vmem:[%s1213 + $0xa0] sm:$0xff]
  %v1235 = vld [vmem:[%s1213 + $0xa8] sm:$0xff]
  %v1236 = vld [vmem:[%s1213 + $0xb0] sm:$0xff]
  %v1237 = vld [vmem:[%s1213 + $0xb8] sm:$0xff]
  %v1238 = vld [vmem:[%s1213 + $0xc0] sm:$0xff]
  %v1239 = vld [vmem:[%s1213 + $0xc8] sm:$0xff]
  %v1240 = vld [vmem:[%s1213 + $0xd0] sm:$0xff]
  %v1241 = vld [vmem:[%s1213 + $0xd8] sm:$0xff]
  %v1242 = vld [vmem:[%s1213 + $0xe0] sm:$0xff]
  %v1243 = vld [vmem:[%s1213 + $0xe8] sm:$0xff]
  %v1244 = vld [vmem:[%s1213 + $0xf0] sm:$0xff]
  %v1245 = vld [vmem:[%s1213 + $0xf8] sm:$0xff]
  %v1246 = vadd.f32 %v1135, %v1214
  %v1247 = vadd.f32 %v1137, %v1215
  %v1248 = vadd.f32 %v1139, %v1216
  %v1249 = vadd.f32 %v1141, %v1217
  %v1250 = vadd.f32 %v1145, %v1218
  %v1251 = vadd.f32 %v1147, %v1219
  %v1252 = vadd.f32 %v1149, %v1220
  %v1253 = vadd.f32 %v1151, %v1221
  %v1254 = vadd.f32 %v1155, %v1222
  %v1255 = vadd.f32 %v1157, %v1223
  %v1256 = vadd.f32 %v1159, %v1224
  %v1257 = vadd.f32 %v1161, %v1225
  %v1258 = vadd.f32 %v1165, %v1226
  %v1259 = vadd.f32 %v1167, %v1227
  %v1260 = vadd.f32 %v1169, %v1228
  %v1261 = vadd.f32 %v1171, %v1229
  %v1262 = vadd.f32 %v1175, %v1230
  %v1263 = vadd.f32 %v1177, %v1231
  %v1264 = vadd.f32 %v1179, %v1232
  %v1265 = vadd.f32 %v1181, %v1233
  %v1266 = vadd.f32 %v1185, %v1234
  %v1267 = vadd.f32 %v1187, %v1235
  %v1268 = vadd.f32 %v1189, %v1236
  %v1269 = vadd.f32 %v1191, %v1237
  %v1270 = vadd.f32 %v1195, %v1238
  %v1271 = vadd.f32 %v1197, %v1239
  %v1272 = vadd.f32 %v1199, %v1240
  %v1273 = vadd.f32 %v1201, %v1241
  %v1274 = vadd.f32 %v1205, %v1242
  %v1275 = vadd.f32 %v1207, %v1243
  %v1276 = vadd.f32 %v1209, %v1244
  %v1277 = vadd.f32 %v1211, %v1245
  %s1278 = scalar_lea.vmem %s6, 256
  %1279 = vst [vmem:[%s1278] sm:$0xff] %v1246
  %1280 = vst [vmem:[%s1278 + $0x8] sm:$0xff] %v1247
  %1281 = vst [vmem:[%s1278 + $0x10] sm:$0xff] %v1248
  %1282 = vst [vmem:[%s1278 + $0x18] sm:$0xff] %v1249
  %1283 = vst [vmem:[%s1278 + $0x20] sm:$0xff] %v1250
  %1284 = vst [vmem:[%s1278 + $0x28] sm:$0xff] %v1251
  %1285 = vst [vmem:[%s1278 + $0x30] sm:$0xff] %v1252
  %1286 = vst [vmem:[%s1278 + $0x38] sm:$0xff] %v1253
  %1287 = vst [vmem:[%s1278 + $0x40] sm:$0xff] %v1254
  %1288 = vst [vmem:[%s1278 + $0x48] sm:$0xff] %v1255
  %1289 = vst [vmem:[%s1278 + $0x50] sm:$0xff] %v1256
  %1290 = vst [vmem:[%s1278 + $0x58] sm:$0xff] %v1257
  %1291 = vst [vmem:[%s1278 + $0x60] sm:$0xff] %v1258
  %1292 = vst [vmem:[%s1278 + $0x68] sm:$0xff] %v1259
  %1293 = vst [vmem:[%s1278 + $0x70] sm:$0xff] %v1260
  %1294 = vst [vmem:[%s1278 + $0x78] sm:$0xff] %v1261
  %1295 = vst [vmem:[%s1278 + $0x80] sm:$0xff] %v1262
  %1296 = vst [vmem:[%s1278 + $0x88] sm:$0xff] %v1263
  %1297 = vst [vmem:[%s1278 + $0x90] sm:$0xff] %v1264
  %1298 = vst [vmem:[%s1278 + $0x98] sm:$0xff] %v1265
  %1299 = vst [vmem:[%s1278 + $0xa0] sm:$0xff] %v1266
  %1300 = vst [vmem:[%s1278 + $0xa8] sm:$0xff] %v1267
  %1301 = vst [vmem:[%s1278 + $0xb0] sm:$0xff] %v1268
  %1302 = vst [vmem:[%s1278 + $0xb8] sm:$0xff] %v1269
  %1303 = vst [vmem:[%s1278 + $0xc0] sm:$0xff] %v1270
  %1304 = vst [vmem:[%s1278 + $0xc8] sm:$0xff] %v1271
  %1305 = vst [vmem:[%s1278 + $0xd0] sm:$0xff] %v1272
  %1306 = vst [vmem:[%s1278 + $0xd8] sm:$0xff] %v1273
  %1307 = vst [vmem:[%s1278 + $0xe0] sm:$0xff] %v1274
  %1308 = vst [vmem:[%s1278 + $0xe8] sm:$0xff] %v1275
  %1309 = vst [vmem:[%s1278 + $0xf0] sm:$0xff] %v1276
  %1310 = vst [vmem:[%s1278 + $0xf8] sm:$0xff] %v1277
  // Predicated region
  $region26: #{oafilter.7} parent=0 // pred_check
    _
  $region27: #{oafilter.7} parent=0 // pred_check_branch
    %1312 = sbr.rel (0) target = $region29
  $region28: #{oafilter.7} parent=0 // pred_region
    _
  $region29: #{oafilter.7} parent=0 // pred_fallthru
    _
  // Predicated region
  $region30: #{oafilter.7} parent=0 // pred_check
    _
  $region31: #{oafilter.7} parent=0 // pred_check_branch
    %1314 = sbr.rel (0) target = $region33
  $region32: #{oafilter.7} parent=0 // pred_region
    _
  $region33: #{oafilter.7} parent=0 // pred_fallthru
    _

</llo_original>
